<compile_context>
chip_gen: v7x
topology: tpu7x:2x2x1
jax: 0.10.0
libtpu: 0.0.40
codegen_flags: <defaults>
</compile_context>

<pallas_src>
import functools

import jax
import jax.numpy as jnp
import numpy as np
from jax import lax
from jax.experimental import pallas as pl
from jax.experimental.pallas import tpu as pltpu


# ----------------------------------------------------------------------------
# Fused Block kernel (one batch element per grid step).
# ----------------------------------------------------------------------------
def _block_kernel(x_ref, w1_ref, b1_ref, w2_ref, b2_ref,
                  wca1_ref, bca1_ref, wca2_ref, bca2_ref,
                  wpa1_ref, bpa1_ref, wpa2_ref, bpa2_ref,
                  o_ref, xpad_ref, *, H, W, C):
    # Zero-fill the halo scratch once; conv calls only overwrite the interior,
    # so the 1-pixel zero border persists across the three convs.
    xpad_ref[...] = jnp.zeros((H + 2, W + 2, C), jnp.float32)

    def conv3x3(src_hwc, w_flat, bias):
        # src_hwc: (H, W, C) f32 value; w_flat: (9*C, Cout); bias: (1, Cout).
        xpad_ref[1:H + 1, 1:W + 1, :] = src_hwc
        # im2col: lane-concatenate the 9 shifted taps -> single K=9*C MXU matmul.
        taps = []
        for dy in range(3):
            for dx in range(3):
                taps.append(
                    xpad_ref[dy:dy + H, dx:dx + W, :].reshape(H * W, C))
        col = jnp.concatenate(taps, axis=1)            # (H*W, 9*C)
        return jnp.dot(col, w_flat,
                       preferred_element_type=jnp.float32) + bias

    x = x_ref[0]                                        # (H, W, C)
    xf = x.reshape(H * W, C)

    # conv1 -> ReLU -> residual add
    r = conv3x3(x, w1_ref[...], b1_ref[...])            # (H*W, C)
    r = jnp.maximum(r, 0.0) + xf

    # conv2
    r = conv3x3(r.reshape(H, W, C), w2_ref[...], b2_ref[...])

    # CALayer: global avg pool -> 1x1 (C->C/8) -> ReLU -> 1x1 (C/8->C) -> sigmoid
    pooled = jnp.mean(r, axis=0, keepdims=True)         # (1, C)
    h = jnp.dot(pooled, wca1_ref[...],
                preferred_element_type=jnp.float32) + bca1_ref[...]
    h = jnp.maximum(h, 0.0)                              # (1, C//8)
    ca = jax.nn.sigmoid(jnp.dot(h, wca2_ref[...],
                                preferred_element_type=jnp.float32)
                        + bca2_ref[...])                 # (1, C)
    r = r * ca                                           # per-channel gate

    # PALayer: 3x3 (C->C/8) -> ReLU -> 1x1 (C/8->1) -> sigmoid -> per-pixel gate
    p = conv3x3(r.reshape(H, W, C), wpa1_ref[...], bpa1_ref[...])   # (H*W, C//8)
    p = jnp.maximum(p, 0.0)
    pa = jax.nn.sigmoid(jnp.dot(p, wpa2_ref[...],
                                preferred_element_type=jnp.float32)
                        + bpa2_ref[...])                 # (H*W, 1)
    r = r * pa                                           # per-pixel gate

    # final residual add
    o_ref[0] = (r + xf).reshape(H, W, C)


def block_forward(x_nchw, p):
    """x_nchw: (N, C, H, W) like the PyTorch module. Returns (N, C, H, W)."""
    x = jnp.transpose(x_nchw, (0, 2, 3, 1)).astype(jnp.float32)   # NCHW -> NHWC
    N, H, W, C = x.shape
    assert C % 8 == 0, "CALayer/PALayer require dim % 8 == 0"
    C8 = C // 8

    # Pre-pack conv weights for the single im2col matmul: (3,3,Cin,Cout)->(9*Cin,Cout)
    w1f = p["w1"].reshape(9 * C, C)
    w2f = p["w2"].reshape(9 * C, C)
    wpa1f = p["wpa1"].reshape(9 * C, C8)

    full2 = lambda n: (0, 0)
    out_nhwc = pl.pallas_call(
        functools.partial(_block_kernel, H=H, W=W, C=C),
        out_shape=jax.ShapeDtypeStruct((N, H, W, C), jnp.float32),
        grid=(N,),
        in_specs=[
            pl.BlockSpec((1, H, W, C), lambda n: (n, 0, 0, 0)),   # x (per batch)
            pl.BlockSpec((9 * C, C), full2),                      # w1 (im2col-packed)
            pl.BlockSpec((1, C), full2),                          # b1
            pl.BlockSpec((9 * C, C), full2),                      # w2
            pl.BlockSpec((1, C), full2),                          # b2
            pl.BlockSpec((C, C8), full2),                         # CA 1x1 #1
            pl.BlockSpec((1, C8), full2),
            pl.BlockSpec((C8, C), full2),                         # CA 1x1 #2
            pl.BlockSpec((1, C), full2),
            pl.BlockSpec((9 * C, C8), full2),                     # PA 3x3
            pl.BlockSpec((1, C8), full2),
            pl.BlockSpec((C8, 1), full2),                         # PA 1x1
            pl.BlockSpec((1, 1), full2),
        ],
        out_specs=pl.BlockSpec((1, H, W, C), lambda n: (n, 0, 0, 0)),
        scratch_shapes=[pltpu.VMEM((H + 2, W + 2, C), jnp.float32)],  # halo tile
        compiler_params=pltpu.CompilerParams(
            dimension_semantics=("parallel",)),       # batch -> both TCs on v7x
    )(x, w1f, p["b1"].reshape(1, C), w2f, p["b2"].reshape(1, C),
      p["wca1"], p["bca1"].reshape(1, C8),
      p["wca2"], p["bca2"].reshape(1, C),
      wpa1f, p["bpa1"].reshape(1, C8),
      p["wpa2"], p["bpa2"].reshape(1, 1))
    return jnp.transpose(out_nhwc, (0, 3, 1, 2))                  # NHWC -> NCHW


# ----------------------------------------------------------------------------
# Deterministic synthetic parameters.
# ----------------------------------------------------------------------------
def init_params(key, C):
    C8 = C // 8
    ks = jax.random.split(key, 12)

    def wconv(k, cin, cout):
        return jax.random.normal(k, (3, 3, cin, cout), jnp.float32) / np.sqrt(9.0 * cin)

    return dict(
        w1=wconv(ks[0], C, C),
        b1=0.05 * jax.random.normal(ks[1], (C,), jnp.float32),
        w2=wconv(ks[2], C, C),
        b2=0.05 * jax.random.normal(ks[3], (C,), jnp.float32),
        wca1=jax.random.normal(ks[4], (C, C8), jnp.float32) / np.sqrt(1.0 * C),
        bca1=0.05 * jax.random.normal(ks[5], (C8,), jnp.float32),
        wca2=jax.random.normal(ks[6], (C8, C), jnp.float32) / np.sqrt(1.0 * C8),
        bca2=0.05 * jax.random.normal(ks[7], (C,), jnp.float32),
        wpa1=wconv(ks[8], C, C8),
        bpa1=0.05 * jax.random.normal(ks[9], (C8,), jnp.float32),
        wpa2=jax.random.normal(ks[10], (C8, 1), jnp.float32) / np.sqrt(1.0 * C8),
        bpa2=0.05 * jax.random.normal(ks[11], (1,), jnp.float32),
    )


# ----------------------------------------------------------------------------
# Pure-JAX reference (identical semantics) for validation.
# ----------------------------------------------------------------------------
def reference_forward(x_nchw, p):
    x = jnp.transpose(x_nchw, (0, 2, 3, 1)).astype(jnp.float32)

    def conv(v, w, b):
        y = lax.conv_general_dilated(
            v, w, window_strides=(1, 1), padding=((1, 1), (1, 1)),
            dimension_numbers=("NHWC", "HWIO", "NHWC"),
            precision=lax.Precision.HIGHEST)
        return y + b

    r = jax.nn.relu(conv(x, p["w1"], p["b1"])) + x
    r = conv(r, p["w2"], p["b2"])
    pooled = jnp.mean(r, axis=(1, 2))                                 # (N, C)
    h = jax.nn.relu(pooled @ p["wca1"] + p["bca1"])
    ca = jax.nn.sigmoid(h @ p["wca2"] + p["bca2"])                    # (N, C)
    r = r * ca[:, None, None, :]
    q = jax.nn.relu(conv(r, p["wpa1"], p["bpa1"]))                    # (N,H,W,C/8)
    pa = jax.nn.sigmoid(q @ p["wpa2"] + p["bpa2"])                    # (N,H,W,1)
    r = r * pa
    r = r + x
    return jnp.transpose(r, (0, 3, 1, 2))


if __name__ == "__main__":
    key = jax.random.PRNGKey(0)
    pkey, xkey = jax.random.split(key)

    # dim must be a multiple of 8 (CALayer/PALayer use channel//8); use the FFA
    # default dim=64 with small 16x16 spatial and batch=2.
    C, H, W, N = 64, 16, 16, 2
    params = init_params(pkey, C)
    x = jax.random.normal(xkey, (N, C, H, W), jnp.float32)   # NCHW like PyTorch

    out = jax.block_until_ready(block_forward(x, params))
    assert out.shape == (N, C, H, W)

    ref = jax.block_until_ready(reference_forward(x, params))
    np.testing.assert_allclose(np.asarray(out), np.asarray(ref), atol=2e-3, rtol=2e-3)

    print("KERNEL_OK")
</pallas_src>

<mosaic_0001>
module attributes {stable_mosaic.version = 11 : i64} {
  func.func @_block_kernel(%arg0: i32, %arg1: memref<1x16x16x64xf32, #tpu.memory_space<vmem>>, %arg2: memref<576x64xf32, #tpu.memory_space<vmem>>, %arg3: memref<1x64xf32, #tpu.memory_space<vmem>>, %arg4: memref<576x64xf32, #tpu.memory_space<vmem>>, %arg5: memref<1x64xf32, #tpu.memory_space<vmem>>, %arg6: memref<64x8xf32, #tpu.memory_space<vmem>>, %arg7: memref<1x8xf32, #tpu.memory_space<vmem>>, %arg8: memref<8x64xf32, #tpu.memory_space<vmem>>, %arg9: memref<1x64xf32, #tpu.memory_space<vmem>>, %arg10: memref<576x8xf32, #tpu.memory_space<vmem>>, %arg11: memref<1x8xf32, #tpu.memory_space<vmem>>, %arg12: memref<8x1xf32, #tpu.memory_space<vmem>>, %arg13: memref<1x1xf32, #tpu.memory_space<vmem>>, %arg14: memref<1x16x16x64xf32, #tpu.memory_space<vmem>>, %arg15: memref<18x18x64xf32, #tpu.memory_space<vmem>>) attributes {dimension_semantics = [#tpu.dimension_semantics<parallel>], iteration_bounds = array<i64: 2>, scalar_prefetch = 0 : i64, scratch_operands = 1 : i64, tpu.core_type = #tpu.core_type<tc>, window_params = [{transform_indices = @transform_0, window_bounds = array<i64: 1, 16, 16, 64>}, {pipeline_mode = #tpu.pipeline_mode<synchronous>, transform_indices = @transform_1, window_bounds = array<i64: 576, 64>}, {pipeline_mode = #tpu.pipeline_mode<synchronous>, transform_indices = @transform_2, window_bounds = array<i64: 1, 64>}, {pipeline_mode = #tpu.pipeline_mode<synchronous>, transform_indices = @transform_3, window_bounds = array<i64: 576, 64>}, {pipeline_mode = #tpu.pipeline_mode<synchronous>, transform_indices = @transform_4, window_bounds = array<i64: 1, 64>}, {pipeline_mode = #tpu.pipeline_mode<synchronous>, transform_indices = @transform_5, window_bounds = array<i64: 64, 8>}, {pipeline_mode = #tpu.pipeline_mode<synchronous>, transform_indices = @transform_6, window_bounds = array<i64: 1, 8>}, {pipeline_mode = #tpu.pipeline_mode<synchronous>, transform_indices = @transform_7, window_bounds = array<i64: 8, 64>}, {pipeline_mode = #tpu.pipeline_mode<synchronous>, transform_indices = @transform_8, window_bounds = array<i64: 1, 64>}, {pipeline_mode = #tpu.pipeline_mode<synchronous>, transform_indices = @transform_9, window_bounds = array<i64: 576, 8>}, {pipeline_mode = #tpu.pipeline_mode<synchronous>, transform_indices = @transform_10, window_bounds = array<i64: 1, 8>}, {pipeline_mode = #tpu.pipeline_mode<synchronous>, transform_indices = @transform_11, window_bounds = array<i64: 8, 1>}, {pipeline_mode = #tpu.pipeline_mode<synchronous>, transform_indices = @transform_12, window_bounds = array<i64: 1, 1>}, {transform_indices = @transform_13, window_bounds = array<i64: 1, 16, 16, 64>}]} {
    %cst = arith.constant 0.000000e+00 : f32
    %0 = vector.broadcast %cst : f32 to vector<18x18x64xf32>
    %c0 = arith.constant 0 : index
    %c0_0 = arith.constant 0 : index
    %c0_1 = arith.constant 0 : index
    %1 = vector.load %arg15[%c0, %c0_0, %c0_1] : memref<18x18x64xf32, #tpu.memory_space<vmem>>, vector<18x18x64xf32>
    tpu.vector_store %arg15[%c0, %c0_0, %c0_1], %0 {strides = array<i32>} : memref<18x18x64xf32, #tpu.memory_space<vmem>>, vector<18x18x64xf32>,
    %c0_2 = arith.constant 0 : index
    %c0_3 = arith.constant 0 : index
    %c0_4 = arith.constant 0 : index
    %c0_5 = arith.constant 0 : index
    %2 = vector.load %arg1[%c0_2, %c0_3, %c0_4, %c0_5] : memref<1x16x16x64xf32, #tpu.memory_space<vmem>>, vector<1x16x16x64xf32>
    %3 = vector.shape_cast %2 : vector<1x16x16x64xf32> to vector<16x16x64xf32>
    %4 = vector.shape_cast %3 : vector<16x16x64xf32> to vector<256x64xf32>
    %c0_6 = arith.constant 0 : index
    %c0_7 = arith.constant 0 : index
    %5 = vector.load %arg2[%c0_6, %c0_7] : memref<576x64xf32, #tpu.memory_space<vmem>>, vector<576x64xf32>
    %c0_8 = arith.constant 0 : index
    %c0_9 = arith.constant 0 : index
    %6 = vector.load %arg3[%c0_8, %c0_9] : memref<1x64xf32, #tpu.memory_space<vmem>>, vector<1x64xf32>
    %c1 = arith.constant 1 : index
    %c1_10 = arith.constant 1 : index
    %c0_11 = arith.constant 0 : index
    %7 = vector.load %arg15[%c1, %c1_10, %c0_11] : memref<18x18x64xf32, #tpu.memory_space<vmem>>, vector<16x16x64xf32>
    tpu.vector_store %arg15[%c1, %c1_10, %c0_11], %3 {strides = array<i32>} : memref<18x18x64xf32, #tpu.memory_space<vmem>>, vector<16x16x64xf32>,
    %c0_12 = arith.constant 0 : index
    %c0_13 = arith.constant 0 : index
    %c0_14 = arith.constant 0 : index
    %8 = vector.load %arg15[%c0_12, %c0_13, %c0_14] : memref<18x18x64xf32, #tpu.memory_space<vmem>>, vector<16x16x64xf32>
    %9 = vector.shape_cast %8 : vector<16x16x64xf32> to vector<256x64xf32>
    %c0_15 = arith.constant 0 : index
    %c1_16 = arith.constant 1 : index
    %c0_17 = arith.constant 0 : index
    %10 = vector.load %arg15[%c0_15, %c1_16, %c0_17] : memref<18x18x64xf32, #tpu.memory_space<vmem>>, vector<16x16x64xf32>
    %11 = vector.shape_cast %10 : vector<16x16x64xf32> to vector<256x64xf32>
    %c0_18 = arith.constant 0 : index
    %c2 = arith.constant 2 : index
    %c0_19 = arith.constant 0 : index
    %12 = vector.load %arg15[%c0_18, %c2, %c0_19] : memref<18x18x64xf32, #tpu.memory_space<vmem>>, vector<16x16x64xf32>
    %13 = vector.shape_cast %12 : vector<16x16x64xf32> to vector<256x64xf32>
    %c1_20 = arith.constant 1 : index
    %c0_21 = arith.constant 0 : index
    %c0_22 = arith.constant 0 : index
    %14 = vector.load %arg15[%c1_20, %c0_21, %c0_22] : memref<18x18x64xf32, #tpu.memory_space<vmem>>, vector<16x16x64xf32>
    %15 = vector.shape_cast %14 : vector<16x16x64xf32> to vector<256x64xf32>
    %c1_23 = arith.constant 1 : index
    %c1_24 = arith.constant 1 : index
    %c0_25 = arith.constant 0 : index
    %16 = vector.load %arg15[%c1_23, %c1_24, %c0_25] : memref<18x18x64xf32, #tpu.memory_space<vmem>>, vector<16x16x64xf32>
    %17 = vector.shape_cast %16 : vector<16x16x64xf32> to vector<256x64xf32>
    %c1_26 = arith.constant 1 : index
    %c2_27 = arith.constant 2 : index
    %c0_28 = arith.constant 0 : index
    %18 = vector.load %arg15[%c1_26, %c2_27, %c0_28] : memref<18x18x64xf32, #tpu.memory_space<vmem>>, vector<16x16x64xf32>
    %19 = vector.shape_cast %18 : vector<16x16x64xf32> to vector<256x64xf32>
    %c2_29 = arith.constant 2 : index
    %c0_30 = arith.constant 0 : index
    %c0_31 = arith.constant 0 : index
    %20 = vector.load %arg15[%c2_29, %c0_30, %c0_31] : memref<18x18x64xf32, #tpu.memory_space<vmem>>, vector<16x16x64xf32>
    %21 = vector.shape_cast %20 : vector<16x16x64xf32> to vector<256x64xf32>
    %c2_32 = arith.constant 2 : index
    %c1_33 = arith.constant 1 : index
    %c0_34 = arith.constant 0 : index
    %22 = vector.load %arg15[%c2_32, %c1_33, %c0_34] : memref<18x18x64xf32, #tpu.memory_space<vmem>>, vector<16x16x64xf32>
    %23 = vector.shape_cast %22 : vector<16x16x64xf32> to vector<256x64xf32>
    %c2_35 = arith.constant 2 : index
    %c2_36 = arith.constant 2 : index
    %c0_37 = arith.constant 0 : index
    %24 = vector.load %arg15[%c2_35, %c2_36, %c0_37] : memref<18x18x64xf32, #tpu.memory_space<vmem>>, vector<16x16x64xf32>
    %25 = vector.shape_cast %24 : vector<16x16x64xf32> to vector<256x64xf32>
    %26 = tpu.concatenate %9, %11, %13, %15, %17, %19, %21, %23, %25 in 1 : vector<256x64xf32>, vector<256x64xf32>, vector<256x64xf32>, vector<256x64xf32>, vector<256x64xf32>, vector<256x64xf32>, vector<256x64xf32>, vector<256x64xf32>, vector<256x64xf32> -> vector<256x576xf32>
    %cst_38 = arith.constant dense<0.000000e+00> : vector<256x64xf32>
    %27 = tpu.matmul %26, %5, %cst_38 {dimension_numbers = #tpu.dot_dimension_numbers<[1], [0], [0], [1], [0, 0, 1, 1], [], []>} : vector<256x576xf32>, vector<576x64xf32>, vector<256x64xf32> -> vector<256x64xf32>
    %28 = vector.broadcast %6 : vector<1x64xf32> to vector<256x64xf32>
    %29 = arith.addf %27, %28 : vector<256x64xf32>
    %cst_39 = arith.constant 0.000000e+00 : f32
    %30 = vector.broadcast %cst_39 : f32 to vector<256x64xf32>
    %31 = arith.maximumf %29, %30 : vector<256x64xf32>
    %32 = arith.addf %31, %4 : vector<256x64xf32>
    %33 = vector.shape_cast %32 : vector<256x64xf32> to vector<16x16x64xf32>
    %c0_40 = arith.constant 0 : index
    %c0_41 = arith.constant 0 : index
    %34 = vector.load %arg4[%c0_40, %c0_41] : memref<576x64xf32, #tpu.memory_space<vmem>>, vector<576x64xf32>
    %c0_42 = arith.constant 0 : index
    %c0_43 = arith.constant 0 : index
    %35 = vector.load %arg5[%c0_42, %c0_43] : memref<1x64xf32, #tpu.memory_space<vmem>>, vector<1x64xf32>
    %c1_44 = arith.constant 1 : index
    %c1_45 = arith.constant 1 : index
    %c0_46 = arith.constant 0 : index
    %36 = vector.load %arg15[%c1_44, %c1_45, %c0_46] : memref<18x18x64xf32, #tpu.memory_space<vmem>>, vector<16x16x64xf32>
    tpu.vector_store %arg15[%c1_44, %c1_45, %c0_46], %33 {strides = array<i32>} : memref<18x18x64xf32, #tpu.memory_space<vmem>>, vector<16x16x64xf32>,
    %c0_47 = arith.constant 0 : index
    %c0_48 = arith.constant 0 : index
    %c0_49 = arith.constant 0 : index
    %37 = vector.load %arg15[%c0_47, %c0_48, %c0_49] : memref<18x18x64xf32, #tpu.memory_space<vmem>>, vector<16x16x64xf32>
    %38 = vector.shape_cast %37 : vector<16x16x64xf32> to vector<256x64xf32>
    %c0_50 = arith.constant 0 : index
    %c1_51 = arith.constant 1 : index
    %c0_52 = arith.constant 0 : index
    %39 = vector.load %arg15[%c0_50, %c1_51, %c0_52] : memref<18x18x64xf32, #tpu.memory_space<vmem>>, vector<16x16x64xf32>
    %40 = vector.shape_cast %39 : vector<16x16x64xf32> to vector<256x64xf32>
    %c0_53 = arith.constant 0 : index
    %c2_54 = arith.constant 2 : index
    %c0_55 = arith.constant 0 : index
    %41 = vector.load %arg15[%c0_53, %c2_54, %c0_55] : memref<18x18x64xf32, #tpu.memory_space<vmem>>, vector<16x16x64xf32>
    %42 = vector.shape_cast %41 : vector<16x16x64xf32> to vector<256x64xf32>
    %c1_56 = arith.constant 1 : index
    %c0_57 = arith.constant 0 : index
    %c0_58 = arith.constant 0 : index
    %43 = vector.load %arg15[%c1_56, %c0_57, %c0_58] : memref<18x18x64xf32, #tpu.memory_space<vmem>>, vector<16x16x64xf32>
    %44 = vector.shape_cast %43 : vector<16x16x64xf32> to vector<256x64xf32>
    %c1_59 = arith.constant 1 : index
    %c1_60 = arith.constant 1 : index
    %c0_61 = arith.constant 0 : index
    %45 = vector.load %arg15[%c1_59, %c1_60, %c0_61] : memref<18x18x64xf32, #tpu.memory_space<vmem>>, vector<16x16x64xf32>
    %46 = vector.shape_cast %45 : vector<16x16x64xf32> to vector<256x64xf32>
    %c1_62 = arith.constant 1 : index
    %c2_63 = arith.constant 2 : index
    %c0_64 = arith.constant 0 : index
    %47 = vector.load %arg15[%c1_62, %c2_63, %c0_64] : memref<18x18x64xf32, #tpu.memory_space<vmem>>, vector<16x16x64xf32>
    %48 = vector.shape_cast %47 : vector<16x16x64xf32> to vector<256x64xf32>
    %c2_65 = arith.constant 2 : index
    %c0_66 = arith.constant 0 : index
    %c0_67 = arith.constant 0 : index
    %49 = vector.load %arg15[%c2_65, %c0_66, %c0_67] : memref<18x18x64xf32, #tpu.memory_space<vmem>>, vector<16x16x64xf32>
    %50 = vector.shape_cast %49 : vector<16x16x64xf32> to vector<256x64xf32>
    %c2_68 = arith.constant 2 : index
    %c1_69 = arith.constant 1 : index
    %c0_70 = arith.constant 0 : index
    %51 = vector.load %arg15[%c2_68, %c1_69, %c0_70] : memref<18x18x64xf32, #tpu.memory_space<vmem>>, vector<16x16x64xf32>
    %52 = vector.shape_cast %51 : vector<16x16x64xf32> to vector<256x64xf32>
    %c2_71 = arith.constant 2 : index
    %c2_72 = arith.constant 2 : index
    %c0_73 = arith.constant 0 : index
    %53 = vector.load %arg15[%c2_71, %c2_72, %c0_73] : memref<18x18x64xf32, #tpu.memory_space<vmem>>, vector<16x16x64xf32>
    %54 = vector.shape_cast %53 : vector<16x16x64xf32> to vector<256x64xf32>
    %55 = tpu.concatenate %38, %40, %42, %44, %46, %48, %50, %52, %54 in 1 : vector<256x64xf32>, vector<256x64xf32>, vector<256x64xf32>, vector<256x64xf32>, vector<256x64xf32>, vector<256x64xf32>, vector<256x64xf32>, vector<256x64xf32>, vector<256x64xf32> -> vector<256x576xf32>
    %cst_74 = arith.constant dense<0.000000e+00> : vector<256x64xf32>
    %56 = tpu.matmul %55, %34, %cst_74 {dimension_numbers = #tpu.dot_dimension_numbers<[1], [0], [0], [1], [0, 0, 1, 1], [], []>} : vector<256x576xf32>, vector<576x64xf32>, vector<256x64xf32> -> vector<256x64xf32>
    %57 = vector.broadcast %35 : vector<1x64xf32> to vector<256x64xf32>
    %58 = arith.addf %56, %57 : vector<256x64xf32>
    %cst_75 = arith.constant dense<0.000000e+00> : vector<64xf32>
    %59 = vector.multi_reduction <add>, %58, %cst_75 [0] : vector<256x64xf32> to vector<64xf32>
    %60 = vector.shape_cast %59 : vector<64xf32> to vector<1x64xf32>
    %cst_76 = arith.constant 2.560000e+02 : f32
    %61 = vector.broadcast %cst_76 : f32 to vector<1x64xf32>
    %62 = arith.divf %60, %61 : vector<1x64xf32>
    %c0_77 = arith.constant 0 : index
    %c0_78 = arith.constant 0 : index
    %63 = vector.load %arg6[%c0_77, %c0_78] : memref<64x8xf32, #tpu.memory_space<vmem>>, vector<64x8xf32>
    %cst_79 = arith.constant dense<0.000000e+00> : vector<1x8xf32>
    %64 = tpu.matmul %62, %63, %cst_79 {dimension_numbers = #tpu.dot_dimension_numbers<[1], [0], [0], [1], [0, 0, 1, 1], [], []>} : vector<1x64xf32>, vector<64x8xf32>, vector<1x8xf32> -> vector<1x8xf32>
    %c0_80 = arith.constant 0 : index
    %c0_81 = arith.constant 0 : index
    %65 = vector.load %arg7[%c0_80, %c0_81] : memref<1x8xf32, #tpu.memory_space<vmem>>, vector<1x8xf32>
    %66 = arith.addf %64, %65 : vector<1x8xf32>
    %cst_82 = arith.constant 0.000000e+00 : f32
    %67 = vector.broadcast %cst_82 : f32 to vector<1x8xf32>
    %68 = arith.maximumf %66, %67 : vector<1x8xf32>
    %c0_83 = arith.constant 0 : index
    %c0_84 = arith.constant 0 : index
    %69 = vector.load %arg8[%c0_83, %c0_84] : memref<8x64xf32, #tpu.memory_space<vmem>>, vector<8x64xf32>
    %cst_85 = arith.constant dense<0.000000e+00> : vector<1x64xf32>
    %70 = tpu.matmul %68, %69, %cst_85 {dimension_numbers = #tpu.dot_dimension_numbers<[1], [0], [0], [1], [0, 0, 1, 1], [], []>} : vector<1x8xf32>, vector<8x64xf32>, vector<1x64xf32> -> vector<1x64xf32>
    %c0_86 = arith.constant 0 : index
    %c0_87 = arith.constant 0 : index
    %71 = vector.load %arg9[%c0_86, %c0_87] : memref<1x64xf32, #tpu.memory_space<vmem>>, vector<1x64xf32>
    %72 = arith.addf %70, %71 : vector<1x64xf32>
    %73 = arith.negf %72 : vector<1x64xf32>
    %74 = math.exp %73 : vector<1x64xf32>
    %cst_88 = arith.constant 1.000000e+00 : f32
    %75 = vector.broadcast %cst_88 : f32 to vector<1x64xf32>
    %76 = arith.addf %75, %74 : vector<1x64xf32>
    %77 = arith.divf %75, %76 : vector<1x64xf32>
    %78 = vector.broadcast %77 : vector<1x64xf32> to vector<256x64xf32>
    %79 = arith.mulf %58, %78 : vector<256x64xf32>
    %80 = vector.shape_cast %79 : vector<256x64xf32> to vector<16x16x64xf32>
    %c0_89 = arith.constant 0 : index
    %c0_90 = arith.constant 0 : index
    %81 = vector.load %arg10[%c0_89, %c0_90] : memref<576x8xf32, #tpu.memory_space<vmem>>, vector<576x8xf32>
    %c0_91 = arith.constant 0 : index
    %c0_92 = arith.constant 0 : index
    %82 = vector.load %arg11[%c0_91, %c0_92] : memref<1x8xf32, #tpu.memory_space<vmem>>, vector<1x8xf32>
    %c1_93 = arith.constant 1 : index
    %c1_94 = arith.constant 1 : index
    %c0_95 = arith.constant 0 : index
    %83 = vector.load %arg15[%c1_93, %c1_94, %c0_95] : memref<18x18x64xf32, #tpu.memory_space<vmem>>, vector<16x16x64xf32>
    tpu.vector_store %arg15[%c1_93, %c1_94, %c0_95], %80 {strides = array<i32>} : memref<18x18x64xf32, #tpu.memory_space<vmem>>, vector<16x16x64xf32>,
    %c0_96 = arith.constant 0 : index
    %c0_97 = arith.constant 0 : index
    %c0_98 = arith.constant 0 : index
    %84 = vector.load %arg15[%c0_96, %c0_97, %c0_98] : memref<18x18x64xf32, #tpu.memory_space<vmem>>, vector<16x16x64xf32>
    %85 = vector.shape_cast %84 : vector<16x16x64xf32> to vector<256x64xf32>
    %c0_99 = arith.constant 0 : index
    %c1_100 = arith.constant 1 : index
    %c0_101 = arith.constant 0 : index
    %86 = vector.load %arg15[%c0_99, %c1_100, %c0_101] : memref<18x18x64xf32, #tpu.memory_space<vmem>>, vector<16x16x64xf32>
    %87 = vector.shape_cast %86 : vector<16x16x64xf32> to vector<256x64xf32>
    %c0_102 = arith.constant 0 : index
    %c2_103 = arith.constant 2 : index
    %c0_104 = arith.constant 0 : index
    %88 = vector.load %arg15[%c0_102, %c2_103, %c0_104] : memref<18x18x64xf32, #tpu.memory_space<vmem>>, vector<16x16x64xf32>
    %89 = vector.shape_cast %88 : vector<16x16x64xf32> to vector<256x64xf32>
    %c1_105 = arith.constant 1 : index
    %c0_106 = arith.constant 0 : index
    %c0_107 = arith.constant 0 : index
    %90 = vector.load %arg15[%c1_105, %c0_106, %c0_107] : memref<18x18x64xf32, #tpu.memory_space<vmem>>, vector<16x16x64xf32>
    %91 = vector.shape_cast %90 : vector<16x16x64xf32> to vector<256x64xf32>
    %c1_108 = arith.constant 1 : index
    %c1_109 = arith.constant 1 : index
    %c0_110 = arith.constant 0 : index
    %92 = vector.load %arg15[%c1_108, %c1_109, %c0_110] : memref<18x18x64xf32, #tpu.memory_space<vmem>>, vector<16x16x64xf32>
    %93 = vector.shape_cast %92 : vector<16x16x64xf32> to vector<256x64xf32>
    %c1_111 = arith.constant 1 : index
    %c2_112 = arith.constant 2 : index
    %c0_113 = arith.constant 0 : index
    %94 = vector.load %arg15[%c1_111, %c2_112, %c0_113] : memref<18x18x64xf32, #tpu.memory_space<vmem>>, vector<16x16x64xf32>
    %95 = vector.shape_cast %94 : vector<16x16x64xf32> to vector<256x64xf32>
    %c2_114 = arith.constant 2 : index
    %c0_115 = arith.constant 0 : index
    %c0_116 = arith.constant 0 : index
    %96 = vector.load %arg15[%c2_114, %c0_115, %c0_116] : memref<18x18x64xf32, #tpu.memory_space<vmem>>, vector<16x16x64xf32>
    %97 = vector.shape_cast %96 : vector<16x16x64xf32> to vector<256x64xf32>
    %c2_117 = arith.constant 2 : index
    %c1_118 = arith.constant 1 : index
    %c0_119 = arith.constant 0 : index
    %98 = vector.load %arg15[%c2_117, %c1_118, %c0_119] : memref<18x18x64xf32, #tpu.memory_space<vmem>>, vector<16x16x64xf32>
    %99 = vector.shape_cast %98 : vector<16x16x64xf32> to vector<256x64xf32>
    %c2_120 = arith.constant 2 : index
    %c2_121 = arith.constant 2 : index
    %c0_122 = arith.constant 0 : index
    %100 = vector.load %arg15[%c2_120, %c2_121, %c0_122] : memref<18x18x64xf32, #tpu.memory_space<vmem>>, vector<16x16x64xf32>
    %101 = vector.shape_cast %100 : vector<16x16x64xf32> to vector<256x64xf32>
    %102 = tpu.concatenate %85, %87, %89, %91, %93, %95, %97, %99, %101 in 1 : vector<256x64xf32>, vector<256x64xf32>, vector<256x64xf32>, vector<256x64xf32>, vector<256x64xf32>, vector<256x64xf32>, vector<256x64xf32>, vector<256x64xf32>, vector<256x64xf32> -> vector<256x576xf32>
    %cst_123 = arith.constant dense<0.000000e+00> : vector<256x8xf32>
    %103 = tpu.matmul %102, %81, %cst_123 {dimension_numbers = #tpu.dot_dimension_numbers<[1], [0], [0], [1], [0, 0, 1, 1], [], []>} : vector<256x576xf32>, vector<576x8xf32>, vector<256x8xf32> -> vector<256x8xf32>
    %104 = vector.broadcast %82 : vector<1x8xf32> to vector<256x8xf32>
    %105 = arith.addf %103, %104 : vector<256x8xf32>
    %cst_124 = arith.constant 0.000000e+00 : f32
    %106 = vector.broadcast %cst_124 : f32 to vector<256x8xf32>
    %107 = arith.maximumf %105, %106 : vector<256x8xf32>
    %c0_125 = arith.constant 0 : index
    %c0_126 = arith.constant 0 : index
    %108 = vector.load %arg12[%c0_125, %c0_126] : memref<8x1xf32, #tpu.memory_space<vmem>>, vector<8x1xf32>
    %cst_127 = arith.constant dense<0.000000e+00> : vector<256x1xf32>
    %109 = tpu.matmul %107, %108, %cst_127 {dimension_numbers = #tpu.dot_dimension_numbers<[1], [0], [0], [1], [0, 0, 1, 1], [], []>} : vector<256x8xf32>, vector<8x1xf32>, vector<256x1xf32> -> vector<256x1xf32>
    %c0_128 = arith.constant 0 : index
    %c0_129 = arith.constant 0 : index
    %110 = vector.load %arg13[%c0_128, %c0_129] : memref<1x1xf32, #tpu.memory_space<vmem>>, vector<1x1xf32>
    %111 = vector.broadcast %110 : vector<1x1xf32> to vector<256x1xf32>
    %112 = arith.addf %109, %111 : vector<256x1xf32>
    %113 = arith.negf %112 : vector<256x1xf32>
    %114 = math.exp %113 : vector<256x1xf32>
    %cst_130 = arith.constant 1.000000e+00 : f32
    %115 = vector.broadcast %cst_130 : f32 to vector<256x1xf32>
    %116 = arith.addf %115, %114 : vector<256x1xf32>
    %117 = arith.divf %115, %116 : vector<256x1xf32>
    %118 = vector.broadcast %117 : vector<256x1xf32> to vector<256x64xf32>
    %119 = arith.mulf %79, %118 : vector<256x64xf32>
    %120 = arith.addf %119, %4 : vector<256x64xf32>
    %121 = vector.shape_cast %120 : vector<256x64xf32> to vector<16x16x64xf32>
    %c0_131 = arith.constant 0 : index
    %c0_132 = arith.constant 0 : index
    %c0_133 = arith.constant 0 : index
    %c0_134 = arith.constant 0 : index
    %122 = vector.load %arg14[%c0_131, %c0_132, %c0_133, %c0_134] : memref<1x16x16x64xf32, #tpu.memory_space<vmem>>, vector<1x16x16x64xf32>
    %123 = vector.shape_cast %122 : vector<1x16x16x64xf32> to vector<16x16x64xf32>
    %124 = vector.shape_cast %121 : vector<16x16x64xf32> to vector<1x16x16x64xf32>
    tpu.vector_store %arg14[%c0_131, %c0_132, %c0_133, %c0_134], %124 {strides = array<i32>} : memref<1x16x16x64xf32, #tpu.memory_space<vmem>>, vector<1x16x16x64xf32>,
    return
  }
  func.func @transform_0(%arg0: i32) -> (i32, i32, i32, i32) {
    %c0_i32 = arith.constant 0 : i32
    %c0_i32_0 = arith.constant 0 : i32
    %c0_i32_1 = arith.constant 0 : i32
    %c0_i32_2 = arith.constant 0 : i32
    return %arg0, %c0_i32, %c0_i32_0, %c0_i32_1 : i32, i32, i32, i32
  }
  func.func @transform_1(%arg0: i32) -> (i32, i32) {
    %c0_i32 = arith.constant 0 : i32
    %c0_i32_0 = arith.constant 0 : i32
    %c0_i32_1 = arith.constant 0 : i32
    return %c0_i32, %c0_i32_0 : i32, i32
  }
  func.func @transform_2(%arg0: i32) -> (i32, i32) {
    %c0_i32 = arith.constant 0 : i32
    %c0_i32_0 = arith.constant 0 : i32
    %c0_i32_1 = arith.constant 0 : i32
    return %c0_i32, %c0_i32_0 : i32, i32
  }
  func.func @transform_3(%arg0: i32) -> (i32, i32) {
    %c0_i32 = arith.constant 0 : i32
    %c0_i32_0 = arith.constant 0 : i32
    %c0_i32_1 = arith.constant 0 : i32
    return %c0_i32, %c0_i32_0 : i32, i32
  }
  func.func @transform_4(%arg0: i32) -> (i32, i32) {
    %c0_i32 = arith.constant 0 : i32
    %c0_i32_0 = arith.constant 0 : i32
    %c0_i32_1 = arith.constant 0 : i32
    return %c0_i32, %c0_i32_0 : i32, i32
  }
  func.func @transform_5(%arg0: i32) -> (i32, i32) {
    %c0_i32 = arith.constant 0 : i32
    %c0_i32_0 = arith.constant 0 : i32
    %c0_i32_1 = arith.constant 0 : i32
    return %c0_i32, %c0_i32_0 : i32, i32
  }
  func.func @transform_6(%arg0: i32) -> (i32, i32) {
    %c0_i32 = arith.constant 0 : i32
    %c0_i32_0 = arith.constant 0 : i32
    %c0_i32_1 = arith.constant 0 : i32
    return %c0_i32, %c0_i32_0 : i32, i32
  }
  func.func @transform_7(%arg0: i32) -> (i32, i32) {
    %c0_i32 = arith.constant 0 : i32
    %c0_i32_0 = arith.constant 0 : i32
    %c0_i32_1 = arith.constant 0 : i32
    return %c0_i32, %c0_i32_0 : i32, i32
  }
  func.func @transform_8(%arg0: i32) -> (i32, i32) {
    %c0_i32 = arith.constant 0 : i32
    %c0_i32_0 = arith.constant 0 : i32
    %c0_i32_1 = arith.constant 0 : i32
    return %c0_i32, %c0_i32_0 : i32, i32
  }
  func.func @transform_9(%arg0: i32) -> (i32, i32) {
    %c0_i32 = arith.constant 0 : i32
    %c0_i32_0 = arith.constant 0 : i32
    %c0_i32_1 = arith.constant 0 : i32
    return %c0_i32, %c0_i32_0 : i32, i32
  }
  func.func @transform_10(%arg0: i32) -> (i32, i32) {
    %c0_i32 = arith.constant 0 : i32
    %c0_i32_0 = arith.constant 0 : i32
    %c0_i32_1 = arith.constant 0 : i32
    return %c0_i32, %c0_i32_0 : i32, i32
  }
  func.func @transform_11(%arg0: i32) -> (i32, i32) {
    %c0_i32 = arith.constant 0 : i32
    %c0_i32_0 = arith.constant 0 : i32
    %c0_i32_1 = arith.constant 0 : i32
    return %c0_i32, %c0_i32_0 : i32, i32
  }
  func.func @transform_12(%arg0: i32) -> (i32, i32) {
    %c0_i32 = arith.constant 0 : i32
    %c0_i32_0 = arith.constant 0 : i32
    %c0_i32_1 = arith.constant 0 : i32
    return %c0_i32, %c0_i32_0 : i32, i32
  }
  func.func @transform_13(%arg0: i32) -> (i32, i32, i32, i32) {
    %c0_i32 = arith.constant 0 : i32
    %c0_i32_0 = arith.constant 0 : i32
    %c0_i32_1 = arith.constant 0 : i32
    %c0_i32_2 = arith.constant 0 : i32
    return %arg0, %c0_i32, %c0_i32_0, %c0_i32_1 : i32, i32, i32, i32
  }
}

</mosaic_0001>

<llo_original>
// kernel: tpu_custom_call.1
$region0: #{tpu_custom_call.1}
  #allocation0 [shape = 'u32[]', space=smem, size = 0x4, offset = 0x4, fixed_abs, tag = 'smem constant byte address 0x4 - core index']
  #allocation1 [shape = 'u32[144,128]{1,0:T(1,128)}', space=vmem, size = 0x12000, scoped, tag = 'internal scratch']
  #allocation2 [shape = 'f32[18,18,64]{2,1,0:T(8,128)}', space=vmem, size = 0x36000, scoped, tag = 'scratch operand']
  #allocation3 [shape = 'f32[1,1]{1,0:T(1,128)S(1)}', space=vmem, size = 0x200, scoped, tag = 'scoped memory for tpu_custom_call.1']
  %s0 = inlined_call_operand.vmem [shape: f32[2,16,16,64], index: 0, kind: input, shape index: {}]
  %s1 = inlined_call_operand.vmem [shape: f32[576,64], index: 1, kind: input, shape index: {}]
  %s2 = inlined_call_operand.vmem [shape: f32[1,64], index: 2, kind: input, shape index: {}]
  %s3 = inlined_call_operand.vmem [shape: f32[576,64], index: 3, kind: input, shape index: {}]
  %s4 = inlined_call_operand.vmem [shape: f32[1,64], index: 4, kind: input, shape index: {}]
  %s5 = inlined_call_operand.vmem [shape: f32[64,8], index: 5, kind: input, shape index: {}]
  %s6 = inlined_call_operand.vmem [shape: f32[1,8], index: 6, kind: input, shape index: {}]
  %s7 = inlined_call_operand.vmem [shape: f32[8,64], index: 7, kind: input, shape index: {}]
  %s8 = inlined_call_operand.vmem [shape: f32[1,64], index: 8, kind: input, shape index: {}]
  %s9 = inlined_call_operand.vmem [shape: f32[576,8], index: 9, kind: input, shape index: {}]
  %s10 = inlined_call_operand.vmem [shape: f32[1,8], index: 10, kind: input, shape index: {}]
  %s11 = inlined_call_operand.vmem [shape: f32[8,1], index: 11, kind: input, shape index: {}]
  %s12 = inlined_call_operand.<no memory space> [shape: f32[1,1], index: 12, kind: input, shape index: {}]
  %s13 = inlined_call_operand.hbm [shape: f32[2,16,16,64], index: 13, kind: output, shape index: {}]
  %s14 = sld [smem:[#allocation0]]
  $region85: #{tpu_custom_call.1} parent=0
    _
  %s16 = ssub.s32 1, %s14
  %s17 = scalar_select 0, %s16, %s14
  %v18 = vstv %s12
  %19 = vst [vmem:[#allocation3] sm:$0x1] %v18
  $region1: #{tpu_custom_call.1} parent=0
    #allocation4 [shape = 'u8[262144]{0}', space=vmem, size = 0x40000, scoped, tag = 'output window, operand 0']
    #allocation5 [shape = 's32[2]{0}', space=sflag, size = 0x8, scoped, tag = 'scoped memory for tpu_custom_call.1']
    %20 = vsyncpa [#allocation5], 0
    %s21 = scalar_lea.sflag [#allocation5], 1
    %22 = vsyncpa %s21, 0
    loop: start=0, step=1, limit=4
    $region2: #{tpu_custom_call.1} parent=1 // loop_pre_header
      _
    $region3: #{tpu_custom_call.1} parent=1 // loop_header
      %s24 = sphi 0, %s28
      %p25 = scmp.ge.s32.totalorder %s24, 4
      %s34 = sphi 0, %s36
      %s37 = sphi 0, %s34
      %s38 = sphi 0, %s37
      %s54 = sphi 0, %s38
      %s58 = sphi 0, %s58
      %s60 = sphi 0, %s58
      %s61 = sphi 0, %s60
      %s75 = sphi 0, %s61
      %s79 = sphi 0, %s79
      %s81 = sphi 0, %s79
      %s82 = sphi 0, %s81
      %s96 = sphi 0, %s82
      %s100 = sphi 0, %s100
      %s102 = sphi 0, %s100
      %s103 = sphi 0, %s102
      %s117 = sphi 0, %s103
      %s121 = sphi 0, %s121
      %s123 = sphi 0, %s121
      %s124 = sphi 0, %s123
      %s138 = sphi 0, %s124
      %s142 = sphi 0, %s142
      %s144 = sphi 0, %s142
      %s145 = sphi 0, %s144
      %s159 = sphi 0, %s145
      %s163 = sphi 0, %s163
      %s165 = sphi 0, %s163
      %s166 = sphi 0, %s165
      %s180 = sphi 0, %s166
      %s184 = sphi 0, %s184
      %s186 = sphi 0, %s184
      %s187 = sphi 0, %s186
      %s201 = sphi 0, %s187
      %s205 = sphi 0, %s205
      %s207 = sphi 0, %s205
      %s208 = sphi 0, %s207
      %s222 = sphi 0, %s208
      %s226 = sphi 0, %s226
      %s228 = sphi 0, %s226
      %s229 = sphi 0, %s228
      %s243 = sphi 0, %s229
      %s247 = sphi 0, %s247
      %s249 = sphi 0, %s247
      %s250 = sphi 0, %s249
      %s264 = sphi 0, %s250
      %s268 = sphi 0, %s268
      %s270 = sphi 0, %s268
      %s271 = sphi 0, %s270
      %s285 = sphi 0, %s271
      %s289 = sphi 0, %s289
      %s291 = sphi 0, %s289
      %s292 = sphi 0, %s291
      %s306 = sphi 0, %s292
      %s312 = sphi 0, %s314
      %s315 = sphi 0, %s312
      %s316 = sphi 0, %s315
      %s332 = sphi 0, %s316
    $region4: #{tpu_custom_call.1} parent=1 // loop_header_branch
      %27 = sbr.rel (%p25) target = $region8
    $region5: #{tpu_custom_call.1} parent=1 // loop_body
      %s29 = ssub.s32 %s24, 1
      %s30 = ssub.s32 %s24, 2
      %s31 = sadd.s32 %s24, 1
      %s32 = ssub.s32 %s24, %s31
      %p33 = scmp.eq.s32.totalorder %s32, 0
      %s35 = sadd.s32 %s34, 1
      %s36 = scalar_select %p33, %s34, %s35
      %p39 = pneg %p33
      %p40 = scmp.eq.s32.totalorder %s24, 1
      %p41 = por %p39, %p40
      %p42 = scmp.ne.s32.totalorder %s34, %s37
      %p43 = scmp.eq.s32.totalorder %s24, 0
      %p44 = por %p42, %p43
      %p45 = scmp.ne.s32.totalorder %s34, %s37
      %p46 = scmp.eq.s32.totalorder %s29, 1
      %p47 = por %p45, %p46
      %p48 = scmp.ne.s32.totalorder %s37, %s38
      %p49 = scmp.eq.s32.totalorder %s29, 0
      %p50 = por %p48, %p49
      %p51 = scmp.ne.s32.totalorder %s37, %s38
      %p52 = scmp.eq.s32.totalorder %s30, 1
      %p53 = por %p51, %p52
      %p55 = scmp.ne.s32.totalorder %s38, %s54
      %p56 = scmp.eq.s32.totalorder %s30, 0
      %p57 = por %p55, %p56
      %s59 = sadd.s32 %s58, 1
      %p62 = scmp.eq.s32.totalorder %s24, 1
      %p63 = scmp.ne.s32.totalorder %s58, %s60
      %p64 = scmp.eq.s32.totalorder %s24, 0
      %p65 = por %p63, %p64
      %p66 = scmp.ne.s32.totalorder %s58, %s60
      %p67 = scmp.eq.s32.totalorder %s29, 1
      %p68 = por %p66, %p67
      %p69 = scmp.ne.s32.totalorder %s60, %s61
      %p70 = scmp.eq.s32.totalorder %s29, 0
      %p71 = por %p69, %p70
      %p72 = scmp.ne.s32.totalorder %s60, %s61
      %p73 = scmp.eq.s32.totalorder %s30, 1
      %p74 = por %p72, %p73
      %p76 = scmp.ne.s32.totalorder %s61, %s75
      %p77 = scmp.eq.s32.totalorder %s30, 0
      %p78 = por %p76, %p77
      %s80 = sadd.s32 %s79, 1
      %p83 = scmp.eq.s32.totalorder %s24, 1
      %p84 = scmp.ne.s32.totalorder %s79, %s81
      %p85 = scmp.eq.s32.totalorder %s24, 0
      %p86 = por %p84, %p85
      %p87 = scmp.ne.s32.totalorder %s79, %s81
      %p88 = scmp.eq.s32.totalorder %s29, 1
      %p89 = por %p87, %p88
      %p90 = scmp.ne.s32.totalorder %s81, %s82
      %p91 = scmp.eq.s32.totalorder %s29, 0
      %p92 = por %p90, %p91
      %p93 = scmp.ne.s32.totalorder %s81, %s82
      %p94 = scmp.eq.s32.totalorder %s30, 1
      %p95 = por %p93, %p94
      %p97 = scmp.ne.s32.totalorder %s82, %s96
      %p98 = scmp.eq.s32.totalorder %s30, 0
      %p99 = por %p97, %p98
      %s101 = sadd.s32 %s100, 1
      %p104 = scmp.eq.s32.totalorder %s24, 1
      %p105 = scmp.ne.s32.totalorder %s100, %s102
      %p106 = scmp.eq.s32.totalorder %s24, 0
      %p107 = por %p105, %p106
      %p108 = scmp.ne.s32.totalorder %s100, %s102
      %p109 = scmp.eq.s32.totalorder %s29, 1
      %p110 = por %p108, %p109
      %p111 = scmp.ne.s32.totalorder %s102, %s103
      %p112 = scmp.eq.s32.totalorder %s29, 0
      %p113 = por %p111, %p112
      %p114 = scmp.ne.s32.totalorder %s102, %s103
      %p115 = scmp.eq.s32.totalorder %s30, 1
      %p116 = por %p114, %p115
      %p118 = scmp.ne.s32.totalorder %s103, %s117
      %p119 = scmp.eq.s32.totalorder %s30, 0
      %p120 = por %p118, %p119
      %s122 = sadd.s32 %s121, 1
      %p125 = scmp.eq.s32.totalorder %s24, 1
      %p126 = scmp.ne.s32.totalorder %s121, %s123
      %p127 = scmp.eq.s32.totalorder %s24, 0
      %p128 = por %p126, %p127
      %p129 = scmp.ne.s32.totalorder %s121, %s123
      %p130 = scmp.eq.s32.totalorder %s29, 1
      %p131 = por %p129, %p130
      %p132 = scmp.ne.s32.totalorder %s123, %s124
      %p133 = scmp.eq.s32.totalorder %s29, 0
      %p134 = por %p132, %p133
      %p135 = scmp.ne.s32.totalorder %s123, %s124
      %p136 = scmp.eq.s32.totalorder %s30, 1
      %p137 = por %p135, %p136
      %p139 = scmp.ne.s32.totalorder %s124, %s138
      %p140 = scmp.eq.s32.totalorder %s30, 0
      %p141 = por %p139, %p140
      %s143 = sadd.s32 %s142, 1
      %p146 = scmp.eq.s32.totalorder %s24, 1
      %p147 = scmp.ne.s32.totalorder %s142, %s144
      %p148 = scmp.eq.s32.totalorder %s24, 0
      %p149 = por %p147, %p148
      %p150 = scmp.ne.s32.totalorder %s142, %s144
      %p151 = scmp.eq.s32.totalorder %s29, 1
      %p152 = por %p150, %p151
      %p153 = scmp.ne.s32.totalorder %s144, %s145
      %p154 = scmp.eq.s32.totalorder %s29, 0
      %p155 = por %p153, %p154
      %p156 = scmp.ne.s32.totalorder %s144, %s145
      %p157 = scmp.eq.s32.totalorder %s30, 1
      %p158 = por %p156, %p157
      %p160 = scmp.ne.s32.totalorder %s145, %s159
      %p161 = scmp.eq.s32.totalorder %s30, 0
      %p162 = por %p160, %p161
      %s164 = sadd.s32 %s163, 1
      %p167 = scmp.eq.s32.totalorder %s24, 1
      %p168 = scmp.ne.s32.totalorder %s163, %s165
      %p169 = scmp.eq.s32.totalorder %s24, 0
      %p170 = por %p168, %p169
      %p171 = scmp.ne.s32.totalorder %s163, %s165
      %p172 = scmp.eq.s32.totalorder %s29, 1
      %p173 = por %p171, %p172
      %p174 = scmp.ne.s32.totalorder %s165, %s166
      %p175 = scmp.eq.s32.totalorder %s29, 0
      %p176 = por %p174, %p175
      %p177 = scmp.ne.s32.totalorder %s165, %s166
      %p178 = scmp.eq.s32.totalorder %s30, 1
      %p179 = por %p177, %p178
      %p181 = scmp.ne.s32.totalorder %s166, %s180
      %p182 = scmp.eq.s32.totalorder %s30, 0
      %p183 = por %p181, %p182
      %s185 = sadd.s32 %s184, 1
      %p188 = scmp.eq.s32.totalorder %s24, 1
      %p189 = scmp.ne.s32.totalorder %s184, %s186
      %p190 = scmp.eq.s32.totalorder %s24, 0
      %p191 = por %p189, %p190
      %p192 = scmp.ne.s32.totalorder %s184, %s186
      %p193 = scmp.eq.s32.totalorder %s29, 1
      %p194 = por %p192, %p193
      %p195 = scmp.ne.s32.totalorder %s186, %s187
      %p196 = scmp.eq.s32.totalorder %s29, 0
      %p197 = por %p195, %p196
      %p198 = scmp.ne.s32.totalorder %s186, %s187
      %p199 = scmp.eq.s32.totalorder %s30, 1
      %p200 = por %p198, %p199
      %p202 = scmp.ne.s32.totalorder %s187, %s201
      %p203 = scmp.eq.s32.totalorder %s30, 0
      %p204 = por %p202, %p203
      %s206 = sadd.s32 %s205, 1
      %p209 = scmp.eq.s32.totalorder %s24, 1
      %p210 = scmp.ne.s32.totalorder %s205, %s207
      %p211 = scmp.eq.s32.totalorder %s24, 0
      %p212 = por %p210, %p211
      %p213 = scmp.ne.s32.totalorder %s205, %s207
      %p214 = scmp.eq.s32.totalorder %s29, 1
      %p215 = por %p213, %p214
      %p216 = scmp.ne.s32.totalorder %s207, %s208
      %p217 = scmp.eq.s32.totalorder %s29, 0
      %p218 = por %p216, %p217
      %p219 = scmp.ne.s32.totalorder %s207, %s208
      %p220 = scmp.eq.s32.totalorder %s30, 1
      %p221 = por %p219, %p220
      %p223 = scmp.ne.s32.totalorder %s208, %s222
      %p224 = scmp.eq.s32.totalorder %s30, 0
      %p225 = por %p223, %p224
      %s227 = sadd.s32 %s226, 1
      %p230 = scmp.eq.s32.totalorder %s24, 1
      %p231 = scmp.ne.s32.totalorder %s226, %s228
      %p232 = scmp.eq.s32.totalorder %s24, 0
      %p233 = por %p231, %p232
      %p234 = scmp.ne.s32.totalorder %s226, %s228
      %p235 = scmp.eq.s32.totalorder %s29, 1
      %p236 = por %p234, %p235
      %p237 = scmp.ne.s32.totalorder %s228, %s229
      %p238 = scmp.eq.s32.totalorder %s29, 0
      %p239 = por %p237, %p238
      %p240 = scmp.ne.s32.totalorder %s228, %s229
      %p241 = scmp.eq.s32.totalorder %s30, 1
      %p242 = por %p240, %p241
      %p244 = scmp.ne.s32.totalorder %s229, %s243
      %p245 = scmp.eq.s32.totalorder %s30, 0
      %p246 = por %p244, %p245
      %s248 = sadd.s32 %s247, 1
      %p251 = scmp.eq.s32.totalorder %s24, 1
      %p252 = scmp.ne.s32.totalorder %s247, %s249
      %p253 = scmp.eq.s32.totalorder %s24, 0
      %p254 = por %p252, %p253
      %p255 = scmp.ne.s32.totalorder %s247, %s249
      %p256 = scmp.eq.s32.totalorder %s29, 1
      %p257 = por %p255, %p256
      %p258 = scmp.ne.s32.totalorder %s249, %s250
      %p259 = scmp.eq.s32.totalorder %s29, 0
      %p260 = por %p258, %p259
      %p261 = scmp.ne.s32.totalorder %s249, %s250
      %p262 = scmp.eq.s32.totalorder %s30, 1
      %p263 = por %p261, %p262
      %p265 = scmp.ne.s32.totalorder %s250, %s264
      %p266 = scmp.eq.s32.totalorder %s30, 0
      %p267 = por %p265, %p266
      %s269 = sadd.s32 %s268, 1
      %p272 = scmp.eq.s32.totalorder %s24, 1
      %p273 = scmp.ne.s32.totalorder %s268, %s270
      %p274 = scmp.eq.s32.totalorder %s24, 0
      %p275 = por %p273, %p274
      %p276 = scmp.ne.s32.totalorder %s268, %s270
      %p277 = scmp.eq.s32.totalorder %s29, 1
      %p278 = por %p276, %p277
      %p279 = scmp.ne.s32.totalorder %s270, %s271
      %p280 = scmp.eq.s32.totalorder %s29, 0
      %p281 = por %p279, %p280
      %p282 = scmp.ne.s32.totalorder %s270, %s271
      %p283 = scmp.eq.s32.totalorder %s30, 1
      %p284 = por %p282, %p283
      %p286 = scmp.ne.s32.totalorder %s271, %s285
      %p287 = scmp.eq.s32.totalorder %s30, 0
      %p288 = por %p286, %p287
      %s290 = sadd.s32 %s289, 1
      %p293 = scmp.eq.s32.totalorder %s24, 1
      %p294 = scmp.ne.s32.totalorder %s289, %s291
      %p295 = scmp.eq.s32.totalorder %s24, 0
      %p296 = por %p294, %p295
      %p297 = scmp.ne.s32.totalorder %s289, %s291
      %p298 = scmp.eq.s32.totalorder %s29, 1
      %p299 = por %p297, %p298
      %p300 = scmp.ne.s32.totalorder %s291, %s292
      %p301 = scmp.eq.s32.totalorder %s29, 0
      %p302 = por %p300, %p301
      %p303 = scmp.ne.s32.totalorder %s291, %s292
      %p304 = scmp.eq.s32.totalorder %s30, 1
      %p305 = por %p303, %p304
      %p307 = scmp.ne.s32.totalorder %s292, %s306
      %p308 = scmp.eq.s32.totalorder %s30, 0
      %p309 = por %p307, %p308
      %s310 = ssub.s32 %s24, %s31
      %p311 = scmp.eq.s32.totalorder %s310, 0
      %s313 = sadd.s32 %s312, 1
      %s314 = scalar_select %p311, %s312, %s313
      %p317 = pneg %p311
      %p318 = scmp.eq.s32.totalorder %s24, 1
      %p319 = por %p317, %p318
      %p320 = scmp.ne.s32.totalorder %s312, %s315
      %p321 = scmp.eq.s32.totalorder %s24, 0
      %p322 = por %p320, %p321
      %p323 = scmp.ne.s32.totalorder %s312, %s315
      %p324 = scmp.eq.s32.totalorder %s29, 1
      %p325 = por %p323, %p324
      %p326 = scmp.ne.s32.totalorder %s315, %s316
      %p327 = scmp.eq.s32.totalorder %s29, 0
      %p328 = por %p326, %p327
      %p329 = scmp.ne.s32.totalorder %s315, %s316
      %p330 = scmp.eq.s32.totalorder %s30, 1
      %p331 = por %p329, %p330
      %p333 = scmp.ne.s32.totalorder %s316, %s332
      %p334 = scmp.eq.s32.totalorder %s30, 0
      %p335 = por %p333, %p334
      %p336 = scmp.le.s32.totalorder 1, %s24
      %p337 = scmp.lt.s32.totalorder %s24, 3
      %p338 = pnand %p336, %p337
      %p339 = pneg %p338
      // Predicated region
      $region9: #{tpu_custom_call.1} parent=5 // pred_check
        _
      $region10: #{tpu_custom_call.1} parent=5 // pred_check_branch
        %341 = sbr.rel (%p338) target = $region12
      $region11: #{tpu_custom_call.1} parent=5 // pred_region
        %s342 = ssub.s32 %s24, 1
        // Predicated region
        $region13: #{tpu_custom_call.1} parent=11 // pred_check
          %p343 = pneg %p71
        $region14: #{tpu_custom_call.1} parent=11 // pred_check_branch
          %345 = sbr.rel (%p343) target = $region16
        $region15: #{tpu_custom_call.1} parent=11 // pred_region
          _
        $region16: #{tpu_custom_call.1} parent=11 // pred_fallthru
          _
        // Predicated region
        $region17: #{tpu_custom_call.1} parent=11 // pred_check
          %p346 = pneg %p92
        $region18: #{tpu_custom_call.1} parent=11 // pred_check_branch
          %348 = sbr.rel (%p346) target = $region20
        $region19: #{tpu_custom_call.1} parent=11 // pred_region
          _
        $region20: #{tpu_custom_call.1} parent=11 // pred_fallthru
          _
        // Predicated region
        $region21: #{tpu_custom_call.1} parent=11 // pred_check
          %p349 = pneg %p113
        $region22: #{tpu_custom_call.1} parent=11 // pred_check_branch
          %351 = sbr.rel (%p349) target = $region24
        $region23: #{tpu_custom_call.1} parent=11 // pred_region
          _
        $region24: #{tpu_custom_call.1} parent=11 // pred_fallthru
          _
        // Predicated region
        $region25: #{tpu_custom_call.1} parent=11 // pred_check
          %p352 = pneg %p134
        $region26: #{tpu_custom_call.1} parent=11 // pred_check_branch
          %354 = sbr.rel (%p352) target = $region28
        $region27: #{tpu_custom_call.1} parent=11 // pred_region
          _
        $region28: #{tpu_custom_call.1} parent=11 // pred_fallthru
          _
        // Predicated region
        $region29: #{tpu_custom_call.1} parent=11 // pred_check
          %p355 = pneg %p155
        $region30: #{tpu_custom_call.1} parent=11 // pred_check_branch
          %357 = sbr.rel (%p355) target = $region32
        $region31: #{tpu_custom_call.1} parent=11 // pred_region
          _
        $region32: #{tpu_custom_call.1} parent=11 // pred_fallthru
          _
        // Predicated region
        $region33: #{tpu_custom_call.1} parent=11 // pred_check
          %p358 = pneg %p176
        $region34: #{tpu_custom_call.1} parent=11 // pred_check_branch
          %360 = sbr.rel (%p358) target = $region36
        $region35: #{tpu_custom_call.1} parent=11 // pred_region
          _
        $region36: #{tpu_custom_call.1} parent=11 // pred_fallthru
          _
        // Predicated region
        $region37: #{tpu_custom_call.1} parent=11 // pred_check
          %p361 = pneg %p197
        $region38: #{tpu_custom_call.1} parent=11 // pred_check_branch
          %363 = sbr.rel (%p361) target = $region40
        $region39: #{tpu_custom_call.1} parent=11 // pred_region
          _
        $region40: #{tpu_custom_call.1} parent=11 // pred_fallthru
          _
        // Predicated region
        $region41: #{tpu_custom_call.1} parent=11 // pred_check
          %p364 = pneg %p218
        $region42: #{tpu_custom_call.1} parent=11 // pred_check_branch
          %366 = sbr.rel (%p364) target = $region44
        $region43: #{tpu_custom_call.1} parent=11 // pred_region
          _
        $region44: #{tpu_custom_call.1} parent=11 // pred_fallthru
          _
        // Predicated region
        $region45: #{tpu_custom_call.1} parent=11 // pred_check
          %p367 = pneg %p239
        $region46: #{tpu_custom_call.1} parent=11 // pred_check_branch
          %369 = sbr.rel (%p367) target = $region48
        $region47: #{tpu_custom_call.1} parent=11 // pred_region
          _
        $region48: #{tpu_custom_call.1} parent=11 // pred_fallthru
          _
        // Predicated region
        $region49: #{tpu_custom_call.1} parent=11 // pred_check
          %p370 = pneg %p260
        $region50: #{tpu_custom_call.1} parent=11 // pred_check_branch
          %372 = sbr.rel (%p370) target = $region52
        $region51: #{tpu_custom_call.1} parent=11 // pred_region
          _
        $region52: #{tpu_custom_call.1} parent=11 // pred_fallthru
          _
        // Predicated region
        $region53: #{tpu_custom_call.1} parent=11 // pred_check
          %p373 = pneg %p281
        $region54: #{tpu_custom_call.1} parent=11 // pred_check_branch
          %375 = sbr.rel (%p373) target = $region56
        $region55: #{tpu_custom_call.1} parent=11 // pred_region
          _
        $region56: #{tpu_custom_call.1} parent=11 // pred_fallthru
          _
        // Predicated region
        $region57: #{tpu_custom_call.1} parent=11 // pred_check
          %p376 = pneg %p302
        $region58: #{tpu_custom_call.1} parent=11 // pred_check_branch
          %378 = sbr.rel (%p376) target = $region60
        $region59: #{tpu_custom_call.1} parent=11 // pred_region
          _
        $region60: #{tpu_custom_call.1} parent=11 // pred_fallthru
          _
      $region12: #{tpu_custom_call.1} parent=5 // pred_fallthru
        _
      %p379 = scmp.lt.s32.totalorder %s24, 2
      // Predicated region
      $region61: #{tpu_custom_call.1} parent=5 // pred_check
        %p380 = pneg %p379
      $region62: #{tpu_custom_call.1} parent=5 // pred_check_branch
        %382 = sbr.rel (%p380) target = $region64
      $region63: #{tpu_custom_call.1} parent=5 // pred_region
        // Predicated region
        $region65: #{tpu_custom_call.1} parent=63 // pred_check
          %p383 = pneg %p44
        $region66: #{tpu_custom_call.1} parent=63 // pred_check_branch
          %385 = sbr.rel (%p383) target = $region68
        $region67: #{tpu_custom_call.1} parent=63 // pred_region
          %p386 = scmp.lt.s32.totalorder %s24, 1
          %s387 = scalar_select %p386, %s24, 1
          %s388 = smul.addr %s387, 32
          %s389 = smul.addr %s388, 8
          %s390 = scalar_lea.vmem %s0, %s389
        $region68: #{tpu_custom_call.1} parent=63 // pred_fallthru
          _
      $region64: #{tpu_custom_call.1} parent=5 // pred_fallthru
        _
      %p391 = scmp.le.s32.totalorder 1, %s24
      %p392 = scmp.lt.s32.totalorder %s24, 3
      %p393 = pnand %p391, %p392
      %p394 = pneg %p393
      // Predicated region
      $region69: #{tpu_custom_call.1} parent=5 // pred_check
        _
      $region70: #{tpu_custom_call.1} parent=5 // pred_check_branch
        %396 = sbr.rel (%p393) target = $region72
      $region71: #{tpu_custom_call.1} parent=5 // pred_region
        %s397 = ssub.s32 %s24, 1
        %p398 = scmp.lt.s32.totalorder %s29, 1
        %s399 = scalar_select %p398, %s29, 1
        %s400 = smul.addr %s399, 32
        %s401 = smul.addr %s400, 8
        %s402 = scalar_lea.vmem %s0, %s401
        %p403 = pneg %p50
        %p404 = pneg %p47
        %p405 = pneg %p71
        %p406 = pneg %p68
        %p407 = pneg %p92
        %p408 = pneg %p89
        %p409 = pneg %p113
        %p410 = pneg %p110
        %p411 = pneg %p134
        %p412 = pneg %p131
        %p413 = pneg %p155
        %p414 = pneg %p152
        %p415 = pneg %p176
        %p416 = pneg %p173
        %p417 = pneg %p197
        %p418 = pneg %p194
        %p419 = pneg %p218
        %p420 = pneg %p215
        %p421 = pneg %p239
        %p422 = pneg %p236
        %p423 = pneg %p260
        %p424 = pneg %p257
        %p425 = pneg %p281
        %p426 = pneg %p278
        %p427 = pneg %p302
        %p428 = pneg %p299
        %p429 = pneg %p328
        %p430 = pneg %p325
        %s431 = sand.u32 %s315, 1
        %s432 = scalar_lea.sflag [#allocation5], %s431
        %s433 = sand.u32 %s315, 1
        %s434 = smul.addr %s433, 256
        %s435 = scalar_lea.vmem [#allocation4], %s434
        %p436 = scmp.lt.s32.totalorder %s29, 1
        %s437 = scalar_select %p436, %s29, 1
        %s438 = smul.addr %s437, 32
        %s439 = smul.addr %s438, 8
        %s440 = scalar_lea.vmem %s0, %s439
        %vm441 = vcmask 523264
        %442 = vst.msk [vmem:[#allocation2] sm:$0xff] %vm441, 0.0
        %443 = vst.msk [vmem:[#allocation2 + $0x8] sm:$0xff] %vm441, 0.0
        %vm444 = vcmask 517120
        %445 = vst.msk [vmem:[#allocation2 + $0x10] sm:$0x3] %vm444, 0.0
        %446 = vst.msk [vmem:[#allocation2 + $0x18] sm:$0xff] %vm441, 0.0
        %447 = vst.msk [vmem:[#allocation2 + $0x20] sm:$0xff] %vm441, 0.0
        %448 = vst.msk [vmem:[#allocation2 + $0x28] sm:$0x3] %vm444, 0.0
        %449 = vst.msk [vmem:[#allocation2 + $0x30] sm:$0xff] %vm441, 0.0
        %450 = vst.msk [vmem:[#allocation2 + $0x38] sm:$0xff] %vm441, 0.0
        %451 = vst.msk [vmem:[#allocation2 + $0x40] sm:$0x3] %vm444, 0.0
        %452 = vst.msk [vmem:[#allocation2 + $0x48] sm:$0xff] %vm441, 0.0
        %453 = vst.msk [vmem:[#allocation2 + $0x50] sm:$0xff] %vm441, 0.0
        %454 = vst.msk [vmem:[#allocation2 + $0x58] sm:$0x3] %vm444, 0.0
        %455 = vst.msk [vmem:[#allocation2 + $0x60] sm:$0xff] %vm441, 0.0
        %456 = vst.msk [vmem:[#allocation2 + $0x68] sm:$0xff] %vm441, 0.0
        %457 = vst.msk [vmem:[#allocation2 + $0x70] sm:$0x3] %vm444, 0.0
        %458 = vst.msk [vmem:[#allocation2 + $0x78] sm:$0xff] %vm441, 0.0
        %459 = vst.msk [vmem:[#allocation2 + $0x80] sm:$0xff] %vm441, 0.0
        %460 = vst.msk [vmem:[#allocation2 + $0x88] sm:$0x3] %vm444, 0.0
        %461 = vst.msk [vmem:[#allocation2 + $0x90] sm:$0xff] %vm441, 0.0
        %462 = vst.msk [vmem:[#allocation2 + $0x98] sm:$0xff] %vm441, 0.0
        %463 = vst.msk [vmem:[#allocation2 + $0xa0] sm:$0x3] %vm444, 0.0
        %464 = vst.msk [vmem:[#allocation2 + $0xa8] sm:$0xff] %vm441, 0.0
        %465 = vst.msk [vmem:[#allocation2 + $0xb0] sm:$0xff] %vm441, 0.0
        %466 = vst.msk [vmem:[#allocation2 + $0xb8] sm:$0x3] %vm444, 0.0
        %467 = vst.msk [vmem:[#allocation2 + $0xc0] sm:$0xff] %vm441, 0.0
        %468 = vst.msk [vmem:[#allocation2 + $0xc8] sm:$0xff] %vm441, 0.0
        %469 = vst.msk [vmem:[#allocation2 + $0xd0] sm:$0x3] %vm444, 0.0
        %470 = vst.msk [vmem:[#allocation2 + $0xd8] sm:$0xff] %vm441, 0.0
        %471 = vst.msk [vmem:[#allocation2 + $0xe0] sm:$0xff] %vm441, 0.0
        %472 = vst.msk [vmem:[#allocation2 + $0xe8] sm:$0x3] %vm444, 0.0
        %473 = vst.msk [vmem:[#allocation2 + $0xf0] sm:$0xff] %vm441, 0.0
        %474 = vst.msk [vmem:[#allocation2 + $0xf8] sm:$0xff] %vm441, 0.0
        %475 = vst.msk [vmem:[#allocation2 + $0x100] sm:$0x3] %vm444, 0.0
        %476 = vst.msk [vmem:[#allocation2 + $0x108] sm:$0xff] %vm441, 0.0
        %477 = vst.msk [vmem:[#allocation2 + $0x110] sm:$0xff] %vm441, 0.0
        %478 = vst.msk [vmem:[#allocation2 + $0x118] sm:$0x3] %vm444, 0.0
        %479 = vst.msk [vmem:[#allocation2 + $0x120] sm:$0xff] %vm441, 0.0
        %480 = vst.msk [vmem:[#allocation2 + $0x128] sm:$0xff] %vm441, 0.0
        %481 = vst.msk [vmem:[#allocation2 + $0x130] sm:$0x3] %vm444, 0.0
        %482 = vst.msk [vmem:[#allocation2 + $0x138] sm:$0xff] %vm441, 0.0
        %483 = vst.msk [vmem:[#allocation2 + $0x140] sm:$0xff] %vm441, 0.0
        %484 = vst.msk [vmem:[#allocation2 + $0x148] sm:$0x3] %vm444, 0.0
        %485 = vst.msk [vmem:[#allocation2 + $0x150] sm:$0xff] %vm441, 0.0
        %486 = vst.msk [vmem:[#allocation2 + $0x158] sm:$0xff] %vm441, 0.0
        %487 = vst.msk [vmem:[#allocation2 + $0x160] sm:$0x3] %vm444, 0.0
        %488 = vst.msk [vmem:[#allocation2 + $0x168] sm:$0xff] %vm441, 0.0
        %489 = vst.msk [vmem:[#allocation2 + $0x170] sm:$0xff] %vm441, 0.0
        %490 = vst.msk [vmem:[#allocation2 + $0x178] sm:$0x3] %vm444, 0.0
        %491 = vst.msk [vmem:[#allocation2 + $0x180] sm:$0xff] %vm441, 0.0
        %492 = vst.msk [vmem:[#allocation2 + $0x188] sm:$0xff] %vm441, 0.0
        %493 = vst.msk [vmem:[#allocation2 + $0x190] sm:$0x3] %vm444, 0.0
        %494 = vst.msk [vmem:[#allocation2 + $0x198] sm:$0xff] %vm441, 0.0
        %495 = vst.msk [vmem:[#allocation2 + $0x1a0] sm:$0xff] %vm441, 0.0
        %496 = vst.msk [vmem:[#allocation2 + $0x1a8] sm:$0x3] %vm444, 0.0
        %v497 = vld [vmem:[%s440] sm:$0xff]
        %v498 = vld [vmem:[%s440 + $0x8] sm:$0xff]
        %v499 = vld [vmem:[%s440 + $0x10] sm:$0xff]
        %v500 = vld [vmem:[%s440 + $0x18] sm:$0xff]
        %v501 = vld [vmem:[%s440 + $0x20] sm:$0xff]
        %v502 = vld [vmem:[%s440 + $0x28] sm:$0xff]
        %v503 = vld [vmem:[%s440 + $0x30] sm:$0xff]
        %v504 = vld [vmem:[%s440 + $0x38] sm:$0xff]
        %v505 = vld [vmem:[%s440 + $0x40] sm:$0xff]
        %v506 = vld [vmem:[%s440 + $0x48] sm:$0xff]
        %v507 = vld [vmem:[%s440 + $0x50] sm:$0xff]
        %v508 = vld [vmem:[%s440 + $0x58] sm:$0xff]
        %v509 = vld [vmem:[%s440 + $0x60] sm:$0xff]
        %v510 = vld [vmem:[%s440 + $0x68] sm:$0xff]
        %v511 = vld [vmem:[%s440 + $0x70] sm:$0xff]
        %v512 = vld [vmem:[%s440 + $0x78] sm:$0xff]
        %v513 = vld [vmem:[%s440 + $0x80] sm:$0xff]
        %v514 = vld [vmem:[%s440 + $0x88] sm:$0xff]
        %v515 = vld [vmem:[%s440 + $0x90] sm:$0xff]
        %v516 = vld [vmem:[%s440 + $0x98] sm:$0xff]
        %v517 = vld [vmem:[%s440 + $0xa0] sm:$0xff]
        %v518 = vld [vmem:[%s440 + $0xa8] sm:$0xff]
        %v519 = vld [vmem:[%s440 + $0xb0] sm:$0xff]
        %v520 = vld [vmem:[%s440 + $0xb8] sm:$0xff]
        %v521 = vld [vmem:[%s440 + $0xc0] sm:$0xff]
        %v522 = vld [vmem:[%s440 + $0xc8] sm:$0xff]
        %v523 = vld [vmem:[%s440 + $0xd0] sm:$0xff]
        %v524 = vld [vmem:[%s440 + $0xd8] sm:$0xff]
        %v525 = vld [vmem:[%s440 + $0xe0] sm:$0xff]
        %v526 = vld [vmem:[%s440 + $0xe8] sm:$0xff]
        %v527 = vld [vmem:[%s440 + $0xf0] sm:$0xff]
        %v528 = vld [vmem:[%s440 + $0xf8] sm:$0xff]
        %v529 = vld [vmem:[%s1] sm:$0xff]
        %v530 = vld [vmem:[%s1 + $0x8] sm:$0xff]
        %v531 = vld [vmem:[%s1 + $0x10] sm:$0xff]
        %v532 = vld [vmem:[%s1 + $0x18] sm:$0xff]
        %v533 = vld [vmem:[%s1 + $0x20] sm:$0xff]
        %v534 = vld [vmem:[%s1 + $0x28] sm:$0xff]
        %v535 = vld [vmem:[%s1 + $0x30] sm:$0xff]
        %v536 = vld [vmem:[%s1 + $0x38] sm:$0xff]
        %v537 = vld [vmem:[%s1 + $0x40] sm:$0xff]
        %v538 = vld [vmem:[%s1 + $0x48] sm:$0xff]
        %v539 = vld [vmem:[%s1 + $0x50] sm:$0xff]
        %v540 = vld [vmem:[%s1 + $0x58] sm:$0xff]
        %v541 = vld [vmem:[%s1 + $0x60] sm:$0xff]
        %v542 = vld [vmem:[%s1 + $0x68] sm:$0xff]
        %v543 = vld [vmem:[%s1 + $0x70] sm:$0xff]
        %v544 = vld [vmem:[%s1 + $0x78] sm:$0xff]
        %v545 = vld [vmem:[%s1 + $0x80] sm:$0xff]
        %v546 = vld [vmem:[%s1 + $0x88] sm:$0xff]
        %v547 = vld [vmem:[%s1 + $0x90] sm:$0xff]
        %v548 = vld [vmem:[%s1 + $0x98] sm:$0xff]
        %v549 = vld [vmem:[%s1 + $0xa0] sm:$0xff]
        %v550 = vld [vmem:[%s1 + $0xa8] sm:$0xff]
        %v551 = vld [vmem:[%s1 + $0xb0] sm:$0xff]
        %v552 = vld [vmem:[%s1 + $0xb8] sm:$0xff]
        %v553 = vld [vmem:[%s1 + $0xc0] sm:$0xff]
        %v554 = vld [vmem:[%s1 + $0xc8] sm:$0xff]
        %v555 = vld [vmem:[%s1 + $0xd0] sm:$0xff]
        %v556 = vld [vmem:[%s1 + $0xd8] sm:$0xff]
        %v557 = vld [vmem:[%s1 + $0xe0] sm:$0xff]
        %v558 = vld [vmem:[%s1 + $0xe8] sm:$0xff]
        %v559 = vld [vmem:[%s1 + $0xf0] sm:$0xff]
        %v560 = vld [vmem:[%s1 + $0xf8] sm:$0xff]
        %v561 = vld [vmem:[%s1 + $0x100] sm:$0xff]
        %v562 = vld [vmem:[%s1 + $0x108] sm:$0xff]
        %v563 = vld [vmem:[%s1 + $0x110] sm:$0xff]
        %v564 = vld [vmem:[%s1 + $0x118] sm:$0xff]
        %v565 = vld [vmem:[%s1 + $0x120] sm:$0xff]
        %v566 = vld [vmem:[%s1 + $0x128] sm:$0xff]
        %v567 = vld [vmem:[%s1 + $0x130] sm:$0xff]
        %v568 = vld [vmem:[%s1 + $0x138] sm:$0xff]
        %v569 = vld [vmem:[%s1 + $0x140] sm:$0xff]
        %v570 = vld [vmem:[%s1 + $0x148] sm:$0xff]
        %v571 = vld [vmem:[%s1 + $0x150] sm:$0xff]
        %v572 = vld [vmem:[%s1 + $0x158] sm:$0xff]
        %v573 = vld [vmem:[%s1 + $0x160] sm:$0xff]
        %v574 = vld [vmem:[%s1 + $0x168] sm:$0xff]
        %v575 = vld [vmem:[%s1 + $0x170] sm:$0xff]
        %v576 = vld [vmem:[%s1 + $0x178] sm:$0xff]
        %v577 = vld [vmem:[%s1 + $0x180] sm:$0xff]
        %v578 = vld [vmem:[%s1 + $0x188] sm:$0xff]
        %v579 = vld [vmem:[%s1 + $0x190] sm:$0xff]
        %v580 = vld [vmem:[%s1 + $0x198] sm:$0xff]
        %v581 = vld [vmem:[%s1 + $0x1a0] sm:$0xff]
        %v582 = vld [vmem:[%s1 + $0x1a8] sm:$0xff]
        %v583 = vld [vmem:[%s1 + $0x1b0] sm:$0xff]
        %v584 = vld [vmem:[%s1 + $0x1b8] sm:$0xff]
        %v585 = vld [vmem:[%s1 + $0x1c0] sm:$0xff]
        %v586 = vld [vmem:[%s1 + $0x1c8] sm:$0xff]
        %v587 = vld [vmem:[%s1 + $0x1d0] sm:$0xff]
        %v588 = vld [vmem:[%s1 + $0x1d8] sm:$0xff]
        %v589 = vld [vmem:[%s1 + $0x1e0] sm:$0xff]
        %v590 = vld [vmem:[%s1 + $0x1e8] sm:$0xff]
        %v591 = vld [vmem:[%s1 + $0x1f0] sm:$0xff]
        %v592 = vld [vmem:[%s1 + $0x1f8] sm:$0xff]
        %v593 = vld [vmem:[%s1 + $0x200] sm:$0xff]
        %v594 = vld [vmem:[%s1 + $0x208] sm:$0xff]
        %v595 = vld [vmem:[%s1 + $0x210] sm:$0xff]
        %v596 = vld [vmem:[%s1 + $0x218] sm:$0xff]
        %v597 = vld [vmem:[%s1 + $0x220] sm:$0xff]
        %v598 = vld [vmem:[%s1 + $0x228] sm:$0xff]
        %v599 = vld [vmem:[%s1 + $0x230] sm:$0xff]
        %v600 = vld [vmem:[%s1 + $0x238] sm:$0xff]
        %v601 = vld [vmem:[%s2] sm:$0x1]
        %s602 = scalar_lea.vmem [#allocation2], 24
        %603 = vst.msk [vmem:[%s602 + $0x1] sm:$0xff] %vm441, %v497
        %604 = vst.msk [vmem:[%s602 + $0x9] sm:$0xff] %vm441, %v498
        %605 = vst.msk [vmem:[%s602 + $0x19] sm:$0xff] %vm441, %v499
        %606 = vst.msk [vmem:[%s602 + $0x21] sm:$0xff] %vm441, %v500
        %607 = vst.msk [vmem:[%s602 + $0x31] sm:$0xff] %vm441, %v501
        %608 = vst.msk [vmem:[%s602 + $0x39] sm:$0xff] %vm441, %v502
        %609 = vst.msk [vmem:[%s602 + $0x49] sm:$0xff] %vm441, %v503
        %610 = vst.msk [vmem:[%s602 + $0x51] sm:$0xff] %vm441, %v504
        %611 = vst.msk [vmem:[%s602 + $0x61] sm:$0xff] %vm441, %v505
        %612 = vst.msk [vmem:[%s602 + $0x69] sm:$0xff] %vm441, %v506
        %613 = vst.msk [vmem:[%s602 + $0x79] sm:$0xff] %vm441, %v507
        %614 = vst.msk [vmem:[%s602 + $0x81] sm:$0xff] %vm441, %v508
        %615 = vst.msk [vmem:[%s602 + $0x91] sm:$0xff] %vm441, %v509
        %616 = vst.msk [vmem:[%s602 + $0x99] sm:$0xff] %vm441, %v510
        %617 = vst.msk [vmem:[%s602 + $0xa9] sm:$0xff] %vm441, %v511
        %618 = vst.msk [vmem:[%s602 + $0xb1] sm:$0xff] %vm441, %v512
        %619 = vst.msk [vmem:[%s602 + $0xc1] sm:$0xff] %vm441, %v513
        %620 = vst.msk [vmem:[%s602 + $0xc9] sm:$0xff] %vm441, %v514
        %621 = vst.msk [vmem:[%s602 + $0xd9] sm:$0xff] %vm441, %v515
        %622 = vst.msk [vmem:[%s602 + $0xe1] sm:$0xff] %vm441, %v516
        %623 = vst.msk [vmem:[%s602 + $0xf1] sm:$0xff] %vm441, %v517
        %624 = vst.msk [vmem:[%s602 + $0xf9] sm:$0xff] %vm441, %v518
        %625 = vst.msk [vmem:[%s602 + $0x109] sm:$0xff] %vm441, %v519
        %626 = vst.msk [vmem:[%s602 + $0x111] sm:$0xff] %vm441, %v520
        %627 = vst.msk [vmem:[%s602 + $0x121] sm:$0xff] %vm441, %v521
        %628 = vst.msk [vmem:[%s602 + $0x129] sm:$0xff] %vm441, %v522
        %629 = vst.msk [vmem:[%s602 + $0x139] sm:$0xff] %vm441, %v523
        %630 = vst.msk [vmem:[%s602 + $0x141] sm:$0xff] %vm441, %v524
        %631 = vst.msk [vmem:[%s602 + $0x151] sm:$0xff] %vm441, %v525
        %632 = vst.msk [vmem:[%s602 + $0x159] sm:$0xff] %vm441, %v526
        %633 = vst.msk [vmem:[%s602 + $0x169] sm:$0xff] %vm441, %v527
        %634 = vst.msk [vmem:[%s602 + $0x171] sm:$0xff] %vm441, %v528
        %v635 = vld [vmem:[#allocation2] sm:$0xff]
        %v636 = vld [vmem:[#allocation2 + $0x8] sm:$0xff]
        %v637 = vld [vmem:[#allocation2 + $0x18] sm:$0xff]
        %v638 = vld [vmem:[#allocation2 + $0x20] sm:$0xff]
        %v639 = vld [vmem:[#allocation2 + $0x30] sm:$0xff]
        %v640 = vld [vmem:[#allocation2 + $0x38] sm:$0xff]
        %v641 = vld [vmem:[#allocation2 + $0x48] sm:$0xff]
        %v642 = vld [vmem:[#allocation2 + $0x50] sm:$0xff]
        %v643 = vld [vmem:[#allocation2 + $0x60] sm:$0xff]
        %v644 = vld [vmem:[#allocation2 + $0x68] sm:$0xff]
        %v645 = vld [vmem:[#allocation2 + $0x78] sm:$0xff]
        %v646 = vld [vmem:[#allocation2 + $0x80] sm:$0xff]
        %v647 = vld [vmem:[#allocation2 + $0x90] sm:$0xff]
        %v648 = vld [vmem:[#allocation2 + $0x98] sm:$0xff]
        %v649 = vld [vmem:[#allocation2 + $0xa8] sm:$0xff]
        %v650 = vld [vmem:[#allocation2 + $0xb0] sm:$0xff]
        %v651 = vld [vmem:[#allocation2 + $0xc0] sm:$0xff]
        %v652 = vld [vmem:[#allocation2 + $0xc8] sm:$0xff]
        %v653 = vld [vmem:[#allocation2 + $0xd8] sm:$0xff]
        %v654 = vld [vmem:[#allocation2 + $0xe0] sm:$0xff]
        %v655 = vld [vmem:[#allocation2 + $0xf0] sm:$0xff]
        %v656 = vld [vmem:[#allocation2 + $0xf8] sm:$0xff]
        %v657 = vld [vmem:[#allocation2 + $0x108] sm:$0xff]
        %v658 = vld [vmem:[#allocation2 + $0x110] sm:$0xff]
        %v659 = vld [vmem:[#allocation2 + $0x120] sm:$0xff]
        %v660 = vld [vmem:[#allocation2 + $0x128] sm:$0xff]
        %v661 = vld [vmem:[#allocation2 + $0x138] sm:$0xff]
        %v662 = vld [vmem:[#allocation2 + $0x140] sm:$0xff]
        %v663 = vld [vmem:[#allocation2 + $0x150] sm:$0xff]
        %v664 = vld [vmem:[#allocation2 + $0x158] sm:$0xff]
        %v665 = vld [vmem:[#allocation2 + $0x168] sm:$0xff]
        %v666 = vld [vmem:[#allocation2 + $0x170] sm:$0xff]
        %v667 = vld [vmem:[#allocation2 + $0x1] sm:$0xff]
        %v668 = vld [vmem:[#allocation2 + $0x9] sm:$0xff]
        %v669 = vld [vmem:[#allocation2 + $0x19] sm:$0xff]
        %v670 = vld [vmem:[#allocation2 + $0x21] sm:$0xff]
        %v671 = vld [vmem:[#allocation2 + $0x31] sm:$0xff]
        %v672 = vld [vmem:[#allocation2 + $0x39] sm:$0xff]
        %v673 = vld [vmem:[#allocation2 + $0x49] sm:$0xff]
        %v674 = vld [vmem:[#allocation2 + $0x51] sm:$0xff]
        %v675 = vld [vmem:[#allocation2 + $0x61] sm:$0xff]
        %v676 = vld [vmem:[#allocation2 + $0x69] sm:$0xff]
        %v677 = vld [vmem:[#allocation2 + $0x79] sm:$0xff]
        %v678 = vld [vmem:[#allocation2 + $0x81] sm:$0xff]
        %v679 = vld [vmem:[#allocation2 + $0x91] sm:$0xff]
        %v680 = vld [vmem:[#allocation2 + $0x99] sm:$0xff]
        %v681 = vld [vmem:[#allocation2 + $0xa9] sm:$0xff]
        %v682 = vld [vmem:[#allocation2 + $0xb1] sm:$0xff]
        %v683 = vld [vmem:[#allocation2 + $0xc1] sm:$0xff]
        %v684 = vld [vmem:[#allocation2 + $0xc9] sm:$0xff]
        %v685 = vld [vmem:[#allocation2 + $0xd9] sm:$0xff]
        %v686 = vld [vmem:[#allocation2 + $0xe1] sm:$0xff]
        %v687 = vld [vmem:[#allocation2 + $0xf1] sm:$0xff]
        %v688 = vld [vmem:[#allocation2 + $0xf9] sm:$0xff]
        %v689 = vld [vmem:[#allocation2 + $0x109] sm:$0xff]
        %v690 = vld [vmem:[#allocation2 + $0x111] sm:$0xff]
        %v691 = vld [vmem:[#allocation2 + $0x121] sm:$0xff]
        %v692 = vld [vmem:[#allocation2 + $0x129] sm:$0xff]
        %v693 = vld [vmem:[#allocation2 + $0x139] sm:$0xff]
        %v694 = vld [vmem:[#allocation2 + $0x141] sm:$0xff]
        %v695 = vld [vmem:[#allocation2 + $0x151] sm:$0xff]
        %v696 = vld [vmem:[#allocation2 + $0x159] sm:$0xff]
        %v697 = vld [vmem:[#allocation2 + $0x169] sm:$0xff]
        %v698 = vld [vmem:[#allocation2 + $0x171] sm:$0xff]
        %v699 = vld [vmem:[#allocation2 + $0x2] sm:$0xff]
        %v700 = vld [vmem:[#allocation2 + $0xa] sm:$0xff]
        %v701 = vld [vmem:[#allocation2 + $0x1a] sm:$0xff]
        %v702 = vld [vmem:[#allocation2 + $0x22] sm:$0xff]
        %v703 = vld [vmem:[#allocation2 + $0x32] sm:$0xff]
        %v704 = vld [vmem:[#allocation2 + $0x3a] sm:$0xff]
        %v705 = vld [vmem:[#allocation2 + $0x4a] sm:$0xff]
        %v706 = vld [vmem:[#allocation2 + $0x52] sm:$0xff]
        %v707 = vld [vmem:[#allocation2 + $0x62] sm:$0xff]
        %v708 = vld [vmem:[#allocation2 + $0x6a] sm:$0xff]
        %v709 = vld [vmem:[#allocation2 + $0x7a] sm:$0xff]
        %v710 = vld [vmem:[#allocation2 + $0x82] sm:$0xff]
        %v711 = vld [vmem:[#allocation2 + $0x92] sm:$0xff]
        %v712 = vld [vmem:[#allocation2 + $0x9a] sm:$0xff]
        %v713 = vld [vmem:[#allocation2 + $0xaa] sm:$0xff]
        %v714 = vld [vmem:[#allocation2 + $0xb2] sm:$0xff]
        %v715 = vld [vmem:[#allocation2 + $0xc2] sm:$0xff]
        %v716 = vld [vmem:[#allocation2 + $0xca] sm:$0xff]
        %v717 = vld [vmem:[#allocation2 + $0xda] sm:$0xff]
        %v718 = vld [vmem:[#allocation2 + $0xe2] sm:$0xff]
        %v719 = vld [vmem:[#allocation2 + $0xf2] sm:$0xff]
        %v720 = vld [vmem:[#allocation2 + $0xfa] sm:$0xff]
        %v721 = vld [vmem:[#allocation2 + $0x10a] sm:$0xff]
        %v722 = vld [vmem:[#allocation2 + $0x112] sm:$0xff]
        %v723 = vld [vmem:[#allocation2 + $0x122] sm:$0xff]
        %v724 = vld [vmem:[#allocation2 + $0x12a] sm:$0xff]
        %v725 = vld [vmem:[#allocation2 + $0x13a] sm:$0xff]
        %v726 = vld [vmem:[#allocation2 + $0x142] sm:$0xff]
        %v727 = vld [vmem:[#allocation2 + $0x152] sm:$0xff]
        %v728 = vld [vmem:[#allocation2 + $0x15a] sm:$0xff]
        %v729 = vld [vmem:[#allocation2 + $0x16a] sm:$0xff]
        %v730 = vld [vmem:[#allocation2 + $0x172] sm:$0xff]
        %v731 = vld [vmem:[%s602] sm:$0xff]
        %v732 = vld [vmem:[%s602 + $0x8] sm:$0xff]
        %v733 = vld [vmem:[%s602 + $0x18] sm:$0xff]
        %v734 = vld [vmem:[%s602 + $0x20] sm:$0xff]
        %v735 = vld [vmem:[%s602 + $0x30] sm:$0xff]
        %v736 = vld [vmem:[%s602 + $0x38] sm:$0xff]
        %v737 = vld [vmem:[%s602 + $0x48] sm:$0xff]
        %v738 = vld [vmem:[%s602 + $0x50] sm:$0xff]
        %v739 = vld [vmem:[%s602 + $0x60] sm:$0xff]
        %v740 = vld [vmem:[%s602 + $0x68] sm:$0xff]
        %v741 = vld [vmem:[%s602 + $0x78] sm:$0xff]
        %v742 = vld [vmem:[%s602 + $0x80] sm:$0xff]
        %v743 = vld [vmem:[%s602 + $0x90] sm:$0xff]
        %v744 = vld [vmem:[%s602 + $0x98] sm:$0xff]
        %v745 = vld [vmem:[%s602 + $0xa8] sm:$0xff]
        %v746 = vld [vmem:[%s602 + $0xb0] sm:$0xff]
        %v747 = vld [vmem:[%s602 + $0xc0] sm:$0xff]
        %v748 = vld [vmem:[%s602 + $0xc8] sm:$0xff]
        %v749 = vld [vmem:[%s602 + $0xd8] sm:$0xff]
        %v750 = vld [vmem:[%s602 + $0xe0] sm:$0xff]
        %v751 = vld [vmem:[%s602 + $0xf0] sm:$0xff]
        %v752 = vld [vmem:[%s602 + $0xf8] sm:$0xff]
        %v753 = vld [vmem:[%s602 + $0x108] sm:$0xff]
        %v754 = vld [vmem:[%s602 + $0x110] sm:$0xff]
        %v755 = vld [vmem:[%s602 + $0x120] sm:$0xff]
        %v756 = vld [vmem:[%s602 + $0x128] sm:$0xff]
        %v757 = vld [vmem:[%s602 + $0x138] sm:$0xff]
        %v758 = vld [vmem:[%s602 + $0x140] sm:$0xff]
        %v759 = vld [vmem:[%s602 + $0x150] sm:$0xff]
        %v760 = vld [vmem:[%s602 + $0x158] sm:$0xff]
        %v761 = vld [vmem:[%s602 + $0x168] sm:$0xff]
        %v762 = vld [vmem:[%s602 + $0x170] sm:$0xff]
        %v763 = vld [vmem:[%s602 + $0x1] sm:$0xff]
        %v764 = vld [vmem:[%s602 + $0x9] sm:$0xff]
        %v765 = vld [vmem:[%s602 + $0x19] sm:$0xff]
        %v766 = vld [vmem:[%s602 + $0x21] sm:$0xff]
        %v767 = vld [vmem:[%s602 + $0x31] sm:$0xff]
        %v768 = vld [vmem:[%s602 + $0x39] sm:$0xff]
        %v769 = vld [vmem:[%s602 + $0x49] sm:$0xff]
        %v770 = vld [vmem:[%s602 + $0x51] sm:$0xff]
        %v771 = vld [vmem:[%s602 + $0x61] sm:$0xff]
        %v772 = vld [vmem:[%s602 + $0x69] sm:$0xff]
        %v773 = vld [vmem:[%s602 + $0x79] sm:$0xff]
        %v774 = vld [vmem:[%s602 + $0x81] sm:$0xff]
        %v775 = vld [vmem:[%s602 + $0x91] sm:$0xff]
        %v776 = vld [vmem:[%s602 + $0x99] sm:$0xff]
        %v777 = vld [vmem:[%s602 + $0xa9] sm:$0xff]
        %v778 = vld [vmem:[%s602 + $0xb1] sm:$0xff]
        %v779 = vld [vmem:[%s602 + $0xc1] sm:$0xff]
        %v780 = vld [vmem:[%s602 + $0xc9] sm:$0xff]
        %v781 = vld [vmem:[%s602 + $0xd9] sm:$0xff]
        %v782 = vld [vmem:[%s602 + $0xe1] sm:$0xff]
        %v783 = vld [vmem:[%s602 + $0xf1] sm:$0xff]
        %v784 = vld [vmem:[%s602 + $0xf9] sm:$0xff]
        %v785 = vld [vmem:[%s602 + $0x109] sm:$0xff]
        %v786 = vld [vmem:[%s602 + $0x111] sm:$0xff]
        %v787 = vld [vmem:[%s602 + $0x121] sm:$0xff]
        %v788 = vld [vmem:[%s602 + $0x129] sm:$0xff]
        %v789 = vld [vmem:[%s602 + $0x139] sm:$0xff]
        %v790 = vld [vmem:[%s602 + $0x141] sm:$0xff]
        %v791 = vld [vmem:[%s602 + $0x151] sm:$0xff]
        %v792 = vld [vmem:[%s602 + $0x159] sm:$0xff]
        %v793 = vld [vmem:[%s602 + $0x169] sm:$0xff]
        %v794 = vld [vmem:[%s602 + $0x171] sm:$0xff]
        %v795 = vld [vmem:[%s602 + $0x2] sm:$0xff]
        %v796 = vld [vmem:[%s602 + $0xa] sm:$0xff]
        %v797 = vld [vmem:[%s602 + $0x1a] sm:$0xff]
        %v798 = vld [vmem:[%s602 + $0x22] sm:$0xff]
        %v799 = vld [vmem:[%s602 + $0x32] sm:$0xff]
        %v800 = vld [vmem:[%s602 + $0x3a] sm:$0xff]
        %v801 = vld [vmem:[%s602 + $0x4a] sm:$0xff]
        %v802 = vld [vmem:[%s602 + $0x52] sm:$0xff]
        %v803 = vld [vmem:[%s602 + $0x62] sm:$0xff]
        %v804 = vld [vmem:[%s602 + $0x6a] sm:$0xff]
        %v805 = vld [vmem:[%s602 + $0x7a] sm:$0xff]
        %v806 = vld [vmem:[%s602 + $0x82] sm:$0xff]
        %v807 = vld [vmem:[%s602 + $0x92] sm:$0xff]
        %v808 = vld [vmem:[%s602 + $0x9a] sm:$0xff]
        %v809 = vld [vmem:[%s602 + $0xaa] sm:$0xff]
        %v810 = vld [vmem:[%s602 + $0xb2] sm:$0xff]
        %v811 = vld [vmem:[%s602 + $0xc2] sm:$0xff]
        %v812 = vld [vmem:[%s602 + $0xca] sm:$0xff]
        %v813 = vld [vmem:[%s602 + $0xda] sm:$0xff]
        %v814 = vld [vmem:[%s602 + $0xe2] sm:$0xff]
        %v815 = vld [vmem:[%s602 + $0xf2] sm:$0xff]
        %v816 = vld [vmem:[%s602 + $0xfa] sm:$0xff]
        %v817 = vld [vmem:[%s602 + $0x10a] sm:$0xff]
        %v818 = vld [vmem:[%s602 + $0x112] sm:$0xff]
        %v819 = vld [vmem:[%s602 + $0x122] sm:$0xff]
        %v820 = vld [vmem:[%s602 + $0x12a] sm:$0xff]
        %v821 = vld [vmem:[%s602 + $0x13a] sm:$0xff]
        %v822 = vld [vmem:[%s602 + $0x142] sm:$0xff]
        %v823 = vld [vmem:[%s602 + $0x152] sm:$0xff]
        %v824 = vld [vmem:[%s602 + $0x15a] sm:$0xff]
        %v825 = vld [vmem:[%s602 + $0x16a] sm:$0xff]
        %v826 = vld [vmem:[%s602 + $0x172] sm:$0xff]
        %s827 = scalar_lea.vmem [#allocation2], 48
        %v828 = vld [vmem:[%s827] sm:$0xff]
        %v829 = vld [vmem:[%s827 + $0x8] sm:$0xff]
        %v830 = vld [vmem:[%s827 + $0x18] sm:$0xff]
        %v831 = vld [vmem:[%s827 + $0x20] sm:$0xff]
        %v832 = vld [vmem:[%s827 + $0x30] sm:$0xff]
        %v833 = vld [vmem:[%s827 + $0x38] sm:$0xff]
        %v834 = vld [vmem:[%s827 + $0x48] sm:$0xff]
        %v835 = vld [vmem:[%s827 + $0x50] sm:$0xff]
        %v836 = vld [vmem:[%s827 + $0x60] sm:$0xff]
        %v837 = vld [vmem:[%s827 + $0x68] sm:$0xff]
        %v838 = vld [vmem:[%s827 + $0x78] sm:$0xff]
        %v839 = vld [vmem:[%s827 + $0x80] sm:$0xff]
        %v840 = vld [vmem:[%s827 + $0x90] sm:$0xff]
        %v841 = vld [vmem:[%s827 + $0x98] sm:$0xff]
        %v842 = vld [vmem:[%s827 + $0xa8] sm:$0xff]
        %v843 = vld [vmem:[%s827 + $0xb0] sm:$0xff]
        %v844 = vld [vmem:[%s827 + $0xc0] sm:$0xff]
        %v845 = vld [vmem:[%s827 + $0xc8] sm:$0xff]
        %v846 = vld [vmem:[%s827 + $0xd8] sm:$0xff]
        %v847 = vld [vmem:[%s827 + $0xe0] sm:$0xff]
        %v848 = vld [vmem:[%s827 + $0xf0] sm:$0xff]
        %v849 = vld [vmem:[%s827 + $0xf8] sm:$0xff]
        %v850 = vld [vmem:[%s827 + $0x108] sm:$0xff]
        %v851 = vld [vmem:[%s827 + $0x110] sm:$0xff]
        %v852 = vld [vmem:[%s827 + $0x120] sm:$0xff]
        %v853 = vld [vmem:[%s827 + $0x128] sm:$0xff]
        %v854 = vld [vmem:[%s827 + $0x138] sm:$0xff]
        %v855 = vld [vmem:[%s827 + $0x140] sm:$0xff]
        %v856 = vld [vmem:[%s827 + $0x150] sm:$0xff]
        %v857 = vld [vmem:[%s827 + $0x158] sm:$0xff]
        %v858 = vld [vmem:[%s827 + $0x168] sm:$0xff]
        %v859 = vld [vmem:[%s827 + $0x170] sm:$0xff]
        %v860 = vld [vmem:[%s827 + $0x1] sm:$0xff]
        %v861 = vld [vmem:[%s827 + $0x9] sm:$0xff]
        %v862 = vld [vmem:[%s827 + $0x19] sm:$0xff]
        %v863 = vld [vmem:[%s827 + $0x21] sm:$0xff]
        %v864 = vld [vmem:[%s827 + $0x31] sm:$0xff]
        %v865 = vld [vmem:[%s827 + $0x39] sm:$0xff]
        %v866 = vld [vmem:[%s827 + $0x49] sm:$0xff]
        %v867 = vld [vmem:[%s827 + $0x51] sm:$0xff]
        %v868 = vld [vmem:[%s827 + $0x61] sm:$0xff]
        %v869 = vld [vmem:[%s827 + $0x69] sm:$0xff]
        %v870 = vld [vmem:[%s827 + $0x79] sm:$0xff]
        %v871 = vld [vmem:[%s827 + $0x81] sm:$0xff]
        %v872 = vld [vmem:[%s827 + $0x91] sm:$0xff]
        %v873 = vld [vmem:[%s827 + $0x99] sm:$0xff]
        %v874 = vld [vmem:[%s827 + $0xa9] sm:$0xff]
        %v875 = vld [vmem:[%s827 + $0xb1] sm:$0xff]
        %v876 = vld [vmem:[%s827 + $0xc1] sm:$0xff]
        %v877 = vld [vmem:[%s827 + $0xc9] sm:$0xff]
        %v878 = vld [vmem:[%s827 + $0xd9] sm:$0xff]
        %v879 = vld [vmem:[%s827 + $0xe1] sm:$0xff]
        %v880 = vld [vmem:[%s827 + $0xf1] sm:$0xff]
        %v881 = vld [vmem:[%s827 + $0xf9] sm:$0xff]
        %v882 = vld [vmem:[%s827 + $0x109] sm:$0xff]
        %v883 = vld [vmem:[%s827 + $0x111] sm:$0xff]
        %v884 = vld [vmem:[%s827 + $0x121] sm:$0xff]
        %v885 = vld [vmem:[%s827 + $0x129] sm:$0xff]
        %v886 = vld [vmem:[%s827 + $0x139] sm:$0xff]
        %v887 = vld [vmem:[%s827 + $0x141] sm:$0xff]
        %v888 = vld [vmem:[%s827 + $0x151] sm:$0xff]
        %v889 = vld [vmem:[%s827 + $0x159] sm:$0xff]
        %v890 = vld [vmem:[%s827 + $0x169] sm:$0xff]
        %v891 = vld [vmem:[%s827 + $0x171] sm:$0xff]
        %v892 = vld [vmem:[%s827 + $0x2] sm:$0xff]
        %v893 = vld [vmem:[%s827 + $0xa] sm:$0xff]
        %v894 = vld [vmem:[%s827 + $0x1a] sm:$0xff]
        %v895 = vld [vmem:[%s827 + $0x22] sm:$0xff]
        %v896 = vld [vmem:[%s827 + $0x32] sm:$0xff]
        %v897 = vld [vmem:[%s827 + $0x3a] sm:$0xff]
        %v898 = vld [vmem:[%s827 + $0x4a] sm:$0xff]
        %v899 = vld [vmem:[%s827 + $0x52] sm:$0xff]
        %v900 = vld [vmem:[%s827 + $0x62] sm:$0xff]
        %v901 = vld [vmem:[%s827 + $0x6a] sm:$0xff]
        %v902 = vld [vmem:[%s827 + $0x7a] sm:$0xff]
        %v903 = vld [vmem:[%s827 + $0x82] sm:$0xff]
        %v904 = vld [vmem:[%s827 + $0x92] sm:$0xff]
        %v905 = vld [vmem:[%s827 + $0x9a] sm:$0xff]
        %v906 = vld [vmem:[%s827 + $0xaa] sm:$0xff]
        %v907 = vld [vmem:[%s827 + $0xb2] sm:$0xff]
        %v908 = vld [vmem:[%s827 + $0xc2] sm:$0xff]
        %v909 = vld [vmem:[%s827 + $0xca] sm:$0xff]
        %v910 = vld [vmem:[%s827 + $0xda] sm:$0xff]
        %v911 = vld [vmem:[%s827 + $0xe2] sm:$0xff]
        %v912 = vld [vmem:[%s827 + $0xf2] sm:$0xff]
        %v913 = vld [vmem:[%s827 + $0xfa] sm:$0xff]
        %v914 = vld [vmem:[%s827 + $0x10a] sm:$0xff]
        %v915 = vld [vmem:[%s827 + $0x112] sm:$0xff]
        %v916 = vld [vmem:[%s827 + $0x122] sm:$0xff]
        %v917 = vld [vmem:[%s827 + $0x12a] sm:$0xff]
        %v918 = vld [vmem:[%s827 + $0x13a] sm:$0xff]
        %v919 = vld [vmem:[%s827 + $0x142] sm:$0xff]
        %v920 = vld [vmem:[%s827 + $0x152] sm:$0xff]
        %v921 = vld [vmem:[%s827 + $0x15a] sm:$0xff]
        %v922 = vld [vmem:[%s827 + $0x16a] sm:$0xff]
        %v923 = vld [vmem:[%s827 + $0x172] sm:$0xff]
        %956 = vrot.lane.b32.xlu0 %v667, 64
        %v957 = vpop.permute.xlu0 %956
        %958 = vrot.lane.b32.xlu0 %v668, 64
        %v959 = vpop.permute.xlu0 %958
        %960 = vrot.lane.b32.xlu0 %v669, 64
        %v961 = vpop.permute.xlu0 %960
        %962 = vrot.lane.b32.xlu0 %v670, 64
        %v963 = vpop.permute.xlu0 %962
        %964 = vrot.lane.b32.xlu0 %v671, 64
        %v965 = vpop.permute.xlu0 %964
        %966 = vrot.lane.b32.xlu0 %v672, 64
        %v967 = vpop.permute.xlu0 %966
        %968 = vrot.lane.b32.xlu0 %v673, 64
        %v969 = vpop.permute.xlu0 %968
        %970 = vrot.lane.b32.xlu0 %v674, 64
        %v971 = vpop.permute.xlu0 %970
        %972 = vrot.lane.b32.xlu0 %v675, 64
        %v973 = vpop.permute.xlu0 %972
        %974 = vrot.lane.b32.xlu0 %v676, 64
        %v975 = vpop.permute.xlu0 %974
        %976 = vrot.lane.b32.xlu0 %v677, 64
        %v977 = vpop.permute.xlu0 %976
        %978 = vrot.lane.b32.xlu0 %v678, 64
        %v979 = vpop.permute.xlu0 %978
        %980 = vrot.lane.b32.xlu0 %v679, 64
        %v981 = vpop.permute.xlu0 %980
        %982 = vrot.lane.b32.xlu0 %v680, 64
        %v983 = vpop.permute.xlu0 %982
        %984 = vrot.lane.b32.xlu0 %v681, 64
        %v985 = vpop.permute.xlu0 %984
        %986 = vrot.lane.b32.xlu0 %v682, 64
        %v987 = vpop.permute.xlu0 %986
        %988 = vrot.lane.b32.xlu0 %v683, 64
        %v989 = vpop.permute.xlu0 %988
        %990 = vrot.lane.b32.xlu0 %v684, 64
        %v991 = vpop.permute.xlu0 %990
        %992 = vrot.lane.b32.xlu0 %v685, 64
        %v993 = vpop.permute.xlu0 %992
        %994 = vrot.lane.b32.xlu0 %v686, 64
        %v995 = vpop.permute.xlu0 %994
        %996 = vrot.lane.b32.xlu0 %v687, 64
        %v997 = vpop.permute.xlu0 %996
        %998 = vrot.lane.b32.xlu0 %v688, 64
        %v999 = vpop.permute.xlu0 %998
        %1000 = vrot.lane.b32.xlu0 %v689, 64
        %v1001 = vpop.permute.xlu0 %1000
        %1002 = vrot.lane.b32.xlu0 %v690, 64
        %v1003 = vpop.permute.xlu0 %1002
        %1004 = vrot.lane.b32.xlu0 %v691, 64
        %v1005 = vpop.permute.xlu0 %1004
        %1006 = vrot.lane.b32.xlu0 %v692, 64
        %v1007 = vpop.permute.xlu0 %1006
        %1008 = vrot.lane.b32.xlu0 %v693, 64
        %v1009 = vpop.permute.xlu0 %1008
        %1010 = vrot.lane.b32.xlu0 %v694, 64
        %v1011 = vpop.permute.xlu0 %1010
        %1012 = vrot.lane.b32.xlu0 %v695, 64
        %v1013 = vpop.permute.xlu0 %1012
        %1014 = vrot.lane.b32.xlu0 %v696, 64
        %v1015 = vpop.permute.xlu0 %1014
        %1016 = vrot.lane.b32.xlu0 %v697, 64
        %v1017 = vpop.permute.xlu0 %1016
        %1018 = vrot.lane.b32.xlu0 %v698, 64
        %v1019 = vpop.permute.xlu0 %1018
        %1084 = vrot.lane.b32.xlu0 %v731, 64
        %v1085 = vpop.permute.xlu0 %1084
        %1086 = vrot.lane.b32.xlu0 %v732, 64
        %v1087 = vpop.permute.xlu0 %1086
        %1088 = vrot.lane.b32.xlu0 %v733, 64
        %v1089 = vpop.permute.xlu0 %1088
        %1090 = vrot.lane.b32.xlu0 %v734, 64
        %v1091 = vpop.permute.xlu0 %1090
        %1092 = vrot.lane.b32.xlu0 %v735, 64
        %v1093 = vpop.permute.xlu0 %1092
        %1094 = vrot.lane.b32.xlu0 %v736, 64
        %v1095 = vpop.permute.xlu0 %1094
        %1096 = vrot.lane.b32.xlu0 %v737, 64
        %v1097 = vpop.permute.xlu0 %1096
        %1098 = vrot.lane.b32.xlu0 %v738, 64
        %v1099 = vpop.permute.xlu0 %1098
        %1100 = vrot.lane.b32.xlu0 %v739, 64
        %v1101 = vpop.permute.xlu0 %1100
        %1102 = vrot.lane.b32.xlu0 %v740, 64
        %v1103 = vpop.permute.xlu0 %1102
        %1104 = vrot.lane.b32.xlu0 %v741, 64
        %v1105 = vpop.permute.xlu0 %1104
        %1106 = vrot.lane.b32.xlu0 %v742, 64
        %v1107 = vpop.permute.xlu0 %1106
        %1108 = vrot.lane.b32.xlu0 %v743, 64
        %v1109 = vpop.permute.xlu0 %1108
        %1110 = vrot.lane.b32.xlu0 %v744, 64
        %v1111 = vpop.permute.xlu0 %1110
        %1112 = vrot.lane.b32.xlu0 %v745, 64
        %v1113 = vpop.permute.xlu0 %1112
        %1114 = vrot.lane.b32.xlu0 %v746, 64
        %v1115 = vpop.permute.xlu0 %1114
        %1116 = vrot.lane.b32.xlu0 %v747, 64
        %v1117 = vpop.permute.xlu0 %1116
        %1118 = vrot.lane.b32.xlu0 %v748, 64
        %v1119 = vpop.permute.xlu0 %1118
        %1120 = vrot.lane.b32.xlu0 %v749, 64
        %v1121 = vpop.permute.xlu0 %1120
        %1122 = vrot.lane.b32.xlu0 %v750, 64
        %v1123 = vpop.permute.xlu0 %1122
        %1124 = vrot.lane.b32.xlu0 %v751, 64
        %v1125 = vpop.permute.xlu0 %1124
        %1126 = vrot.lane.b32.xlu0 %v752, 64
        %v1127 = vpop.permute.xlu0 %1126
        %1128 = vrot.lane.b32.xlu0 %v753, 64
        %v1129 = vpop.permute.xlu0 %1128
        %1130 = vrot.lane.b32.xlu0 %v754, 64
        %v1131 = vpop.permute.xlu0 %1130
        %1132 = vrot.lane.b32.xlu0 %v755, 64
        %v1133 = vpop.permute.xlu0 %1132
        %1134 = vrot.lane.b32.xlu0 %v756, 64
        %v1135 = vpop.permute.xlu0 %1134
        %1136 = vrot.lane.b32.xlu0 %v757, 64
        %v1137 = vpop.permute.xlu0 %1136
        %1138 = vrot.lane.b32.xlu0 %v758, 64
        %v1139 = vpop.permute.xlu0 %1138
        %1140 = vrot.lane.b32.xlu0 %v759, 64
        %v1141 = vpop.permute.xlu0 %1140
        %1142 = vrot.lane.b32.xlu0 %v760, 64
        %v1143 = vpop.permute.xlu0 %1142
        %1144 = vrot.lane.b32.xlu0 %v761, 64
        %v1145 = vpop.permute.xlu0 %1144
        %1146 = vrot.lane.b32.xlu0 %v762, 64
        %v1147 = vpop.permute.xlu0 %1146
        %1212 = vrot.lane.b32.xlu0 %v795, 64
        %v1213 = vpop.permute.xlu0 %1212
        %1214 = vrot.lane.b32.xlu0 %v796, 64
        %v1215 = vpop.permute.xlu0 %1214
        %1216 = vrot.lane.b32.xlu0 %v797, 64
        %v1217 = vpop.permute.xlu0 %1216
        %1218 = vrot.lane.b32.xlu0 %v798, 64
        %v1219 = vpop.permute.xlu0 %1218
        %1220 = vrot.lane.b32.xlu0 %v799, 64
        %v1221 = vpop.permute.xlu0 %1220
        %1222 = vrot.lane.b32.xlu0 %v800, 64
        %v1223 = vpop.permute.xlu0 %1222
        %1224 = vrot.lane.b32.xlu0 %v801, 64
        %v1225 = vpop.permute.xlu0 %1224
        %1226 = vrot.lane.b32.xlu0 %v802, 64
        %v1227 = vpop.permute.xlu0 %1226
        %1228 = vrot.lane.b32.xlu0 %v803, 64
        %v1229 = vpop.permute.xlu0 %1228
        %1230 = vrot.lane.b32.xlu0 %v804, 64
        %v1231 = vpop.permute.xlu0 %1230
        %1232 = vrot.lane.b32.xlu0 %v805, 64
        %v1233 = vpop.permute.xlu0 %1232
        %1234 = vrot.lane.b32.xlu0 %v806, 64
        %v1235 = vpop.permute.xlu0 %1234
        %1236 = vrot.lane.b32.xlu0 %v807, 64
        %v1237 = vpop.permute.xlu0 %1236
        %1238 = vrot.lane.b32.xlu0 %v808, 64
        %v1239 = vpop.permute.xlu0 %1238
        %1240 = vrot.lane.b32.xlu0 %v809, 64
        %v1241 = vpop.permute.xlu0 %1240
        %1242 = vrot.lane.b32.xlu0 %v810, 64
        %v1243 = vpop.permute.xlu0 %1242
        %1244 = vrot.lane.b32.xlu0 %v811, 64
        %v1245 = vpop.permute.xlu0 %1244
        %1246 = vrot.lane.b32.xlu0 %v812, 64
        %v1247 = vpop.permute.xlu0 %1246
        %1248 = vrot.lane.b32.xlu0 %v813, 64
        %v1249 = vpop.permute.xlu0 %1248
        %1250 = vrot.lane.b32.xlu0 %v814, 64
        %v1251 = vpop.permute.xlu0 %1250
        %1252 = vrot.lane.b32.xlu0 %v815, 64
        %v1253 = vpop.permute.xlu0 %1252
        %1254 = vrot.lane.b32.xlu0 %v816, 64
        %v1255 = vpop.permute.xlu0 %1254
        %1256 = vrot.lane.b32.xlu0 %v817, 64
        %v1257 = vpop.permute.xlu0 %1256
        %1258 = vrot.lane.b32.xlu0 %v818, 64
        %v1259 = vpop.permute.xlu0 %1258
        %1260 = vrot.lane.b32.xlu0 %v819, 64
        %v1261 = vpop.permute.xlu0 %1260
        %1262 = vrot.lane.b32.xlu0 %v820, 64
        %v1263 = vpop.permute.xlu0 %1262
        %1264 = vrot.lane.b32.xlu0 %v821, 64
        %v1265 = vpop.permute.xlu0 %1264
        %1266 = vrot.lane.b32.xlu0 %v822, 64
        %v1267 = vpop.permute.xlu0 %1266
        %1268 = vrot.lane.b32.xlu0 %v823, 64
        %v1269 = vpop.permute.xlu0 %1268
        %1270 = vrot.lane.b32.xlu0 %v824, 64
        %v1271 = vpop.permute.xlu0 %1270
        %1272 = vrot.lane.b32.xlu0 %v825, 64
        %v1273 = vpop.permute.xlu0 %1272
        %1274 = vrot.lane.b32.xlu0 %v826, 64
        %v1275 = vpop.permute.xlu0 %1274
        %1340 = vrot.lane.b32.xlu0 %v860, 64
        %v1341 = vpop.permute.xlu0 %1340
        %1342 = vrot.lane.b32.xlu0 %v861, 64
        %v1343 = vpop.permute.xlu0 %1342
        %1344 = vrot.lane.b32.xlu0 %v862, 64
        %v1345 = vpop.permute.xlu0 %1344
        %1346 = vrot.lane.b32.xlu0 %v863, 64
        %v1347 = vpop.permute.xlu0 %1346
        %1348 = vrot.lane.b32.xlu0 %v864, 64
        %v1349 = vpop.permute.xlu0 %1348
        %1350 = vrot.lane.b32.xlu0 %v865, 64
        %v1351 = vpop.permute.xlu0 %1350
        %1352 = vrot.lane.b32.xlu0 %v866, 64
        %v1353 = vpop.permute.xlu0 %1352
        %1354 = vrot.lane.b32.xlu0 %v867, 64
        %v1355 = vpop.permute.xlu0 %1354
        %1356 = vrot.lane.b32.xlu0 %v868, 64
        %v1357 = vpop.permute.xlu0 %1356
        %1358 = vrot.lane.b32.xlu0 %v869, 64
        %v1359 = vpop.permute.xlu0 %1358
        %1360 = vrot.lane.b32.xlu0 %v870, 64
        %v1361 = vpop.permute.xlu0 %1360
        %1362 = vrot.lane.b32.xlu0 %v871, 64
        %v1363 = vpop.permute.xlu0 %1362
        %1364 = vrot.lane.b32.xlu0 %v872, 64
        %v1365 = vpop.permute.xlu0 %1364
        %1366 = vrot.lane.b32.xlu0 %v873, 64
        %v1367 = vpop.permute.xlu0 %1366
        %1368 = vrot.lane.b32.xlu0 %v874, 64
        %v1369 = vpop.permute.xlu0 %1368
        %1370 = vrot.lane.b32.xlu0 %v875, 64
        %v1371 = vpop.permute.xlu0 %1370
        %1372 = vrot.lane.b32.xlu0 %v876, 64
        %v1373 = vpop.permute.xlu0 %1372
        %1374 = vrot.lane.b32.xlu0 %v877, 64
        %v1375 = vpop.permute.xlu0 %1374
        %1376 = vrot.lane.b32.xlu0 %v878, 64
        %v1377 = vpop.permute.xlu0 %1376
        %1378 = vrot.lane.b32.xlu0 %v879, 64
        %v1379 = vpop.permute.xlu0 %1378
        %1380 = vrot.lane.b32.xlu0 %v880, 64
        %v1381 = vpop.permute.xlu0 %1380
        %1382 = vrot.lane.b32.xlu0 %v881, 64
        %v1383 = vpop.permute.xlu0 %1382
        %1384 = vrot.lane.b32.xlu0 %v882, 64
        %v1385 = vpop.permute.xlu0 %1384
        %1386 = vrot.lane.b32.xlu0 %v883, 64
        %v1387 = vpop.permute.xlu0 %1386
        %1388 = vrot.lane.b32.xlu0 %v884, 64
        %v1389 = vpop.permute.xlu0 %1388
        %1390 = vrot.lane.b32.xlu0 %v885, 64
        %v1391 = vpop.permute.xlu0 %1390
        %1392 = vrot.lane.b32.xlu0 %v886, 64
        %v1393 = vpop.permute.xlu0 %1392
        %1394 = vrot.lane.b32.xlu0 %v887, 64
        %v1395 = vpop.permute.xlu0 %1394
        %1396 = vrot.lane.b32.xlu0 %v888, 64
        %v1397 = vpop.permute.xlu0 %1396
        %1398 = vrot.lane.b32.xlu0 %v889, 64
        %v1399 = vpop.permute.xlu0 %1398
        %1400 = vrot.lane.b32.xlu0 %v890, 64
        %v1401 = vpop.permute.xlu0 %1400
        %1402 = vrot.lane.b32.xlu0 %v891, 64
        %v1403 = vpop.permute.xlu0 %1402
        %v1436 = vsel %vm441, %v635, %v957
        %v1437 = vsel %vm441, %v636, %v959
        %v1438 = vsel %vm441, %v637, %v961
        %v1439 = vsel %vm441, %v638, %v963
        %v1440 = vsel %vm441, %v639, %v965
        %v1441 = vsel %vm441, %v640, %v967
        %v1442 = vsel %vm441, %v641, %v969
        %v1443 = vsel %vm441, %v642, %v971
        %v1444 = vsel %vm441, %v643, %v973
        %v1445 = vsel %vm441, %v644, %v975
        %v1446 = vsel %vm441, %v645, %v977
        %v1447 = vsel %vm441, %v646, %v979
        %v1448 = vsel %vm441, %v647, %v981
        %v1449 = vsel %vm441, %v648, %v983
        %v1450 = vsel %vm441, %v649, %v985
        %v1451 = vsel %vm441, %v650, %v987
        %v1452 = vsel %vm441, %v651, %v989
        %v1453 = vsel %vm441, %v652, %v991
        %v1454 = vsel %vm441, %v653, %v993
        %v1455 = vsel %vm441, %v654, %v995
        %v1456 = vsel %vm441, %v655, %v997
        %v1457 = vsel %vm441, %v656, %v999
        %v1458 = vsel %vm441, %v657, %v1001
        %v1459 = vsel %vm441, %v658, %v1003
        %v1460 = vsel %vm441, %v659, %v1005
        %v1461 = vsel %vm441, %v660, %v1007
        %v1462 = vsel %vm441, %v661, %v1009
        %v1463 = vsel %vm441, %v662, %v1011
        %v1464 = vsel %vm441, %v663, %v1013
        %v1465 = vsel %vm441, %v664, %v1015
        %v1466 = vsel %vm441, %v665, %v1017
        %v1467 = vsel %vm441, %v666, %v1019
        %v1468 = vsel %vm441, %v699, %v1085
        %v1469 = vsel %vm441, %v700, %v1087
        %v1470 = vsel %vm441, %v701, %v1089
        %v1471 = vsel %vm441, %v702, %v1091
        %v1472 = vsel %vm441, %v703, %v1093
        %v1473 = vsel %vm441, %v704, %v1095
        %v1474 = vsel %vm441, %v705, %v1097
        %v1475 = vsel %vm441, %v706, %v1099
        %v1476 = vsel %vm441, %v707, %v1101
        %v1477 = vsel %vm441, %v708, %v1103
        %v1478 = vsel %vm441, %v709, %v1105
        %v1479 = vsel %vm441, %v710, %v1107
        %v1480 = vsel %vm441, %v711, %v1109
        %v1481 = vsel %vm441, %v712, %v1111
        %v1482 = vsel %vm441, %v713, %v1113
        %v1483 = vsel %vm441, %v714, %v1115
        %v1484 = vsel %vm441, %v715, %v1117
        %v1485 = vsel %vm441, %v716, %v1119
        %v1486 = vsel %vm441, %v717, %v1121
        %v1487 = vsel %vm441, %v718, %v1123
        %v1488 = vsel %vm441, %v719, %v1125
        %v1489 = vsel %vm441, %v720, %v1127
        %v1490 = vsel %vm441, %v721, %v1129
        %v1491 = vsel %vm441, %v722, %v1131
        %v1492 = vsel %vm441, %v723, %v1133
        %v1493 = vsel %vm441, %v724, %v1135
        %v1494 = vsel %vm441, %v725, %v1137
        %v1495 = vsel %vm441, %v726, %v1139
        %v1496 = vsel %vm441, %v727, %v1141
        %v1497 = vsel %vm441, %v728, %v1143
        %v1498 = vsel %vm441, %v729, %v1145
        %v1499 = vsel %vm441, %v730, %v1147
        %v1500 = vsel %vm441, %v763, %v1213
        %v1501 = vsel %vm441, %v764, %v1215
        %v1502 = vsel %vm441, %v765, %v1217
        %v1503 = vsel %vm441, %v766, %v1219
        %v1504 = vsel %vm441, %v767, %v1221
        %v1505 = vsel %vm441, %v768, %v1223
        %v1506 = vsel %vm441, %v769, %v1225
        %v1507 = vsel %vm441, %v770, %v1227
        %v1508 = vsel %vm441, %v771, %v1229
        %v1509 = vsel %vm441, %v772, %v1231
        %v1510 = vsel %vm441, %v773, %v1233
        %v1511 = vsel %vm441, %v774, %v1235
        %v1512 = vsel %vm441, %v775, %v1237
        %v1513 = vsel %vm441, %v776, %v1239
        %v1514 = vsel %vm441, %v777, %v1241
        %v1515 = vsel %vm441, %v778, %v1243
        %v1516 = vsel %vm441, %v779, %v1245
        %v1517 = vsel %vm441, %v780, %v1247
        %v1518 = vsel %vm441, %v781, %v1249
        %v1519 = vsel %vm441, %v782, %v1251
        %v1520 = vsel %vm441, %v783, %v1253
        %v1521 = vsel %vm441, %v784, %v1255
        %v1522 = vsel %vm441, %v785, %v1257
        %v1523 = vsel %vm441, %v786, %v1259
        %v1524 = vsel %vm441, %v787, %v1261
        %v1525 = vsel %vm441, %v788, %v1263
        %v1526 = vsel %vm441, %v789, %v1265
        %v1527 = vsel %vm441, %v790, %v1267
        %v1528 = vsel %vm441, %v791, %v1269
        %v1529 = vsel %vm441, %v792, %v1271
        %v1530 = vsel %vm441, %v793, %v1273
        %v1531 = vsel %vm441, %v794, %v1275
        %v1532 = vsel %vm441, %v828, %v1341
        %v1533 = vsel %vm441, %v829, %v1343
        %v1534 = vsel %vm441, %v830, %v1345
        %v1535 = vsel %vm441, %v831, %v1347
        %v1536 = vsel %vm441, %v832, %v1349
        %v1537 = vsel %vm441, %v833, %v1351
        %v1538 = vsel %vm441, %v834, %v1353
        %v1539 = vsel %vm441, %v835, %v1355
        %v1540 = vsel %vm441, %v836, %v1357
        %v1541 = vsel %vm441, %v837, %v1359
        %v1542 = vsel %vm441, %v838, %v1361
        %v1543 = vsel %vm441, %v839, %v1363
        %v1544 = vsel %vm441, %v840, %v1365
        %v1545 = vsel %vm441, %v841, %v1367
        %v1546 = vsel %vm441, %v842, %v1369
        %v1547 = vsel %vm441, %v843, %v1371
        %v1548 = vsel %vm441, %v844, %v1373
        %v1549 = vsel %vm441, %v845, %v1375
        %v1550 = vsel %vm441, %v846, %v1377
        %v1551 = vsel %vm441, %v847, %v1379
        %v1552 = vsel %vm441, %v848, %v1381
        %v1553 = vsel %vm441, %v849, %v1383
        %v1554 = vsel %vm441, %v850, %v1385
        %v1555 = vsel %vm441, %v851, %v1387
        %v1556 = vsel %vm441, %v852, %v1389
        %v1557 = vsel %vm441, %v853, %v1391
        %v1558 = vsel %vm441, %v854, %v1393
        %v1559 = vsel %vm441, %v855, %v1395
        %v1560 = vsel %vm441, %v856, %v1397
        %v1561 = vsel %vm441, %v857, %v1399
        %v1562 = vsel %vm441, %v858, %v1401
        %v1563 = vsel %vm441, %v859, %v1403
        %v1565 = vlaneseq
        %v1566 = vshrl.u32 %v1565, 7
        %v1567 = vsub.s32 0, %v1566
        %v1568 = vrot.slane %v601, %v1567
        %v1571 = vsel %vm441, %v892, 0
        %v1574 = vsel %vm441, %v893, 0
        %v1577 = vsel %vm441, %v894, 0
        %v1580 = vsel %vm441, %v895, 0
        %v1583 = vsel %vm441, %v896, 0
        %v1586 = vsel %vm441, %v897, 0
        %v1589 = vsel %vm441, %v898, 0
        %v1592 = vsel %vm441, %v899, 0
        %v1595 = vsel %vm441, %v900, 0
        %v1598 = vsel %vm441, %v901, 0
        %v1601 = vsel %vm441, %v902, 0
        %v1604 = vsel %vm441, %v903, 0
        %v1607 = vsel %vm441, %v904, 0
        %v1610 = vsel %vm441, %v905, 0
        %v1613 = vsel %vm441, %v906, 0
        %v1616 = vsel %vm441, %v907, 0
        %v1619 = vsel %vm441, %v908, 0
        %v1622 = vsel %vm441, %v909, 0
        %v1625 = vsel %vm441, %v910, 0
        %v1628 = vsel %vm441, %v911, 0
        %v1631 = vsel %vm441, %v912, 0
        %v1634 = vsel %vm441, %v913, 0
        %v1637 = vsel %vm441, %v914, 0
        %v1640 = vsel %vm441, %v915, 0
        %v1643 = vsel %vm441, %v916, 0
        %v1646 = vsel %vm441, %v917, 0
        %v1649 = vsel %vm441, %v918, 0
        %v1652 = vsel %vm441, %v919, 0
        %v1655 = vsel %vm441, %v920, 0
        %v1658 = vsel %vm441, %v921, 0
        %v1661 = vsel %vm441, %v922, 0
        %v1664 = vsel %vm441, %v923, 0
        %1666 = vmatprep.subr.mxu0 0.0
        %1667 = vmatpush1.msra.mxu0 %v529
        %1668 = vmatprep.subr.mxu0 0.0
        %1669 = vmatpush1.msra.mxu0 %v530
        %1670 = vmatprep.subr.mxu0 0.0
        %1671 = vmatpush1.msra.mxu0 %v531
        %1672 = vmatprep.subr.mxu0 0.0
        %1673 = vmatpush1.msra.mxu0 %v532
        %1674 = vmatprep.subr.mxu0 0.0
        %1675 = vmatpush1.msra.mxu0 %v533
        %1676 = vmatprep.subr.mxu0 0.0
        %1677 = vmatpush1.msra.mxu0 %v534
        %1678 = vmatprep.subr.mxu0 0.0
        %1679 = vmatpush1.msra.mxu0 %v535
        %1680 = vmatprep.subr.mxu0 0.0
        %1681 = vmatpush1.msra.mxu0 %v536
        %1682 = vmatprep.subr.mxu0 0.0
        %1683 = vmatpush1.msra.mxu0 %v537
        %1684 = vmatprep.subr.mxu0 0.0
        %1685 = vmatpush1.msra.mxu0 %v538
        %1686 = vmatprep.subr.mxu0 0.0
        %1687 = vmatpush1.msra.mxu0 %v539
        %1688 = vmatprep.subr.mxu0 0.0
        %1689 = vmatpush1.msra.mxu0 %v540
        %1690 = vmatprep.subr.mxu0 0.0
        %1691 = vmatpush1.msra.mxu0 %v541
        %1692 = vmatprep.subr.mxu0 0.0
        %1693 = vmatpush1.msra.mxu0 %v542
        %1694 = vmatprep.subr.mxu0 0.0
        %1695 = vmatpush1.msra.mxu0 %v543
        %1696 = vmatprep.subr.mxu0 0.0
        %1697 = vmatpush1.msra.mxu0 %v544
        %1698 = vmatprep.subr.mxu0 0.0
        %1699 = vmatpush1.msra.mxu0 %v545
        %1700 = vmatprep.subr.mxu0 0.0
        %1701 = vmatpush1.msra.mxu0 %v546
        %1702 = vmatprep.subr.mxu0 0.0
        %1703 = vmatpush1.msra.mxu0 %v547
        %1704 = vmatprep.subr.mxu0 0.0
        %1705 = vmatpush1.msra.mxu0 %v548
        %1706 = vmatprep.subr.mxu0 0.0
        %1707 = vmatpush1.msra.mxu0 %v549
        %1708 = vmatprep.subr.mxu0 0.0
        %1709 = vmatpush1.msra.mxu0 %v550
        %1710 = vmatprep.subr.mxu0 0.0
        %1711 = vmatpush1.msra.mxu0 %v551
        %1712 = vmatprep.subr.mxu0 0.0
        %1713 = vmatpush1.msra.mxu0 %v552
        %1714 = vmatprep.subr.mxu0 0.0
        %1715 = vmatpush1.msra.mxu0 %v553
        %1716 = vmatprep.subr.mxu0 0.0
        %1717 = vmatpush1.msra.mxu0 %v554
        %1718 = vmatprep.subr.mxu0 0.0
        %1719 = vmatpush1.msra.mxu0 %v555
        %1720 = vmatprep.subr.mxu0 0.0
        %1721 = vmatpush1.msra.mxu0 %v556
        %1722 = vmatprep.subr.mxu0 0.0
        %1723 = vmatpush1.msra.mxu0 %v557
        %1724 = vmatprep.subr.mxu0 0.0
        %1725 = vmatpush1.msra.mxu0 %v558
        %1726 = vmatprep.subr.mxu0 0.0
        %1727 = vmatpush1.msra.mxu0 %v559
        %1728 = vmatprep.subr.mxu0 0.0
        %1729 = vmatpush1.msra.mxu0 %v560
        %1730 = vmatprep.mubr.f32.mxu0 %v1468
        %1731 = vmatmul.mubr.f32.gmra.mrb[0].mxu0 %v1436
        %v1732 = vpop.f32.mrb[0].mxu0
        %v1733 = vadd.f32 %v1568, %v1732
        %v1734 = vpop.f32.mrb[0].mxu0
        %1735 = vmatprep.mubr.f32.mxu0 %v1469
        %1736 = vmatmul.mubr.f32.gmra.mrb[0].mxu0 %v1437
        %v1737 = vpop.f32.mrb[0].mxu0
        %v1738 = vadd.f32 %v1568, %v1737
        %v1739 = vpop.f32.mrb[0].mxu0
        %1740 = vmatprep.mubr.f32.mxu0 %v1470
        %1741 = vmatmul.mubr.f32.gmra.mrb[0].mxu0 %v1438
        %v1742 = vpop.f32.mrb[0].mxu0
        %v1743 = vadd.f32 %v1568, %v1742
        %v1744 = vpop.f32.mrb[0].mxu0
        %1745 = vmatprep.mubr.f32.mxu0 %v1471
        %1746 = vmatmul.mubr.f32.gmra.mrb[0].mxu0 %v1439
        %v1747 = vpop.f32.mrb[0].mxu0
        %v1748 = vadd.f32 %v1568, %v1747
        %v1749 = vpop.f32.mrb[0].mxu0
        %1750 = vmatprep.mubr.f32.mxu0 %v1472
        %1751 = vmatmul.mubr.f32.gmra.mrb[0].mxu0 %v1440
        %v1752 = vpop.f32.mrb[0].mxu0
        %v1753 = vadd.f32 %v1568, %v1752
        %v1754 = vpop.f32.mrb[0].mxu0
        %1755 = vmatprep.mubr.f32.mxu0 %v1473
        %1756 = vmatmul.mubr.f32.gmra.mrb[0].mxu0 %v1441
        %v1757 = vpop.f32.mrb[0].mxu0
        %v1758 = vadd.f32 %v1568, %v1757
        %v1759 = vpop.f32.mrb[0].mxu0
        %1760 = vmatprep.mubr.f32.mxu0 %v1474
        %1761 = vmatmul.mubr.f32.gmra.mrb[0].mxu0 %v1442
        %v1762 = vpop.f32.mrb[0].mxu0
        %v1763 = vadd.f32 %v1568, %v1762
        %v1764 = vpop.f32.mrb[0].mxu0
        %1765 = vmatprep.mubr.f32.mxu0 %v1475
        %1766 = vmatmul.mubr.f32.gmra.mrb[0].mxu0 %v1443
        %v1767 = vpop.f32.mrb[0].mxu0
        %v1768 = vadd.f32 %v1568, %v1767
        %v1769 = vpop.f32.mrb[0].mxu0
        %1770 = vmatprep.mubr.f32.mxu0 %v1476
        %1771 = vmatmul.mubr.f32.gmra.mrb[0].mxu0 %v1444
        %v1772 = vpop.f32.mrb[0].mxu0
        %v1773 = vadd.f32 %v1568, %v1772
        %v1774 = vpop.f32.mrb[0].mxu0
        %1775 = vmatprep.mubr.f32.mxu0 %v1477
        %1776 = vmatmul.mubr.f32.gmra.mrb[0].mxu0 %v1445
        %v1777 = vpop.f32.mrb[0].mxu0
        %v1778 = vadd.f32 %v1568, %v1777
        %v1779 = vpop.f32.mrb[0].mxu0
        %1780 = vmatprep.mubr.f32.mxu0 %v1478
        %1781 = vmatmul.mubr.f32.gmra.mrb[0].mxu0 %v1446
        %v1782 = vpop.f32.mrb[0].mxu0
        %v1783 = vadd.f32 %v1568, %v1782
        %v1784 = vpop.f32.mrb[0].mxu0
        %1785 = vmatprep.mubr.f32.mxu0 %v1479
        %1786 = vmatmul.mubr.f32.gmra.mrb[0].mxu0 %v1447
        %v1787 = vpop.f32.mrb[0].mxu0
        %v1788 = vadd.f32 %v1568, %v1787
        %v1789 = vpop.f32.mrb[0].mxu0
        %1790 = vmatprep.mubr.f32.mxu0 %v1480
        %1791 = vmatmul.mubr.f32.gmra.mrb[0].mxu0 %v1448
        %v1792 = vpop.f32.mrb[0].mxu0
        %v1793 = vadd.f32 %v1568, %v1792
        %v1794 = vpop.f32.mrb[0].mxu0
        %1795 = vmatprep.mubr.f32.mxu0 %v1481
        %1796 = vmatmul.mubr.f32.gmra.mrb[0].mxu0 %v1449
        %v1797 = vpop.f32.mrb[0].mxu0
        %v1798 = vadd.f32 %v1568, %v1797
        %v1799 = vpop.f32.mrb[0].mxu0
        %1800 = vmatprep.mubr.f32.mxu0 %v1482
        %1801 = vmatmul.mubr.f32.gmra.mrb[0].mxu0 %v1450
        %v1802 = vpop.f32.mrb[0].mxu0
        %v1803 = vadd.f32 %v1568, %v1802
        %v1804 = vpop.f32.mrb[0].mxu0
        %1805 = vmatprep.mubr.f32.mxu0 %v1483
        %1806 = vmatmul.mubr.f32.gmra.mrb[0].mxu0 %v1451
        %v1807 = vpop.f32.mrb[0].mxu0
        %v1808 = vadd.f32 %v1568, %v1807
        %v1809 = vpop.f32.mrb[0].mxu0
        %1810 = vmatprep.mubr.f32.mxu0 %v1484
        %1811 = vmatmul.mubr.f32.gmra.mrb[0].mxu0 %v1452
        %v1812 = vpop.f32.mrb[0].mxu0
        %v1813 = vadd.f32 %v1568, %v1812
        %v1814 = vpop.f32.mrb[0].mxu0
        %1815 = vmatprep.mubr.f32.mxu0 %v1485
        %1816 = vmatmul.mubr.f32.gmra.mrb[0].mxu0 %v1453
        %v1817 = vpop.f32.mrb[0].mxu0
        %v1818 = vadd.f32 %v1568, %v1817
        %v1819 = vpop.f32.mrb[0].mxu0
        %1820 = vmatprep.mubr.f32.mxu0 %v1486
        %1821 = vmatmul.mubr.f32.gmra.mrb[0].mxu0 %v1454
        %v1822 = vpop.f32.mrb[0].mxu0
        %v1823 = vadd.f32 %v1568, %v1822
        %v1824 = vpop.f32.mrb[0].mxu0
        %1825 = vmatprep.mubr.f32.mxu0 %v1487
        %1826 = vmatmul.mubr.f32.gmra.mrb[0].mxu0 %v1455
        %v1827 = vpop.f32.mrb[0].mxu0
        %v1828 = vadd.f32 %v1568, %v1827
        %v1829 = vpop.f32.mrb[0].mxu0
        %1830 = vmatprep.mubr.f32.mxu0 %v1488
        %1831 = vmatmul.mubr.f32.gmra.mrb[0].mxu0 %v1456
        %v1832 = vpop.f32.mrb[0].mxu0
        %v1833 = vadd.f32 %v1568, %v1832
        %v1834 = vpop.f32.mrb[0].mxu0
        %1835 = vmatprep.mubr.f32.mxu0 %v1489
        %1836 = vmatmul.mubr.f32.gmra.mrb[0].mxu0 %v1457
        %v1837 = vpop.f32.mrb[0].mxu0
        %v1838 = vadd.f32 %v1568, %v1837
        %v1839 = vpop.f32.mrb[0].mxu0
        %1840 = vmatprep.mubr.f32.mxu0 %v1490
        %1841 = vmatmul.mubr.f32.gmra.mrb[0].mxu0 %v1458
        %v1842 = vpop.f32.mrb[0].mxu0
        %v1843 = vadd.f32 %v1568, %v1842
        %v1844 = vpop.f32.mrb[0].mxu0
        %1845 = vmatprep.mubr.f32.mxu0 %v1491
        %1846 = vmatmul.mubr.f32.gmra.mrb[0].mxu0 %v1459
        %v1847 = vpop.f32.mrb[0].mxu0
        %v1848 = vadd.f32 %v1568, %v1847
        %v1849 = vpop.f32.mrb[0].mxu0
        %1850 = vmatprep.mubr.f32.mxu0 %v1492
        %1851 = vmatmul.mubr.f32.gmra.mrb[0].mxu0 %v1460
        %v1852 = vpop.f32.mrb[0].mxu0
        %v1853 = vadd.f32 %v1568, %v1852
        %v1854 = vpop.f32.mrb[0].mxu0
        %1855 = vmatprep.mubr.f32.mxu0 %v1493
        %1856 = vmatmul.mubr.f32.gmra.mrb[0].mxu0 %v1461
        %v1857 = vpop.f32.mrb[0].mxu0
        %v1858 = vadd.f32 %v1568, %v1857
        %v1859 = vpop.f32.mrb[0].mxu0
        %1860 = vmatprep.mubr.f32.mxu0 %v1494
        %1861 = vmatmul.mubr.f32.gmra.mrb[0].mxu0 %v1462
        %v1862 = vpop.f32.mrb[0].mxu0
        %v1863 = vadd.f32 %v1568, %v1862
        %v1864 = vpop.f32.mrb[0].mxu0
        %1865 = vmatprep.mubr.f32.mxu0 %v1495
        %1866 = vmatmul.mubr.f32.gmra.mrb[0].mxu0 %v1463
        %v1867 = vpop.f32.mrb[0].mxu0
        %v1868 = vadd.f32 %v1568, %v1867
        %v1869 = vpop.f32.mrb[0].mxu0
        %1870 = vmatprep.mubr.f32.mxu0 %v1496
        %1871 = vmatmul.mubr.f32.gmra.mrb[0].mxu0 %v1464
        %v1872 = vpop.f32.mrb[0].mxu0
        %v1873 = vadd.f32 %v1568, %v1872
        %v1874 = vpop.f32.mrb[0].mxu0
        %1875 = vmatprep.mubr.f32.mxu0 %v1497
        %1876 = vmatmul.mubr.f32.gmra.mrb[0].mxu0 %v1465
        %v1877 = vpop.f32.mrb[0].mxu0
        %v1878 = vadd.f32 %v1568, %v1877
        %v1879 = vpop.f32.mrb[0].mxu0
        %1880 = vmatprep.mubr.f32.mxu0 %v1498
        %1881 = vmatmul.mubr.f32.gmra.mrb[0].mxu0 %v1466
        %v1882 = vpop.f32.mrb[0].mxu0
        %v1883 = vadd.f32 %v1568, %v1882
        %v1884 = vpop.f32.mrb[0].mxu0
        %1885 = vmatprep.mubr.f32.mxu0 %v1499
        %1886 = vmatmul.mubr.f32.gmra.mrb[0].mxu0 %v1467
        %v1887 = vpop.f32.mrb[0].mxu0
        %v1888 = vadd.f32 %v1568, %v1887
        %v1889 = vpop.f32.mrb[0].mxu0
        %1890 = vdwg.mxu0
        %1891 = vmatprep.subr.mxu0 0.0
        %1892 = vmatpush1.msra.mxu0 %v561
        %1893 = vmatprep.subr.mxu0 0.0
        %1894 = vmatpush1.msra.mxu0 %v562
        %1895 = vmatprep.subr.mxu0 0.0
        %1896 = vmatpush1.msra.mxu0 %v563
        %1897 = vmatprep.subr.mxu0 0.0
        %1898 = vmatpush1.msra.mxu0 %v564
        %1899 = vmatprep.subr.mxu0 0.0
        %1900 = vmatpush1.msra.mxu0 %v565
        %1901 = vmatprep.subr.mxu0 0.0
        %1902 = vmatpush1.msra.mxu0 %v566
        %1903 = vmatprep.subr.mxu0 0.0
        %1904 = vmatpush1.msra.mxu0 %v567
        %1905 = vmatprep.subr.mxu0 0.0
        %1906 = vmatpush1.msra.mxu0 %v568
        %1907 = vmatprep.subr.mxu0 0.0
        %1908 = vmatpush1.msra.mxu0 %v569
        %1909 = vmatprep.subr.mxu0 0.0
        %1910 = vmatpush1.msra.mxu0 %v570
        %1911 = vmatprep.subr.mxu0 0.0
        %1912 = vmatpush1.msra.mxu0 %v571
        %1913 = vmatprep.subr.mxu0 0.0
        %1914 = vmatpush1.msra.mxu0 %v572
        %1915 = vmatprep.subr.mxu0 0.0
        %1916 = vmatpush1.msra.mxu0 %v573
        %1917 = vmatprep.subr.mxu0 0.0
        %1918 = vmatpush1.msra.mxu0 %v574
        %1919 = vmatprep.subr.mxu0 0.0
        %1920 = vmatpush1.msra.mxu0 %v575
        %1921 = vmatprep.subr.mxu0 0.0
        %1922 = vmatpush1.msra.mxu0 %v576
        %1923 = vmatprep.subr.mxu0 0.0
        %1924 = vmatpush1.msra.mxu0 %v577
        %1925 = vmatprep.subr.mxu0 0.0
        %1926 = vmatpush1.msra.mxu0 %v578
        %1927 = vmatprep.subr.mxu0 0.0
        %1928 = vmatpush1.msra.mxu0 %v579
        %1929 = vmatprep.subr.mxu0 0.0
        %1930 = vmatpush1.msra.mxu0 %v580
        %1931 = vmatprep.subr.mxu0 0.0
        %1932 = vmatpush1.msra.mxu0 %v581
        %1933 = vmatprep.subr.mxu0 0.0
        %1934 = vmatpush1.msra.mxu0 %v582
        %1935 = vmatprep.subr.mxu0 0.0
        %1936 = vmatpush1.msra.mxu0 %v583
        %1937 = vmatprep.subr.mxu0 0.0
        %1938 = vmatpush1.msra.mxu0 %v584
        %1939 = vmatprep.subr.mxu0 0.0
        %1940 = vmatpush1.msra.mxu0 %v585
        %1941 = vmatprep.subr.mxu0 0.0
        %1942 = vmatpush1.msra.mxu0 %v586
        %1943 = vmatprep.subr.mxu0 0.0
        %1944 = vmatpush1.msra.mxu0 %v587
        %1945 = vmatprep.subr.mxu0 0.0
        %1946 = vmatpush1.msra.mxu0 %v588
        %1947 = vmatprep.subr.mxu0 0.0
        %1948 = vmatpush1.msra.mxu0 %v589
        %1949 = vmatprep.subr.mxu0 0.0
        %1950 = vmatpush1.msra.mxu0 %v590
        %1951 = vmatprep.subr.mxu0 0.0
        %1952 = vmatpush1.msra.mxu0 %v591
        %1953 = vmatprep.subr.mxu0 0.0
        %1954 = vmatpush1.msra.mxu0 %v592
        %1955 = vmatprep.mubr.f32.mxu0 %v1532
        %1956 = vmatmul.mubr.f32.gmra.mrb[0].mxu0 %v1500
        %v1957 = vpop.f32.mrb[0].mxu0
        %v1958 = vadd.f32 %v1733, %v1957
        %v1959 = vpop.f32.mrb[0].mxu0
        %1960 = vmatprep.mubr.f32.mxu0 %v1533
        %1961 = vmatmul.mubr.f32.gmra.mrb[0].mxu0 %v1501
        %v1962 = vpop.f32.mrb[0].mxu0
        %v1963 = vadd.f32 %v1738, %v1962
        %v1964 = vpop.f32.mrb[0].mxu0
        %1965 = vmatprep.mubr.f32.mxu0 %v1534
        %1966 = vmatmul.mubr.f32.gmra.mrb[0].mxu0 %v1502
        %v1967 = vpop.f32.mrb[0].mxu0
        %v1968 = vadd.f32 %v1743, %v1967
        %v1969 = vpop.f32.mrb[0].mxu0
        %1970 = vmatprep.mubr.f32.mxu0 %v1535
        %1971 = vmatmul.mubr.f32.gmra.mrb[0].mxu0 %v1503
        %v1972 = vpop.f32.mrb[0].mxu0
        %v1973 = vadd.f32 %v1748, %v1972
        %v1974 = vpop.f32.mrb[0].mxu0
        %1975 = vmatprep.mubr.f32.mxu0 %v1536
        %1976 = vmatmul.mubr.f32.gmra.mrb[0].mxu0 %v1504
        %v1977 = vpop.f32.mrb[0].mxu0
        %v1978 = vadd.f32 %v1753, %v1977
        %v1979 = vpop.f32.mrb[0].mxu0
        %1980 = vmatprep.mubr.f32.mxu0 %v1537
        %1981 = vmatmul.mubr.f32.gmra.mrb[0].mxu0 %v1505
        %v1982 = vpop.f32.mrb[0].mxu0
        %v1983 = vadd.f32 %v1758, %v1982
        %v1984 = vpop.f32.mrb[0].mxu0
        %1985 = vmatprep.mubr.f32.mxu0 %v1538
        %1986 = vmatmul.mubr.f32.gmra.mrb[0].mxu0 %v1506
        %v1987 = vpop.f32.mrb[0].mxu0
        %v1988 = vadd.f32 %v1763, %v1987
        %v1989 = vpop.f32.mrb[0].mxu0
        %1990 = vmatprep.mubr.f32.mxu0 %v1539
        %1991 = vmatmul.mubr.f32.gmra.mrb[0].mxu0 %v1507
        %v1992 = vpop.f32.mrb[0].mxu0
        %v1993 = vadd.f32 %v1768, %v1992
        %v1994 = vpop.f32.mrb[0].mxu0
        %1995 = vmatprep.mubr.f32.mxu0 %v1540
        %1996 = vmatmul.mubr.f32.gmra.mrb[0].mxu0 %v1508
        %v1997 = vpop.f32.mrb[0].mxu0
        %v1998 = vadd.f32 %v1773, %v1997
        %v1999 = vpop.f32.mrb[0].mxu0
        %2000 = vmatprep.mubr.f32.mxu0 %v1541
        %2001 = vmatmul.mubr.f32.gmra.mrb[0].mxu0 %v1509
        %v2002 = vpop.f32.mrb[0].mxu0
        %v2003 = vadd.f32 %v1778, %v2002
        %v2004 = vpop.f32.mrb[0].mxu0
        %2005 = vmatprep.mubr.f32.mxu0 %v1542
        %2006 = vmatmul.mubr.f32.gmra.mrb[0].mxu0 %v1510
        %v2007 = vpop.f32.mrb[0].mxu0
        %v2008 = vadd.f32 %v1783, %v2007
        %v2009 = vpop.f32.mrb[0].mxu0
        %2010 = vmatprep.mubr.f32.mxu0 %v1543
        %2011 = vmatmul.mubr.f32.gmra.mrb[0].mxu0 %v1511
        %v2012 = vpop.f32.mrb[0].mxu0
        %v2013 = vadd.f32 %v1788, %v2012
        %v2014 = vpop.f32.mrb[0].mxu0
        %2015 = vmatprep.mubr.f32.mxu0 %v1544
        %2016 = vmatmul.mubr.f32.gmra.mrb[0].mxu0 %v1512
        %v2017 = vpop.f32.mrb[0].mxu0
        %v2018 = vadd.f32 %v1793, %v2017
        %v2019 = vpop.f32.mrb[0].mxu0
        %2020 = vmatprep.mubr.f32.mxu0 %v1545
        %2021 = vmatmul.mubr.f32.gmra.mrb[0].mxu0 %v1513
        %v2022 = vpop.f32.mrb[0].mxu0
        %v2023 = vadd.f32 %v1798, %v2022
        %v2024 = vpop.f32.mrb[0].mxu0
        %2025 = vmatprep.mubr.f32.mxu0 %v1546
        %2026 = vmatmul.mubr.f32.gmra.mrb[0].mxu0 %v1514
        %v2027 = vpop.f32.mrb[0].mxu0
        %v2028 = vadd.f32 %v1803, %v2027
        %v2029 = vpop.f32.mrb[0].mxu0
        %2030 = vmatprep.mubr.f32.mxu0 %v1547
        %2031 = vmatmul.mubr.f32.gmra.mrb[0].mxu0 %v1515
        %v2032 = vpop.f32.mrb[0].mxu0
        %v2033 = vadd.f32 %v1808, %v2032
        %v2034 = vpop.f32.mrb[0].mxu0
        %2035 = vmatprep.mubr.f32.mxu0 %v1548
        %2036 = vmatmul.mubr.f32.gmra.mrb[0].mxu0 %v1516
        %v2037 = vpop.f32.mrb[0].mxu0
        %v2038 = vadd.f32 %v1813, %v2037
        %v2039 = vpop.f32.mrb[0].mxu0
        %2040 = vmatprep.mubr.f32.mxu0 %v1549
        %2041 = vmatmul.mubr.f32.gmra.mrb[0].mxu0 %v1517
        %v2042 = vpop.f32.mrb[0].mxu0
        %v2043 = vadd.f32 %v1818, %v2042
        %v2044 = vpop.f32.mrb[0].mxu0
        %2045 = vmatprep.mubr.f32.mxu0 %v1550
        %2046 = vmatmul.mubr.f32.gmra.mrb[0].mxu0 %v1518
        %v2047 = vpop.f32.mrb[0].mxu0
        %v2048 = vadd.f32 %v1823, %v2047
        %v2049 = vpop.f32.mrb[0].mxu0
        %2050 = vmatprep.mubr.f32.mxu0 %v1551
        %2051 = vmatmul.mubr.f32.gmra.mrb[0].mxu0 %v1519
        %v2052 = vpop.f32.mrb[0].mxu0
        %v2053 = vadd.f32 %v1828, %v2052
        %v2054 = vpop.f32.mrb[0].mxu0
        %2055 = vmatprep.mubr.f32.mxu0 %v1552
        %2056 = vmatmul.mubr.f32.gmra.mrb[0].mxu0 %v1520
        %v2057 = vpop.f32.mrb[0].mxu0
        %v2058 = vadd.f32 %v1833, %v2057
        %v2059 = vpop.f32.mrb[0].mxu0
        %2060 = vmatprep.mubr.f32.mxu0 %v1553
        %2061 = vmatmul.mubr.f32.gmra.mrb[0].mxu0 %v1521
        %v2062 = vpop.f32.mrb[0].mxu0
        %v2063 = vadd.f32 %v1838, %v2062
        %v2064 = vpop.f32.mrb[0].mxu0
        %2065 = vmatprep.mubr.f32.mxu0 %v1554
        %2066 = vmatmul.mubr.f32.gmra.mrb[0].mxu0 %v1522
        %v2067 = vpop.f32.mrb[0].mxu0
        %v2068 = vadd.f32 %v1843, %v2067
        %v2069 = vpop.f32.mrb[0].mxu0
        %2070 = vmatprep.mubr.f32.mxu0 %v1555
        %2071 = vmatmul.mubr.f32.gmra.mrb[0].mxu0 %v1523
        %v2072 = vpop.f32.mrb[0].mxu0
        %v2073 = vadd.f32 %v1848, %v2072
        %v2074 = vpop.f32.mrb[0].mxu0
        %2075 = vmatprep.mubr.f32.mxu0 %v1556
        %2076 = vmatmul.mubr.f32.gmra.mrb[0].mxu0 %v1524
        %v2077 = vpop.f32.mrb[0].mxu0
        %v2078 = vadd.f32 %v1853, %v2077
        %v2079 = vpop.f32.mrb[0].mxu0
        %2080 = vmatprep.mubr.f32.mxu0 %v1557
        %2081 = vmatmul.mubr.f32.gmra.mrb[0].mxu0 %v1525
        %v2082 = vpop.f32.mrb[0].mxu0
        %v2083 = vadd.f32 %v1858, %v2082
        %v2084 = vpop.f32.mrb[0].mxu0
        %2085 = vmatprep.mubr.f32.mxu0 %v1558
        %2086 = vmatmul.mubr.f32.gmra.mrb[0].mxu0 %v1526
        %v2087 = vpop.f32.mrb[0].mxu0
        %v2088 = vadd.f32 %v1863, %v2087
        %v2089 = vpop.f32.mrb[0].mxu0
        %2090 = vmatprep.mubr.f32.mxu0 %v1559
        %2091 = vmatmul.mubr.f32.gmra.mrb[0].mxu0 %v1527
        %v2092 = vpop.f32.mrb[0].mxu0
        %v2093 = vadd.f32 %v1868, %v2092
        %v2094 = vpop.f32.mrb[0].mxu0
        %2095 = vmatprep.mubr.f32.mxu0 %v1560
        %2096 = vmatmul.mubr.f32.gmra.mrb[0].mxu0 %v1528
        %v2097 = vpop.f32.mrb[0].mxu0
        %v2098 = vadd.f32 %v1873, %v2097
        %v2099 = vpop.f32.mrb[0].mxu0
        %2100 = vmatprep.mubr.f32.mxu0 %v1561
        %2101 = vmatmul.mubr.f32.gmra.mrb[0].mxu0 %v1529
        %v2102 = vpop.f32.mrb[0].mxu0
        %v2103 = vadd.f32 %v1878, %v2102
        %v2104 = vpop.f32.mrb[0].mxu0
        %2105 = vmatprep.mubr.f32.mxu0 %v1562
        %2106 = vmatmul.mubr.f32.gmra.mrb[0].mxu0 %v1530
        %v2107 = vpop.f32.mrb[0].mxu0
        %v2108 = vadd.f32 %v1883, %v2107
        %v2109 = vpop.f32.mrb[0].mxu0
        %2110 = vmatprep.mubr.f32.mxu0 %v1563
        %2111 = vmatmul.mubr.f32.gmra.mrb[0].mxu0 %v1531
        %v2112 = vpop.f32.mrb[0].mxu0
        %v2113 = vadd.f32 %v1888, %v2112
        %v2114 = vpop.f32.mrb[0].mxu0
        %2115 = vdwg.mxu0
        %2116 = vmatprep.subr.mxu0 0.0
        %2117 = vmatpush1.msra.mxu0 %v593
        %2118 = vmatprep.subr.mxu0 0.0
        %2119 = vmatpush1.msra.mxu0 %v594
        %2120 = vmatprep.subr.mxu0 0.0
        %2121 = vmatpush1.msra.mxu0 %v595
        %2122 = vmatprep.subr.mxu0 0.0
        %2123 = vmatpush1.msra.mxu0 %v596
        %2124 = vmatprep.subr.mxu0 0.0
        %2125 = vmatpush1.msra.mxu0 %v597
        %2126 = vmatprep.subr.mxu0 0.0
        %2127 = vmatpush1.msra.mxu0 %v598
        %2128 = vmatprep.subr.mxu0 0.0
        %2129 = vmatpush1.msra.mxu0 %v599
        %2130 = vmatprep.subr.mxu0 0.0
        %2131 = vmatpush1.msra.mxu0 %v600
        %2132 = vmatprep.subr.mxu0 0.0
        %2133 = vmatpush1.msra.mxu0 0.0
        %2134 = vmatprep.subr.mxu0 0.0
        %2135 = vmatpush1.msra.mxu0 0.0
        %2136 = vmatprep.subr.mxu0 0.0
        %2137 = vmatpush1.msra.mxu0 0.0
        %2138 = vmatprep.subr.mxu0 0.0
        %2139 = vmatpush1.msra.mxu0 0.0
        %2140 = vmatprep.subr.mxu0 0.0
        %2141 = vmatpush1.msra.mxu0 0.0
        %2142 = vmatprep.subr.mxu0 0.0
        %2143 = vmatpush1.msra.mxu0 0.0
        %2144 = vmatprep.subr.mxu0 0.0
        %2145 = vmatpush1.msra.mxu0 0.0
        %2146 = vmatprep.subr.mxu0 0.0
        %2147 = vmatpush1.msra.mxu0 0.0
        %2148 = vmatprep.subr.mxu0 0.0
        %2149 = vmatpush1.msra.mxu0 0.0
        %2150 = vmatprep.subr.mxu0 0.0
        %2151 = vmatpush1.msra.mxu0 0.0
        %2152 = vmatprep.subr.mxu0 0.0
        %2153 = vmatpush1.msra.mxu0 0.0
        %2154 = vmatprep.subr.mxu0 0.0
        %2155 = vmatpush1.msra.mxu0 0.0
        %2156 = vmatprep.subr.mxu0 0.0
        %2157 = vmatpush1.msra.mxu0 0.0
        %2158 = vmatprep.subr.mxu0 0.0
        %2159 = vmatpush1.msra.mxu0 0.0
        %2160 = vmatprep.subr.mxu0 0.0
        %2161 = vmatpush1.msra.mxu0 0.0
        %2162 = vmatprep.subr.mxu0 0.0
        %2163 = vmatpush1.msra.mxu0 0.0
        %2164 = vmatprep.subr.mxu0 0.0
        %2165 = vmatpush1.msra.mxu0 0.0
        %2166 = vmatprep.subr.mxu0 0.0
        %2167 = vmatpush1.msra.mxu0 0.0
        %2168 = vmatprep.subr.mxu0 0.0
        %2169 = vmatpush1.msra.mxu0 0.0
        %2170 = vmatprep.subr.mxu0 0.0
        %2171 = vmatpush1.msra.mxu0 0.0
        %2172 = vmatprep.subr.mxu0 0.0
        %2173 = vmatpush1.msra.mxu0 0.0
        %2174 = vmatprep.subr.mxu0 0.0
        %2175 = vmatpush1.msra.mxu0 0.0
        %2176 = vmatprep.subr.mxu0 0.0
        %2177 = vmatpush1.msra.mxu0 0.0
        %2178 = vmatprep.subr.mxu0 0.0
        %2179 = vmatpush1.msra.mxu0 0.0
        %2180 = vmatprep.mubr.f32.mxu0 0.0
        %2181 = vmatmul.mubr.f32.gmra.mrb[0].mxu0 %v1571
        %v2182 = vpop.f32.mrb[0].mxu0
        %v2183 = vadd.f32 %v1958, %v2182
        %v2184 = vpop.f32.mrb[0].mxu0
        %2185 = vmatprep.mubr.f32.mxu0 0.0
        %2186 = vmatmul.mubr.f32.gmra.mrb[0].mxu0 %v1574
        %v2187 = vpop.f32.mrb[0].mxu0
        %v2188 = vadd.f32 %v1963, %v2187
        %v2189 = vpop.f32.mrb[0].mxu0
        %2190 = vmatprep.mubr.f32.mxu0 0.0
        %2191 = vmatmul.mubr.f32.gmra.mrb[0].mxu0 %v1577
        %v2192 = vpop.f32.mrb[0].mxu0
        %v2193 = vadd.f32 %v1968, %v2192
        %v2194 = vpop.f32.mrb[0].mxu0
        %2195 = vmatprep.mubr.f32.mxu0 0.0
        %2196 = vmatmul.mubr.f32.gmra.mrb[0].mxu0 %v1580
        %v2197 = vpop.f32.mrb[0].mxu0
        %v2198 = vadd.f32 %v1973, %v2197
        %v2199 = vpop.f32.mrb[0].mxu0
        %2200 = vmatprep.mubr.f32.mxu0 0.0
        %2201 = vmatmul.mubr.f32.gmra.mrb[0].mxu0 %v1583
        %v2202 = vpop.f32.mrb[0].mxu0
        %v2203 = vadd.f32 %v1978, %v2202
        %v2204 = vpop.f32.mrb[0].mxu0
        %2205 = vmatprep.mubr.f32.mxu0 0.0
        %2206 = vmatmul.mubr.f32.gmra.mrb[0].mxu0 %v1586
        %v2207 = vpop.f32.mrb[0].mxu0
        %v2208 = vadd.f32 %v1983, %v2207
        %v2209 = vpop.f32.mrb[0].mxu0
        %2210 = vmatprep.mubr.f32.mxu0 0.0
        %2211 = vmatmul.mubr.f32.gmra.mrb[0].mxu0 %v1589
        %v2212 = vpop.f32.mrb[0].mxu0
        %v2213 = vadd.f32 %v1988, %v2212
        %v2214 = vpop.f32.mrb[0].mxu0
        %2215 = vmatprep.mubr.f32.mxu0 0.0
        %2216 = vmatmul.mubr.f32.gmra.mrb[0].mxu0 %v1592
        %v2217 = vpop.f32.mrb[0].mxu0
        %v2218 = vadd.f32 %v1993, %v2217
        %v2219 = vpop.f32.mrb[0].mxu0
        %2220 = vmatprep.mubr.f32.mxu0 0.0
        %2221 = vmatmul.mubr.f32.gmra.mrb[0].mxu0 %v1595
        %v2222 = vpop.f32.mrb[0].mxu0
        %v2223 = vadd.f32 %v1998, %v2222
        %v2224 = vpop.f32.mrb[0].mxu0
        %2225 = vmatprep.mubr.f32.mxu0 0.0
        %2226 = vmatmul.mubr.f32.gmra.mrb[0].mxu0 %v1598
        %v2227 = vpop.f32.mrb[0].mxu0
        %v2228 = vadd.f32 %v2003, %v2227
        %v2229 = vpop.f32.mrb[0].mxu0
        %2230 = vmatprep.mubr.f32.mxu0 0.0
        %2231 = vmatmul.mubr.f32.gmra.mrb[0].mxu0 %v1601
        %v2232 = vpop.f32.mrb[0].mxu0
        %v2233 = vadd.f32 %v2008, %v2232
        %v2234 = vpop.f32.mrb[0].mxu0
        %2235 = vmatprep.mubr.f32.mxu0 0.0
        %2236 = vmatmul.mubr.f32.gmra.mrb[0].mxu0 %v1604
        %v2237 = vpop.f32.mrb[0].mxu0
        %v2238 = vadd.f32 %v2013, %v2237
        %v2239 = vpop.f32.mrb[0].mxu0
        %2240 = vmatprep.mubr.f32.mxu0 0.0
        %2241 = vmatmul.mubr.f32.gmra.mrb[0].mxu0 %v1607
        %v2242 = vpop.f32.mrb[0].mxu0
        %v2243 = vadd.f32 %v2018, %v2242
        %v2244 = vpop.f32.mrb[0].mxu0
        %2245 = vmatprep.mubr.f32.mxu0 0.0
        %2246 = vmatmul.mubr.f32.gmra.mrb[0].mxu0 %v1610
        %v2247 = vpop.f32.mrb[0].mxu0
        %v2248 = vadd.f32 %v2023, %v2247
        %v2249 = vpop.f32.mrb[0].mxu0
        %2250 = vmatprep.mubr.f32.mxu0 0.0
        %2251 = vmatmul.mubr.f32.gmra.mrb[0].mxu0 %v1613
        %v2252 = vpop.f32.mrb[0].mxu0
        %v2253 = vadd.f32 %v2028, %v2252
        %v2254 = vpop.f32.mrb[0].mxu0
        %2255 = vmatprep.mubr.f32.mxu0 0.0
        %2256 = vmatmul.mubr.f32.gmra.mrb[0].mxu0 %v1616
        %v2257 = vpop.f32.mrb[0].mxu0
        %v2258 = vadd.f32 %v2033, %v2257
        %v2259 = vpop.f32.mrb[0].mxu0
        %2260 = vmatprep.mubr.f32.mxu0 0.0
        %2261 = vmatmul.mubr.f32.gmra.mrb[0].mxu0 %v1619
        %v2262 = vpop.f32.mrb[0].mxu0
        %v2263 = vadd.f32 %v2038, %v2262
        %v2264 = vpop.f32.mrb[0].mxu0
        %2265 = vmatprep.mubr.f32.mxu0 0.0
        %2266 = vmatmul.mubr.f32.gmra.mrb[0].mxu0 %v1622
        %v2267 = vpop.f32.mrb[0].mxu0
        %v2268 = vadd.f32 %v2043, %v2267
        %v2269 = vpop.f32.mrb[0].mxu0
        %2270 = vmatprep.mubr.f32.mxu0 0.0
        %2271 = vmatmul.mubr.f32.gmra.mrb[0].mxu0 %v1625
        %v2272 = vpop.f32.mrb[0].mxu0
        %v2273 = vadd.f32 %v2048, %v2272
        %v2274 = vpop.f32.mrb[0].mxu0
        %2275 = vmatprep.mubr.f32.mxu0 0.0
        %2276 = vmatmul.mubr.f32.gmra.mrb[0].mxu0 %v1628
        %v2277 = vpop.f32.mrb[0].mxu0
        %v2278 = vadd.f32 %v2053, %v2277
        %v2279 = vpop.f32.mrb[0].mxu0
        %2280 = vmatprep.mubr.f32.mxu0 0.0
        %2281 = vmatmul.mubr.f32.gmra.mrb[0].mxu0 %v1631
        %v2282 = vpop.f32.mrb[0].mxu0
        %v2283 = vadd.f32 %v2058, %v2282
        %v2284 = vpop.f32.mrb[0].mxu0
        %2285 = vmatprep.mubr.f32.mxu0 0.0
        %2286 = vmatmul.mubr.f32.gmra.mrb[0].mxu0 %v1634
        %v2287 = vpop.f32.mrb[0].mxu0
        %v2288 = vadd.f32 %v2063, %v2287
        %v2289 = vpop.f32.mrb[0].mxu0
        %2290 = vmatprep.mubr.f32.mxu0 0.0
        %2291 = vmatmul.mubr.f32.gmra.mrb[0].mxu0 %v1637
        %v2292 = vpop.f32.mrb[0].mxu0
        %v2293 = vadd.f32 %v2068, %v2292
        %v2294 = vpop.f32.mrb[0].mxu0
        %2295 = vmatprep.mubr.f32.mxu0 0.0
        %2296 = vmatmul.mubr.f32.gmra.mrb[0].mxu0 %v1640
        %v2297 = vpop.f32.mrb[0].mxu0
        %v2298 = vadd.f32 %v2073, %v2297
        %v2299 = vpop.f32.mrb[0].mxu0
        %2300 = vmatprep.mubr.f32.mxu0 0.0
        %2301 = vmatmul.mubr.f32.gmra.mrb[0].mxu0 %v1643
        %v2302 = vpop.f32.mrb[0].mxu0
        %v2303 = vadd.f32 %v2078, %v2302
        %v2304 = vpop.f32.mrb[0].mxu0
        %2305 = vmatprep.mubr.f32.mxu0 0.0
        %2306 = vmatmul.mubr.f32.gmra.mrb[0].mxu0 %v1646
        %v2307 = vpop.f32.mrb[0].mxu0
        %v2308 = vadd.f32 %v2083, %v2307
        %v2309 = vpop.f32.mrb[0].mxu0
        %2310 = vmatprep.mubr.f32.mxu0 0.0
        %2311 = vmatmul.mubr.f32.gmra.mrb[0].mxu0 %v1649
        %v2312 = vpop.f32.mrb[0].mxu0
        %v2313 = vadd.f32 %v2088, %v2312
        %v2314 = vpop.f32.mrb[0].mxu0
        %2315 = vmatprep.mubr.f32.mxu0 0.0
        %2316 = vmatmul.mubr.f32.gmra.mrb[0].mxu0 %v1652
        %v2317 = vpop.f32.mrb[0].mxu0
        %v2318 = vadd.f32 %v2093, %v2317
        %v2319 = vpop.f32.mrb[0].mxu0
        %2320 = vmatprep.mubr.f32.mxu0 0.0
        %2321 = vmatmul.mubr.f32.gmra.mrb[0].mxu0 %v1655
        %v2322 = vpop.f32.mrb[0].mxu0
        %v2323 = vadd.f32 %v2098, %v2322
        %v2324 = vpop.f32.mrb[0].mxu0
        %2325 = vmatprep.mubr.f32.mxu0 0.0
        %2326 = vmatmul.mubr.f32.gmra.mrb[0].mxu0 %v1658
        %v2327 = vpop.f32.mrb[0].mxu0
        %v2328 = vadd.f32 %v2103, %v2327
        %v2329 = vpop.f32.mrb[0].mxu0
        %2330 = vmatprep.mubr.f32.mxu0 0.0
        %2331 = vmatmul.mubr.f32.gmra.mrb[0].mxu0 %v1661
        %v2332 = vpop.f32.mrb[0].mxu0
        %v2333 = vadd.f32 %v2108, %v2332
        %v2334 = vpop.f32.mrb[0].mxu0
        %2335 = vmatprep.mubr.f32.mxu0 0.0
        %2336 = vmatmul.mubr.f32.gmra.mrb[0].mxu0 %v1664
        %v2337 = vpop.f32.mrb[0].mxu0
        %v2338 = vadd.f32 %v2113, %v2337
        %v2339 = vpop.f32.mrb[0].mxu0
        %2340 = vdwg.mxu0
        %v2341 = vmax.f32 %v2183, 0.0
        %v2342 = vmax.f32 %v2188, 0.0
        %v2343 = vmax.f32 %v2193, 0.0
        %v2344 = vmax.f32 %v2198, 0.0
        %v2345 = vmax.f32 %v2203, 0.0
        %v2346 = vmax.f32 %v2208, 0.0
        %v2347 = vmax.f32 %v2213, 0.0
        %v2348 = vmax.f32 %v2218, 0.0
        %v2349 = vmax.f32 %v2223, 0.0
        %v2350 = vmax.f32 %v2228, 0.0
        %v2351 = vmax.f32 %v2233, 0.0
        %v2352 = vmax.f32 %v2238, 0.0
        %v2353 = vmax.f32 %v2243, 0.0
        %v2354 = vmax.f32 %v2248, 0.0
        %v2355 = vmax.f32 %v2253, 0.0
        %v2356 = vmax.f32 %v2258, 0.0
        %v2357 = vmax.f32 %v2263, 0.0
        %v2358 = vmax.f32 %v2268, 0.0
        %v2359 = vmax.f32 %v2273, 0.0
        %v2360 = vmax.f32 %v2278, 0.0
        %v2361 = vmax.f32 %v2283, 0.0
        %v2362 = vmax.f32 %v2288, 0.0
        %v2363 = vmax.f32 %v2293, 0.0
        %v2364 = vmax.f32 %v2298, 0.0
        %v2365 = vmax.f32 %v2303, 0.0
        %v2366 = vmax.f32 %v2308, 0.0
        %v2367 = vmax.f32 %v2313, 0.0
        %v2368 = vmax.f32 %v2318, 0.0
        %v2369 = vmax.f32 %v2323, 0.0
        %v2370 = vmax.f32 %v2328, 0.0
        %v2371 = vmax.f32 %v2333, 0.0
        %v2372 = vmax.f32 %v2338, 0.0
        %v2373 = vadd.f32 %v2341, %v497
        %v2374 = vadd.f32 %v2342, %v498
        %v2375 = vadd.f32 %v2343, %v499
        %v2376 = vadd.f32 %v2344, %v500
        %v2377 = vadd.f32 %v2345, %v501
        %v2378 = vadd.f32 %v2346, %v502
        %v2379 = vadd.f32 %v2347, %v503
        %v2380 = vadd.f32 %v2348, %v504
        %v2381 = vadd.f32 %v2349, %v505
        %v2382 = vadd.f32 %v2350, %v506
        %v2383 = vadd.f32 %v2351, %v507
        %v2384 = vadd.f32 %v2352, %v508
        %v2385 = vadd.f32 %v2353, %v509
        %v2386 = vadd.f32 %v2354, %v510
        %v2387 = vadd.f32 %v2355, %v511
        %v2388 = vadd.f32 %v2356, %v512
        %v2389 = vadd.f32 %v2357, %v513
        %v2390 = vadd.f32 %v2358, %v514
        %v2391 = vadd.f32 %v2359, %v515
        %v2392 = vadd.f32 %v2360, %v516
        %v2393 = vadd.f32 %v2361, %v517
        %v2394 = vadd.f32 %v2362, %v518
        %v2395 = vadd.f32 %v2363, %v519
        %v2396 = vadd.f32 %v2364, %v520
        %v2397 = vadd.f32 %v2365, %v521
        %v2398 = vadd.f32 %v2366, %v522
        %v2399 = vadd.f32 %v2367, %v523
        %v2400 = vadd.f32 %v2368, %v524
        %v2401 = vadd.f32 %v2369, %v525
        %v2402 = vadd.f32 %v2370, %v526
        %v2403 = vadd.f32 %v2371, %v527
        %v2404 = vadd.f32 %v2372, %v528
        %v2405 = vld [vmem:[%s3] sm:$0xff]
        %v2406 = vld [vmem:[%s3 + $0x8] sm:$0xff]
        %v2407 = vld [vmem:[%s3 + $0x10] sm:$0xff]
        %v2408 = vld [vmem:[%s3 + $0x18] sm:$0xff]
        %v2409 = vld [vmem:[%s3 + $0x20] sm:$0xff]
        %v2410 = vld [vmem:[%s3 + $0x28] sm:$0xff]
        %v2411 = vld [vmem:[%s3 + $0x30] sm:$0xff]
        %v2412 = vld [vmem:[%s3 + $0x38] sm:$0xff]
        %v2413 = vld [vmem:[%s3 + $0x40] sm:$0xff]
        %v2414 = vld [vmem:[%s3 + $0x48] sm:$0xff]
        %v2415 = vld [vmem:[%s3 + $0x50] sm:$0xff]
        %v2416 = vld [vmem:[%s3 + $0x58] sm:$0xff]
        %v2417 = vld [vmem:[%s3 + $0x60] sm:$0xff]
        %v2418 = vld [vmem:[%s3 + $0x68] sm:$0xff]
        %v2419 = vld [vmem:[%s3 + $0x70] sm:$0xff]
        %v2420 = vld [vmem:[%s3 + $0x78] sm:$0xff]
        %v2421 = vld [vmem:[%s3 + $0x80] sm:$0xff]
        %v2422 = vld [vmem:[%s3 + $0x88] sm:$0xff]
        %v2423 = vld [vmem:[%s3 + $0x90] sm:$0xff]
        %v2424 = vld [vmem:[%s3 + $0x98] sm:$0xff]
        %v2425 = vld [vmem:[%s3 + $0xa0] sm:$0xff]
        %v2426 = vld [vmem:[%s3 + $0xa8] sm:$0xff]
        %v2427 = vld [vmem:[%s3 + $0xb0] sm:$0xff]
        %v2428 = vld [vmem:[%s3 + $0xb8] sm:$0xff]
        %v2429 = vld [vmem:[%s3 + $0xc0] sm:$0xff]
        %v2430 = vld [vmem:[%s3 + $0xc8] sm:$0xff]
        %v2431 = vld [vmem:[%s3 + $0xd0] sm:$0xff]
        %v2432 = vld [vmem:[%s3 + $0xd8] sm:$0xff]
        %v2433 = vld [vmem:[%s3 + $0xe0] sm:$0xff]
        %v2434 = vld [vmem:[%s3 + $0xe8] sm:$0xff]
        %v2435 = vld [vmem:[%s3 + $0xf0] sm:$0xff]
        %v2436 = vld [vmem:[%s3 + $0xf8] sm:$0xff]
        %v2437 = vld [vmem:[%s3 + $0x100] sm:$0xff]
        %v2438 = vld [vmem:[%s3 + $0x108] sm:$0xff]
        %v2439 = vld [vmem:[%s3 + $0x110] sm:$0xff]
        %v2440 = vld [vmem:[%s3 + $0x118] sm:$0xff]
        %v2441 = vld [vmem:[%s3 + $0x120] sm:$0xff]
        %v2442 = vld [vmem:[%s3 + $0x128] sm:$0xff]
        %v2443 = vld [vmem:[%s3 + $0x130] sm:$0xff]
        %v2444 = vld [vmem:[%s3 + $0x138] sm:$0xff]
        %v2445 = vld [vmem:[%s3 + $0x140] sm:$0xff]
        %v2446 = vld [vmem:[%s3 + $0x148] sm:$0xff]
        %v2447 = vld [vmem:[%s3 + $0x150] sm:$0xff]
        %v2448 = vld [vmem:[%s3 + $0x158] sm:$0xff]
        %v2449 = vld [vmem:[%s3 + $0x160] sm:$0xff]
        %v2450 = vld [vmem:[%s3 + $0x168] sm:$0xff]
        %v2451 = vld [vmem:[%s3 + $0x170] sm:$0xff]
        %v2452 = vld [vmem:[%s3 + $0x178] sm:$0xff]
        %v2453 = vld [vmem:[%s3 + $0x180] sm:$0xff]
        %v2454 = vld [vmem:[%s3 + $0x188] sm:$0xff]
        %v2455 = vld [vmem:[%s3 + $0x190] sm:$0xff]
        %v2456 = vld [vmem:[%s3 + $0x198] sm:$0xff]
        %v2457 = vld [vmem:[%s3 + $0x1a0] sm:$0xff]
        %v2458 = vld [vmem:[%s3 + $0x1a8] sm:$0xff]
        %v2459 = vld [vmem:[%s3 + $0x1b0] sm:$0xff]
        %v2460 = vld [vmem:[%s3 + $0x1b8] sm:$0xff]
        %v2461 = vld [vmem:[%s3 + $0x1c0] sm:$0xff]
        %v2462 = vld [vmem:[%s3 + $0x1c8] sm:$0xff]
        %v2463 = vld [vmem:[%s3 + $0x1d0] sm:$0xff]
        %v2464 = vld [vmem:[%s3 + $0x1d8] sm:$0xff]
        %v2465 = vld [vmem:[%s3 + $0x1e0] sm:$0xff]
        %v2466 = vld [vmem:[%s3 + $0x1e8] sm:$0xff]
        %v2467 = vld [vmem:[%s3 + $0x1f0] sm:$0xff]
        %v2468 = vld [vmem:[%s3 + $0x1f8] sm:$0xff]
        %v2469 = vld [vmem:[%s3 + $0x200] sm:$0xff]
        %v2470 = vld [vmem:[%s3 + $0x208] sm:$0xff]
        %v2471 = vld [vmem:[%s3 + $0x210] sm:$0xff]
        %v2472 = vld [vmem:[%s3 + $0x218] sm:$0xff]
        %v2473 = vld [vmem:[%s3 + $0x220] sm:$0xff]
        %v2474 = vld [vmem:[%s3 + $0x228] sm:$0xff]
        %v2475 = vld [vmem:[%s3 + $0x230] sm:$0xff]
        %v2476 = vld [vmem:[%s3 + $0x238] sm:$0xff]
        %v2477 = vld [vmem:[%s4] sm:$0x1]
        %2478 = vst.msk [vmem:[%s602 + $0x1] sm:$0xff] %vm441, %v2373
        %2479 = vst.msk [vmem:[%s602 + $0x9] sm:$0xff] %vm441, %v2374
        %2480 = vst.msk [vmem:[%s602 + $0x19] sm:$0xff] %vm441, %v2375
        %2481 = vst.msk [vmem:[%s602 + $0x21] sm:$0xff] %vm441, %v2376
        %2482 = vst.msk [vmem:[%s602 + $0x31] sm:$0xff] %vm441, %v2377
        %2483 = vst.msk [vmem:[%s602 + $0x39] sm:$0xff] %vm441, %v2378
        %2484 = vst.msk [vmem:[%s602 + $0x49] sm:$0xff] %vm441, %v2379
        %2485 = vst.msk [vmem:[%s602 + $0x51] sm:$0xff] %vm441, %v2380
        %2486 = vst.msk [vmem:[%s602 + $0x61] sm:$0xff] %vm441, %v2381
        %2487 = vst.msk [vmem:[%s602 + $0x69] sm:$0xff] %vm441, %v2382
        %2488 = vst.msk [vmem:[%s602 + $0x79] sm:$0xff] %vm441, %v2383
        %2489 = vst.msk [vmem:[%s602 + $0x81] sm:$0xff] %vm441, %v2384
        %2490 = vst.msk [vmem:[%s602 + $0x91] sm:$0xff] %vm441, %v2385
        %2491 = vst.msk [vmem:[%s602 + $0x99] sm:$0xff] %vm441, %v2386
        %2492 = vst.msk [vmem:[%s602 + $0xa9] sm:$0xff] %vm441, %v2387
        %2493 = vst.msk [vmem:[%s602 + $0xb1] sm:$0xff] %vm441, %v2388
        %2494 = vst.msk [vmem:[%s602 + $0xc1] sm:$0xff] %vm441, %v2389
        %2495 = vst.msk [vmem:[%s602 + $0xc9] sm:$0xff] %vm441, %v2390
        %2496 = vst.msk [vmem:[%s602 + $0xd9] sm:$0xff] %vm441, %v2391
        %2497 = vst.msk [vmem:[%s602 + $0xe1] sm:$0xff] %vm441, %v2392
        %2498 = vst.msk [vmem:[%s602 + $0xf1] sm:$0xff] %vm441, %v2393
        %2499 = vst.msk [vmem:[%s602 + $0xf9] sm:$0xff] %vm441, %v2394
        %2500 = vst.msk [vmem:[%s602 + $0x109] sm:$0xff] %vm441, %v2395
        %2501 = vst.msk [vmem:[%s602 + $0x111] sm:$0xff] %vm441, %v2396
        %2502 = vst.msk [vmem:[%s602 + $0x121] sm:$0xff] %vm441, %v2397
        %2503 = vst.msk [vmem:[%s602 + $0x129] sm:$0xff] %vm441, %v2398
        %2504 = vst.msk [vmem:[%s602 + $0x139] sm:$0xff] %vm441, %v2399
        %2505 = vst.msk [vmem:[%s602 + $0x141] sm:$0xff] %vm441, %v2400
        %2506 = vst.msk [vmem:[%s602 + $0x151] sm:$0xff] %vm441, %v2401
        %2507 = vst.msk [vmem:[%s602 + $0x159] sm:$0xff] %vm441, %v2402
        %2508 = vst.msk [vmem:[%s602 + $0x169] sm:$0xff] %vm441, %v2403
        %2509 = vst.msk [vmem:[%s602 + $0x171] sm:$0xff] %vm441, %v2404
        %v2510 = vld [vmem:[#allocation2] sm:$0xff]
        %v2511 = vld [vmem:[#allocation2 + $0x8] sm:$0xff]
        %v2512 = vld [vmem:[#allocation2 + $0x18] sm:$0xff]
        %v2513 = vld [vmem:[#allocation2 + $0x20] sm:$0xff]
        %v2514 = vld [vmem:[#allocation2 + $0x30] sm:$0xff]
        %v2515 = vld [vmem:[#allocation2 + $0x38] sm:$0xff]
        %v2516 = vld [vmem:[#allocation2 + $0x48] sm:$0xff]
        %v2517 = vld [vmem:[#allocation2 + $0x50] sm:$0xff]
        %v2518 = vld [vmem:[#allocation2 + $0x60] sm:$0xff]
        %v2519 = vld [vmem:[#allocation2 + $0x68] sm:$0xff]
        %v2520 = vld [vmem:[#allocation2 + $0x78] sm:$0xff]
        %v2521 = vld [vmem:[#allocation2 + $0x80] sm:$0xff]
        %v2522 = vld [vmem:[#allocation2 + $0x90] sm:$0xff]
        %v2523 = vld [vmem:[#allocation2 + $0x98] sm:$0xff]
        %v2524 = vld [vmem:[#allocation2 + $0xa8] sm:$0xff]
        %v2525 = vld [vmem:[#allocation2 + $0xb0] sm:$0xff]
        %v2526 = vld [vmem:[#allocation2 + $0xc0] sm:$0xff]
        %v2527 = vld [vmem:[#allocation2 + $0xc8] sm:$0xff]
        %v2528 = vld [vmem:[#allocation2 + $0xd8] sm:$0xff]
        %v2529 = vld [vmem:[#allocation2 + $0xe0] sm:$0xff]
        %v2530 = vld [vmem:[#allocation2 + $0xf0] sm:$0xff]
        %v2531 = vld [vmem:[#allocation2 + $0xf8] sm:$0xff]
        %v2532 = vld [vmem:[#allocation2 + $0x108] sm:$0xff]
        %v2533 = vld [vmem:[#allocation2 + $0x110] sm:$0xff]
        %v2534 = vld [vmem:[#allocation2 + $0x120] sm:$0xff]
        %v2535 = vld [vmem:[#allocation2 + $0x128] sm:$0xff]
        %v2536 = vld [vmem:[#allocation2 + $0x138] sm:$0xff]
        %v2537 = vld [vmem:[#allocation2 + $0x140] sm:$0xff]
        %v2538 = vld [vmem:[#allocation2 + $0x150] sm:$0xff]
        %v2539 = vld [vmem:[#allocation2 + $0x158] sm:$0xff]
        %v2540 = vld [vmem:[#allocation2 + $0x168] sm:$0xff]
        %v2541 = vld [vmem:[#allocation2 + $0x170] sm:$0xff]
        %v2542 = vld [vmem:[#allocation2 + $0x1] sm:$0xff]
        %v2543 = vld [vmem:[#allocation2 + $0x9] sm:$0xff]
        %v2544 = vld [vmem:[#allocation2 + $0x19] sm:$0xff]
        %v2545 = vld [vmem:[#allocation2 + $0x21] sm:$0xff]
        %v2546 = vld [vmem:[#allocation2 + $0x31] sm:$0xff]
        %v2547 = vld [vmem:[#allocation2 + $0x39] sm:$0xff]
        %v2548 = vld [vmem:[#allocation2 + $0x49] sm:$0xff]
        %v2549 = vld [vmem:[#allocation2 + $0x51] sm:$0xff]
        %v2550 = vld [vmem:[#allocation2 + $0x61] sm:$0xff]
        %v2551 = vld [vmem:[#allocation2 + $0x69] sm:$0xff]
        %v2552 = vld [vmem:[#allocation2 + $0x79] sm:$0xff]
        %v2553 = vld [vmem:[#allocation2 + $0x81] sm:$0xff]
        %v2554 = vld [vmem:[#allocation2 + $0x91] sm:$0xff]
        %v2555 = vld [vmem:[#allocation2 + $0x99] sm:$0xff]
        %v2556 = vld [vmem:[#allocation2 + $0xa9] sm:$0xff]
        %v2557 = vld [vmem:[#allocation2 + $0xb1] sm:$0xff]
        %v2558 = vld [vmem:[#allocation2 + $0xc1] sm:$0xff]
        %v2559 = vld [vmem:[#allocation2 + $0xc9] sm:$0xff]
        %v2560 = vld [vmem:[#allocation2 + $0xd9] sm:$0xff]
        %v2561 = vld [vmem:[#allocation2 + $0xe1] sm:$0xff]
        %v2562 = vld [vmem:[#allocation2 + $0xf1] sm:$0xff]
        %v2563 = vld [vmem:[#allocation2 + $0xf9] sm:$0xff]
        %v2564 = vld [vmem:[#allocation2 + $0x109] sm:$0xff]
        %v2565 = vld [vmem:[#allocation2 + $0x111] sm:$0xff]
        %v2566 = vld [vmem:[#allocation2 + $0x121] sm:$0xff]
        %v2567 = vld [vmem:[#allocation2 + $0x129] sm:$0xff]
        %v2568 = vld [vmem:[#allocation2 + $0x139] sm:$0xff]
        %v2569 = vld [vmem:[#allocation2 + $0x141] sm:$0xff]
        %v2570 = vld [vmem:[#allocation2 + $0x151] sm:$0xff]
        %v2571 = vld [vmem:[#allocation2 + $0x159] sm:$0xff]
        %v2572 = vld [vmem:[#allocation2 + $0x169] sm:$0xff]
        %v2573 = vld [vmem:[#allocation2 + $0x171] sm:$0xff]
        %v2574 = vld [vmem:[#allocation2 + $0x2] sm:$0xff]
        %v2575 = vld [vmem:[#allocation2 + $0xa] sm:$0xff]
        %v2576 = vld [vmem:[#allocation2 + $0x1a] sm:$0xff]
        %v2577 = vld [vmem:[#allocation2 + $0x22] sm:$0xff]
        %v2578 = vld [vmem:[#allocation2 + $0x32] sm:$0xff]
        %v2579 = vld [vmem:[#allocation2 + $0x3a] sm:$0xff]
        %v2580 = vld [vmem:[#allocation2 + $0x4a] sm:$0xff]
        %v2581 = vld [vmem:[#allocation2 + $0x52] sm:$0xff]
        %v2582 = vld [vmem:[#allocation2 + $0x62] sm:$0xff]
        %v2583 = vld [vmem:[#allocation2 + $0x6a] sm:$0xff]
        %v2584 = vld [vmem:[#allocation2 + $0x7a] sm:$0xff]
        %v2585 = vld [vmem:[#allocation2 + $0x82] sm:$0xff]
        %v2586 = vld [vmem:[#allocation2 + $0x92] sm:$0xff]
        %v2587 = vld [vmem:[#allocation2 + $0x9a] sm:$0xff]
        %v2588 = vld [vmem:[#allocation2 + $0xaa] sm:$0xff]
        %v2589 = vld [vmem:[#allocation2 + $0xb2] sm:$0xff]
        %v2590 = vld [vmem:[#allocation2 + $0xc2] sm:$0xff]
        %v2591 = vld [vmem:[#allocation2 + $0xca] sm:$0xff]
        %v2592 = vld [vmem:[#allocation2 + $0xda] sm:$0xff]
        %v2593 = vld [vmem:[#allocation2 + $0xe2] sm:$0xff]
        %v2594 = vld [vmem:[#allocation2 + $0xf2] sm:$0xff]
        %v2595 = vld [vmem:[#allocation2 + $0xfa] sm:$0xff]
        %v2596 = vld [vmem:[#allocation2 + $0x10a] sm:$0xff]
        %v2597 = vld [vmem:[#allocation2 + $0x112] sm:$0xff]
        %v2598 = vld [vmem:[#allocation2 + $0x122] sm:$0xff]
        %v2599 = vld [vmem:[#allocation2 + $0x12a] sm:$0xff]
        %v2600 = vld [vmem:[#allocation2 + $0x13a] sm:$0xff]
        %v2601 = vld [vmem:[#allocation2 + $0x142] sm:$0xff]
        %v2602 = vld [vmem:[#allocation2 + $0x152] sm:$0xff]
        %v2603 = vld [vmem:[#allocation2 + $0x15a] sm:$0xff]
        %v2604 = vld [vmem:[#allocation2 + $0x16a] sm:$0xff]
        %v2605 = vld [vmem:[#allocation2 + $0x172] sm:$0xff]
        %v2606 = vld [vmem:[%s602] sm:$0xff]
        %v2607 = vld [vmem:[%s602 + $0x8] sm:$0xff]
        %v2608 = vld [vmem:[%s602 + $0x18] sm:$0xff]
        %v2609 = vld [vmem:[%s602 + $0x20] sm:$0xff]
        %v2610 = vld [vmem:[%s602 + $0x30] sm:$0xff]
        %v2611 = vld [vmem:[%s602 + $0x38] sm:$0xff]
        %v2612 = vld [vmem:[%s602 + $0x48] sm:$0xff]
        %v2613 = vld [vmem:[%s602 + $0x50] sm:$0xff]
        %v2614 = vld [vmem:[%s602 + $0x60] sm:$0xff]
        %v2615 = vld [vmem:[%s602 + $0x68] sm:$0xff]
        %v2616 = vld [vmem:[%s602 + $0x78] sm:$0xff]
        %v2617 = vld [vmem:[%s602 + $0x80] sm:$0xff]
        %v2618 = vld [vmem:[%s602 + $0x90] sm:$0xff]
        %v2619 = vld [vmem:[%s602 + $0x98] sm:$0xff]
        %v2620 = vld [vmem:[%s602 + $0xa8] sm:$0xff]
        %v2621 = vld [vmem:[%s602 + $0xb0] sm:$0xff]
        %v2622 = vld [vmem:[%s602 + $0xc0] sm:$0xff]
        %v2623 = vld [vmem:[%s602 + $0xc8] sm:$0xff]
        %v2624 = vld [vmem:[%s602 + $0xd8] sm:$0xff]
        %v2625 = vld [vmem:[%s602 + $0xe0] sm:$0xff]
        %v2626 = vld [vmem:[%s602 + $0xf0] sm:$0xff]
        %v2627 = vld [vmem:[%s602 + $0xf8] sm:$0xff]
        %v2628 = vld [vmem:[%s602 + $0x108] sm:$0xff]
        %v2629 = vld [vmem:[%s602 + $0x110] sm:$0xff]
        %v2630 = vld [vmem:[%s602 + $0x120] sm:$0xff]
        %v2631 = vld [vmem:[%s602 + $0x128] sm:$0xff]
        %v2632 = vld [vmem:[%s602 + $0x138] sm:$0xff]
        %v2633 = vld [vmem:[%s602 + $0x140] sm:$0xff]
        %v2634 = vld [vmem:[%s602 + $0x150] sm:$0xff]
        %v2635 = vld [vmem:[%s602 + $0x158] sm:$0xff]
        %v2636 = vld [vmem:[%s602 + $0x168] sm:$0xff]
        %v2637 = vld [vmem:[%s602 + $0x170] sm:$0xff]
        %v2638 = vld [vmem:[%s602 + $0x1] sm:$0xff]
        %v2639 = vld [vmem:[%s602 + $0x9] sm:$0xff]
        %v2640 = vld [vmem:[%s602 + $0x19] sm:$0xff]
        %v2641 = vld [vmem:[%s602 + $0x21] sm:$0xff]
        %v2642 = vld [vmem:[%s602 + $0x31] sm:$0xff]
        %v2643 = vld [vmem:[%s602 + $0x39] sm:$0xff]
        %v2644 = vld [vmem:[%s602 + $0x49] sm:$0xff]
        %v2645 = vld [vmem:[%s602 + $0x51] sm:$0xff]
        %v2646 = vld [vmem:[%s602 + $0x61] sm:$0xff]
        %v2647 = vld [vmem:[%s602 + $0x69] sm:$0xff]
        %v2648 = vld [vmem:[%s602 + $0x79] sm:$0xff]
        %v2649 = vld [vmem:[%s602 + $0x81] sm:$0xff]
        %v2650 = vld [vmem:[%s602 + $0x91] sm:$0xff]
        %v2651 = vld [vmem:[%s602 + $0x99] sm:$0xff]
        %v2652 = vld [vmem:[%s602 + $0xa9] sm:$0xff]
        %v2653 = vld [vmem:[%s602 + $0xb1] sm:$0xff]
        %v2654 = vld [vmem:[%s602 + $0xc1] sm:$0xff]
        %v2655 = vld [vmem:[%s602 + $0xc9] sm:$0xff]
        %v2656 = vld [vmem:[%s602 + $0xd9] sm:$0xff]
        %v2657 = vld [vmem:[%s602 + $0xe1] sm:$0xff]
        %v2658 = vld [vmem:[%s602 + $0xf1] sm:$0xff]
        %v2659 = vld [vmem:[%s602 + $0xf9] sm:$0xff]
        %v2660 = vld [vmem:[%s602 + $0x109] sm:$0xff]
        %v2661 = vld [vmem:[%s602 + $0x111] sm:$0xff]
        %v2662 = vld [vmem:[%s602 + $0x121] sm:$0xff]
        %v2663 = vld [vmem:[%s602 + $0x129] sm:$0xff]
        %v2664 = vld [vmem:[%s602 + $0x139] sm:$0xff]
        %v2665 = vld [vmem:[%s602 + $0x141] sm:$0xff]
        %v2666 = vld [vmem:[%s602 + $0x151] sm:$0xff]
        %v2667 = vld [vmem:[%s602 + $0x159] sm:$0xff]
        %v2668 = vld [vmem:[%s602 + $0x169] sm:$0xff]
        %v2669 = vld [vmem:[%s602 + $0x171] sm:$0xff]
        %v2670 = vld [vmem:[%s602 + $0x2] sm:$0xff]
        %v2671 = vld [vmem:[%s602 + $0xa] sm:$0xff]
        %v2672 = vld [vmem:[%s602 + $0x1a] sm:$0xff]
        %v2673 = vld [vmem:[%s602 + $0x22] sm:$0xff]
        %v2674 = vld [vmem:[%s602 + $0x32] sm:$0xff]
        %v2675 = vld [vmem:[%s602 + $0x3a] sm:$0xff]
        %v2676 = vld [vmem:[%s602 + $0x4a] sm:$0xff]
        %v2677 = vld [vmem:[%s602 + $0x52] sm:$0xff]
        %v2678 = vld [vmem:[%s602 + $0x62] sm:$0xff]
        %v2679 = vld [vmem:[%s602 + $0x6a] sm:$0xff]
        %v2680 = vld [vmem:[%s602 + $0x7a] sm:$0xff]
        %v2681 = vld [vmem:[%s602 + $0x82] sm:$0xff]
        %v2682 = vld [vmem:[%s602 + $0x92] sm:$0xff]
        %v2683 = vld [vmem:[%s602 + $0x9a] sm:$0xff]
        %v2684 = vld [vmem:[%s602 + $0xaa] sm:$0xff]
        %v2685 = vld [vmem:[%s602 + $0xb2] sm:$0xff]
        %v2686 = vld [vmem:[%s602 + $0xc2] sm:$0xff]
        %v2687 = vld [vmem:[%s602 + $0xca] sm:$0xff]
        %v2688 = vld [vmem:[%s602 + $0xda] sm:$0xff]
        %v2689 = vld [vmem:[%s602 + $0xe2] sm:$0xff]
        %v2690 = vld [vmem:[%s602 + $0xf2] sm:$0xff]
        %v2691 = vld [vmem:[%s602 + $0xfa] sm:$0xff]
        %v2692 = vld [vmem:[%s602 + $0x10a] sm:$0xff]
        %v2693 = vld [vmem:[%s602 + $0x112] sm:$0xff]
        %v2694 = vld [vmem:[%s602 + $0x122] sm:$0xff]
        %v2695 = vld [vmem:[%s602 + $0x12a] sm:$0xff]
        %v2696 = vld [vmem:[%s602 + $0x13a] sm:$0xff]
        %v2697 = vld [vmem:[%s602 + $0x142] sm:$0xff]
        %v2698 = vld [vmem:[%s602 + $0x152] sm:$0xff]
        %v2699 = vld [vmem:[%s602 + $0x15a] sm:$0xff]
        %v2700 = vld [vmem:[%s602 + $0x16a] sm:$0xff]
        %v2701 = vld [vmem:[%s602 + $0x172] sm:$0xff]
        %v2702 = vld [vmem:[%s827] sm:$0xff]
        %v2703 = vld [vmem:[%s827 + $0x8] sm:$0xff]
        %v2704 = vld [vmem:[%s827 + $0x18] sm:$0xff]
        %v2705 = vld [vmem:[%s827 + $0x20] sm:$0xff]
        %v2706 = vld [vmem:[%s827 + $0x30] sm:$0xff]
        %v2707 = vld [vmem:[%s827 + $0x38] sm:$0xff]
        %v2708 = vld [vmem:[%s827 + $0x48] sm:$0xff]
        %v2709 = vld [vmem:[%s827 + $0x50] sm:$0xff]
        %v2710 = vld [vmem:[%s827 + $0x60] sm:$0xff]
        %v2711 = vld [vmem:[%s827 + $0x68] sm:$0xff]
        %v2712 = vld [vmem:[%s827 + $0x78] sm:$0xff]
        %v2713 = vld [vmem:[%s827 + $0x80] sm:$0xff]
        %v2714 = vld [vmem:[%s827 + $0x90] sm:$0xff]
        %v2715 = vld [vmem:[%s827 + $0x98] sm:$0xff]
        %v2716 = vld [vmem:[%s827 + $0xa8] sm:$0xff]
        %v2717 = vld [vmem:[%s827 + $0xb0] sm:$0xff]
        %v2718 = vld [vmem:[%s827 + $0xc0] sm:$0xff]
        %v2719 = vld [vmem:[%s827 + $0xc8] sm:$0xff]
        %v2720 = vld [vmem:[%s827 + $0xd8] sm:$0xff]
        %v2721 = vld [vmem:[%s827 + $0xe0] sm:$0xff]
        %v2722 = vld [vmem:[%s827 + $0xf0] sm:$0xff]
        %v2723 = vld [vmem:[%s827 + $0xf8] sm:$0xff]
        %v2724 = vld [vmem:[%s827 + $0x108] sm:$0xff]
        %v2725 = vld [vmem:[%s827 + $0x110] sm:$0xff]
        %v2726 = vld [vmem:[%s827 + $0x120] sm:$0xff]
        %v2727 = vld [vmem:[%s827 + $0x128] sm:$0xff]
        %v2728 = vld [vmem:[%s827 + $0x138] sm:$0xff]
        %v2729 = vld [vmem:[%s827 + $0x140] sm:$0xff]
        %v2730 = vld [vmem:[%s827 + $0x150] sm:$0xff]
        %v2731 = vld [vmem:[%s827 + $0x158] sm:$0xff]
        %v2732 = vld [vmem:[%s827 + $0x168] sm:$0xff]
        %v2733 = vld [vmem:[%s827 + $0x170] sm:$0xff]
        %v2734 = vld [vmem:[%s827 + $0x1] sm:$0xff]
        %v2735 = vld [vmem:[%s827 + $0x9] sm:$0xff]
        %v2736 = vld [vmem:[%s827 + $0x19] sm:$0xff]
        %v2737 = vld [vmem:[%s827 + $0x21] sm:$0xff]
        %v2738 = vld [vmem:[%s827 + $0x31] sm:$0xff]
        %v2739 = vld [vmem:[%s827 + $0x39] sm:$0xff]
        %v2740 = vld [vmem:[%s827 + $0x49] sm:$0xff]
        %v2741 = vld [vmem:[%s827 + $0x51] sm:$0xff]
        %v2742 = vld [vmem:[%s827 + $0x61] sm:$0xff]
        %v2743 = vld [vmem:[%s827 + $0x69] sm:$0xff]
        %v2744 = vld [vmem:[%s827 + $0x79] sm:$0xff]
        %v2745 = vld [vmem:[%s827 + $0x81] sm:$0xff]
        %v2746 = vld [vmem:[%s827 + $0x91] sm:$0xff]
        %v2747 = vld [vmem:[%s827 + $0x99] sm:$0xff]
        %v2748 = vld [vmem:[%s827 + $0xa9] sm:$0xff]
        %v2749 = vld [vmem:[%s827 + $0xb1] sm:$0xff]
        %v2750 = vld [vmem:[%s827 + $0xc1] sm:$0xff]
        %v2751 = vld [vmem:[%s827 + $0xc9] sm:$0xff]
        %v2752 = vld [vmem:[%s827 + $0xd9] sm:$0xff]
        %v2753 = vld [vmem:[%s827 + $0xe1] sm:$0xff]
        %v2754 = vld [vmem:[%s827 + $0xf1] sm:$0xff]
        %v2755 = vld [vmem:[%s827 + $0xf9] sm:$0xff]
        %v2756 = vld [vmem:[%s827 + $0x109] sm:$0xff]
        %v2757 = vld [vmem:[%s827 + $0x111] sm:$0xff]
        %v2758 = vld [vmem:[%s827 + $0x121] sm:$0xff]
        %v2759 = vld [vmem:[%s827 + $0x129] sm:$0xff]
        %v2760 = vld [vmem:[%s827 + $0x139] sm:$0xff]
        %v2761 = vld [vmem:[%s827 + $0x141] sm:$0xff]
        %v2762 = vld [vmem:[%s827 + $0x151] sm:$0xff]
        %v2763 = vld [vmem:[%s827 + $0x159] sm:$0xff]
        %v2764 = vld [vmem:[%s827 + $0x169] sm:$0xff]
        %v2765 = vld [vmem:[%s827 + $0x171] sm:$0xff]
        %v2766 = vld [vmem:[%s827 + $0x2] sm:$0xff]
        %v2767 = vld [vmem:[%s827 + $0xa] sm:$0xff]
        %v2768 = vld [vmem:[%s827 + $0x1a] sm:$0xff]
        %v2769 = vld [vmem:[%s827 + $0x22] sm:$0xff]
        %v2770 = vld [vmem:[%s827 + $0x32] sm:$0xff]
        %v2771 = vld [vmem:[%s827 + $0x3a] sm:$0xff]
        %v2772 = vld [vmem:[%s827 + $0x4a] sm:$0xff]
        %v2773 = vld [vmem:[%s827 + $0x52] sm:$0xff]
        %v2774 = vld [vmem:[%s827 + $0x62] sm:$0xff]
        %v2775 = vld [vmem:[%s827 + $0x6a] sm:$0xff]
        %v2776 = vld [vmem:[%s827 + $0x7a] sm:$0xff]
        %v2777 = vld [vmem:[%s827 + $0x82] sm:$0xff]
        %v2778 = vld [vmem:[%s827 + $0x92] sm:$0xff]
        %v2779 = vld [vmem:[%s827 + $0x9a] sm:$0xff]
        %v2780 = vld [vmem:[%s827 + $0xaa] sm:$0xff]
        %v2781 = vld [vmem:[%s827 + $0xb2] sm:$0xff]
        %v2782 = vld [vmem:[%s827 + $0xc2] sm:$0xff]
        %v2783 = vld [vmem:[%s827 + $0xca] sm:$0xff]
        %v2784 = vld [vmem:[%s827 + $0xda] sm:$0xff]
        %v2785 = vld [vmem:[%s827 + $0xe2] sm:$0xff]
        %v2786 = vld [vmem:[%s827 + $0xf2] sm:$0xff]
        %v2787 = vld [vmem:[%s827 + $0xfa] sm:$0xff]
        %v2788 = vld [vmem:[%s827 + $0x10a] sm:$0xff]
        %v2789 = vld [vmem:[%s827 + $0x112] sm:$0xff]
        %v2790 = vld [vmem:[%s827 + $0x122] sm:$0xff]
        %v2791 = vld [vmem:[%s827 + $0x12a] sm:$0xff]
        %v2792 = vld [vmem:[%s827 + $0x13a] sm:$0xff]
        %v2793 = vld [vmem:[%s827 + $0x142] sm:$0xff]
        %v2794 = vld [vmem:[%s827 + $0x152] sm:$0xff]
        %v2795 = vld [vmem:[%s827 + $0x15a] sm:$0xff]
        %v2796 = vld [vmem:[%s827 + $0x16a] sm:$0xff]
        %v2797 = vld [vmem:[%s827 + $0x172] sm:$0xff]
        %2830 = vrot.lane.b32.xlu0 %v2542, 64
        %v2831 = vpop.permute.xlu0 %2830
        %2832 = vrot.lane.b32.xlu0 %v2543, 64
        %v2833 = vpop.permute.xlu0 %2832
        %2834 = vrot.lane.b32.xlu0 %v2544, 64
        %v2835 = vpop.permute.xlu0 %2834
        %2836 = vrot.lane.b32.xlu0 %v2545, 64
        %v2837 = vpop.permute.xlu0 %2836
        %2838 = vrot.lane.b32.xlu0 %v2546, 64
        %v2839 = vpop.permute.xlu0 %2838
        %2840 = vrot.lane.b32.xlu0 %v2547, 64
        %v2841 = vpop.permute.xlu0 %2840
        %2842 = vrot.lane.b32.xlu0 %v2548, 64
        %v2843 = vpop.permute.xlu0 %2842
        %2844 = vrot.lane.b32.xlu0 %v2549, 64
        %v2845 = vpop.permute.xlu0 %2844
        %2846 = vrot.lane.b32.xlu0 %v2550, 64
        %v2847 = vpop.permute.xlu0 %2846
        %2848 = vrot.lane.b32.xlu0 %v2551, 64
        %v2849 = vpop.permute.xlu0 %2848
        %2850 = vrot.lane.b32.xlu0 %v2552, 64
        %v2851 = vpop.permute.xlu0 %2850
        %2852 = vrot.lane.b32.xlu0 %v2553, 64
        %v2853 = vpop.permute.xlu0 %2852
        %2854 = vrot.lane.b32.xlu0 %v2554, 64
        %v2855 = vpop.permute.xlu0 %2854
        %2856 = vrot.lane.b32.xlu0 %v2555, 64
        %v2857 = vpop.permute.xlu0 %2856
        %2858 = vrot.lane.b32.xlu0 %v2556, 64
        %v2859 = vpop.permute.xlu0 %2858
        %2860 = vrot.lane.b32.xlu0 %v2557, 64
        %v2861 = vpop.permute.xlu0 %2860
        %2862 = vrot.lane.b32.xlu0 %v2558, 64
        %v2863 = vpop.permute.xlu0 %2862
        %2864 = vrot.lane.b32.xlu0 %v2559, 64
        %v2865 = vpop.permute.xlu0 %2864
        %2866 = vrot.lane.b32.xlu0 %v2560, 64
        %v2867 = vpop.permute.xlu0 %2866
        %2868 = vrot.lane.b32.xlu0 %v2561, 64
        %v2869 = vpop.permute.xlu0 %2868
        %2870 = vrot.lane.b32.xlu0 %v2562, 64
        %v2871 = vpop.permute.xlu0 %2870
        %2872 = vrot.lane.b32.xlu0 %v2563, 64
        %v2873 = vpop.permute.xlu0 %2872
        %2874 = vrot.lane.b32.xlu0 %v2564, 64
        %v2875 = vpop.permute.xlu0 %2874
        %2876 = vrot.lane.b32.xlu0 %v2565, 64
        %v2877 = vpop.permute.xlu0 %2876
        %2878 = vrot.lane.b32.xlu0 %v2566, 64
        %v2879 = vpop.permute.xlu0 %2878
        %2880 = vrot.lane.b32.xlu0 %v2567, 64
        %v2881 = vpop.permute.xlu0 %2880
        %2882 = vrot.lane.b32.xlu0 %v2568, 64
        %v2883 = vpop.permute.xlu0 %2882
        %2884 = vrot.lane.b32.xlu0 %v2569, 64
        %v2885 = vpop.permute.xlu0 %2884
        %2886 = vrot.lane.b32.xlu0 %v2570, 64
        %v2887 = vpop.permute.xlu0 %2886
        %2888 = vrot.lane.b32.xlu0 %v2571, 64
        %v2889 = vpop.permute.xlu0 %2888
        %2890 = vrot.lane.b32.xlu0 %v2572, 64
        %v2891 = vpop.permute.xlu0 %2890
        %2892 = vrot.lane.b32.xlu0 %v2573, 64
        %v2893 = vpop.permute.xlu0 %2892
        %2958 = vrot.lane.b32.xlu0 %v2606, 64
        %v2959 = vpop.permute.xlu0 %2958
        %2960 = vrot.lane.b32.xlu0 %v2607, 64
        %v2961 = vpop.permute.xlu0 %2960
        %2962 = vrot.lane.b32.xlu0 %v2608, 64
        %v2963 = vpop.permute.xlu0 %2962
        %2964 = vrot.lane.b32.xlu0 %v2609, 64
        %v2965 = vpop.permute.xlu0 %2964
        %2966 = vrot.lane.b32.xlu0 %v2610, 64
        %v2967 = vpop.permute.xlu0 %2966
        %2968 = vrot.lane.b32.xlu0 %v2611, 64
        %v2969 = vpop.permute.xlu0 %2968
        %2970 = vrot.lane.b32.xlu0 %v2612, 64
        %v2971 = vpop.permute.xlu0 %2970
        %2972 = vrot.lane.b32.xlu0 %v2613, 64
        %v2973 = vpop.permute.xlu0 %2972
        %2974 = vrot.lane.b32.xlu0 %v2614, 64
        %v2975 = vpop.permute.xlu0 %2974
        %2976 = vrot.lane.b32.xlu0 %v2615, 64
        %v2977 = vpop.permute.xlu0 %2976
        %2978 = vrot.lane.b32.xlu0 %v2616, 64
        %v2979 = vpop.permute.xlu0 %2978
        %2980 = vrot.lane.b32.xlu0 %v2617, 64
        %v2981 = vpop.permute.xlu0 %2980
        %2982 = vrot.lane.b32.xlu0 %v2618, 64
        %v2983 = vpop.permute.xlu0 %2982
        %2984 = vrot.lane.b32.xlu0 %v2619, 64
        %v2985 = vpop.permute.xlu0 %2984
        %2986 = vrot.lane.b32.xlu0 %v2620, 64
        %v2987 = vpop.permute.xlu0 %2986
        %2988 = vrot.lane.b32.xlu0 %v2621, 64
        %v2989 = vpop.permute.xlu0 %2988
        %2990 = vrot.lane.b32.xlu0 %v2622, 64
        %v2991 = vpop.permute.xlu0 %2990
        %2992 = vrot.lane.b32.xlu0 %v2623, 64
        %v2993 = vpop.permute.xlu0 %2992
        %2994 = vrot.lane.b32.xlu0 %v2624, 64
        %v2995 = vpop.permute.xlu0 %2994
        %2996 = vrot.lane.b32.xlu0 %v2625, 64
        %v2997 = vpop.permute.xlu0 %2996
        %2998 = vrot.lane.b32.xlu0 %v2626, 64
        %v2999 = vpop.permute.xlu0 %2998
        %3000 = vrot.lane.b32.xlu0 %v2627, 64
        %v3001 = vpop.permute.xlu0 %3000
        %3002 = vrot.lane.b32.xlu0 %v2628, 64
        %v3003 = vpop.permute.xlu0 %3002
        %3004 = vrot.lane.b32.xlu0 %v2629, 64
        %v3005 = vpop.permute.xlu0 %3004
        %3006 = vrot.lane.b32.xlu0 %v2630, 64
        %v3007 = vpop.permute.xlu0 %3006
        %3008 = vrot.lane.b32.xlu0 %v2631, 64
        %v3009 = vpop.permute.xlu0 %3008
        %3010 = vrot.lane.b32.xlu0 %v2632, 64
        %v3011 = vpop.permute.xlu0 %3010
        %3012 = vrot.lane.b32.xlu0 %v2633, 64
        %v3013 = vpop.permute.xlu0 %3012
        %3014 = vrot.lane.b32.xlu0 %v2634, 64
        %v3015 = vpop.permute.xlu0 %3014
        %3016 = vrot.lane.b32.xlu0 %v2635, 64
        %v3017 = vpop.permute.xlu0 %3016
        %3018 = vrot.lane.b32.xlu0 %v2636, 64
        %v3019 = vpop.permute.xlu0 %3018
        %3020 = vrot.lane.b32.xlu0 %v2637, 64
        %v3021 = vpop.permute.xlu0 %3020
        %3086 = vrot.lane.b32.xlu0 %v2670, 64
        %v3087 = vpop.permute.xlu0 %3086
        %3088 = vrot.lane.b32.xlu0 %v2671, 64
        %v3089 = vpop.permute.xlu0 %3088
        %3090 = vrot.lane.b32.xlu0 %v2672, 64
        %v3091 = vpop.permute.xlu0 %3090
        %3092 = vrot.lane.b32.xlu0 %v2673, 64
        %v3093 = vpop.permute.xlu0 %3092
        %3094 = vrot.lane.b32.xlu0 %v2674, 64
        %v3095 = vpop.permute.xlu0 %3094
        %3096 = vrot.lane.b32.xlu0 %v2675, 64
        %v3097 = vpop.permute.xlu0 %3096
        %3098 = vrot.lane.b32.xlu0 %v2676, 64
        %v3099 = vpop.permute.xlu0 %3098
        %3100 = vrot.lane.b32.xlu0 %v2677, 64
        %v3101 = vpop.permute.xlu0 %3100
        %3102 = vrot.lane.b32.xlu0 %v2678, 64
        %v3103 = vpop.permute.xlu0 %3102
        %3104 = vrot.lane.b32.xlu0 %v2679, 64
        %v3105 = vpop.permute.xlu0 %3104
        %3106 = vrot.lane.b32.xlu0 %v2680, 64
        %v3107 = vpop.permute.xlu0 %3106
        %3108 = vrot.lane.b32.xlu0 %v2681, 64
        %v3109 = vpop.permute.xlu0 %3108
        %3110 = vrot.lane.b32.xlu0 %v2682, 64
        %v3111 = vpop.permute.xlu0 %3110
        %3112 = vrot.lane.b32.xlu0 %v2683, 64
        %v3113 = vpop.permute.xlu0 %3112
        %3114 = vrot.lane.b32.xlu0 %v2684, 64
        %v3115 = vpop.permute.xlu0 %3114
        %3116 = vrot.lane.b32.xlu0 %v2685, 64
        %v3117 = vpop.permute.xlu0 %3116
        %3118 = vrot.lane.b32.xlu0 %v2686, 64
        %v3119 = vpop.permute.xlu0 %3118
        %3120 = vrot.lane.b32.xlu0 %v2687, 64
        %v3121 = vpop.permute.xlu0 %3120
        %3122 = vrot.lane.b32.xlu0 %v2688, 64
        %v3123 = vpop.permute.xlu0 %3122
        %3124 = vrot.lane.b32.xlu0 %v2689, 64
        %v3125 = vpop.permute.xlu0 %3124
        %3126 = vrot.lane.b32.xlu0 %v2690, 64
        %v3127 = vpop.permute.xlu0 %3126
        %3128 = vrot.lane.b32.xlu0 %v2691, 64
        %v3129 = vpop.permute.xlu0 %3128
        %3130 = vrot.lane.b32.xlu0 %v2692, 64
        %v3131 = vpop.permute.xlu0 %3130
        %3132 = vrot.lane.b32.xlu0 %v2693, 64
        %v3133 = vpop.permute.xlu0 %3132
        %3134 = vrot.lane.b32.xlu0 %v2694, 64
        %v3135 = vpop.permute.xlu0 %3134
        %3136 = vrot.lane.b32.xlu0 %v2695, 64
        %v3137 = vpop.permute.xlu0 %3136
        %3138 = vrot.lane.b32.xlu0 %v2696, 64
        %v3139 = vpop.permute.xlu0 %3138
        %3140 = vrot.lane.b32.xlu0 %v2697, 64
        %v3141 = vpop.permute.xlu0 %3140
        %3142 = vrot.lane.b32.xlu0 %v2698, 64
        %v3143 = vpop.permute.xlu0 %3142
        %3144 = vrot.lane.b32.xlu0 %v2699, 64
        %v3145 = vpop.permute.xlu0 %3144
        %3146 = vrot.lane.b32.xlu0 %v2700, 64
        %v3147 = vpop.permute.xlu0 %3146
        %3148 = vrot.lane.b32.xlu0 %v2701, 64
        %v3149 = vpop.permute.xlu0 %3148
        %3214 = vrot.lane.b32.xlu0 %v2734, 64
        %v3215 = vpop.permute.xlu0 %3214
        %3216 = vrot.lane.b32.xlu0 %v2735, 64
        %v3217 = vpop.permute.xlu0 %3216
        %3218 = vrot.lane.b32.xlu0 %v2736, 64
        %v3219 = vpop.permute.xlu0 %3218
        %3220 = vrot.lane.b32.xlu0 %v2737, 64
        %v3221 = vpop.permute.xlu0 %3220
        %3222 = vrot.lane.b32.xlu0 %v2738, 64
        %v3223 = vpop.permute.xlu0 %3222
        %3224 = vrot.lane.b32.xlu0 %v2739, 64
        %v3225 = vpop.permute.xlu0 %3224
        %3226 = vrot.lane.b32.xlu0 %v2740, 64
        %v3227 = vpop.permute.xlu0 %3226
        %3228 = vrot.lane.b32.xlu0 %v2741, 64
        %v3229 = vpop.permute.xlu0 %3228
        %3230 = vrot.lane.b32.xlu0 %v2742, 64
        %v3231 = vpop.permute.xlu0 %3230
        %3232 = vrot.lane.b32.xlu0 %v2743, 64
        %v3233 = vpop.permute.xlu0 %3232
        %3234 = vrot.lane.b32.xlu0 %v2744, 64
        %v3235 = vpop.permute.xlu0 %3234
        %3236 = vrot.lane.b32.xlu0 %v2745, 64
        %v3237 = vpop.permute.xlu0 %3236
        %3238 = vrot.lane.b32.xlu0 %v2746, 64
        %v3239 = vpop.permute.xlu0 %3238
        %3240 = vrot.lane.b32.xlu0 %v2747, 64
        %v3241 = vpop.permute.xlu0 %3240
        %3242 = vrot.lane.b32.xlu0 %v2748, 64
        %v3243 = vpop.permute.xlu0 %3242
        %3244 = vrot.lane.b32.xlu0 %v2749, 64
        %v3245 = vpop.permute.xlu0 %3244
        %3246 = vrot.lane.b32.xlu0 %v2750, 64
        %v3247 = vpop.permute.xlu0 %3246
        %3248 = vrot.lane.b32.xlu0 %v2751, 64
        %v3249 = vpop.permute.xlu0 %3248
        %3250 = vrot.lane.b32.xlu0 %v2752, 64
        %v3251 = vpop.permute.xlu0 %3250
        %3252 = vrot.lane.b32.xlu0 %v2753, 64
        %v3253 = vpop.permute.xlu0 %3252
        %3254 = vrot.lane.b32.xlu0 %v2754, 64
        %v3255 = vpop.permute.xlu0 %3254
        %3256 = vrot.lane.b32.xlu0 %v2755, 64
        %v3257 = vpop.permute.xlu0 %3256
        %3258 = vrot.lane.b32.xlu0 %v2756, 64
        %v3259 = vpop.permute.xlu0 %3258
        %3260 = vrot.lane.b32.xlu0 %v2757, 64
        %v3261 = vpop.permute.xlu0 %3260
        %3262 = vrot.lane.b32.xlu0 %v2758, 64
        %v3263 = vpop.permute.xlu0 %3262
        %3264 = vrot.lane.b32.xlu0 %v2759, 64
        %v3265 = vpop.permute.xlu0 %3264
        %3266 = vrot.lane.b32.xlu0 %v2760, 64
        %v3267 = vpop.permute.xlu0 %3266
        %3268 = vrot.lane.b32.xlu0 %v2761, 64
        %v3269 = vpop.permute.xlu0 %3268
        %3270 = vrot.lane.b32.xlu0 %v2762, 64
        %v3271 = vpop.permute.xlu0 %3270
        %3272 = vrot.lane.b32.xlu0 %v2763, 64
        %v3273 = vpop.permute.xlu0 %3272
        %3274 = vrot.lane.b32.xlu0 %v2764, 64
        %v3275 = vpop.permute.xlu0 %3274
        %3276 = vrot.lane.b32.xlu0 %v2765, 64
        %v3277 = vpop.permute.xlu0 %3276
        %v3310 = vsel %vm441, %v2510, %v2831
        %v3311 = vsel %vm441, %v2511, %v2833
        %v3312 = vsel %vm441, %v2512, %v2835
        %v3313 = vsel %vm441, %v2513, %v2837
        %v3314 = vsel %vm441, %v2514, %v2839
        %v3315 = vsel %vm441, %v2515, %v2841
        %v3316 = vsel %vm441, %v2516, %v2843
        %v3317 = vsel %vm441, %v2517, %v2845
        %v3318 = vsel %vm441, %v2518, %v2847
        %v3319 = vsel %vm441, %v2519, %v2849
        %v3320 = vsel %vm441, %v2520, %v2851
        %v3321 = vsel %vm441, %v2521, %v2853
        %v3322 = vsel %vm441, %v2522, %v2855
        %v3323 = vsel %vm441, %v2523, %v2857
        %v3324 = vsel %vm441, %v2524, %v2859
        %v3325 = vsel %vm441, %v2525, %v2861
        %v3326 = vsel %vm441, %v2526, %v2863
        %v3327 = vsel %vm441, %v2527, %v2865
        %v3328 = vsel %vm441, %v2528, %v2867
        %v3329 = vsel %vm441, %v2529, %v2869
        %v3330 = vsel %vm441, %v2530, %v2871
        %v3331 = vsel %vm441, %v2531, %v2873
        %v3332 = vsel %vm441, %v2532, %v2875
        %v3333 = vsel %vm441, %v2533, %v2877
        %v3334 = vsel %vm441, %v2534, %v2879
        %v3335 = vsel %vm441, %v2535, %v2881
        %v3336 = vsel %vm441, %v2536, %v2883
        %v3337 = vsel %vm441, %v2537, %v2885
        %v3338 = vsel %vm441, %v2538, %v2887
        %v3339 = vsel %vm441, %v2539, %v2889
        %v3340 = vsel %vm441, %v2540, %v2891
        %v3341 = vsel %vm441, %v2541, %v2893
        %v3342 = vsel %vm441, %v2574, %v2959
        %v3343 = vsel %vm441, %v2575, %v2961
        %v3344 = vsel %vm441, %v2576, %v2963
        %v3345 = vsel %vm441, %v2577, %v2965
        %v3346 = vsel %vm441, %v2578, %v2967
        %v3347 = vsel %vm441, %v2579, %v2969
        %v3348 = vsel %vm441, %v2580, %v2971
        %v3349 = vsel %vm441, %v2581, %v2973
        %v3350 = vsel %vm441, %v2582, %v2975
        %v3351 = vsel %vm441, %v2583, %v2977
        %v3352 = vsel %vm441, %v2584, %v2979
        %v3353 = vsel %vm441, %v2585, %v2981
        %v3354 = vsel %vm441, %v2586, %v2983
        %v3355 = vsel %vm441, %v2587, %v2985
        %v3356 = vsel %vm441, %v2588, %v2987
        %v3357 = vsel %vm441, %v2589, %v2989
        %v3358 = vsel %vm441, %v2590, %v2991
        %v3359 = vsel %vm441, %v2591, %v2993
        %v3360 = vsel %vm441, %v2592, %v2995
        %v3361 = vsel %vm441, %v2593, %v2997
        %v3362 = vsel %vm441, %v2594, %v2999
        %v3363 = vsel %vm441, %v2595, %v3001
        %v3364 = vsel %vm441, %v2596, %v3003
        %v3365 = vsel %vm441, %v2597, %v3005
        %v3366 = vsel %vm441, %v2598, %v3007
        %v3367 = vsel %vm441, %v2599, %v3009
        %v3368 = vsel %vm441, %v2600, %v3011
        %v3369 = vsel %vm441, %v2601, %v3013
        %v3370 = vsel %vm441, %v2602, %v3015
        %v3371 = vsel %vm441, %v2603, %v3017
        %v3372 = vsel %vm441, %v2604, %v3019
        %v3373 = vsel %vm441, %v2605, %v3021
        %v3374 = vsel %vm441, %v2638, %v3087
        %v3375 = vsel %vm441, %v2639, %v3089
        %v3376 = vsel %vm441, %v2640, %v3091
        %v3377 = vsel %vm441, %v2641, %v3093
        %v3378 = vsel %vm441, %v2642, %v3095
        %v3379 = vsel %vm441, %v2643, %v3097
        %v3380 = vsel %vm441, %v2644, %v3099
        %v3381 = vsel %vm441, %v2645, %v3101
        %v3382 = vsel %vm441, %v2646, %v3103
        %v3383 = vsel %vm441, %v2647, %v3105
        %v3384 = vsel %vm441, %v2648, %v3107
        %v3385 = vsel %vm441, %v2649, %v3109
        %v3386 = vsel %vm441, %v2650, %v3111
        %v3387 = vsel %vm441, %v2651, %v3113
        %v3388 = vsel %vm441, %v2652, %v3115
        %v3389 = vsel %vm441, %v2653, %v3117
        %v3390 = vsel %vm441, %v2654, %v3119
        %v3391 = vsel %vm441, %v2655, %v3121
        %v3392 = vsel %vm441, %v2656, %v3123
        %v3393 = vsel %vm441, %v2657, %v3125
        %v3394 = vsel %vm441, %v2658, %v3127
        %v3395 = vsel %vm441, %v2659, %v3129
        %v3396 = vsel %vm441, %v2660, %v3131
        %v3397 = vsel %vm441, %v2661, %v3133
        %v3398 = vsel %vm441, %v2662, %v3135
        %v3399 = vsel %vm441, %v2663, %v3137
        %v3400 = vsel %vm441, %v2664, %v3139
        %v3401 = vsel %vm441, %v2665, %v3141
        %v3402 = vsel %vm441, %v2666, %v3143
        %v3403 = vsel %vm441, %v2667, %v3145
        %v3404 = vsel %vm441, %v2668, %v3147
        %v3405 = vsel %vm441, %v2669, %v3149
        %v3406 = vsel %vm441, %v2702, %v3215
        %v3407 = vsel %vm441, %v2703, %v3217
        %v3408 = vsel %vm441, %v2704, %v3219
        %v3409 = vsel %vm441, %v2705, %v3221
        %v3410 = vsel %vm441, %v2706, %v3223
        %v3411 = vsel %vm441, %v2707, %v3225
        %v3412 = vsel %vm441, %v2708, %v3227
        %v3413 = vsel %vm441, %v2709, %v3229
        %v3414 = vsel %vm441, %v2710, %v3231
        %v3415 = vsel %vm441, %v2711, %v3233
        %v3416 = vsel %vm441, %v2712, %v3235
        %v3417 = vsel %vm441, %v2713, %v3237
        %v3418 = vsel %vm441, %v2714, %v3239
        %v3419 = vsel %vm441, %v2715, %v3241
        %v3420 = vsel %vm441, %v2716, %v3243
        %v3421 = vsel %vm441, %v2717, %v3245
        %v3422 = vsel %vm441, %v2718, %v3247
        %v3423 = vsel %vm441, %v2719, %v3249
        %v3424 = vsel %vm441, %v2720, %v3251
        %v3425 = vsel %vm441, %v2721, %v3253
        %v3426 = vsel %vm441, %v2722, %v3255
        %v3427 = vsel %vm441, %v2723, %v3257
        %v3428 = vsel %vm441, %v2724, %v3259
        %v3429 = vsel %vm441, %v2725, %v3261
        %v3430 = vsel %vm441, %v2726, %v3263
        %v3431 = vsel %vm441, %v2727, %v3265
        %v3432 = vsel %vm441, %v2728, %v3267
        %v3433 = vsel %vm441, %v2729, %v3269
        %v3434 = vsel %vm441, %v2730, %v3271
        %v3435 = vsel %vm441, %v2731, %v3273
        %v3436 = vsel %vm441, %v2732, %v3275
        %v3437 = vsel %vm441, %v2733, %v3277
        %v3439 = vlaneseq
        %v3440 = vshrl.u32 %v3439, 7
        %v3441 = vsub.s32 0, %v3440
        %v3442 = vrot.slane %v2477, %v3441
        %v3445 = vsel %vm441, %v2766, 0
        %v3448 = vsel %vm441, %v2767, 0
        %v3451 = vsel %vm441, %v2768, 0
        %v3454 = vsel %vm441, %v2769, 0
        %v3457 = vsel %vm441, %v2770, 0
        %v3460 = vsel %vm441, %v2771, 0
        %v3463 = vsel %vm441, %v2772, 0
        %v3466 = vsel %vm441, %v2773, 0
        %v3469 = vsel %vm441, %v2774, 0
        %v3472 = vsel %vm441, %v2775, 0
        %v3475 = vsel %vm441, %v2776, 0
        %v3478 = vsel %vm441, %v2777, 0
        %v3481 = vsel %vm441, %v2778, 0
        %v3484 = vsel %vm441, %v2779, 0
        %v3487 = vsel %vm441, %v2780, 0
        %v3490 = vsel %vm441, %v2781, 0
        %v3493 = vsel %vm441, %v2782, 0
        %v3496 = vsel %vm441, %v2783, 0
        %v3499 = vsel %vm441, %v2784, 0
        %v3502 = vsel %vm441, %v2785, 0
        %v3505 = vsel %vm441, %v2786, 0
        %v3508 = vsel %vm441, %v2787, 0
        %v3511 = vsel %vm441, %v2788, 0
        %v3514 = vsel %vm441, %v2789, 0
        %v3517 = vsel %vm441, %v2790, 0
        %v3520 = vsel %vm441, %v2791, 0
        %v3523 = vsel %vm441, %v2792, 0
        %v3526 = vsel %vm441, %v2793, 0
        %v3529 = vsel %vm441, %v2794, 0
        %v3532 = vsel %vm441, %v2795, 0
        %v3535 = vsel %vm441, %v2796, 0
        %v3538 = vsel %vm441, %v2797, 0
        %3540 = vmatprep.subr.mxu0 0.0
        %3541 = vmatpush1.msra.mxu0 %v2405
        %3542 = vmatprep.subr.mxu0 0.0
        %3543 = vmatpush1.msra.mxu0 %v2406
        %3544 = vmatprep.subr.mxu0 0.0
        %3545 = vmatpush1.msra.mxu0 %v2407
        %3546 = vmatprep.subr.mxu0 0.0
        %3547 = vmatpush1.msra.mxu0 %v2408
        %3548 = vmatprep.subr.mxu0 0.0
        %3549 = vmatpush1.msra.mxu0 %v2409
        %3550 = vmatprep.subr.mxu0 0.0
        %3551 = vmatpush1.msra.mxu0 %v2410
        %3552 = vmatprep.subr.mxu0 0.0
        %3553 = vmatpush1.msra.mxu0 %v2411
        %3554 = vmatprep.subr.mxu0 0.0
        %3555 = vmatpush1.msra.mxu0 %v2412
        %3556 = vmatprep.subr.mxu0 0.0
        %3557 = vmatpush1.msra.mxu0 %v2413
        %3558 = vmatprep.subr.mxu0 0.0
        %3559 = vmatpush1.msra.mxu0 %v2414
        %3560 = vmatprep.subr.mxu0 0.0
        %3561 = vmatpush1.msra.mxu0 %v2415
        %3562 = vmatprep.subr.mxu0 0.0
        %3563 = vmatpush1.msra.mxu0 %v2416
        %3564 = vmatprep.subr.mxu0 0.0
        %3565 = vmatpush1.msra.mxu0 %v2417
        %3566 = vmatprep.subr.mxu0 0.0
        %3567 = vmatpush1.msra.mxu0 %v2418
        %3568 = vmatprep.subr.mxu0 0.0
        %3569 = vmatpush1.msra.mxu0 %v2419
        %3570 = vmatprep.subr.mxu0 0.0
        %3571 = vmatpush1.msra.mxu0 %v2420
        %3572 = vmatprep.subr.mxu0 0.0
        %3573 = vmatpush1.msra.mxu0 %v2421
        %3574 = vmatprep.subr.mxu0 0.0
        %3575 = vmatpush1.msra.mxu0 %v2422
        %3576 = vmatprep.subr.mxu0 0.0
        %3577 = vmatpush1.msra.mxu0 %v2423
        %3578 = vmatprep.subr.mxu0 0.0
        %3579 = vmatpush1.msra.mxu0 %v2424
        %3580 = vmatprep.subr.mxu0 0.0
        %3581 = vmatpush1.msra.mxu0 %v2425
        %3582 = vmatprep.subr.mxu0 0.0
        %3583 = vmatpush1.msra.mxu0 %v2426
        %3584 = vmatprep.subr.mxu0 0.0
        %3585 = vmatpush1.msra.mxu0 %v2427
        %3586 = vmatprep.subr.mxu0 0.0
        %3587 = vmatpush1.msra.mxu0 %v2428
        %3588 = vmatprep.subr.mxu0 0.0
        %3589 = vmatpush1.msra.mxu0 %v2429
        %3590 = vmatprep.subr.mxu0 0.0
        %3591 = vmatpush1.msra.mxu0 %v2430
        %3592 = vmatprep.subr.mxu0 0.0
        %3593 = vmatpush1.msra.mxu0 %v2431
        %3594 = vmatprep.subr.mxu0 0.0
        %3595 = vmatpush1.msra.mxu0 %v2432
        %3596 = vmatprep.subr.mxu0 0.0
        %3597 = vmatpush1.msra.mxu0 %v2433
        %3598 = vmatprep.subr.mxu0 0.0
        %3599 = vmatpush1.msra.mxu0 %v2434
        %3600 = vmatprep.subr.mxu0 0.0
        %3601 = vmatpush1.msra.mxu0 %v2435
        %3602 = vmatprep.subr.mxu0 0.0
        %3603 = vmatpush1.msra.mxu0 %v2436
        %3604 = vmatprep.mubr.f32.mxu0 %v3342
        %3605 = vmatmul.mubr.f32.gmra.mrb[0].mxu0 %v3310
        %v3606 = vpop.f32.mrb[0].mxu0
        %v3607 = vadd.f32 %v3442, %v3606
        %v3608 = vpop.f32.mrb[0].mxu0
        %3609 = vmatprep.mubr.f32.mxu0 %v3343
        %3610 = vmatmul.mubr.f32.gmra.mrb[0].mxu0 %v3311
        %v3611 = vpop.f32.mrb[0].mxu0
        %v3612 = vadd.f32 %v3442, %v3611
        %v3613 = vpop.f32.mrb[0].mxu0
        %3614 = vmatprep.mubr.f32.mxu0 %v3344
        %3615 = vmatmul.mubr.f32.gmra.mrb[0].mxu0 %v3312
        %v3616 = vpop.f32.mrb[0].mxu0
        %v3617 = vadd.f32 %v3442, %v3616
        %v3618 = vpop.f32.mrb[0].mxu0
        %3619 = vmatprep.mubr.f32.mxu0 %v3345
        %3620 = vmatmul.mubr.f32.gmra.mrb[0].mxu0 %v3313
        %v3621 = vpop.f32.mrb[0].mxu0
        %v3622 = vadd.f32 %v3442, %v3621
        %v3623 = vpop.f32.mrb[0].mxu0
        %3624 = vmatprep.mubr.f32.mxu0 %v3346
        %3625 = vmatmul.mubr.f32.gmra.mrb[0].mxu0 %v3314
        %v3626 = vpop.f32.mrb[0].mxu0
        %v3627 = vadd.f32 %v3442, %v3626
        %v3628 = vpop.f32.mrb[0].mxu0
        %3629 = vmatprep.mubr.f32.mxu0 %v3347
        %3630 = vmatmul.mubr.f32.gmra.mrb[0].mxu0 %v3315
        %v3631 = vpop.f32.mrb[0].mxu0
        %v3632 = vadd.f32 %v3442, %v3631
        %v3633 = vpop.f32.mrb[0].mxu0
        %3634 = vmatprep.mubr.f32.mxu0 %v3348
        %3635 = vmatmul.mubr.f32.gmra.mrb[0].mxu0 %v3316
        %v3636 = vpop.f32.mrb[0].mxu0
        %v3637 = vadd.f32 %v3442, %v3636
        %v3638 = vpop.f32.mrb[0].mxu0
        %3639 = vmatprep.mubr.f32.mxu0 %v3349
        %3640 = vmatmul.mubr.f32.gmra.mrb[0].mxu0 %v3317
        %v3641 = vpop.f32.mrb[0].mxu0
        %v3642 = vadd.f32 %v3442, %v3641
        %v3643 = vpop.f32.mrb[0].mxu0
        %3644 = vmatprep.mubr.f32.mxu0 %v3350
        %3645 = vmatmul.mubr.f32.gmra.mrb[0].mxu0 %v3318
        %v3646 = vpop.f32.mrb[0].mxu0
        %v3647 = vadd.f32 %v3442, %v3646
        %v3648 = vpop.f32.mrb[0].mxu0
        %3649 = vmatprep.mubr.f32.mxu0 %v3351
        %3650 = vmatmul.mubr.f32.gmra.mrb[0].mxu0 %v3319
        %v3651 = vpop.f32.mrb[0].mxu0
        %v3652 = vadd.f32 %v3442, %v3651
        %v3653 = vpop.f32.mrb[0].mxu0
        %3654 = vmatprep.mubr.f32.mxu0 %v3352
        %3655 = vmatmul.mubr.f32.gmra.mrb[0].mxu0 %v3320
        %v3656 = vpop.f32.mrb[0].mxu0
        %v3657 = vadd.f32 %v3442, %v3656
        %v3658 = vpop.f32.mrb[0].mxu0
        %3659 = vmatprep.mubr.f32.mxu0 %v3353
        %3660 = vmatmul.mubr.f32.gmra.mrb[0].mxu0 %v3321
        %v3661 = vpop.f32.mrb[0].mxu0
        %v3662 = vadd.f32 %v3442, %v3661
        %v3663 = vpop.f32.mrb[0].mxu0
        %3664 = vmatprep.mubr.f32.mxu0 %v3354
        %3665 = vmatmul.mubr.f32.gmra.mrb[0].mxu0 %v3322
        %v3666 = vpop.f32.mrb[0].mxu0
        %v3667 = vadd.f32 %v3442, %v3666
        %v3668 = vpop.f32.mrb[0].mxu0
        %3669 = vmatprep.mubr.f32.mxu0 %v3355
        %3670 = vmatmul.mubr.f32.gmra.mrb[0].mxu0 %v3323
        %v3671 = vpop.f32.mrb[0].mxu0
        %v3672 = vadd.f32 %v3442, %v3671
        %v3673 = vpop.f32.mrb[0].mxu0
        %3674 = vmatprep.mubr.f32.mxu0 %v3356
        %3675 = vmatmul.mubr.f32.gmra.mrb[0].mxu0 %v3324
        %v3676 = vpop.f32.mrb[0].mxu0
        %v3677 = vadd.f32 %v3442, %v3676
        %v3678 = vpop.f32.mrb[0].mxu0
        %3679 = vmatprep.mubr.f32.mxu0 %v3357
        %3680 = vmatmul.mubr.f32.gmra.mrb[0].mxu0 %v3325
        %v3681 = vpop.f32.mrb[0].mxu0
        %v3682 = vadd.f32 %v3442, %v3681
        %v3683 = vpop.f32.mrb[0].mxu0
        %3684 = vmatprep.mubr.f32.mxu0 %v3358
        %3685 = vmatmul.mubr.f32.gmra.mrb[0].mxu0 %v3326
        %v3686 = vpop.f32.mrb[0].mxu0
        %v3687 = vadd.f32 %v3442, %v3686
        %v3688 = vpop.f32.mrb[0].mxu0
        %3689 = vmatprep.mubr.f32.mxu0 %v3359
        %3690 = vmatmul.mubr.f32.gmra.mrb[0].mxu0 %v3327
        %v3691 = vpop.f32.mrb[0].mxu0
        %v3692 = vadd.f32 %v3442, %v3691
        %v3693 = vpop.f32.mrb[0].mxu0
        %3694 = vmatprep.mubr.f32.mxu0 %v3360
        %3695 = vmatmul.mubr.f32.gmra.mrb[0].mxu0 %v3328
        %v3696 = vpop.f32.mrb[0].mxu0
        %v3697 = vadd.f32 %v3442, %v3696
        %v3698 = vpop.f32.mrb[0].mxu0
        %3699 = vmatprep.mubr.f32.mxu0 %v3361
        %3700 = vmatmul.mubr.f32.gmra.mrb[0].mxu0 %v3329
        %v3701 = vpop.f32.mrb[0].mxu0
        %v3702 = vadd.f32 %v3442, %v3701
        %v3703 = vpop.f32.mrb[0].mxu0
        %3704 = vmatprep.mubr.f32.mxu0 %v3362
        %3705 = vmatmul.mubr.f32.gmra.mrb[0].mxu0 %v3330
        %v3706 = vpop.f32.mrb[0].mxu0
        %v3707 = vadd.f32 %v3442, %v3706
        %v3708 = vpop.f32.mrb[0].mxu0
        %3709 = vmatprep.mubr.f32.mxu0 %v3363
        %3710 = vmatmul.mubr.f32.gmra.mrb[0].mxu0 %v3331
        %v3711 = vpop.f32.mrb[0].mxu0
        %v3712 = vadd.f32 %v3442, %v3711
        %v3713 = vpop.f32.mrb[0].mxu0
        %3714 = vmatprep.mubr.f32.mxu0 %v3364
        %3715 = vmatmul.mubr.f32.gmra.mrb[0].mxu0 %v3332
        %v3716 = vpop.f32.mrb[0].mxu0
        %v3717 = vadd.f32 %v3442, %v3716
        %v3718 = vpop.f32.mrb[0].mxu0
        %3719 = vmatprep.mubr.f32.mxu0 %v3365
        %3720 = vmatmul.mubr.f32.gmra.mrb[0].mxu0 %v3333
        %v3721 = vpop.f32.mrb[0].mxu0
        %v3722 = vadd.f32 %v3442, %v3721
        %v3723 = vpop.f32.mrb[0].mxu0
        %3724 = vmatprep.mubr.f32.mxu0 %v3366
        %3725 = vmatmul.mubr.f32.gmra.mrb[0].mxu0 %v3334
        %v3726 = vpop.f32.mrb[0].mxu0
        %v3727 = vadd.f32 %v3442, %v3726
        %v3728 = vpop.f32.mrb[0].mxu0
        %3729 = vmatprep.mubr.f32.mxu0 %v3367
        %3730 = vmatmul.mubr.f32.gmra.mrb[0].mxu0 %v3335
        %v3731 = vpop.f32.mrb[0].mxu0
        %v3732 = vadd.f32 %v3442, %v3731
        %v3733 = vpop.f32.mrb[0].mxu0
        %3734 = vmatprep.mubr.f32.mxu0 %v3368
        %3735 = vmatmul.mubr.f32.gmra.mrb[0].mxu0 %v3336
        %v3736 = vpop.f32.mrb[0].mxu0
        %v3737 = vadd.f32 %v3442, %v3736
        %v3738 = vpop.f32.mrb[0].mxu0
        %3739 = vmatprep.mubr.f32.mxu0 %v3369
        %3740 = vmatmul.mubr.f32.gmra.mrb[0].mxu0 %v3337
        %v3741 = vpop.f32.mrb[0].mxu0
        %v3742 = vadd.f32 %v3442, %v3741
        %v3743 = vpop.f32.mrb[0].mxu0
        %3744 = vmatprep.mubr.f32.mxu0 %v3370
        %3745 = vmatmul.mubr.f32.gmra.mrb[0].mxu0 %v3338
        %v3746 = vpop.f32.mrb[0].mxu0
        %v3747 = vadd.f32 %v3442, %v3746
        %v3748 = vpop.f32.mrb[0].mxu0
        %3749 = vmatprep.mubr.f32.mxu0 %v3371
        %3750 = vmatmul.mubr.f32.gmra.mrb[0].mxu0 %v3339
        %v3751 = vpop.f32.mrb[0].mxu0
        %v3752 = vadd.f32 %v3442, %v3751
        %v3753 = vpop.f32.mrb[0].mxu0
        %3754 = vmatprep.mubr.f32.mxu0 %v3372
        %3755 = vmatmul.mubr.f32.gmra.mrb[0].mxu0 %v3340
        %v3756 = vpop.f32.mrb[0].mxu0
        %v3757 = vadd.f32 %v3442, %v3756
        %v3758 = vpop.f32.mrb[0].mxu0
        %3759 = vmatprep.mubr.f32.mxu0 %v3373
        %3760 = vmatmul.mubr.f32.gmra.mrb[0].mxu0 %v3341
        %v3761 = vpop.f32.mrb[0].mxu0
        %v3762 = vadd.f32 %v3442, %v3761
        %v3763 = vpop.f32.mrb[0].mxu0
        %3764 = vdwg.mxu0
        %3765 = vmatprep.subr.mxu0 0.0
        %3766 = vmatpush1.msra.mxu0 %v2437
        %3767 = vmatprep.subr.mxu0 0.0
        %3768 = vmatpush1.msra.mxu0 %v2438
        %3769 = vmatprep.subr.mxu0 0.0
        %3770 = vmatpush1.msra.mxu0 %v2439
        %3771 = vmatprep.subr.mxu0 0.0
        %3772 = vmatpush1.msra.mxu0 %v2440
        %3773 = vmatprep.subr.mxu0 0.0
        %3774 = vmatpush1.msra.mxu0 %v2441
        %3775 = vmatprep.subr.mxu0 0.0
        %3776 = vmatpush1.msra.mxu0 %v2442
        %3777 = vmatprep.subr.mxu0 0.0
        %3778 = vmatpush1.msra.mxu0 %v2443
        %3779 = vmatprep.subr.mxu0 0.0
        %3780 = vmatpush1.msra.mxu0 %v2444
        %3781 = vmatprep.subr.mxu0 0.0
        %3782 = vmatpush1.msra.mxu0 %v2445
        %3783 = vmatprep.subr.mxu0 0.0
        %3784 = vmatpush1.msra.mxu0 %v2446
        %3785 = vmatprep.subr.mxu0 0.0
        %3786 = vmatpush1.msra.mxu0 %v2447
        %3787 = vmatprep.subr.mxu0 0.0
        %3788 = vmatpush1.msra.mxu0 %v2448
        %3789 = vmatprep.subr.mxu0 0.0
        %3790 = vmatpush1.msra.mxu0 %v2449
        %3791 = vmatprep.subr.mxu0 0.0
        %3792 = vmatpush1.msra.mxu0 %v2450
        %3793 = vmatprep.subr.mxu0 0.0
        %3794 = vmatpush1.msra.mxu0 %v2451
        %3795 = vmatprep.subr.mxu0 0.0
        %3796 = vmatpush1.msra.mxu0 %v2452
        %3797 = vmatprep.subr.mxu0 0.0
        %3798 = vmatpush1.msra.mxu0 %v2453
        %3799 = vmatprep.subr.mxu0 0.0
        %3800 = vmatpush1.msra.mxu0 %v2454
        %3801 = vmatprep.subr.mxu0 0.0
        %3802 = vmatpush1.msra.mxu0 %v2455
        %3803 = vmatprep.subr.mxu0 0.0
        %3804 = vmatpush1.msra.mxu0 %v2456
        %3805 = vmatprep.subr.mxu0 0.0
        %3806 = vmatpush1.msra.mxu0 %v2457
        %3807 = vmatprep.subr.mxu0 0.0
        %3808 = vmatpush1.msra.mxu0 %v2458
        %3809 = vmatprep.subr.mxu0 0.0
        %3810 = vmatpush1.msra.mxu0 %v2459
        %3811 = vmatprep.subr.mxu0 0.0
        %3812 = vmatpush1.msra.mxu0 %v2460
        %3813 = vmatprep.subr.mxu0 0.0
        %3814 = vmatpush1.msra.mxu0 %v2461
        %3815 = vmatprep.subr.mxu0 0.0
        %3816 = vmatpush1.msra.mxu0 %v2462
        %3817 = vmatprep.subr.mxu0 0.0
        %3818 = vmatpush1.msra.mxu0 %v2463
        %3819 = vmatprep.subr.mxu0 0.0
        %3820 = vmatpush1.msra.mxu0 %v2464
        %3821 = vmatprep.subr.mxu0 0.0
        %3822 = vmatpush1.msra.mxu0 %v2465
        %3823 = vmatprep.subr.mxu0 0.0
        %3824 = vmatpush1.msra.mxu0 %v2466
        %3825 = vmatprep.subr.mxu0 0.0
        %3826 = vmatpush1.msra.mxu0 %v2467
        %3827 = vmatprep.subr.mxu0 0.0
        %3828 = vmatpush1.msra.mxu0 %v2468
        %3829 = vmatprep.mubr.f32.mxu0 %v3406
        %3830 = vmatmul.mubr.f32.gmra.mrb[0].mxu0 %v3374
        %v3831 = vpop.f32.mrb[0].mxu0
        %v3832 = vadd.f32 %v3607, %v3831
        %v3833 = vpop.f32.mrb[0].mxu0
        %3834 = vmatprep.mubr.f32.mxu0 %v3407
        %3835 = vmatmul.mubr.f32.gmra.mrb[0].mxu0 %v3375
        %v3836 = vpop.f32.mrb[0].mxu0
        %v3837 = vadd.f32 %v3612, %v3836
        %v3838 = vpop.f32.mrb[0].mxu0
        %3839 = vmatprep.mubr.f32.mxu0 %v3408
        %3840 = vmatmul.mubr.f32.gmra.mrb[0].mxu0 %v3376
        %v3841 = vpop.f32.mrb[0].mxu0
        %v3842 = vadd.f32 %v3617, %v3841
        %v3843 = vpop.f32.mrb[0].mxu0
        %3844 = vmatprep.mubr.f32.mxu0 %v3409
        %3845 = vmatmul.mubr.f32.gmra.mrb[0].mxu0 %v3377
        %v3846 = vpop.f32.mrb[0].mxu0
        %v3847 = vadd.f32 %v3622, %v3846
        %v3848 = vpop.f32.mrb[0].mxu0
        %3849 = vmatprep.mubr.f32.mxu0 %v3410
        %3850 = vmatmul.mubr.f32.gmra.mrb[0].mxu0 %v3378
        %v3851 = vpop.f32.mrb[0].mxu0
        %v3852 = vadd.f32 %v3627, %v3851
        %v3853 = vpop.f32.mrb[0].mxu0
        %3854 = vmatprep.mubr.f32.mxu0 %v3411
        %3855 = vmatmul.mubr.f32.gmra.mrb[0].mxu0 %v3379
        %v3856 = vpop.f32.mrb[0].mxu0
        %v3857 = vadd.f32 %v3632, %v3856
        %v3858 = vpop.f32.mrb[0].mxu0
        %3859 = vmatprep.mubr.f32.mxu0 %v3412
        %3860 = vmatmul.mubr.f32.gmra.mrb[0].mxu0 %v3380
        %v3861 = vpop.f32.mrb[0].mxu0
        %v3862 = vadd.f32 %v3637, %v3861
        %v3863 = vpop.f32.mrb[0].mxu0
        %3864 = vmatprep.mubr.f32.mxu0 %v3413
        %3865 = vmatmul.mubr.f32.gmra.mrb[0].mxu0 %v3381
        %v3866 = vpop.f32.mrb[0].mxu0
        %v3867 = vadd.f32 %v3642, %v3866
        %v3868 = vpop.f32.mrb[0].mxu0
        %3869 = vmatprep.mubr.f32.mxu0 %v3414
        %3870 = vmatmul.mubr.f32.gmra.mrb[0].mxu0 %v3382
        %v3871 = vpop.f32.mrb[0].mxu0
        %v3872 = vadd.f32 %v3647, %v3871
        %v3873 = vpop.f32.mrb[0].mxu0
        %3874 = vmatprep.mubr.f32.mxu0 %v3415
        %3875 = vmatmul.mubr.f32.gmra.mrb[0].mxu0 %v3383
        %v3876 = vpop.f32.mrb[0].mxu0
        %v3877 = vadd.f32 %v3652, %v3876
        %v3878 = vpop.f32.mrb[0].mxu0
        %3879 = vmatprep.mubr.f32.mxu0 %v3416
        %3880 = vmatmul.mubr.f32.gmra.mrb[0].mxu0 %v3384
        %v3881 = vpop.f32.mrb[0].mxu0
        %v3882 = vadd.f32 %v3657, %v3881
        %v3883 = vpop.f32.mrb[0].mxu0
        %3884 = vmatprep.mubr.f32.mxu0 %v3417
        %3885 = vmatmul.mubr.f32.gmra.mrb[0].mxu0 %v3385
        %v3886 = vpop.f32.mrb[0].mxu0
        %v3887 = vadd.f32 %v3662, %v3886
        %v3888 = vpop.f32.mrb[0].mxu0
        %3889 = vmatprep.mubr.f32.mxu0 %v3418
        %3890 = vmatmul.mubr.f32.gmra.mrb[0].mxu0 %v3386
        %v3891 = vpop.f32.mrb[0].mxu0
        %v3892 = vadd.f32 %v3667, %v3891
        %v3893 = vpop.f32.mrb[0].mxu0
        %3894 = vmatprep.mubr.f32.mxu0 %v3419
        %3895 = vmatmul.mubr.f32.gmra.mrb[0].mxu0 %v3387
        %v3896 = vpop.f32.mrb[0].mxu0
        %v3897 = vadd.f32 %v3672, %v3896
        %v3898 = vpop.f32.mrb[0].mxu0
        %3899 = vmatprep.mubr.f32.mxu0 %v3420
        %3900 = vmatmul.mubr.f32.gmra.mrb[0].mxu0 %v3388
        %v3901 = vpop.f32.mrb[0].mxu0
        %v3902 = vadd.f32 %v3677, %v3901
        %v3903 = vpop.f32.mrb[0].mxu0
        %3904 = vmatprep.mubr.f32.mxu0 %v3421
        %3905 = vmatmul.mubr.f32.gmra.mrb[0].mxu0 %v3389
        %v3906 = vpop.f32.mrb[0].mxu0
        %v3907 = vadd.f32 %v3682, %v3906
        %v3908 = vpop.f32.mrb[0].mxu0
        %3909 = vmatprep.mubr.f32.mxu0 %v3422
        %3910 = vmatmul.mubr.f32.gmra.mrb[0].mxu0 %v3390
        %v3911 = vpop.f32.mrb[0].mxu0
        %v3912 = vadd.f32 %v3687, %v3911
        %v3913 = vpop.f32.mrb[0].mxu0
        %3914 = vmatprep.mubr.f32.mxu0 %v3423
        %3915 = vmatmul.mubr.f32.gmra.mrb[0].mxu0 %v3391
        %v3916 = vpop.f32.mrb[0].mxu0
        %v3917 = vadd.f32 %v3692, %v3916
        %v3918 = vpop.f32.mrb[0].mxu0
        %3919 = vmatprep.mubr.f32.mxu0 %v3424
        %3920 = vmatmul.mubr.f32.gmra.mrb[0].mxu0 %v3392
        %v3921 = vpop.f32.mrb[0].mxu0
        %v3922 = vadd.f32 %v3697, %v3921
        %v3923 = vpop.f32.mrb[0].mxu0
        %3924 = vmatprep.mubr.f32.mxu0 %v3425
        %3925 = vmatmul.mubr.f32.gmra.mrb[0].mxu0 %v3393
        %v3926 = vpop.f32.mrb[0].mxu0
        %v3927 = vadd.f32 %v3702, %v3926
        %v3928 = vpop.f32.mrb[0].mxu0
        %3929 = vmatprep.mubr.f32.mxu0 %v3426
        %3930 = vmatmul.mubr.f32.gmra.mrb[0].mxu0 %v3394
        %v3931 = vpop.f32.mrb[0].mxu0
        %v3932 = vadd.f32 %v3707, %v3931
        %v3933 = vpop.f32.mrb[0].mxu0
        %3934 = vmatprep.mubr.f32.mxu0 %v3427
        %3935 = vmatmul.mubr.f32.gmra.mrb[0].mxu0 %v3395
        %v3936 = vpop.f32.mrb[0].mxu0
        %v3937 = vadd.f32 %v3712, %v3936
        %v3938 = vpop.f32.mrb[0].mxu0
        %3939 = vmatprep.mubr.f32.mxu0 %v3428
        %3940 = vmatmul.mubr.f32.gmra.mrb[0].mxu0 %v3396
        %v3941 = vpop.f32.mrb[0].mxu0
        %v3942 = vadd.f32 %v3717, %v3941
        %v3943 = vpop.f32.mrb[0].mxu0
        %3944 = vmatprep.mubr.f32.mxu0 %v3429
        %3945 = vmatmul.mubr.f32.gmra.mrb[0].mxu0 %v3397
        %v3946 = vpop.f32.mrb[0].mxu0
        %v3947 = vadd.f32 %v3722, %v3946
        %v3948 = vpop.f32.mrb[0].mxu0
        %3949 = vmatprep.mubr.f32.mxu0 %v3430
        %3950 = vmatmul.mubr.f32.gmra.mrb[0].mxu0 %v3398
        %v3951 = vpop.f32.mrb[0].mxu0
        %v3952 = vadd.f32 %v3727, %v3951
        %v3953 = vpop.f32.mrb[0].mxu0
        %3954 = vmatprep.mubr.f32.mxu0 %v3431
        %3955 = vmatmul.mubr.f32.gmra.mrb[0].mxu0 %v3399
        %v3956 = vpop.f32.mrb[0].mxu0
        %v3957 = vadd.f32 %v3732, %v3956
        %v3958 = vpop.f32.mrb[0].mxu0
        %3959 = vmatprep.mubr.f32.mxu0 %v3432
        %3960 = vmatmul.mubr.f32.gmra.mrb[0].mxu0 %v3400
        %v3961 = vpop.f32.mrb[0].mxu0
        %v3962 = vadd.f32 %v3737, %v3961
        %v3963 = vpop.f32.mrb[0].mxu0
        %3964 = vmatprep.mubr.f32.mxu0 %v3433
        %3965 = vmatmul.mubr.f32.gmra.mrb[0].mxu0 %v3401
        %v3966 = vpop.f32.mrb[0].mxu0
        %v3967 = vadd.f32 %v3742, %v3966
        %v3968 = vpop.f32.mrb[0].mxu0
        %3969 = vmatprep.mubr.f32.mxu0 %v3434
        %3970 = vmatmul.mubr.f32.gmra.mrb[0].mxu0 %v3402
        %v3971 = vpop.f32.mrb[0].mxu0
        %v3972 = vadd.f32 %v3747, %v3971
        %v3973 = vpop.f32.mrb[0].mxu0
        %3974 = vmatprep.mubr.f32.mxu0 %v3435
        %3975 = vmatmul.mubr.f32.gmra.mrb[0].mxu0 %v3403
        %v3976 = vpop.f32.mrb[0].mxu0
        %v3977 = vadd.f32 %v3752, %v3976
        %v3978 = vpop.f32.mrb[0].mxu0
        %3979 = vmatprep.mubr.f32.mxu0 %v3436
        %3980 = vmatmul.mubr.f32.gmra.mrb[0].mxu0 %v3404
        %v3981 = vpop.f32.mrb[0].mxu0
        %v3982 = vadd.f32 %v3757, %v3981
        %v3983 = vpop.f32.mrb[0].mxu0
        %3984 = vmatprep.mubr.f32.mxu0 %v3437
        %3985 = vmatmul.mubr.f32.gmra.mrb[0].mxu0 %v3405
        %v3986 = vpop.f32.mrb[0].mxu0
        %v3987 = vadd.f32 %v3762, %v3986
        %v3988 = vpop.f32.mrb[0].mxu0
        %3989 = vdwg.mxu0
        %3990 = vmatprep.subr.mxu0 0.0
        %3991 = vmatpush1.msra.mxu0 %v2469
        %3992 = vmatprep.subr.mxu0 0.0
        %3993 = vmatpush1.msra.mxu0 %v2470
        %3994 = vmatprep.subr.mxu0 0.0
        %3995 = vmatpush1.msra.mxu0 %v2471
        %3996 = vmatprep.subr.mxu0 0.0
        %3997 = vmatpush1.msra.mxu0 %v2472
        %3998 = vmatprep.subr.mxu0 0.0
        %3999 = vmatpush1.msra.mxu0 %v2473
        %4000 = vmatprep.subr.mxu0 0.0
        %4001 = vmatpush1.msra.mxu0 %v2474
        %4002 = vmatprep.subr.mxu0 0.0
        %4003 = vmatpush1.msra.mxu0 %v2475
        %4004 = vmatprep.subr.mxu0 0.0
        %4005 = vmatpush1.msra.mxu0 %v2476
        %4006 = vmatprep.subr.mxu0 0.0
        %4007 = vmatpush1.msra.mxu0 0.0
        %4008 = vmatprep.subr.mxu0 0.0
        %4009 = vmatpush1.msra.mxu0 0.0
        %4010 = vmatprep.subr.mxu0 0.0
        %4011 = vmatpush1.msra.mxu0 0.0
        %4012 = vmatprep.subr.mxu0 0.0
        %4013 = vmatpush1.msra.mxu0 0.0
        %4014 = vmatprep.subr.mxu0 0.0
        %4015 = vmatpush1.msra.mxu0 0.0
        %4016 = vmatprep.subr.mxu0 0.0
        %4017 = vmatpush1.msra.mxu0 0.0
        %4018 = vmatprep.subr.mxu0 0.0
        %4019 = vmatpush1.msra.mxu0 0.0
        %4020 = vmatprep.subr.mxu0 0.0
        %4021 = vmatpush1.msra.mxu0 0.0
        %4022 = vmatprep.subr.mxu0 0.0
        %4023 = vmatpush1.msra.mxu0 0.0
        %4024 = vmatprep.subr.mxu0 0.0
        %4025 = vmatpush1.msra.mxu0 0.0
        %4026 = vmatprep.subr.mxu0 0.0
        %4027 = vmatpush1.msra.mxu0 0.0
        %4028 = vmatprep.subr.mxu0 0.0
        %4029 = vmatpush1.msra.mxu0 0.0
        %4030 = vmatprep.subr.mxu0 0.0
        %4031 = vmatpush1.msra.mxu0 0.0
        %4032 = vmatprep.subr.mxu0 0.0
        %4033 = vmatpush1.msra.mxu0 0.0
        %4034 = vmatprep.subr.mxu0 0.0
        %4035 = vmatpush1.msra.mxu0 0.0
        %4036 = vmatprep.subr.mxu0 0.0
        %4037 = vmatpush1.msra.mxu0 0.0
        %4038 = vmatprep.subr.mxu0 0.0
        %4039 = vmatpush1.msra.mxu0 0.0
        %4040 = vmatprep.subr.mxu0 0.0
        %4041 = vmatpush1.msra.mxu0 0.0
        %4042 = vmatprep.subr.mxu0 0.0
        %4043 = vmatpush1.msra.mxu0 0.0
        %4044 = vmatprep.subr.mxu0 0.0
        %4045 = vmatpush1.msra.mxu0 0.0
        %4046 = vmatprep.subr.mxu0 0.0
        %4047 = vmatpush1.msra.mxu0 0.0
        %4048 = vmatprep.subr.mxu0 0.0
        %4049 = vmatpush1.msra.mxu0 0.0
        %4050 = vmatprep.subr.mxu0 0.0
        %4051 = vmatpush1.msra.mxu0 0.0
        %4052 = vmatprep.subr.mxu0 0.0
        %4053 = vmatpush1.msra.mxu0 0.0
        %4054 = vmatprep.mubr.f32.mxu0 0.0
        %4055 = vmatmul.mubr.f32.gmra.mrb[0].mxu0 %v3445
        %v4056 = vpop.f32.mrb[0].mxu0
        %v4057 = vadd.f32 %v3832, %v4056
        %v4058 = vpop.f32.mrb[0].mxu0
        %4059 = vmatprep.mubr.f32.mxu0 0.0
        %4060 = vmatmul.mubr.f32.gmra.mrb[0].mxu0 %v3448
        %v4061 = vpop.f32.mrb[0].mxu0
        %v4062 = vadd.f32 %v3837, %v4061
        %v4063 = vpop.f32.mrb[0].mxu0
        %4064 = vmatprep.mubr.f32.mxu0 0.0
        %4065 = vmatmul.mubr.f32.gmra.mrb[0].mxu0 %v3451
        %v4066 = vpop.f32.mrb[0].mxu0
        %v4067 = vadd.f32 %v3842, %v4066
        %v4068 = vpop.f32.mrb[0].mxu0
        %4069 = vmatprep.mubr.f32.mxu0 0.0
        %4070 = vmatmul.mubr.f32.gmra.mrb[0].mxu0 %v3454
        %v4071 = vpop.f32.mrb[0].mxu0
        %v4072 = vadd.f32 %v3847, %v4071
        %v4073 = vpop.f32.mrb[0].mxu0
        %4074 = vmatprep.mubr.f32.mxu0 0.0
        %4075 = vmatmul.mubr.f32.gmra.mrb[0].mxu0 %v3457
        %v4076 = vpop.f32.mrb[0].mxu0
        %v4077 = vadd.f32 %v3852, %v4076
        %v4078 = vpop.f32.mrb[0].mxu0
        %4079 = vmatprep.mubr.f32.mxu0 0.0
        %4080 = vmatmul.mubr.f32.gmra.mrb[0].mxu0 %v3460
        %v4081 = vpop.f32.mrb[0].mxu0
        %v4082 = vadd.f32 %v3857, %v4081
        %v4083 = vpop.f32.mrb[0].mxu0
        %4084 = vmatprep.mubr.f32.mxu0 0.0
        %4085 = vmatmul.mubr.f32.gmra.mrb[0].mxu0 %v3463
        %v4086 = vpop.f32.mrb[0].mxu0
        %v4087 = vadd.f32 %v3862, %v4086
        %v4088 = vpop.f32.mrb[0].mxu0
        %4089 = vmatprep.mubr.f32.mxu0 0.0
        %4090 = vmatmul.mubr.f32.gmra.mrb[0].mxu0 %v3466
        %v4091 = vpop.f32.mrb[0].mxu0
        %v4092 = vadd.f32 %v3867, %v4091
        %v4093 = vpop.f32.mrb[0].mxu0
        %4094 = vmatprep.mubr.f32.mxu0 0.0
        %4095 = vmatmul.mubr.f32.gmra.mrb[0].mxu0 %v3469
        %v4096 = vpop.f32.mrb[0].mxu0
        %v4097 = vadd.f32 %v3872, %v4096
        %v4098 = vpop.f32.mrb[0].mxu0
        %4099 = vmatprep.mubr.f32.mxu0 0.0
        %4100 = vmatmul.mubr.f32.gmra.mrb[0].mxu0 %v3472
        %v4101 = vpop.f32.mrb[0].mxu0
        %v4102 = vadd.f32 %v3877, %v4101
        %v4103 = vpop.f32.mrb[0].mxu0
        %4104 = vmatprep.mubr.f32.mxu0 0.0
        %4105 = vmatmul.mubr.f32.gmra.mrb[0].mxu0 %v3475
        %v4106 = vpop.f32.mrb[0].mxu0
        %v4107 = vadd.f32 %v3882, %v4106
        %v4108 = vpop.f32.mrb[0].mxu0
        %4109 = vmatprep.mubr.f32.mxu0 0.0
        %4110 = vmatmul.mubr.f32.gmra.mrb[0].mxu0 %v3478
        %v4111 = vpop.f32.mrb[0].mxu0
        %v4112 = vadd.f32 %v3887, %v4111
        %v4113 = vpop.f32.mrb[0].mxu0
        %4114 = vmatprep.mubr.f32.mxu0 0.0
        %4115 = vmatmul.mubr.f32.gmra.mrb[0].mxu0 %v3481
        %v4116 = vpop.f32.mrb[0].mxu0
        %v4117 = vadd.f32 %v3892, %v4116
        %v4118 = vpop.f32.mrb[0].mxu0
        %4119 = vmatprep.mubr.f32.mxu0 0.0
        %4120 = vmatmul.mubr.f32.gmra.mrb[0].mxu0 %v3484
        %v4121 = vpop.f32.mrb[0].mxu0
        %v4122 = vadd.f32 %v3897, %v4121
        %v4123 = vpop.f32.mrb[0].mxu0
        %4124 = vmatprep.mubr.f32.mxu0 0.0
        %4125 = vmatmul.mubr.f32.gmra.mrb[0].mxu0 %v3487
        %v4126 = vpop.f32.mrb[0].mxu0
        %v4127 = vadd.f32 %v3902, %v4126
        %v4128 = vpop.f32.mrb[0].mxu0
        %4129 = vmatprep.mubr.f32.mxu0 0.0
        %4130 = vmatmul.mubr.f32.gmra.mrb[0].mxu0 %v3490
        %v4131 = vpop.f32.mrb[0].mxu0
        %v4132 = vadd.f32 %v3907, %v4131
        %v4133 = vpop.f32.mrb[0].mxu0
        %4134 = vmatprep.mubr.f32.mxu0 0.0
        %4135 = vmatmul.mubr.f32.gmra.mrb[0].mxu0 %v3493
        %v4136 = vpop.f32.mrb[0].mxu0
        %v4137 = vadd.f32 %v3912, %v4136
        %v4138 = vpop.f32.mrb[0].mxu0
        %4139 = vmatprep.mubr.f32.mxu0 0.0
        %4140 = vmatmul.mubr.f32.gmra.mrb[0].mxu0 %v3496
        %v4141 = vpop.f32.mrb[0].mxu0
        %v4142 = vadd.f32 %v3917, %v4141
        %v4143 = vpop.f32.mrb[0].mxu0
        %4144 = vmatprep.mubr.f32.mxu0 0.0
        %4145 = vmatmul.mubr.f32.gmra.mrb[0].mxu0 %v3499
        %v4146 = vpop.f32.mrb[0].mxu0
        %v4147 = vadd.f32 %v3922, %v4146
        %v4148 = vpop.f32.mrb[0].mxu0
        %4149 = vmatprep.mubr.f32.mxu0 0.0
        %4150 = vmatmul.mubr.f32.gmra.mrb[0].mxu0 %v3502
        %v4151 = vpop.f32.mrb[0].mxu0
        %v4152 = vadd.f32 %v3927, %v4151
        %v4153 = vpop.f32.mrb[0].mxu0
        %4154 = vmatprep.mubr.f32.mxu0 0.0
        %4155 = vmatmul.mubr.f32.gmra.mrb[0].mxu0 %v3505
        %v4156 = vpop.f32.mrb[0].mxu0
        %v4157 = vadd.f32 %v3932, %v4156
        %v4158 = vpop.f32.mrb[0].mxu0
        %4159 = vmatprep.mubr.f32.mxu0 0.0
        %4160 = vmatmul.mubr.f32.gmra.mrb[0].mxu0 %v3508
        %v4161 = vpop.f32.mrb[0].mxu0
        %v4162 = vadd.f32 %v3937, %v4161
        %v4163 = vpop.f32.mrb[0].mxu0
        %4164 = vmatprep.mubr.f32.mxu0 0.0
        %4165 = vmatmul.mubr.f32.gmra.mrb[0].mxu0 %v3511
        %v4166 = vpop.f32.mrb[0].mxu0
        %v4167 = vadd.f32 %v3942, %v4166
        %v4168 = vpop.f32.mrb[0].mxu0
        %4169 = vmatprep.mubr.f32.mxu0 0.0
        %4170 = vmatmul.mubr.f32.gmra.mrb[0].mxu0 %v3514
        %v4171 = vpop.f32.mrb[0].mxu0
        %v4172 = vadd.f32 %v3947, %v4171
        %v4173 = vpop.f32.mrb[0].mxu0
        %4174 = vmatprep.mubr.f32.mxu0 0.0
        %4175 = vmatmul.mubr.f32.gmra.mrb[0].mxu0 %v3517
        %v4176 = vpop.f32.mrb[0].mxu0
        %v4177 = vadd.f32 %v3952, %v4176
        %v4178 = vpop.f32.mrb[0].mxu0
        %4179 = vmatprep.mubr.f32.mxu0 0.0
        %4180 = vmatmul.mubr.f32.gmra.mrb[0].mxu0 %v3520
        %v4181 = vpop.f32.mrb[0].mxu0
        %v4182 = vadd.f32 %v3957, %v4181
        %v4183 = vpop.f32.mrb[0].mxu0
        %4184 = vmatprep.mubr.f32.mxu0 0.0
        %4185 = vmatmul.mubr.f32.gmra.mrb[0].mxu0 %v3523
        %v4186 = vpop.f32.mrb[0].mxu0
        %v4187 = vadd.f32 %v3962, %v4186
        %v4188 = vpop.f32.mrb[0].mxu0
        %4189 = vmatprep.mubr.f32.mxu0 0.0
        %4190 = vmatmul.mubr.f32.gmra.mrb[0].mxu0 %v3526
        %v4191 = vpop.f32.mrb[0].mxu0
        %v4192 = vadd.f32 %v3967, %v4191
        %v4193 = vpop.f32.mrb[0].mxu0
        %4194 = vmatprep.mubr.f32.mxu0 0.0
        %4195 = vmatmul.mubr.f32.gmra.mrb[0].mxu0 %v3529
        %v4196 = vpop.f32.mrb[0].mxu0
        %v4197 = vadd.f32 %v3972, %v4196
        %v4198 = vpop.f32.mrb[0].mxu0
        %4199 = vmatprep.mubr.f32.mxu0 0.0
        %4200 = vmatmul.mubr.f32.gmra.mrb[0].mxu0 %v3532
        %v4201 = vpop.f32.mrb[0].mxu0
        %v4202 = vadd.f32 %v3977, %v4201
        %v4203 = vpop.f32.mrb[0].mxu0
        %4204 = vmatprep.mubr.f32.mxu0 0.0
        %4205 = vmatmul.mubr.f32.gmra.mrb[0].mxu0 %v3535
        %v4206 = vpop.f32.mrb[0].mxu0
        %v4207 = vadd.f32 %v3982, %v4206
        %v4208 = vpop.f32.mrb[0].mxu0
        %4209 = vmatprep.mubr.f32.mxu0 0.0
        %4210 = vmatmul.mubr.f32.gmra.mrb[0].mxu0 %v3538
        %v4211 = vpop.f32.mrb[0].mxu0
        %v4212 = vadd.f32 %v3987, %v4211
        %v4213 = vpop.f32.mrb[0].mxu0
        %4214 = vdwg.mxu0
        %v4215 = vsel %vm441, %v4057, 0.0
        %v4216 = vsel %vm441, %v4062, 0.0
        %v4217 = vadd.f32 %v4215, %v4216
        %v4218 = vsel %vm441, %v4067, 0.0
        %v4219 = vadd.f32 %v4217, %v4218
        %v4220 = vsel %vm441, %v4072, 0.0
        %v4221 = vadd.f32 %v4219, %v4220
        %v4222 = vsel %vm441, %v4077, 0.0
        %v4223 = vadd.f32 %v4221, %v4222
        %v4224 = vsel %vm441, %v4082, 0.0
        %v4225 = vadd.f32 %v4223, %v4224
        %v4226 = vsel %vm441, %v4087, 0.0
        %v4227 = vadd.f32 %v4225, %v4226
        %v4228 = vsel %vm441, %v4092, 0.0
        %v4229 = vadd.f32 %v4227, %v4228
        %v4230 = vsel %vm441, %v4097, 0.0
        %v4231 = vadd.f32 %v4229, %v4230
        %v4232 = vsel %vm441, %v4102, 0.0
        %v4233 = vadd.f32 %v4231, %v4232
        %v4234 = vsel %vm441, %v4107, 0.0
        %v4235 = vadd.f32 %v4233, %v4234
        %v4236 = vsel %vm441, %v4112, 0.0
        %v4237 = vadd.f32 %v4235, %v4236
        %v4238 = vsel %vm441, %v4117, 0.0
        %v4239 = vadd.f32 %v4237, %v4238
        %v4240 = vsel %vm441, %v4122, 0.0
        %v4241 = vadd.f32 %v4239, %v4240
        %v4242 = vsel %vm441, %v4127, 0.0
        %v4243 = vadd.f32 %v4241, %v4242
        %v4244 = vsel %vm441, %v4132, 0.0
        %v4245 = vadd.f32 %v4243, %v4244
        %v4246 = vsel %vm441, %v4137, 0.0
        %v4247 = vadd.f32 %v4245, %v4246
        %v4248 = vsel %vm441, %v4142, 0.0
        %v4249 = vadd.f32 %v4247, %v4248
        %v4250 = vsel %vm441, %v4147, 0.0
        %v4251 = vadd.f32 %v4249, %v4250
        %v4252 = vsel %vm441, %v4152, 0.0
        %v4253 = vadd.f32 %v4251, %v4252
        %v4254 = vsel %vm441, %v4157, 0.0
        %v4255 = vadd.f32 %v4253, %v4254
        %v4256 = vsel %vm441, %v4162, 0.0
        %v4257 = vadd.f32 %v4255, %v4256
        %v4258 = vsel %vm441, %v4167, 0.0
        %v4259 = vadd.f32 %v4257, %v4258
        %v4260 = vsel %vm441, %v4172, 0.0
        %v4261 = vadd.f32 %v4259, %v4260
        %v4262 = vsel %vm441, %v4177, 0.0
        %v4263 = vadd.f32 %v4261, %v4262
        %v4264 = vsel %vm441, %v4182, 0.0
        %v4265 = vadd.f32 %v4263, %v4264
        %v4266 = vsel %vm441, %v4187, 0.0
        %v4267 = vadd.f32 %v4265, %v4266
        %v4268 = vsel %vm441, %v4192, 0.0
        %v4269 = vadd.f32 %v4267, %v4268
        %v4270 = vsel %vm441, %v4197, 0.0
        %v4271 = vadd.f32 %v4269, %v4270
        %v4272 = vsel %vm441, %v4202, 0.0
        %v4273 = vadd.f32 %v4271, %v4272
        %v4274 = vsel %vm441, %v4207, 0.0
        %v4275 = vadd.f32 %v4273, %v4274
        %v4276 = vsel %vm441, %v4212, 0.0
        %v4277 = vadd.f32 %v4275, %v4276
        %v4278 = vrot.slane %v4277, 4
        %v4279 = vadd.f32 %v4277, %v4278
        %v4280 = vrot.slane %v4279, 2
        %v4281 = vadd.f32 %v4279, %v4280
        %v4282 = vrot.slane %v4281, 1
        %v4283 = vadd.f32 %v4281, %v4282
        %v4284 = vrcp.pop 256.0
        %v4285 = vmul.f32 %v4283, %v4284
        %v4286 = vld [vmem:[%s5] sm:$0xff]
        %v4287 = vld [vmem:[%s5 + $0x8] sm:$0xff]
        %v4288 = vld [vmem:[%s5 + $0x10] sm:$0xff]
        %v4289 = vld [vmem:[%s5 + $0x18] sm:$0xff]
        %v4290 = vld [vmem:[%s5 + $0x20] sm:$0xff]
        %v4291 = vld [vmem:[%s5 + $0x28] sm:$0xff]
        %v4292 = vld [vmem:[%s5 + $0x30] sm:$0xff]
        %v4293 = vld [vmem:[%s5 + $0x38] sm:$0xff]
        %v4294 = vld [vmem:[%s6] sm:$0x1]
        %v4296 = vsel %vm441, %v4285, 0
        %4298 = vmatprep.subr.mxu0 0.0
        %4299 = vmatpush1.msra.mxu0 %v4286
        %4300 = vmatprep.subr.mxu0 0.0
        %4301 = vmatpush1.msra.mxu0 %v4287
        %4302 = vmatprep.subr.mxu0 0.0
        %4303 = vmatpush1.msra.mxu0 %v4288
        %4304 = vmatprep.subr.mxu0 0.0
        %4305 = vmatpush1.msra.mxu0 %v4289
        %4306 = vmatprep.subr.mxu0 0.0
        %4307 = vmatpush1.msra.mxu0 %v4290
        %4308 = vmatprep.subr.mxu0 0.0
        %4309 = vmatpush1.msra.mxu0 %v4291
        %4310 = vmatprep.subr.mxu0 0.0
        %4311 = vmatpush1.msra.mxu0 %v4292
        %4312 = vmatprep.subr.mxu0 0.0
        %4313 = vmatpush1.msra.mxu0 %v4293
        %4314 = vmatprep.subr.mxu0 0.0
        %4315 = vmatpush1.msra.mxu0 0.0
        %4316 = vmatprep.subr.mxu0 0.0
        %4317 = vmatpush1.msra.mxu0 0.0
        %4318 = vmatprep.subr.mxu0 0.0
        %4319 = vmatpush1.msra.mxu0 0.0
        %4320 = vmatprep.subr.mxu0 0.0
        %4321 = vmatpush1.msra.mxu0 0.0
        %4322 = vmatprep.subr.mxu0 0.0
        %4323 = vmatpush1.msra.mxu0 0.0
        %4324 = vmatprep.subr.mxu0 0.0
        %4325 = vmatpush1.msra.mxu0 0.0
        %4326 = vmatprep.subr.mxu0 0.0
        %4327 = vmatpush1.msra.mxu0 0.0
        %4328 = vmatprep.subr.mxu0 0.0
        %4329 = vmatpush1.msra.mxu0 0.0
        %4330 = vmatprep.subr.mxu0 0.0
        %4331 = vmatpush1.msra.mxu0 0.0
        %4332 = vmatprep.subr.mxu0 0.0
        %4333 = vmatpush1.msra.mxu0 0.0
        %4334 = vmatprep.subr.mxu0 0.0
        %4335 = vmatpush1.msra.mxu0 0.0
        %4336 = vmatprep.subr.mxu0 0.0
        %4337 = vmatpush1.msra.mxu0 0.0
        %4338 = vmatprep.subr.mxu0 0.0
        %4339 = vmatpush1.msra.mxu0 0.0
        %4340 = vmatprep.subr.mxu0 0.0
        %4341 = vmatpush1.msra.mxu0 0.0
        %4342 = vmatprep.subr.mxu0 0.0
        %4343 = vmatpush1.msra.mxu0 0.0
        %4344 = vmatprep.subr.mxu0 0.0
        %4345 = vmatpush1.msra.mxu0 0.0
        %4346 = vmatprep.subr.mxu0 0.0
        %4347 = vmatpush1.msra.mxu0 0.0
        %4348 = vmatprep.subr.mxu0 0.0
        %4349 = vmatpush1.msra.mxu0 0.0
        %4350 = vmatprep.subr.mxu0 0.0
        %4351 = vmatpush1.msra.mxu0 0.0
        %4352 = vmatprep.subr.mxu0 0.0
        %4353 = vmatpush1.msra.mxu0 0.0
        %4354 = vmatprep.subr.mxu0 0.0
        %4355 = vmatpush1.msra.mxu0 0.0
        %4356 = vmatprep.subr.mxu0 0.0
        %4357 = vmatpush1.msra.mxu0 0.0
        %4358 = vmatprep.subr.mxu0 0.0
        %4359 = vmatpush1.msra.mxu0 0.0
        %4360 = vmatprep.subr.mxu0 0.0
        %4361 = vmatpush1.msra.mxu0 0.0
        %4362 = vmatprep.mubr.f32.mxu0 0.0
        %4363 = vmatmul.mubr.f32.gmra.mrb[0].mxu0 %v4296
        %v4364 = vpop.f32.mrb[0].mxu0
        %v4365 = vadd.f32 %v4294, %v4364
        %v4366 = vpop.f32.mrb[0].mxu0
        %4367 = vdwg.mxu0
        %v4368 = vmax.f32 %v4365, 0.0
        %v4369 = vld [vmem:[%s7] sm:$0xff]
        %v4370 = vld [vmem:[%s8] sm:$0x1]
        %vm4371 = vcmask 64512
        %v4373 = vsel %vm4371, %v4368, 0
        %4375 = vmatprep.subr.mxu0 0.0
        %4376 = vmatpush1.msra.mxu0 %v4369
        %4377 = vmatprep.subr.mxu0 0.0
        %4378 = vmatpush1.msra.mxu0 0.0
        %4379 = vmatprep.subr.mxu0 0.0
        %4380 = vmatpush1.msra.mxu0 0.0
        %4381 = vmatprep.subr.mxu0 0.0
        %4382 = vmatpush1.msra.mxu0 0.0
        %4383 = vmatprep.subr.mxu0 0.0
        %4384 = vmatpush1.msra.mxu0 0.0
        %4385 = vmatprep.subr.mxu0 0.0
        %4386 = vmatpush1.msra.mxu0 0.0
        %4387 = vmatprep.subr.mxu0 0.0
        %4388 = vmatpush1.msra.mxu0 0.0
        %4389 = vmatprep.subr.mxu0 0.0
        %4390 = vmatpush1.msra.mxu0 0.0
        %4391 = vmatprep.subr.mxu0 0.0
        %4392 = vmatpush1.msra.mxu0 0.0
        %4393 = vmatprep.subr.mxu0 0.0
        %4394 = vmatpush1.msra.mxu0 0.0
        %4395 = vmatprep.subr.mxu0 0.0
        %4396 = vmatpush1.msra.mxu0 0.0
        %4397 = vmatprep.subr.mxu0 0.0
        %4398 = vmatpush1.msra.mxu0 0.0
        %4399 = vmatprep.subr.mxu0 0.0
        %4400 = vmatpush1.msra.mxu0 0.0
        %4401 = vmatprep.subr.mxu0 0.0
        %4402 = vmatpush1.msra.mxu0 0.0
        %4403 = vmatprep.subr.mxu0 0.0
        %4404 = vmatpush1.msra.mxu0 0.0
        %4405 = vmatprep.subr.mxu0 0.0
        %4406 = vmatpush1.msra.mxu0 0.0
        %4407 = vmatprep.subr.mxu0 0.0
        %4408 = vmatpush1.msra.mxu0 0.0
        %4409 = vmatprep.subr.mxu0 0.0
        %4410 = vmatpush1.msra.mxu0 0.0
        %4411 = vmatprep.subr.mxu0 0.0
        %4412 = vmatpush1.msra.mxu0 0.0
        %4413 = vmatprep.subr.mxu0 0.0
        %4414 = vmatpush1.msra.mxu0 0.0
        %4415 = vmatprep.subr.mxu0 0.0
        %4416 = vmatpush1.msra.mxu0 0.0
        %4417 = vmatprep.subr.mxu0 0.0
        %4418 = vmatpush1.msra.mxu0 0.0
        %4419 = vmatprep.subr.mxu0 0.0
        %4420 = vmatpush1.msra.mxu0 0.0
        %4421 = vmatprep.subr.mxu0 0.0
        %4422 = vmatpush1.msra.mxu0 0.0
        %4423 = vmatprep.subr.mxu0 0.0
        %4424 = vmatpush1.msra.mxu0 0.0
        %4425 = vmatprep.subr.mxu0 0.0
        %4426 = vmatpush1.msra.mxu0 0.0
        %4427 = vmatprep.subr.mxu0 0.0
        %4428 = vmatpush1.msra.mxu0 0.0
        %4429 = vmatprep.subr.mxu0 0.0
        %4430 = vmatpush1.msra.mxu0 0.0
        %4431 = vmatprep.subr.mxu0 0.0
        %4432 = vmatpush1.msra.mxu0 0.0
        %4433 = vmatprep.subr.mxu0 0.0
        %4434 = vmatpush1.msra.mxu0 0.0
        %4435 = vmatprep.subr.mxu0 0.0
        %4436 = vmatpush1.msra.mxu0 0.0
        %4437 = vmatprep.subr.mxu0 0.0
        %4438 = vmatpush1.msra.mxu0 0.0
        %4439 = vmatprep.mubr.f32.mxu0 0.0
        %4440 = vmatmul.mubr.f32.gmra.mrb[0].mxu0 %v4373
        %v4441 = vpop.f32.mrb[0].mxu0
        %v4442 = vadd.f32 %v4370, %v4441
        %v4443 = vpop.f32.mrb[0].mxu0
        %4444 = vdwg.mxu0
        %v4445 = vxor.u32 %v4442, 2147483648
        %v4446 = vmul.f32 %v4445, 1.442695
        %v4447 = vpow.pop %v4446
        %v4448 = vadd.f32 %v4447, 1.0
        %v4449 = vrcp.pop %v4448
        %v4450 = vmul.f32 1.0, %v4449
        %v4451 = vlaneseq
        %v4452 = vshrl.u32 %v4451, 7
        %v4453 = vsub.s32 0, %v4452
        %v4454 = vrot.slane %v4450, %v4453
        %v4455 = vmul.f32 %v4057, %v4454
        %v4456 = vmul.f32 %v4062, %v4454
        %v4457 = vmul.f32 %v4067, %v4454
        %v4458 = vmul.f32 %v4072, %v4454
        %v4459 = vmul.f32 %v4077, %v4454
        %v4460 = vmul.f32 %v4082, %v4454
        %v4461 = vmul.f32 %v4087, %v4454
        %v4462 = vmul.f32 %v4092, %v4454
        %v4463 = vmul.f32 %v4097, %v4454
        %v4464 = vmul.f32 %v4102, %v4454
        %v4465 = vmul.f32 %v4107, %v4454
        %v4466 = vmul.f32 %v4112, %v4454
        %v4467 = vmul.f32 %v4117, %v4454
        %v4468 = vmul.f32 %v4122, %v4454
        %v4469 = vmul.f32 %v4127, %v4454
        %v4470 = vmul.f32 %v4132, %v4454
        %v4471 = vmul.f32 %v4137, %v4454
        %v4472 = vmul.f32 %v4142, %v4454
        %v4473 = vmul.f32 %v4147, %v4454
        %v4474 = vmul.f32 %v4152, %v4454
        %v4475 = vmul.f32 %v4157, %v4454
        %v4476 = vmul.f32 %v4162, %v4454
        %v4477 = vmul.f32 %v4167, %v4454
        %v4478 = vmul.f32 %v4172, %v4454
        %v4479 = vmul.f32 %v4177, %v4454
        %v4480 = vmul.f32 %v4182, %v4454
        %v4481 = vmul.f32 %v4187, %v4454
        %v4482 = vmul.f32 %v4192, %v4454
        %v4483 = vmul.f32 %v4197, %v4454
        %v4484 = vmul.f32 %v4202, %v4454
        %v4485 = vmul.f32 %v4207, %v4454
        %v4486 = vmul.f32 %v4212, %v4454
        %v4487 = vld [vmem:[%s9] sm:$0xff]
        %v4488 = vld [vmem:[%s9 + $0x8] sm:$0xff]
        %v4489 = vld [vmem:[%s9 + $0x10] sm:$0xff]
        %v4490 = vld [vmem:[%s9 + $0x18] sm:$0xff]
        %v4491 = vld [vmem:[%s9 + $0x20] sm:$0xff]
        %v4492 = vld [vmem:[%s9 + $0x28] sm:$0xff]
        %v4493 = vld [vmem:[%s9 + $0x30] sm:$0xff]
        %v4494 = vld [vmem:[%s9 + $0x38] sm:$0xff]
        %v4495 = vld [vmem:[%s9 + $0x40] sm:$0xff]
        %v4496 = vld [vmem:[%s9 + $0x48] sm:$0xff]
        %v4497 = vld [vmem:[%s9 + $0x50] sm:$0xff]
        %v4498 = vld [vmem:[%s9 + $0x58] sm:$0xff]
        %v4499 = vld [vmem:[%s9 + $0x60] sm:$0xff]
        %v4500 = vld [vmem:[%s9 + $0x68] sm:$0xff]
        %v4501 = vld [vmem:[%s9 + $0x70] sm:$0xff]
        %v4502 = vld [vmem:[%s9 + $0x78] sm:$0xff]
        %v4503 = vld [vmem:[%s9 + $0x80] sm:$0xff]
        %v4504 = vld [vmem:[%s9 + $0x88] sm:$0xff]
        %v4505 = vld [vmem:[%s9 + $0x90] sm:$0xff]
        %v4506 = vld [vmem:[%s9 + $0x98] sm:$0xff]
        %v4507 = vld [vmem:[%s9 + $0xa0] sm:$0xff]
        %v4508 = vld [vmem:[%s9 + $0xa8] sm:$0xff]
        %v4509 = vld [vmem:[%s9 + $0xb0] sm:$0xff]
        %v4510 = vld [vmem:[%s9 + $0xb8] sm:$0xff]
        %v4511 = vld [vmem:[%s9 + $0xc0] sm:$0xff]
        %v4512 = vld [vmem:[%s9 + $0xc8] sm:$0xff]
        %v4513 = vld [vmem:[%s9 + $0xd0] sm:$0xff]
        %v4514 = vld [vmem:[%s9 + $0xd8] sm:$0xff]
        %v4515 = vld [vmem:[%s9 + $0xe0] sm:$0xff]
        %v4516 = vld [vmem:[%s9 + $0xe8] sm:$0xff]
        %v4517 = vld [vmem:[%s9 + $0xf0] sm:$0xff]
        %v4518 = vld [vmem:[%s9 + $0xf8] sm:$0xff]
        %v4519 = vld [vmem:[%s9 + $0x100] sm:$0xff]
        %v4520 = vld [vmem:[%s9 + $0x108] sm:$0xff]
        %v4521 = vld [vmem:[%s9 + $0x110] sm:$0xff]
        %v4522 = vld [vmem:[%s9 + $0x118] sm:$0xff]
        %v4523 = vld [vmem:[%s9 + $0x120] sm:$0xff]
        %v4524 = vld [vmem:[%s9 + $0x128] sm:$0xff]
        %v4525 = vld [vmem:[%s9 + $0x130] sm:$0xff]
        %v4526 = vld [vmem:[%s9 + $0x138] sm:$0xff]
        %v4527 = vld [vmem:[%s9 + $0x140] sm:$0xff]
        %v4528 = vld [vmem:[%s9 + $0x148] sm:$0xff]
        %v4529 = vld [vmem:[%s9 + $0x150] sm:$0xff]
        %v4530 = vld [vmem:[%s9 + $0x158] sm:$0xff]
        %v4531 = vld [vmem:[%s9 + $0x160] sm:$0xff]
        %v4532 = vld [vmem:[%s9 + $0x168] sm:$0xff]
        %v4533 = vld [vmem:[%s9 + $0x170] sm:$0xff]
        %v4534 = vld [vmem:[%s9 + $0x178] sm:$0xff]
        %v4535 = vld [vmem:[%s9 + $0x180] sm:$0xff]
        %v4536 = vld [vmem:[%s9 + $0x188] sm:$0xff]
        %v4537 = vld [vmem:[%s9 + $0x190] sm:$0xff]
        %v4538 = vld [vmem:[%s9 + $0x198] sm:$0xff]
        %v4539 = vld [vmem:[%s9 + $0x1a0] sm:$0xff]
        %v4540 = vld [vmem:[%s9 + $0x1a8] sm:$0xff]
        %v4541 = vld [vmem:[%s9 + $0x1b0] sm:$0xff]
        %v4542 = vld [vmem:[%s9 + $0x1b8] sm:$0xff]
        %v4543 = vld [vmem:[%s9 + $0x1c0] sm:$0xff]
        %v4544 = vld [vmem:[%s9 + $0x1c8] sm:$0xff]
        %v4545 = vld [vmem:[%s9 + $0x1d0] sm:$0xff]
        %v4546 = vld [vmem:[%s9 + $0x1d8] sm:$0xff]
        %v4547 = vld [vmem:[%s9 + $0x1e0] sm:$0xff]
        %v4548 = vld [vmem:[%s9 + $0x1e8] sm:$0xff]
        %v4549 = vld [vmem:[%s9 + $0x1f0] sm:$0xff]
        %v4550 = vld [vmem:[%s9 + $0x1f8] sm:$0xff]
        %v4551 = vld [vmem:[%s9 + $0x200] sm:$0xff]
        %v4552 = vld [vmem:[%s9 + $0x208] sm:$0xff]
        %v4553 = vld [vmem:[%s9 + $0x210] sm:$0xff]
        %v4554 = vld [vmem:[%s9 + $0x218] sm:$0xff]
        %v4555 = vld [vmem:[%s9 + $0x220] sm:$0xff]
        %v4556 = vld [vmem:[%s9 + $0x228] sm:$0xff]
        %v4557 = vld [vmem:[%s9 + $0x230] sm:$0xff]
        %v4558 = vld [vmem:[%s9 + $0x238] sm:$0xff]
        %v4559 = vld [vmem:[%s10] sm:$0x1]
        %4560 = vst.msk [vmem:[%s602 + $0x1] sm:$0xff] %vm441, %v4455
        %4561 = vst.msk [vmem:[%s602 + $0x9] sm:$0xff] %vm441, %v4456
        %4562 = vst.msk [vmem:[%s602 + $0x19] sm:$0xff] %vm441, %v4457
        %4563 = vst.msk [vmem:[%s602 + $0x21] sm:$0xff] %vm441, %v4458
        %4564 = vst.msk [vmem:[%s602 + $0x31] sm:$0xff] %vm441, %v4459
        %4565 = vst.msk [vmem:[%s602 + $0x39] sm:$0xff] %vm441, %v4460
        %4566 = vst.msk [vmem:[%s602 + $0x49] sm:$0xff] %vm441, %v4461
        %4567 = vst.msk [vmem:[%s602 + $0x51] sm:$0xff] %vm441, %v4462
        %4568 = vst.msk [vmem:[%s602 + $0x61] sm:$0xff] %vm441, %v4463
        %4569 = vst.msk [vmem:[%s602 + $0x69] sm:$0xff] %vm441, %v4464
        %4570 = vst.msk [vmem:[%s602 + $0x79] sm:$0xff] %vm441, %v4465
        %4571 = vst.msk [vmem:[%s602 + $0x81] sm:$0xff] %vm441, %v4466
        %4572 = vst.msk [vmem:[%s602 + $0x91] sm:$0xff] %vm441, %v4467
        %4573 = vst.msk [vmem:[%s602 + $0x99] sm:$0xff] %vm441, %v4468
        %4574 = vst.msk [vmem:[%s602 + $0xa9] sm:$0xff] %vm441, %v4469
        %4575 = vst.msk [vmem:[%s602 + $0xb1] sm:$0xff] %vm441, %v4470
        %4576 = vst.msk [vmem:[%s602 + $0xc1] sm:$0xff] %vm441, %v4471
        %4577 = vst.msk [vmem:[%s602 + $0xc9] sm:$0xff] %vm441, %v4472
        %4578 = vst.msk [vmem:[%s602 + $0xd9] sm:$0xff] %vm441, %v4473
        %4579 = vst.msk [vmem:[%s602 + $0xe1] sm:$0xff] %vm441, %v4474
        %4580 = vst.msk [vmem:[%s602 + $0xf1] sm:$0xff] %vm441, %v4475
        %4581 = vst.msk [vmem:[%s602 + $0xf9] sm:$0xff] %vm441, %v4476
        %4582 = vst.msk [vmem:[%s602 + $0x109] sm:$0xff] %vm441, %v4477
        %4583 = vst.msk [vmem:[%s602 + $0x111] sm:$0xff] %vm441, %v4478
        %4584 = vst.msk [vmem:[%s602 + $0x121] sm:$0xff] %vm441, %v4479
        %4585 = vst.msk [vmem:[%s602 + $0x129] sm:$0xff] %vm441, %v4480
        %4586 = vst.msk [vmem:[%s602 + $0x139] sm:$0xff] %vm441, %v4481
        %4587 = vst.msk [vmem:[%s602 + $0x141] sm:$0xff] %vm441, %v4482
        %4588 = vst.msk [vmem:[%s602 + $0x151] sm:$0xff] %vm441, %v4483
        %4589 = vst.msk [vmem:[%s602 + $0x159] sm:$0xff] %vm441, %v4484
        %4590 = vst.msk [vmem:[%s602 + $0x169] sm:$0xff] %vm441, %v4485
        %4591 = vst.msk [vmem:[%s602 + $0x171] sm:$0xff] %vm441, %v4486
        %v4592 = vld [vmem:[#allocation2] sm:$0xff]
        %v4593 = vld [vmem:[#allocation2 + $0x8] sm:$0xff]
        %v4594 = vld [vmem:[#allocation2 + $0x18] sm:$0xff]
        %v4595 = vld [vmem:[#allocation2 + $0x20] sm:$0xff]
        %v4596 = vld [vmem:[#allocation2 + $0x30] sm:$0xff]
        %v4597 = vld [vmem:[#allocation2 + $0x38] sm:$0xff]
        %v4598 = vld [vmem:[#allocation2 + $0x48] sm:$0xff]
        %v4599 = vld [vmem:[#allocation2 + $0x50] sm:$0xff]
        %v4600 = vld [vmem:[#allocation2 + $0x60] sm:$0xff]
        %v4601 = vld [vmem:[#allocation2 + $0x68] sm:$0xff]
        %v4602 = vld [vmem:[#allocation2 + $0x78] sm:$0xff]
        %v4603 = vld [vmem:[#allocation2 + $0x80] sm:$0xff]
        %v4604 = vld [vmem:[#allocation2 + $0x90] sm:$0xff]
        %v4605 = vld [vmem:[#allocation2 + $0x98] sm:$0xff]
        %v4606 = vld [vmem:[#allocation2 + $0xa8] sm:$0xff]
        %v4607 = vld [vmem:[#allocation2 + $0xb0] sm:$0xff]
        %v4608 = vld [vmem:[#allocation2 + $0xc0] sm:$0xff]
        %v4609 = vld [vmem:[#allocation2 + $0xc8] sm:$0xff]
        %v4610 = vld [vmem:[#allocation2 + $0xd8] sm:$0xff]
        %v4611 = vld [vmem:[#allocation2 + $0xe0] sm:$0xff]
        %v4612 = vld [vmem:[#allocation2 + $0xf0] sm:$0xff]
        %v4613 = vld [vmem:[#allocation2 + $0xf8] sm:$0xff]
        %v4614 = vld [vmem:[#allocation2 + $0x108] sm:$0xff]
        %v4615 = vld [vmem:[#allocation2 + $0x110] sm:$0xff]
        %v4616 = vld [vmem:[#allocation2 + $0x120] sm:$0xff]
        %v4617 = vld [vmem:[#allocation2 + $0x128] sm:$0xff]
        %v4618 = vld [vmem:[#allocation2 + $0x138] sm:$0xff]
        %v4619 = vld [vmem:[#allocation2 + $0x140] sm:$0xff]
        %v4620 = vld [vmem:[#allocation2 + $0x150] sm:$0xff]
        %v4621 = vld [vmem:[#allocation2 + $0x158] sm:$0xff]
        %v4622 = vld [vmem:[#allocation2 + $0x168] sm:$0xff]
        %v4623 = vld [vmem:[#allocation2 + $0x170] sm:$0xff]
        %v4624 = vld [vmem:[#allocation2 + $0x1] sm:$0xff]
        %v4625 = vld [vmem:[#allocation2 + $0x9] sm:$0xff]
        %v4626 = vld [vmem:[#allocation2 + $0x19] sm:$0xff]
        %v4627 = vld [vmem:[#allocation2 + $0x21] sm:$0xff]
        %v4628 = vld [vmem:[#allocation2 + $0x31] sm:$0xff]
        %v4629 = vld [vmem:[#allocation2 + $0x39] sm:$0xff]
        %v4630 = vld [vmem:[#allocation2 + $0x49] sm:$0xff]
        %v4631 = vld [vmem:[#allocation2 + $0x51] sm:$0xff]
        %v4632 = vld [vmem:[#allocation2 + $0x61] sm:$0xff]
        %v4633 = vld [vmem:[#allocation2 + $0x69] sm:$0xff]
        %v4634 = vld [vmem:[#allocation2 + $0x79] sm:$0xff]
        %v4635 = vld [vmem:[#allocation2 + $0x81] sm:$0xff]
        %v4636 = vld [vmem:[#allocation2 + $0x91] sm:$0xff]
        %v4637 = vld [vmem:[#allocation2 + $0x99] sm:$0xff]
        %v4638 = vld [vmem:[#allocation2 + $0xa9] sm:$0xff]
        %v4639 = vld [vmem:[#allocation2 + $0xb1] sm:$0xff]
        %v4640 = vld [vmem:[#allocation2 + $0xc1] sm:$0xff]
        %v4641 = vld [vmem:[#allocation2 + $0xc9] sm:$0xff]
        %v4642 = vld [vmem:[#allocation2 + $0xd9] sm:$0xff]
        %v4643 = vld [vmem:[#allocation2 + $0xe1] sm:$0xff]
        %v4644 = vld [vmem:[#allocation2 + $0xf1] sm:$0xff]
        %v4645 = vld [vmem:[#allocation2 + $0xf9] sm:$0xff]
        %v4646 = vld [vmem:[#allocation2 + $0x109] sm:$0xff]
        %v4647 = vld [vmem:[#allocation2 + $0x111] sm:$0xff]
        %v4648 = vld [vmem:[#allocation2 + $0x121] sm:$0xff]
        %v4649 = vld [vmem:[#allocation2 + $0x129] sm:$0xff]
        %v4650 = vld [vmem:[#allocation2 + $0x139] sm:$0xff]
        %v4651 = vld [vmem:[#allocation2 + $0x141] sm:$0xff]
        %v4652 = vld [vmem:[#allocation2 + $0x151] sm:$0xff]
        %v4653 = vld [vmem:[#allocation2 + $0x159] sm:$0xff]
        %v4654 = vld [vmem:[#allocation2 + $0x169] sm:$0xff]
        %v4655 = vld [vmem:[#allocation2 + $0x171] sm:$0xff]
        %v4656 = vld [vmem:[#allocation2 + $0x2] sm:$0xff]
        %v4657 = vld [vmem:[#allocation2 + $0xa] sm:$0xff]
        %v4658 = vld [vmem:[#allocation2 + $0x1a] sm:$0xff]
        %v4659 = vld [vmem:[#allocation2 + $0x22] sm:$0xff]
        %v4660 = vld [vmem:[#allocation2 + $0x32] sm:$0xff]
        %v4661 = vld [vmem:[#allocation2 + $0x3a] sm:$0xff]
        %v4662 = vld [vmem:[#allocation2 + $0x4a] sm:$0xff]
        %v4663 = vld [vmem:[#allocation2 + $0x52] sm:$0xff]
        %v4664 = vld [vmem:[#allocation2 + $0x62] sm:$0xff]
        %v4665 = vld [vmem:[#allocation2 + $0x6a] sm:$0xff]
        %v4666 = vld [vmem:[#allocation2 + $0x7a] sm:$0xff]
        %v4667 = vld [vmem:[#allocation2 + $0x82] sm:$0xff]
        %v4668 = vld [vmem:[#allocation2 + $0x92] sm:$0xff]
        %v4669 = vld [vmem:[#allocation2 + $0x9a] sm:$0xff]
        %v4670 = vld [vmem:[#allocation2 + $0xaa] sm:$0xff]
        %v4671 = vld [vmem:[#allocation2 + $0xb2] sm:$0xff]
        %v4672 = vld [vmem:[#allocation2 + $0xc2] sm:$0xff]
        %v4673 = vld [vmem:[#allocation2 + $0xca] sm:$0xff]
        %v4674 = vld [vmem:[#allocation2 + $0xda] sm:$0xff]
        %v4675 = vld [vmem:[#allocation2 + $0xe2] sm:$0xff]
        %v4676 = vld [vmem:[#allocation2 + $0xf2] sm:$0xff]
        %v4677 = vld [vmem:[#allocation2 + $0xfa] sm:$0xff]
        %v4678 = vld [vmem:[#allocation2 + $0x10a] sm:$0xff]
        %v4679 = vld [vmem:[#allocation2 + $0x112] sm:$0xff]
        %v4680 = vld [vmem:[#allocation2 + $0x122] sm:$0xff]
        %v4681 = vld [vmem:[#allocation2 + $0x12a] sm:$0xff]
        %v4682 = vld [vmem:[#allocation2 + $0x13a] sm:$0xff]
        %v4683 = vld [vmem:[#allocation2 + $0x142] sm:$0xff]
        %v4684 = vld [vmem:[#allocation2 + $0x152] sm:$0xff]
        %v4685 = vld [vmem:[#allocation2 + $0x15a] sm:$0xff]
        %v4686 = vld [vmem:[#allocation2 + $0x16a] sm:$0xff]
        %v4687 = vld [vmem:[#allocation2 + $0x172] sm:$0xff]
        %v4688 = vld [vmem:[%s602] sm:$0xff]
        %v4689 = vld [vmem:[%s602 + $0x8] sm:$0xff]
        %v4690 = vld [vmem:[%s602 + $0x18] sm:$0xff]
        %v4691 = vld [vmem:[%s602 + $0x20] sm:$0xff]
        %v4692 = vld [vmem:[%s602 + $0x30] sm:$0xff]
        %v4693 = vld [vmem:[%s602 + $0x38] sm:$0xff]
        %v4694 = vld [vmem:[%s602 + $0x48] sm:$0xff]
        %v4695 = vld [vmem:[%s602 + $0x50] sm:$0xff]
        %v4696 = vld [vmem:[%s602 + $0x60] sm:$0xff]
        %v4697 = vld [vmem:[%s602 + $0x68] sm:$0xff]
        %v4698 = vld [vmem:[%s602 + $0x78] sm:$0xff]
        %v4699 = vld [vmem:[%s602 + $0x80] sm:$0xff]
        %v4700 = vld [vmem:[%s602 + $0x90] sm:$0xff]
        %v4701 = vld [vmem:[%s602 + $0x98] sm:$0xff]
        %v4702 = vld [vmem:[%s602 + $0xa8] sm:$0xff]
        %v4703 = vld [vmem:[%s602 + $0xb0] sm:$0xff]
        %v4704 = vld [vmem:[%s602 + $0xc0] sm:$0xff]
        %v4705 = vld [vmem:[%s602 + $0xc8] sm:$0xff]
        %v4706 = vld [vmem:[%s602 + $0xd8] sm:$0xff]
        %v4707 = vld [vmem:[%s602 + $0xe0] sm:$0xff]
        %v4708 = vld [vmem:[%s602 + $0xf0] sm:$0xff]
        %v4709 = vld [vmem:[%s602 + $0xf8] sm:$0xff]
        %v4710 = vld [vmem:[%s602 + $0x108] sm:$0xff]
        %v4711 = vld [vmem:[%s602 + $0x110] sm:$0xff]
        %v4712 = vld [vmem:[%s602 + $0x120] sm:$0xff]
        %v4713 = vld [vmem:[%s602 + $0x128] sm:$0xff]
        %v4714 = vld [vmem:[%s602 + $0x138] sm:$0xff]
        %v4715 = vld [vmem:[%s602 + $0x140] sm:$0xff]
        %v4716 = vld [vmem:[%s602 + $0x150] sm:$0xff]
        %v4717 = vld [vmem:[%s602 + $0x158] sm:$0xff]
        %v4718 = vld [vmem:[%s602 + $0x168] sm:$0xff]
        %v4719 = vld [vmem:[%s602 + $0x170] sm:$0xff]
        %v4720 = vld [vmem:[%s602 + $0x1] sm:$0xff]
        %v4721 = vld [vmem:[%s602 + $0x9] sm:$0xff]
        %v4722 = vld [vmem:[%s602 + $0x19] sm:$0xff]
        %v4723 = vld [vmem:[%s602 + $0x21] sm:$0xff]
        %v4724 = vld [vmem:[%s602 + $0x31] sm:$0xff]
        %v4725 = vld [vmem:[%s602 + $0x39] sm:$0xff]
        %v4726 = vld [vmem:[%s602 + $0x49] sm:$0xff]
        %v4727 = vld [vmem:[%s602 + $0x51] sm:$0xff]
        %v4728 = vld [vmem:[%s602 + $0x61] sm:$0xff]
        %v4729 = vld [vmem:[%s602 + $0x69] sm:$0xff]
        %v4730 = vld [vmem:[%s602 + $0x79] sm:$0xff]
        %v4731 = vld [vmem:[%s602 + $0x81] sm:$0xff]
        %v4732 = vld [vmem:[%s602 + $0x91] sm:$0xff]
        %v4733 = vld [vmem:[%s602 + $0x99] sm:$0xff]
        %v4734 = vld [vmem:[%s602 + $0xa9] sm:$0xff]
        %v4735 = vld [vmem:[%s602 + $0xb1] sm:$0xff]
        %v4736 = vld [vmem:[%s602 + $0xc1] sm:$0xff]
        %v4737 = vld [vmem:[%s602 + $0xc9] sm:$0xff]
        %v4738 = vld [vmem:[%s602 + $0xd9] sm:$0xff]
        %v4739 = vld [vmem:[%s602 + $0xe1] sm:$0xff]
        %v4740 = vld [vmem:[%s602 + $0xf1] sm:$0xff]
        %v4741 = vld [vmem:[%s602 + $0xf9] sm:$0xff]
        %v4742 = vld [vmem:[%s602 + $0x109] sm:$0xff]
        %v4743 = vld [vmem:[%s602 + $0x111] sm:$0xff]
        %v4744 = vld [vmem:[%s602 + $0x121] sm:$0xff]
        %v4745 = vld [vmem:[%s602 + $0x129] sm:$0xff]
        %v4746 = vld [vmem:[%s602 + $0x139] sm:$0xff]
        %v4747 = vld [vmem:[%s602 + $0x141] sm:$0xff]
        %v4748 = vld [vmem:[%s602 + $0x151] sm:$0xff]
        %v4749 = vld [vmem:[%s602 + $0x159] sm:$0xff]
        %v4750 = vld [vmem:[%s602 + $0x169] sm:$0xff]
        %v4751 = vld [vmem:[%s602 + $0x171] sm:$0xff]
        %v4752 = vld [vmem:[%s602 + $0x2] sm:$0xff]
        %v4753 = vld [vmem:[%s602 + $0xa] sm:$0xff]
        %v4754 = vld [vmem:[%s602 + $0x1a] sm:$0xff]
        %v4755 = vld [vmem:[%s602 + $0x22] sm:$0xff]
        %v4756 = vld [vmem:[%s602 + $0x32] sm:$0xff]
        %v4757 = vld [vmem:[%s602 + $0x3a] sm:$0xff]
        %v4758 = vld [vmem:[%s602 + $0x4a] sm:$0xff]
        %v4759 = vld [vmem:[%s602 + $0x52] sm:$0xff]
        %v4760 = vld [vmem:[%s602 + $0x62] sm:$0xff]
        %v4761 = vld [vmem:[%s602 + $0x6a] sm:$0xff]
        %v4762 = vld [vmem:[%s602 + $0x7a] sm:$0xff]
        %v4763 = vld [vmem:[%s602 + $0x82] sm:$0xff]
        %v4764 = vld [vmem:[%s602 + $0x92] sm:$0xff]
        %v4765 = vld [vmem:[%s602 + $0x9a] sm:$0xff]
        %v4766 = vld [vmem:[%s602 + $0xaa] sm:$0xff]
        %v4767 = vld [vmem:[%s602 + $0xb2] sm:$0xff]
        %v4768 = vld [vmem:[%s602 + $0xc2] sm:$0xff]
        %v4769 = vld [vmem:[%s602 + $0xca] sm:$0xff]
        %v4770 = vld [vmem:[%s602 + $0xda] sm:$0xff]
        %v4771 = vld [vmem:[%s602 + $0xe2] sm:$0xff]
        %v4772 = vld [vmem:[%s602 + $0xf2] sm:$0xff]
        %v4773 = vld [vmem:[%s602 + $0xfa] sm:$0xff]
        %v4774 = vld [vmem:[%s602 + $0x10a] sm:$0xff]
        %v4775 = vld [vmem:[%s602 + $0x112] sm:$0xff]
        %v4776 = vld [vmem:[%s602 + $0x122] sm:$0xff]
        %v4777 = vld [vmem:[%s602 + $0x12a] sm:$0xff]
        %v4778 = vld [vmem:[%s602 + $0x13a] sm:$0xff]
        %v4779 = vld [vmem:[%s602 + $0x142] sm:$0xff]
        %v4780 = vld [vmem:[%s602 + $0x152] sm:$0xff]
        %v4781 = vld [vmem:[%s602 + $0x15a] sm:$0xff]
        %v4782 = vld [vmem:[%s602 + $0x16a] sm:$0xff]
        %v4783 = vld [vmem:[%s602 + $0x172] sm:$0xff]
        %v4784 = vld [vmem:[%s827] sm:$0xff]
        %v4785 = vld [vmem:[%s827 + $0x8] sm:$0xff]
        %v4786 = vld [vmem:[%s827 + $0x18] sm:$0xff]
        %v4787 = vld [vmem:[%s827 + $0x20] sm:$0xff]
        %v4788 = vld [vmem:[%s827 + $0x30] sm:$0xff]
        %v4789 = vld [vmem:[%s827 + $0x38] sm:$0xff]
        %v4790 = vld [vmem:[%s827 + $0x48] sm:$0xff]
        %v4791 = vld [vmem:[%s827 + $0x50] sm:$0xff]
        %v4792 = vld [vmem:[%s827 + $0x60] sm:$0xff]
        %v4793 = vld [vmem:[%s827 + $0x68] sm:$0xff]
        %v4794 = vld [vmem:[%s827 + $0x78] sm:$0xff]
        %v4795 = vld [vmem:[%s827 + $0x80] sm:$0xff]
        %v4796 = vld [vmem:[%s827 + $0x90] sm:$0xff]
        %v4797 = vld [vmem:[%s827 + $0x98] sm:$0xff]
        %v4798 = vld [vmem:[%s827 + $0xa8] sm:$0xff]
        %v4799 = vld [vmem:[%s827 + $0xb0] sm:$0xff]
        %v4800 = vld [vmem:[%s827 + $0xc0] sm:$0xff]
        %v4801 = vld [vmem:[%s827 + $0xc8] sm:$0xff]
        %v4802 = vld [vmem:[%s827 + $0xd8] sm:$0xff]
        %v4803 = vld [vmem:[%s827 + $0xe0] sm:$0xff]
        %v4804 = vld [vmem:[%s827 + $0xf0] sm:$0xff]
        %v4805 = vld [vmem:[%s827 + $0xf8] sm:$0xff]
        %v4806 = vld [vmem:[%s827 + $0x108] sm:$0xff]
        %v4807 = vld [vmem:[%s827 + $0x110] sm:$0xff]
        %v4808 = vld [vmem:[%s827 + $0x120] sm:$0xff]
        %v4809 = vld [vmem:[%s827 + $0x128] sm:$0xff]
        %v4810 = vld [vmem:[%s827 + $0x138] sm:$0xff]
        %v4811 = vld [vmem:[%s827 + $0x140] sm:$0xff]
        %v4812 = vld [vmem:[%s827 + $0x150] sm:$0xff]
        %v4813 = vld [vmem:[%s827 + $0x158] sm:$0xff]
        %v4814 = vld [vmem:[%s827 + $0x168] sm:$0xff]
        %v4815 = vld [vmem:[%s827 + $0x170] sm:$0xff]
        %v4816 = vld [vmem:[%s827 + $0x1] sm:$0xff]
        %v4817 = vld [vmem:[%s827 + $0x9] sm:$0xff]
        %v4818 = vld [vmem:[%s827 + $0x19] sm:$0xff]
        %v4819 = vld [vmem:[%s827 + $0x21] sm:$0xff]
        %v4820 = vld [vmem:[%s827 + $0x31] sm:$0xff]
        %v4821 = vld [vmem:[%s827 + $0x39] sm:$0xff]
        %v4822 = vld [vmem:[%s827 + $0x49] sm:$0xff]
        %v4823 = vld [vmem:[%s827 + $0x51] sm:$0xff]
        %v4824 = vld [vmem:[%s827 + $0x61] sm:$0xff]
        %v4825 = vld [vmem:[%s827 + $0x69] sm:$0xff]
        %v4826 = vld [vmem:[%s827 + $0x79] sm:$0xff]
        %v4827 = vld [vmem:[%s827 + $0x81] sm:$0xff]
        %v4828 = vld [vmem:[%s827 + $0x91] sm:$0xff]
        %v4829 = vld [vmem:[%s827 + $0x99] sm:$0xff]
        %v4830 = vld [vmem:[%s827 + $0xa9] sm:$0xff]
        %v4831 = vld [vmem:[%s827 + $0xb1] sm:$0xff]
        %v4832 = vld [vmem:[%s827 + $0xc1] sm:$0xff]
        %v4833 = vld [vmem:[%s827 + $0xc9] sm:$0xff]
        %v4834 = vld [vmem:[%s827 + $0xd9] sm:$0xff]
        %v4835 = vld [vmem:[%s827 + $0xe1] sm:$0xff]
        %v4836 = vld [vmem:[%s827 + $0xf1] sm:$0xff]
        %v4837 = vld [vmem:[%s827 + $0xf9] sm:$0xff]
        %v4838 = vld [vmem:[%s827 + $0x109] sm:$0xff]
        %v4839 = vld [vmem:[%s827 + $0x111] sm:$0xff]
        %v4840 = vld [vmem:[%s827 + $0x121] sm:$0xff]
        %v4841 = vld [vmem:[%s827 + $0x129] sm:$0xff]
        %v4842 = vld [vmem:[%s827 + $0x139] sm:$0xff]
        %v4843 = vld [vmem:[%s827 + $0x141] sm:$0xff]
        %v4844 = vld [vmem:[%s827 + $0x151] sm:$0xff]
        %v4845 = vld [vmem:[%s827 + $0x159] sm:$0xff]
        %v4846 = vld [vmem:[%s827 + $0x169] sm:$0xff]
        %v4847 = vld [vmem:[%s827 + $0x171] sm:$0xff]
        %v4848 = vld [vmem:[%s827 + $0x2] sm:$0xff]
        %v4849 = vld [vmem:[%s827 + $0xa] sm:$0xff]
        %v4850 = vld [vmem:[%s827 + $0x1a] sm:$0xff]
        %v4851 = vld [vmem:[%s827 + $0x22] sm:$0xff]
        %v4852 = vld [vmem:[%s827 + $0x32] sm:$0xff]
        %v4853 = vld [vmem:[%s827 + $0x3a] sm:$0xff]
        %v4854 = vld [vmem:[%s827 + $0x4a] sm:$0xff]
        %v4855 = vld [vmem:[%s827 + $0x52] sm:$0xff]
        %v4856 = vld [vmem:[%s827 + $0x62] sm:$0xff]
        %v4857 = vld [vmem:[%s827 + $0x6a] sm:$0xff]
        %v4858 = vld [vmem:[%s827 + $0x7a] sm:$0xff]
        %v4859 = vld [vmem:[%s827 + $0x82] sm:$0xff]
        %v4860 = vld [vmem:[%s827 + $0x92] sm:$0xff]
        %v4861 = vld [vmem:[%s827 + $0x9a] sm:$0xff]
        %v4862 = vld [vmem:[%s827 + $0xaa] sm:$0xff]
        %v4863 = vld [vmem:[%s827 + $0xb2] sm:$0xff]
        %v4864 = vld [vmem:[%s827 + $0xc2] sm:$0xff]
        %v4865 = vld [vmem:[%s827 + $0xca] sm:$0xff]
        %v4866 = vld [vmem:[%s827 + $0xda] sm:$0xff]
        %v4867 = vld [vmem:[%s827 + $0xe2] sm:$0xff]
        %v4868 = vld [vmem:[%s827 + $0xf2] sm:$0xff]
        %v4869 = vld [vmem:[%s827 + $0xfa] sm:$0xff]
        %v4870 = vld [vmem:[%s827 + $0x10a] sm:$0xff]
        %v4871 = vld [vmem:[%s827 + $0x112] sm:$0xff]
        %v4872 = vld [vmem:[%s827 + $0x122] sm:$0xff]
        %v4873 = vld [vmem:[%s827 + $0x12a] sm:$0xff]
        %v4874 = vld [vmem:[%s827 + $0x13a] sm:$0xff]
        %v4875 = vld [vmem:[%s827 + $0x142] sm:$0xff]
        %v4876 = vld [vmem:[%s827 + $0x152] sm:$0xff]
        %v4877 = vld [vmem:[%s827 + $0x15a] sm:$0xff]
        %v4878 = vld [vmem:[%s827 + $0x16a] sm:$0xff]
        %v4879 = vld [vmem:[%s827 + $0x172] sm:$0xff]
        %4912 = vrot.lane.b32.xlu0 %v4624, 64
        %v4913 = vpop.permute.xlu0 %4912
        %4914 = vrot.lane.b32.xlu0 %v4625, 64
        %v4915 = vpop.permute.xlu0 %4914
        %4916 = vrot.lane.b32.xlu0 %v4626, 64
        %v4917 = vpop.permute.xlu0 %4916
        %4918 = vrot.lane.b32.xlu0 %v4627, 64
        %v4919 = vpop.permute.xlu0 %4918
        %4920 = vrot.lane.b32.xlu0 %v4628, 64
        %v4921 = vpop.permute.xlu0 %4920
        %4922 = vrot.lane.b32.xlu0 %v4629, 64
        %v4923 = vpop.permute.xlu0 %4922
        %4924 = vrot.lane.b32.xlu0 %v4630, 64
        %v4925 = vpop.permute.xlu0 %4924
        %4926 = vrot.lane.b32.xlu0 %v4631, 64
        %v4927 = vpop.permute.xlu0 %4926
        %4928 = vrot.lane.b32.xlu0 %v4632, 64
        %v4929 = vpop.permute.xlu0 %4928
        %4930 = vrot.lane.b32.xlu0 %v4633, 64
        %v4931 = vpop.permute.xlu0 %4930
        %4932 = vrot.lane.b32.xlu0 %v4634, 64
        %v4933 = vpop.permute.xlu0 %4932
        %4934 = vrot.lane.b32.xlu0 %v4635, 64
        %v4935 = vpop.permute.xlu0 %4934
        %4936 = vrot.lane.b32.xlu0 %v4636, 64
        %v4937 = vpop.permute.xlu0 %4936
        %4938 = vrot.lane.b32.xlu0 %v4637, 64
        %v4939 = vpop.permute.xlu0 %4938
        %4940 = vrot.lane.b32.xlu0 %v4638, 64
        %v4941 = vpop.permute.xlu0 %4940
        %4942 = vrot.lane.b32.xlu0 %v4639, 64
        %v4943 = vpop.permute.xlu0 %4942
        %4944 = vrot.lane.b32.xlu0 %v4640, 64
        %v4945 = vpop.permute.xlu0 %4944
        %4946 = vrot.lane.b32.xlu0 %v4641, 64
        %v4947 = vpop.permute.xlu0 %4946
        %4948 = vrot.lane.b32.xlu0 %v4642, 64
        %v4949 = vpop.permute.xlu0 %4948
        %4950 = vrot.lane.b32.xlu0 %v4643, 64
        %v4951 = vpop.permute.xlu0 %4950
        %4952 = vrot.lane.b32.xlu0 %v4644, 64
        %v4953 = vpop.permute.xlu0 %4952
        %4954 = vrot.lane.b32.xlu0 %v4645, 64
        %v4955 = vpop.permute.xlu0 %4954
        %4956 = vrot.lane.b32.xlu0 %v4646, 64
        %v4957 = vpop.permute.xlu0 %4956
        %4958 = vrot.lane.b32.xlu0 %v4647, 64
        %v4959 = vpop.permute.xlu0 %4958
        %4960 = vrot.lane.b32.xlu0 %v4648, 64
        %v4961 = vpop.permute.xlu0 %4960
        %4962 = vrot.lane.b32.xlu0 %v4649, 64
        %v4963 = vpop.permute.xlu0 %4962
        %4964 = vrot.lane.b32.xlu0 %v4650, 64
        %v4965 = vpop.permute.xlu0 %4964
        %4966 = vrot.lane.b32.xlu0 %v4651, 64
        %v4967 = vpop.permute.xlu0 %4966
        %4968 = vrot.lane.b32.xlu0 %v4652, 64
        %v4969 = vpop.permute.xlu0 %4968
        %4970 = vrot.lane.b32.xlu0 %v4653, 64
        %v4971 = vpop.permute.xlu0 %4970
        %4972 = vrot.lane.b32.xlu0 %v4654, 64
        %v4973 = vpop.permute.xlu0 %4972
        %4974 = vrot.lane.b32.xlu0 %v4655, 64
        %v4975 = vpop.permute.xlu0 %4974
        %5040 = vrot.lane.b32.xlu0 %v4688, 64
        %v5041 = vpop.permute.xlu0 %5040
        %5042 = vrot.lane.b32.xlu0 %v4689, 64
        %v5043 = vpop.permute.xlu0 %5042
        %5044 = vrot.lane.b32.xlu0 %v4690, 64
        %v5045 = vpop.permute.xlu0 %5044
        %5046 = vrot.lane.b32.xlu0 %v4691, 64
        %v5047 = vpop.permute.xlu0 %5046
        %5048 = vrot.lane.b32.xlu0 %v4692, 64
        %v5049 = vpop.permute.xlu0 %5048
        %5050 = vrot.lane.b32.xlu0 %v4693, 64
        %v5051 = vpop.permute.xlu0 %5050
        %5052 = vrot.lane.b32.xlu0 %v4694, 64
        %v5053 = vpop.permute.xlu0 %5052
        %5054 = vrot.lane.b32.xlu0 %v4695, 64
        %v5055 = vpop.permute.xlu0 %5054
        %5056 = vrot.lane.b32.xlu0 %v4696, 64
        %v5057 = vpop.permute.xlu0 %5056
        %5058 = vrot.lane.b32.xlu0 %v4697, 64
        %v5059 = vpop.permute.xlu0 %5058
        %5060 = vrot.lane.b32.xlu0 %v4698, 64
        %v5061 = vpop.permute.xlu0 %5060
        %5062 = vrot.lane.b32.xlu0 %v4699, 64
        %v5063 = vpop.permute.xlu0 %5062
        %5064 = vrot.lane.b32.xlu0 %v4700, 64
        %v5065 = vpop.permute.xlu0 %5064
        %5066 = vrot.lane.b32.xlu0 %v4701, 64
        %v5067 = vpop.permute.xlu0 %5066
        %5068 = vrot.lane.b32.xlu0 %v4702, 64
        %v5069 = vpop.permute.xlu0 %5068
        %5070 = vrot.lane.b32.xlu0 %v4703, 64
        %v5071 = vpop.permute.xlu0 %5070
        %5072 = vrot.lane.b32.xlu0 %v4704, 64
        %v5073 = vpop.permute.xlu0 %5072
        %5074 = vrot.lane.b32.xlu0 %v4705, 64
        %v5075 = vpop.permute.xlu0 %5074
        %5076 = vrot.lane.b32.xlu0 %v4706, 64
        %v5077 = vpop.permute.xlu0 %5076
        %5078 = vrot.lane.b32.xlu0 %v4707, 64
        %v5079 = vpop.permute.xlu0 %5078
        %5080 = vrot.lane.b32.xlu0 %v4708, 64
        %v5081 = vpop.permute.xlu0 %5080
        %5082 = vrot.lane.b32.xlu0 %v4709, 64
        %v5083 = vpop.permute.xlu0 %5082
        %5084 = vrot.lane.b32.xlu0 %v4710, 64
        %v5085 = vpop.permute.xlu0 %5084
        %5086 = vrot.lane.b32.xlu0 %v4711, 64
        %v5087 = vpop.permute.xlu0 %5086
        %5088 = vrot.lane.b32.xlu0 %v4712, 64
        %v5089 = vpop.permute.xlu0 %5088
        %5090 = vrot.lane.b32.xlu0 %v4713, 64
        %v5091 = vpop.permute.xlu0 %5090
        %5092 = vrot.lane.b32.xlu0 %v4714, 64
        %v5093 = vpop.permute.xlu0 %5092
        %5094 = vrot.lane.b32.xlu0 %v4715, 64
        %v5095 = vpop.permute.xlu0 %5094
        %5096 = vrot.lane.b32.xlu0 %v4716, 64
        %v5097 = vpop.permute.xlu0 %5096
        %5098 = vrot.lane.b32.xlu0 %v4717, 64
        %v5099 = vpop.permute.xlu0 %5098
        %5100 = vrot.lane.b32.xlu0 %v4718, 64
        %v5101 = vpop.permute.xlu0 %5100
        %5102 = vrot.lane.b32.xlu0 %v4719, 64
        %v5103 = vpop.permute.xlu0 %5102
        %5168 = vrot.lane.b32.xlu0 %v4752, 64
        %v5169 = vpop.permute.xlu0 %5168
        %5170 = vrot.lane.b32.xlu0 %v4753, 64
        %v5171 = vpop.permute.xlu0 %5170
        %5172 = vrot.lane.b32.xlu0 %v4754, 64
        %v5173 = vpop.permute.xlu0 %5172
        %5174 = vrot.lane.b32.xlu0 %v4755, 64
        %v5175 = vpop.permute.xlu0 %5174
        %5176 = vrot.lane.b32.xlu0 %v4756, 64
        %v5177 = vpop.permute.xlu0 %5176
        %5178 = vrot.lane.b32.xlu0 %v4757, 64
        %v5179 = vpop.permute.xlu0 %5178
        %5180 = vrot.lane.b32.xlu0 %v4758, 64
        %v5181 = vpop.permute.xlu0 %5180
        %5182 = vrot.lane.b32.xlu0 %v4759, 64
        %v5183 = vpop.permute.xlu0 %5182
        %5184 = vrot.lane.b32.xlu0 %v4760, 64
        %v5185 = vpop.permute.xlu0 %5184
        %5186 = vrot.lane.b32.xlu0 %v4761, 64
        %v5187 = vpop.permute.xlu0 %5186
        %5188 = vrot.lane.b32.xlu0 %v4762, 64
        %v5189 = vpop.permute.xlu0 %5188
        %5190 = vrot.lane.b32.xlu0 %v4763, 64
        %v5191 = vpop.permute.xlu0 %5190
        %5192 = vrot.lane.b32.xlu0 %v4764, 64
        %v5193 = vpop.permute.xlu0 %5192
        %5194 = vrot.lane.b32.xlu0 %v4765, 64
        %v5195 = vpop.permute.xlu0 %5194
        %5196 = vrot.lane.b32.xlu0 %v4766, 64
        %v5197 = vpop.permute.xlu0 %5196
        %5198 = vrot.lane.b32.xlu0 %v4767, 64
        %v5199 = vpop.permute.xlu0 %5198
        %5200 = vrot.lane.b32.xlu0 %v4768, 64
        %v5201 = vpop.permute.xlu0 %5200
        %5202 = vrot.lane.b32.xlu0 %v4769, 64
        %v5203 = vpop.permute.xlu0 %5202
        %5204 = vrot.lane.b32.xlu0 %v4770, 64
        %v5205 = vpop.permute.xlu0 %5204
        %5206 = vrot.lane.b32.xlu0 %v4771, 64
        %v5207 = vpop.permute.xlu0 %5206
        %5208 = vrot.lane.b32.xlu0 %v4772, 64
        %v5209 = vpop.permute.xlu0 %5208
        %5210 = vrot.lane.b32.xlu0 %v4773, 64
        %v5211 = vpop.permute.xlu0 %5210
        %5212 = vrot.lane.b32.xlu0 %v4774, 64
        %v5213 = vpop.permute.xlu0 %5212
        %5214 = vrot.lane.b32.xlu0 %v4775, 64
        %v5215 = vpop.permute.xlu0 %5214
        %5216 = vrot.lane.b32.xlu0 %v4776, 64
        %v5217 = vpop.permute.xlu0 %5216
        %5218 = vrot.lane.b32.xlu0 %v4777, 64
        %v5219 = vpop.permute.xlu0 %5218
        %5220 = vrot.lane.b32.xlu0 %v4778, 64
        %v5221 = vpop.permute.xlu0 %5220
        %5222 = vrot.lane.b32.xlu0 %v4779, 64
        %v5223 = vpop.permute.xlu0 %5222
        %5224 = vrot.lane.b32.xlu0 %v4780, 64
        %v5225 = vpop.permute.xlu0 %5224
        %5226 = vrot.lane.b32.xlu0 %v4781, 64
        %v5227 = vpop.permute.xlu0 %5226
        %5228 = vrot.lane.b32.xlu0 %v4782, 64
        %v5229 = vpop.permute.xlu0 %5228
        %5230 = vrot.lane.b32.xlu0 %v4783, 64
        %v5231 = vpop.permute.xlu0 %5230
        %5296 = vrot.lane.b32.xlu0 %v4816, 64
        %v5297 = vpop.permute.xlu0 %5296
        %5298 = vrot.lane.b32.xlu0 %v4817, 64
        %v5299 = vpop.permute.xlu0 %5298
        %5300 = vrot.lane.b32.xlu0 %v4818, 64
        %v5301 = vpop.permute.xlu0 %5300
        %5302 = vrot.lane.b32.xlu0 %v4819, 64
        %v5303 = vpop.permute.xlu0 %5302
        %5304 = vrot.lane.b32.xlu0 %v4820, 64
        %v5305 = vpop.permute.xlu0 %5304
        %5306 = vrot.lane.b32.xlu0 %v4821, 64
        %v5307 = vpop.permute.xlu0 %5306
        %5308 = vrot.lane.b32.xlu0 %v4822, 64
        %v5309 = vpop.permute.xlu0 %5308
        %5310 = vrot.lane.b32.xlu0 %v4823, 64
        %v5311 = vpop.permute.xlu0 %5310
        %5312 = vrot.lane.b32.xlu0 %v4824, 64
        %v5313 = vpop.permute.xlu0 %5312
        %5314 = vrot.lane.b32.xlu0 %v4825, 64
        %v5315 = vpop.permute.xlu0 %5314
        %5316 = vrot.lane.b32.xlu0 %v4826, 64
        %v5317 = vpop.permute.xlu0 %5316
        %5318 = vrot.lane.b32.xlu0 %v4827, 64
        %v5319 = vpop.permute.xlu0 %5318
        %5320 = vrot.lane.b32.xlu0 %v4828, 64
        %v5321 = vpop.permute.xlu0 %5320
        %5322 = vrot.lane.b32.xlu0 %v4829, 64
        %v5323 = vpop.permute.xlu0 %5322
        %5324 = vrot.lane.b32.xlu0 %v4830, 64
        %v5325 = vpop.permute.xlu0 %5324
        %5326 = vrot.lane.b32.xlu0 %v4831, 64
        %v5327 = vpop.permute.xlu0 %5326
        %5328 = vrot.lane.b32.xlu0 %v4832, 64
        %v5329 = vpop.permute.xlu0 %5328
        %5330 = vrot.lane.b32.xlu0 %v4833, 64
        %v5331 = vpop.permute.xlu0 %5330
        %5332 = vrot.lane.b32.xlu0 %v4834, 64
        %v5333 = vpop.permute.xlu0 %5332
        %5334 = vrot.lane.b32.xlu0 %v4835, 64
        %v5335 = vpop.permute.xlu0 %5334
        %5336 = vrot.lane.b32.xlu0 %v4836, 64
        %v5337 = vpop.permute.xlu0 %5336
        %5338 = vrot.lane.b32.xlu0 %v4837, 64
        %v5339 = vpop.permute.xlu0 %5338
        %5340 = vrot.lane.b32.xlu0 %v4838, 64
        %v5341 = vpop.permute.xlu0 %5340
        %5342 = vrot.lane.b32.xlu0 %v4839, 64
        %v5343 = vpop.permute.xlu0 %5342
        %5344 = vrot.lane.b32.xlu0 %v4840, 64
        %v5345 = vpop.permute.xlu0 %5344
        %5346 = vrot.lane.b32.xlu0 %v4841, 64
        %v5347 = vpop.permute.xlu0 %5346
        %5348 = vrot.lane.b32.xlu0 %v4842, 64
        %v5349 = vpop.permute.xlu0 %5348
        %5350 = vrot.lane.b32.xlu0 %v4843, 64
        %v5351 = vpop.permute.xlu0 %5350
        %5352 = vrot.lane.b32.xlu0 %v4844, 64
        %v5353 = vpop.permute.xlu0 %5352
        %5354 = vrot.lane.b32.xlu0 %v4845, 64
        %v5355 = vpop.permute.xlu0 %5354
        %5356 = vrot.lane.b32.xlu0 %v4846, 64
        %v5357 = vpop.permute.xlu0 %5356
        %5358 = vrot.lane.b32.xlu0 %v4847, 64
        %v5359 = vpop.permute.xlu0 %5358
        %v5392 = vsel %vm441, %v4592, %v4913
        %v5393 = vsel %vm441, %v4593, %v4915
        %v5394 = vsel %vm441, %v4594, %v4917
        %v5395 = vsel %vm441, %v4595, %v4919
        %v5396 = vsel %vm441, %v4596, %v4921
        %v5397 = vsel %vm441, %v4597, %v4923
        %v5398 = vsel %vm441, %v4598, %v4925
        %v5399 = vsel %vm441, %v4599, %v4927
        %v5400 = vsel %vm441, %v4600, %v4929
        %v5401 = vsel %vm441, %v4601, %v4931
        %v5402 = vsel %vm441, %v4602, %v4933
        %v5403 = vsel %vm441, %v4603, %v4935
        %v5404 = vsel %vm441, %v4604, %v4937
        %v5405 = vsel %vm441, %v4605, %v4939
        %v5406 = vsel %vm441, %v4606, %v4941
        %v5407 = vsel %vm441, %v4607, %v4943
        %v5408 = vsel %vm441, %v4608, %v4945
        %v5409 = vsel %vm441, %v4609, %v4947
        %v5410 = vsel %vm441, %v4610, %v4949
        %v5411 = vsel %vm441, %v4611, %v4951
        %v5412 = vsel %vm441, %v4612, %v4953
        %v5413 = vsel %vm441, %v4613, %v4955
        %v5414 = vsel %vm441, %v4614, %v4957
        %v5415 = vsel %vm441, %v4615, %v4959
        %v5416 = vsel %vm441, %v4616, %v4961
        %v5417 = vsel %vm441, %v4617, %v4963
        %v5418 = vsel %vm441, %v4618, %v4965
        %v5419 = vsel %vm441, %v4619, %v4967
        %v5420 = vsel %vm441, %v4620, %v4969
        %v5421 = vsel %vm441, %v4621, %v4971
        %v5422 = vsel %vm441, %v4622, %v4973
        %v5423 = vsel %vm441, %v4623, %v4975
        %v5424 = vsel %vm441, %v4656, %v5041
        %v5425 = vsel %vm441, %v4657, %v5043
        %v5426 = vsel %vm441, %v4658, %v5045
        %v5427 = vsel %vm441, %v4659, %v5047
        %v5428 = vsel %vm441, %v4660, %v5049
        %v5429 = vsel %vm441, %v4661, %v5051
        %v5430 = vsel %vm441, %v4662, %v5053
        %v5431 = vsel %vm441, %v4663, %v5055
        %v5432 = vsel %vm441, %v4664, %v5057
        %v5433 = vsel %vm441, %v4665, %v5059
        %v5434 = vsel %vm441, %v4666, %v5061
        %v5435 = vsel %vm441, %v4667, %v5063
        %v5436 = vsel %vm441, %v4668, %v5065
        %v5437 = vsel %vm441, %v4669, %v5067
        %v5438 = vsel %vm441, %v4670, %v5069
        %v5439 = vsel %vm441, %v4671, %v5071
        %v5440 = vsel %vm441, %v4672, %v5073
        %v5441 = vsel %vm441, %v4673, %v5075
        %v5442 = vsel %vm441, %v4674, %v5077
        %v5443 = vsel %vm441, %v4675, %v5079
        %v5444 = vsel %vm441, %v4676, %v5081
        %v5445 = vsel %vm441, %v4677, %v5083
        %v5446 = vsel %vm441, %v4678, %v5085
        %v5447 = vsel %vm441, %v4679, %v5087
        %v5448 = vsel %vm441, %v4680, %v5089
        %v5449 = vsel %vm441, %v4681, %v5091
        %v5450 = vsel %vm441, %v4682, %v5093
        %v5451 = vsel %vm441, %v4683, %v5095
        %v5452 = vsel %vm441, %v4684, %v5097
        %v5453 = vsel %vm441, %v4685, %v5099
        %v5454 = vsel %vm441, %v4686, %v5101
        %v5455 = vsel %vm441, %v4687, %v5103
        %v5456 = vsel %vm441, %v4720, %v5169
        %v5457 = vsel %vm441, %v4721, %v5171
        %v5458 = vsel %vm441, %v4722, %v5173
        %v5459 = vsel %vm441, %v4723, %v5175
        %v5460 = vsel %vm441, %v4724, %v5177
        %v5461 = vsel %vm441, %v4725, %v5179
        %v5462 = vsel %vm441, %v4726, %v5181
        %v5463 = vsel %vm441, %v4727, %v5183
        %v5464 = vsel %vm441, %v4728, %v5185
        %v5465 = vsel %vm441, %v4729, %v5187
        %v5466 = vsel %vm441, %v4730, %v5189
        %v5467 = vsel %vm441, %v4731, %v5191
        %v5468 = vsel %vm441, %v4732, %v5193
        %v5469 = vsel %vm441, %v4733, %v5195
        %v5470 = vsel %vm441, %v4734, %v5197
        %v5471 = vsel %vm441, %v4735, %v5199
        %v5472 = vsel %vm441, %v4736, %v5201
        %v5473 = vsel %vm441, %v4737, %v5203
        %v5474 = vsel %vm441, %v4738, %v5205
        %v5475 = vsel %vm441, %v4739, %v5207
        %v5476 = vsel %vm441, %v4740, %v5209
        %v5477 = vsel %vm441, %v4741, %v5211
        %v5478 = vsel %vm441, %v4742, %v5213
        %v5479 = vsel %vm441, %v4743, %v5215
        %v5480 = vsel %vm441, %v4744, %v5217
        %v5481 = vsel %vm441, %v4745, %v5219
        %v5482 = vsel %vm441, %v4746, %v5221
        %v5483 = vsel %vm441, %v4747, %v5223
        %v5484 = vsel %vm441, %v4748, %v5225
        %v5485 = vsel %vm441, %v4749, %v5227
        %v5486 = vsel %vm441, %v4750, %v5229
        %v5487 = vsel %vm441, %v4751, %v5231
        %v5488 = vsel %vm441, %v4784, %v5297
        %v5489 = vsel %vm441, %v4785, %v5299
        %v5490 = vsel %vm441, %v4786, %v5301
        %v5491 = vsel %vm441, %v4787, %v5303
        %v5492 = vsel %vm441, %v4788, %v5305
        %v5493 = vsel %vm441, %v4789, %v5307
        %v5494 = vsel %vm441, %v4790, %v5309
        %v5495 = vsel %vm441, %v4791, %v5311
        %v5496 = vsel %vm441, %v4792, %v5313
        %v5497 = vsel %vm441, %v4793, %v5315
        %v5498 = vsel %vm441, %v4794, %v5317
        %v5499 = vsel %vm441, %v4795, %v5319
        %v5500 = vsel %vm441, %v4796, %v5321
        %v5501 = vsel %vm441, %v4797, %v5323
        %v5502 = vsel %vm441, %v4798, %v5325
        %v5503 = vsel %vm441, %v4799, %v5327
        %v5504 = vsel %vm441, %v4800, %v5329
        %v5505 = vsel %vm441, %v4801, %v5331
        %v5506 = vsel %vm441, %v4802, %v5333
        %v5507 = vsel %vm441, %v4803, %v5335
        %v5508 = vsel %vm441, %v4804, %v5337
        %v5509 = vsel %vm441, %v4805, %v5339
        %v5510 = vsel %vm441, %v4806, %v5341
        %v5511 = vsel %vm441, %v4807, %v5343
        %v5512 = vsel %vm441, %v4808, %v5345
        %v5513 = vsel %vm441, %v4809, %v5347
        %v5514 = vsel %vm441, %v4810, %v5349
        %v5515 = vsel %vm441, %v4811, %v5351
        %v5516 = vsel %vm441, %v4812, %v5353
        %v5517 = vsel %vm441, %v4813, %v5355
        %v5518 = vsel %vm441, %v4814, %v5357
        %v5519 = vsel %vm441, %v4815, %v5359
        %v5521 = vlaneseq
        %v5522 = vshrl.u32 %v5521, 7
        %v5523 = vsub.s32 0, %v5522
        %v5524 = vrot.slane %v4559, %v5523
        %v5527 = vsel %vm441, %v4848, 0
        %v5530 = vsel %vm441, %v4849, 0
        %v5533 = vsel %vm441, %v4850, 0
        %v5536 = vsel %vm441, %v4851, 0
        %v5539 = vsel %vm441, %v4852, 0
        %v5542 = vsel %vm441, %v4853, 0
        %v5545 = vsel %vm441, %v4854, 0
        %v5548 = vsel %vm441, %v4855, 0
        %v5551 = vsel %vm441, %v4856, 0
        %v5554 = vsel %vm441, %v4857, 0
        %v5557 = vsel %vm441, %v4858, 0
        %v5560 = vsel %vm441, %v4859, 0
        %v5563 = vsel %vm441, %v4860, 0
        %v5566 = vsel %vm441, %v4861, 0
        %v5569 = vsel %vm441, %v4862, 0
        %v5572 = vsel %vm441, %v4863, 0
        %v5575 = vsel %vm441, %v4864, 0
        %v5578 = vsel %vm441, %v4865, 0
        %v5581 = vsel %vm441, %v4866, 0
        %v5584 = vsel %vm441, %v4867, 0
        %v5587 = vsel %vm441, %v4868, 0
        %v5590 = vsel %vm441, %v4869, 0
        %v5593 = vsel %vm441, %v4870, 0
        %v5596 = vsel %vm441, %v4871, 0
        %v5599 = vsel %vm441, %v4872, 0
        %v5602 = vsel %vm441, %v4873, 0
        %v5605 = vsel %vm441, %v4874, 0
        %v5608 = vsel %vm441, %v4875, 0
        %v5611 = vsel %vm441, %v4876, 0
        %v5614 = vsel %vm441, %v4877, 0
        %v5617 = vsel %vm441, %v4878, 0
        %v5620 = vsel %vm441, %v4879, 0
        %5622 = vmatprep.subr.mxu0 0.0
        %5623 = vmatpush1.msra.mxu0 %v4487
        %5624 = vmatprep.subr.mxu0 0.0
        %5625 = vmatpush1.msra.mxu0 %v4488
        %5626 = vmatprep.subr.mxu0 0.0
        %5627 = vmatpush1.msra.mxu0 %v4489
        %5628 = vmatprep.subr.mxu0 0.0
        %5629 = vmatpush1.msra.mxu0 %v4490
        %5630 = vmatprep.subr.mxu0 0.0
        %5631 = vmatpush1.msra.mxu0 %v4491
        %5632 = vmatprep.subr.mxu0 0.0
        %5633 = vmatpush1.msra.mxu0 %v4492
        %5634 = vmatprep.subr.mxu0 0.0
        %5635 = vmatpush1.msra.mxu0 %v4493
        %5636 = vmatprep.subr.mxu0 0.0
        %5637 = vmatpush1.msra.mxu0 %v4494
        %5638 = vmatprep.subr.mxu0 0.0
        %5639 = vmatpush1.msra.mxu0 %v4495
        %5640 = vmatprep.subr.mxu0 0.0
        %5641 = vmatpush1.msra.mxu0 %v4496
        %5642 = vmatprep.subr.mxu0 0.0
        %5643 = vmatpush1.msra.mxu0 %v4497
        %5644 = vmatprep.subr.mxu0 0.0
        %5645 = vmatpush1.msra.mxu0 %v4498
        %5646 = vmatprep.subr.mxu0 0.0
        %5647 = vmatpush1.msra.mxu0 %v4499
        %5648 = vmatprep.subr.mxu0 0.0
        %5649 = vmatpush1.msra.mxu0 %v4500
        %5650 = vmatprep.subr.mxu0 0.0
        %5651 = vmatpush1.msra.mxu0 %v4501
        %5652 = vmatprep.subr.mxu0 0.0
        %5653 = vmatpush1.msra.mxu0 %v4502
        %5654 = vmatprep.subr.mxu0 0.0
        %5655 = vmatpush1.msra.mxu0 %v4503
        %5656 = vmatprep.subr.mxu0 0.0
        %5657 = vmatpush1.msra.mxu0 %v4504
        %5658 = vmatprep.subr.mxu0 0.0
        %5659 = vmatpush1.msra.mxu0 %v4505
        %5660 = vmatprep.subr.mxu0 0.0
        %5661 = vmatpush1.msra.mxu0 %v4506
        %5662 = vmatprep.subr.mxu0 0.0
        %5663 = vmatpush1.msra.mxu0 %v4507
        %5664 = vmatprep.subr.mxu0 0.0
        %5665 = vmatpush1.msra.mxu0 %v4508
        %5666 = vmatprep.subr.mxu0 0.0
        %5667 = vmatpush1.msra.mxu0 %v4509
        %5668 = vmatprep.subr.mxu0 0.0
        %5669 = vmatpush1.msra.mxu0 %v4510
        %5670 = vmatprep.subr.mxu0 0.0
        %5671 = vmatpush1.msra.mxu0 %v4511
        %5672 = vmatprep.subr.mxu0 0.0
        %5673 = vmatpush1.msra.mxu0 %v4512
        %5674 = vmatprep.subr.mxu0 0.0
        %5675 = vmatpush1.msra.mxu0 %v4513
        %5676 = vmatprep.subr.mxu0 0.0
        %5677 = vmatpush1.msra.mxu0 %v4514
        %5678 = vmatprep.subr.mxu0 0.0
        %5679 = vmatpush1.msra.mxu0 %v4515
        %5680 = vmatprep.subr.mxu0 0.0
        %5681 = vmatpush1.msra.mxu0 %v4516
        %5682 = vmatprep.subr.mxu0 0.0
        %5683 = vmatpush1.msra.mxu0 %v4517
        %5684 = vmatprep.subr.mxu0 0.0
        %5685 = vmatpush1.msra.mxu0 %v4518
        %5686 = vmatprep.mubr.f32.mxu0 %v5424
        %5687 = vmatmul.mubr.f32.gmra.mrb[0].mxu0 %v5392
        %v5688 = vpop.f32.mrb[0].mxu0
        %v5689 = vadd.f32 %v5524, %v5688
        %v5690 = vpop.f32.mrb[0].mxu0
        %5691 = vmatprep.mubr.f32.mxu0 %v5425
        %5692 = vmatmul.mubr.f32.gmra.mrb[0].mxu0 %v5393
        %v5693 = vpop.f32.mrb[0].mxu0
        %v5694 = vadd.f32 %v5524, %v5693
        %v5695 = vpop.f32.mrb[0].mxu0
        %5696 = vmatprep.mubr.f32.mxu0 %v5426
        %5697 = vmatmul.mubr.f32.gmra.mrb[0].mxu0 %v5394
        %v5698 = vpop.f32.mrb[0].mxu0
        %v5699 = vadd.f32 %v5524, %v5698
        %v5700 = vpop.f32.mrb[0].mxu0
        %5701 = vmatprep.mubr.f32.mxu0 %v5427
        %5702 = vmatmul.mubr.f32.gmra.mrb[0].mxu0 %v5395
        %v5703 = vpop.f32.mrb[0].mxu0
        %v5704 = vadd.f32 %v5524, %v5703
        %v5705 = vpop.f32.mrb[0].mxu0
        %5706 = vmatprep.mubr.f32.mxu0 %v5428
        %5707 = vmatmul.mubr.f32.gmra.mrb[0].mxu0 %v5396
        %v5708 = vpop.f32.mrb[0].mxu0
        %v5709 = vadd.f32 %v5524, %v5708
        %v5710 = vpop.f32.mrb[0].mxu0
        %5711 = vmatprep.mubr.f32.mxu0 %v5429
        %5712 = vmatmul.mubr.f32.gmra.mrb[0].mxu0 %v5397
        %v5713 = vpop.f32.mrb[0].mxu0
        %v5714 = vadd.f32 %v5524, %v5713
        %v5715 = vpop.f32.mrb[0].mxu0
        %5716 = vmatprep.mubr.f32.mxu0 %v5430
        %5717 = vmatmul.mubr.f32.gmra.mrb[0].mxu0 %v5398
        %v5718 = vpop.f32.mrb[0].mxu0
        %v5719 = vadd.f32 %v5524, %v5718
        %v5720 = vpop.f32.mrb[0].mxu0
        %5721 = vmatprep.mubr.f32.mxu0 %v5431
        %5722 = vmatmul.mubr.f32.gmra.mrb[0].mxu0 %v5399
        %v5723 = vpop.f32.mrb[0].mxu0
        %v5724 = vadd.f32 %v5524, %v5723
        %v5725 = vpop.f32.mrb[0].mxu0
        %5726 = vmatprep.mubr.f32.mxu0 %v5432
        %5727 = vmatmul.mubr.f32.gmra.mrb[0].mxu0 %v5400
        %v5728 = vpop.f32.mrb[0].mxu0
        %v5729 = vadd.f32 %v5524, %v5728
        %v5730 = vpop.f32.mrb[0].mxu0
        %5731 = vmatprep.mubr.f32.mxu0 %v5433
        %5732 = vmatmul.mubr.f32.gmra.mrb[0].mxu0 %v5401
        %v5733 = vpop.f32.mrb[0].mxu0
        %v5734 = vadd.f32 %v5524, %v5733
        %v5735 = vpop.f32.mrb[0].mxu0
        %5736 = vmatprep.mubr.f32.mxu0 %v5434
        %5737 = vmatmul.mubr.f32.gmra.mrb[0].mxu0 %v5402
        %v5738 = vpop.f32.mrb[0].mxu0
        %v5739 = vadd.f32 %v5524, %v5738
        %v5740 = vpop.f32.mrb[0].mxu0
        %5741 = vmatprep.mubr.f32.mxu0 %v5435
        %5742 = vmatmul.mubr.f32.gmra.mrb[0].mxu0 %v5403
        %v5743 = vpop.f32.mrb[0].mxu0
        %v5744 = vadd.f32 %v5524, %v5743
        %v5745 = vpop.f32.mrb[0].mxu0
        %5746 = vmatprep.mubr.f32.mxu0 %v5436
        %5747 = vmatmul.mubr.f32.gmra.mrb[0].mxu0 %v5404
        %v5748 = vpop.f32.mrb[0].mxu0
        %v5749 = vadd.f32 %v5524, %v5748
        %v5750 = vpop.f32.mrb[0].mxu0
        %5751 = vmatprep.mubr.f32.mxu0 %v5437
        %5752 = vmatmul.mubr.f32.gmra.mrb[0].mxu0 %v5405
        %v5753 = vpop.f32.mrb[0].mxu0
        %v5754 = vadd.f32 %v5524, %v5753
        %v5755 = vpop.f32.mrb[0].mxu0
        %5756 = vmatprep.mubr.f32.mxu0 %v5438
        %5757 = vmatmul.mubr.f32.gmra.mrb[0].mxu0 %v5406
        %v5758 = vpop.f32.mrb[0].mxu0
        %v5759 = vadd.f32 %v5524, %v5758
        %v5760 = vpop.f32.mrb[0].mxu0
        %5761 = vmatprep.mubr.f32.mxu0 %v5439
        %5762 = vmatmul.mubr.f32.gmra.mrb[0].mxu0 %v5407
        %v5763 = vpop.f32.mrb[0].mxu0
        %v5764 = vadd.f32 %v5524, %v5763
        %v5765 = vpop.f32.mrb[0].mxu0
        %5766 = vmatprep.mubr.f32.mxu0 %v5440
        %5767 = vmatmul.mubr.f32.gmra.mrb[0].mxu0 %v5408
        %v5768 = vpop.f32.mrb[0].mxu0
        %v5769 = vadd.f32 %v5524, %v5768
        %v5770 = vpop.f32.mrb[0].mxu0
        %5771 = vmatprep.mubr.f32.mxu0 %v5441
        %5772 = vmatmul.mubr.f32.gmra.mrb[0].mxu0 %v5409
        %v5773 = vpop.f32.mrb[0].mxu0
        %v5774 = vadd.f32 %v5524, %v5773
        %v5775 = vpop.f32.mrb[0].mxu0
        %5776 = vmatprep.mubr.f32.mxu0 %v5442
        %5777 = vmatmul.mubr.f32.gmra.mrb[0].mxu0 %v5410
        %v5778 = vpop.f32.mrb[0].mxu0
        %v5779 = vadd.f32 %v5524, %v5778
        %v5780 = vpop.f32.mrb[0].mxu0
        %5781 = vmatprep.mubr.f32.mxu0 %v5443
        %5782 = vmatmul.mubr.f32.gmra.mrb[0].mxu0 %v5411
        %v5783 = vpop.f32.mrb[0].mxu0
        %v5784 = vadd.f32 %v5524, %v5783
        %v5785 = vpop.f32.mrb[0].mxu0
        %5786 = vmatprep.mubr.f32.mxu0 %v5444
        %5787 = vmatmul.mubr.f32.gmra.mrb[0].mxu0 %v5412
        %v5788 = vpop.f32.mrb[0].mxu0
        %v5789 = vadd.f32 %v5524, %v5788
        %v5790 = vpop.f32.mrb[0].mxu0
        %5791 = vmatprep.mubr.f32.mxu0 %v5445
        %5792 = vmatmul.mubr.f32.gmra.mrb[0].mxu0 %v5413
        %v5793 = vpop.f32.mrb[0].mxu0
        %v5794 = vadd.f32 %v5524, %v5793
        %v5795 = vpop.f32.mrb[0].mxu0
        %5796 = vmatprep.mubr.f32.mxu0 %v5446
        %5797 = vmatmul.mubr.f32.gmra.mrb[0].mxu0 %v5414
        %v5798 = vpop.f32.mrb[0].mxu0
        %v5799 = vadd.f32 %v5524, %v5798
        %v5800 = vpop.f32.mrb[0].mxu0
        %5801 = vmatprep.mubr.f32.mxu0 %v5447
        %5802 = vmatmul.mubr.f32.gmra.mrb[0].mxu0 %v5415
        %v5803 = vpop.f32.mrb[0].mxu0
        %v5804 = vadd.f32 %v5524, %v5803
        %v5805 = vpop.f32.mrb[0].mxu0
        %5806 = vmatprep.mubr.f32.mxu0 %v5448
        %5807 = vmatmul.mubr.f32.gmra.mrb[0].mxu0 %v5416
        %v5808 = vpop.f32.mrb[0].mxu0
        %v5809 = vadd.f32 %v5524, %v5808
        %v5810 = vpop.f32.mrb[0].mxu0
        %5811 = vmatprep.mubr.f32.mxu0 %v5449
        %5812 = vmatmul.mubr.f32.gmra.mrb[0].mxu0 %v5417
        %v5813 = vpop.f32.mrb[0].mxu0
        %v5814 = vadd.f32 %v5524, %v5813
        %v5815 = vpop.f32.mrb[0].mxu0
        %5816 = vmatprep.mubr.f32.mxu0 %v5450
        %5817 = vmatmul.mubr.f32.gmra.mrb[0].mxu0 %v5418
        %v5818 = vpop.f32.mrb[0].mxu0
        %v5819 = vadd.f32 %v5524, %v5818
        %v5820 = vpop.f32.mrb[0].mxu0
        %5821 = vmatprep.mubr.f32.mxu0 %v5451
        %5822 = vmatmul.mubr.f32.gmra.mrb[0].mxu0 %v5419
        %v5823 = vpop.f32.mrb[0].mxu0
        %v5824 = vadd.f32 %v5524, %v5823
        %v5825 = vpop.f32.mrb[0].mxu0
        %5826 = vmatprep.mubr.f32.mxu0 %v5452
        %5827 = vmatmul.mubr.f32.gmra.mrb[0].mxu0 %v5420
        %v5828 = vpop.f32.mrb[0].mxu0
        %v5829 = vadd.f32 %v5524, %v5828
        %v5830 = vpop.f32.mrb[0].mxu0
        %5831 = vmatprep.mubr.f32.mxu0 %v5453
        %5832 = vmatmul.mubr.f32.gmra.mrb[0].mxu0 %v5421
        %v5833 = vpop.f32.mrb[0].mxu0
        %v5834 = vadd.f32 %v5524, %v5833
        %v5835 = vpop.f32.mrb[0].mxu0
        %5836 = vmatprep.mubr.f32.mxu0 %v5454
        %5837 = vmatmul.mubr.f32.gmra.mrb[0].mxu0 %v5422
        %v5838 = vpop.f32.mrb[0].mxu0
        %v5839 = vadd.f32 %v5524, %v5838
        %v5840 = vpop.f32.mrb[0].mxu0
        %5841 = vmatprep.mubr.f32.mxu0 %v5455
        %5842 = vmatmul.mubr.f32.gmra.mrb[0].mxu0 %v5423
        %v5843 = vpop.f32.mrb[0].mxu0
        %v5844 = vadd.f32 %v5524, %v5843
        %v5845 = vpop.f32.mrb[0].mxu0
        %5846 = vdwg.mxu0
        %5847 = vmatprep.subr.mxu0 0.0
        %5848 = vmatpush1.msra.mxu0 %v4519
        %5849 = vmatprep.subr.mxu0 0.0
        %5850 = vmatpush1.msra.mxu0 %v4520
        %5851 = vmatprep.subr.mxu0 0.0
        %5852 = vmatpush1.msra.mxu0 %v4521
        %5853 = vmatprep.subr.mxu0 0.0
        %5854 = vmatpush1.msra.mxu0 %v4522
        %5855 = vmatprep.subr.mxu0 0.0
        %5856 = vmatpush1.msra.mxu0 %v4523
        %5857 = vmatprep.subr.mxu0 0.0
        %5858 = vmatpush1.msra.mxu0 %v4524
        %5859 = vmatprep.subr.mxu0 0.0
        %5860 = vmatpush1.msra.mxu0 %v4525
        %5861 = vmatprep.subr.mxu0 0.0
        %5862 = vmatpush1.msra.mxu0 %v4526
        %5863 = vmatprep.subr.mxu0 0.0
        %5864 = vmatpush1.msra.mxu0 %v4527
        %5865 = vmatprep.subr.mxu0 0.0
        %5866 = vmatpush1.msra.mxu0 %v4528
        %5867 = vmatprep.subr.mxu0 0.0
        %5868 = vmatpush1.msra.mxu0 %v4529
        %5869 = vmatprep.subr.mxu0 0.0
        %5870 = vmatpush1.msra.mxu0 %v4530
        %5871 = vmatprep.subr.mxu0 0.0
        %5872 = vmatpush1.msra.mxu0 %v4531
        %5873 = vmatprep.subr.mxu0 0.0
        %5874 = vmatpush1.msra.mxu0 %v4532
        %5875 = vmatprep.subr.mxu0 0.0
        %5876 = vmatpush1.msra.mxu0 %v4533
        %5877 = vmatprep.subr.mxu0 0.0
        %5878 = vmatpush1.msra.mxu0 %v4534
        %5879 = vmatprep.subr.mxu0 0.0
        %5880 = vmatpush1.msra.mxu0 %v4535
        %5881 = vmatprep.subr.mxu0 0.0
        %5882 = vmatpush1.msra.mxu0 %v4536
        %5883 = vmatprep.subr.mxu0 0.0
        %5884 = vmatpush1.msra.mxu0 %v4537
        %5885 = vmatprep.subr.mxu0 0.0
        %5886 = vmatpush1.msra.mxu0 %v4538
        %5887 = vmatprep.subr.mxu0 0.0
        %5888 = vmatpush1.msra.mxu0 %v4539
        %5889 = vmatprep.subr.mxu0 0.0
        %5890 = vmatpush1.msra.mxu0 %v4540
        %5891 = vmatprep.subr.mxu0 0.0
        %5892 = vmatpush1.msra.mxu0 %v4541
        %5893 = vmatprep.subr.mxu0 0.0
        %5894 = vmatpush1.msra.mxu0 %v4542
        %5895 = vmatprep.subr.mxu0 0.0
        %5896 = vmatpush1.msra.mxu0 %v4543
        %5897 = vmatprep.subr.mxu0 0.0
        %5898 = vmatpush1.msra.mxu0 %v4544
        %5899 = vmatprep.subr.mxu0 0.0
        %5900 = vmatpush1.msra.mxu0 %v4545
        %5901 = vmatprep.subr.mxu0 0.0
        %5902 = vmatpush1.msra.mxu0 %v4546
        %5903 = vmatprep.subr.mxu0 0.0
        %5904 = vmatpush1.msra.mxu0 %v4547
        %5905 = vmatprep.subr.mxu0 0.0
        %5906 = vmatpush1.msra.mxu0 %v4548
        %5907 = vmatprep.subr.mxu0 0.0
        %5908 = vmatpush1.msra.mxu0 %v4549
        %5909 = vmatprep.subr.mxu0 0.0
        %5910 = vmatpush1.msra.mxu0 %v4550
        %5911 = vmatprep.mubr.f32.mxu0 %v5488
        %5912 = vmatmul.mubr.f32.gmra.mrb[0].mxu0 %v5456
        %v5913 = vpop.f32.mrb[0].mxu0
        %v5914 = vadd.f32 %v5689, %v5913
        %v5915 = vpop.f32.mrb[0].mxu0
        %5916 = vmatprep.mubr.f32.mxu0 %v5489
        %5917 = vmatmul.mubr.f32.gmra.mrb[0].mxu0 %v5457
        %v5918 = vpop.f32.mrb[0].mxu0
        %v5919 = vadd.f32 %v5694, %v5918
        %v5920 = vpop.f32.mrb[0].mxu0
        %5921 = vmatprep.mubr.f32.mxu0 %v5490
        %5922 = vmatmul.mubr.f32.gmra.mrb[0].mxu0 %v5458
        %v5923 = vpop.f32.mrb[0].mxu0
        %v5924 = vadd.f32 %v5699, %v5923
        %v5925 = vpop.f32.mrb[0].mxu0
        %5926 = vmatprep.mubr.f32.mxu0 %v5491
        %5927 = vmatmul.mubr.f32.gmra.mrb[0].mxu0 %v5459
        %v5928 = vpop.f32.mrb[0].mxu0
        %v5929 = vadd.f32 %v5704, %v5928
        %v5930 = vpop.f32.mrb[0].mxu0
        %5931 = vmatprep.mubr.f32.mxu0 %v5492
        %5932 = vmatmul.mubr.f32.gmra.mrb[0].mxu0 %v5460
        %v5933 = vpop.f32.mrb[0].mxu0
        %v5934 = vadd.f32 %v5709, %v5933
        %v5935 = vpop.f32.mrb[0].mxu0
        %5936 = vmatprep.mubr.f32.mxu0 %v5493
        %5937 = vmatmul.mubr.f32.gmra.mrb[0].mxu0 %v5461
        %v5938 = vpop.f32.mrb[0].mxu0
        %v5939 = vadd.f32 %v5714, %v5938
        %v5940 = vpop.f32.mrb[0].mxu0
        %5941 = vmatprep.mubr.f32.mxu0 %v5494
        %5942 = vmatmul.mubr.f32.gmra.mrb[0].mxu0 %v5462
        %v5943 = vpop.f32.mrb[0].mxu0
        %v5944 = vadd.f32 %v5719, %v5943
        %v5945 = vpop.f32.mrb[0].mxu0
        %5946 = vmatprep.mubr.f32.mxu0 %v5495
        %5947 = vmatmul.mubr.f32.gmra.mrb[0].mxu0 %v5463
        %v5948 = vpop.f32.mrb[0].mxu0
        %v5949 = vadd.f32 %v5724, %v5948
        %v5950 = vpop.f32.mrb[0].mxu0
        %5951 = vmatprep.mubr.f32.mxu0 %v5496
        %5952 = vmatmul.mubr.f32.gmra.mrb[0].mxu0 %v5464
        %v5953 = vpop.f32.mrb[0].mxu0
        %v5954 = vadd.f32 %v5729, %v5953
        %v5955 = vpop.f32.mrb[0].mxu0
        %5956 = vmatprep.mubr.f32.mxu0 %v5497
        %5957 = vmatmul.mubr.f32.gmra.mrb[0].mxu0 %v5465
        %v5958 = vpop.f32.mrb[0].mxu0
        %v5959 = vadd.f32 %v5734, %v5958
        %v5960 = vpop.f32.mrb[0].mxu0
        %5961 = vmatprep.mubr.f32.mxu0 %v5498
        %5962 = vmatmul.mubr.f32.gmra.mrb[0].mxu0 %v5466
        %v5963 = vpop.f32.mrb[0].mxu0
        %v5964 = vadd.f32 %v5739, %v5963
        %v5965 = vpop.f32.mrb[0].mxu0
        %5966 = vmatprep.mubr.f32.mxu0 %v5499
        %5967 = vmatmul.mubr.f32.gmra.mrb[0].mxu0 %v5467
        %v5968 = vpop.f32.mrb[0].mxu0
        %v5969 = vadd.f32 %v5744, %v5968
        %v5970 = vpop.f32.mrb[0].mxu0
        %5971 = vmatprep.mubr.f32.mxu0 %v5500
        %5972 = vmatmul.mubr.f32.gmra.mrb[0].mxu0 %v5468
        %v5973 = vpop.f32.mrb[0].mxu0
        %v5974 = vadd.f32 %v5749, %v5973
        %v5975 = vpop.f32.mrb[0].mxu0
        %5976 = vmatprep.mubr.f32.mxu0 %v5501
        %5977 = vmatmul.mubr.f32.gmra.mrb[0].mxu0 %v5469
        %v5978 = vpop.f32.mrb[0].mxu0
        %v5979 = vadd.f32 %v5754, %v5978
        %v5980 = vpop.f32.mrb[0].mxu0
        %5981 = vmatprep.mubr.f32.mxu0 %v5502
        %5982 = vmatmul.mubr.f32.gmra.mrb[0].mxu0 %v5470
        %v5983 = vpop.f32.mrb[0].mxu0
        %v5984 = vadd.f32 %v5759, %v5983
        %v5985 = vpop.f32.mrb[0].mxu0
        %5986 = vmatprep.mubr.f32.mxu0 %v5503
        %5987 = vmatmul.mubr.f32.gmra.mrb[0].mxu0 %v5471
        %v5988 = vpop.f32.mrb[0].mxu0
        %v5989 = vadd.f32 %v5764, %v5988
        %v5990 = vpop.f32.mrb[0].mxu0
        %5991 = vmatprep.mubr.f32.mxu0 %v5504
        %5992 = vmatmul.mubr.f32.gmra.mrb[0].mxu0 %v5472
        %v5993 = vpop.f32.mrb[0].mxu0
        %v5994 = vadd.f32 %v5769, %v5993
        %v5995 = vpop.f32.mrb[0].mxu0
        %5996 = vmatprep.mubr.f32.mxu0 %v5505
        %5997 = vmatmul.mubr.f32.gmra.mrb[0].mxu0 %v5473
        %v5998 = vpop.f32.mrb[0].mxu0
        %v5999 = vadd.f32 %v5774, %v5998
        %v6000 = vpop.f32.mrb[0].mxu0
        %6001 = vmatprep.mubr.f32.mxu0 %v5506
        %6002 = vmatmul.mubr.f32.gmra.mrb[0].mxu0 %v5474
        %v6003 = vpop.f32.mrb[0].mxu0
        %v6004 = vadd.f32 %v5779, %v6003
        %v6005 = vpop.f32.mrb[0].mxu0
        %6006 = vmatprep.mubr.f32.mxu0 %v5507
        %6007 = vmatmul.mubr.f32.gmra.mrb[0].mxu0 %v5475
        %v6008 = vpop.f32.mrb[0].mxu0
        %v6009 = vadd.f32 %v5784, %v6008
        %v6010 = vpop.f32.mrb[0].mxu0
        %6011 = vmatprep.mubr.f32.mxu0 %v5508
        %6012 = vmatmul.mubr.f32.gmra.mrb[0].mxu0 %v5476
        %v6013 = vpop.f32.mrb[0].mxu0
        %v6014 = vadd.f32 %v5789, %v6013
        %v6015 = vpop.f32.mrb[0].mxu0
        %6016 = vmatprep.mubr.f32.mxu0 %v5509
        %6017 = vmatmul.mubr.f32.gmra.mrb[0].mxu0 %v5477
        %v6018 = vpop.f32.mrb[0].mxu0
        %v6019 = vadd.f32 %v5794, %v6018
        %v6020 = vpop.f32.mrb[0].mxu0
        %6021 = vmatprep.mubr.f32.mxu0 %v5510
        %6022 = vmatmul.mubr.f32.gmra.mrb[0].mxu0 %v5478
        %v6023 = vpop.f32.mrb[0].mxu0
        %v6024 = vadd.f32 %v5799, %v6023
        %v6025 = vpop.f32.mrb[0].mxu0
        %6026 = vmatprep.mubr.f32.mxu0 %v5511
        %6027 = vmatmul.mubr.f32.gmra.mrb[0].mxu0 %v5479
        %v6028 = vpop.f32.mrb[0].mxu0
        %v6029 = vadd.f32 %v5804, %v6028
        %v6030 = vpop.f32.mrb[0].mxu0
        %6031 = vmatprep.mubr.f32.mxu0 %v5512
        %6032 = vmatmul.mubr.f32.gmra.mrb[0].mxu0 %v5480
        %v6033 = vpop.f32.mrb[0].mxu0
        %v6034 = vadd.f32 %v5809, %v6033
        %v6035 = vpop.f32.mrb[0].mxu0
        %6036 = vmatprep.mubr.f32.mxu0 %v5513
        %6037 = vmatmul.mubr.f32.gmra.mrb[0].mxu0 %v5481
        %v6038 = vpop.f32.mrb[0].mxu0
        %v6039 = vadd.f32 %v5814, %v6038
        %v6040 = vpop.f32.mrb[0].mxu0
        %6041 = vmatprep.mubr.f32.mxu0 %v5514
        %6042 = vmatmul.mubr.f32.gmra.mrb[0].mxu0 %v5482
        %v6043 = vpop.f32.mrb[0].mxu0
        %v6044 = vadd.f32 %v5819, %v6043
        %v6045 = vpop.f32.mrb[0].mxu0
        %6046 = vmatprep.mubr.f32.mxu0 %v5515
        %6047 = vmatmul.mubr.f32.gmra.mrb[0].mxu0 %v5483
        %v6048 = vpop.f32.mrb[0].mxu0
        %v6049 = vadd.f32 %v5824, %v6048
        %v6050 = vpop.f32.mrb[0].mxu0
        %6051 = vmatprep.mubr.f32.mxu0 %v5516
        %6052 = vmatmul.mubr.f32.gmra.mrb[0].mxu0 %v5484
        %v6053 = vpop.f32.mrb[0].mxu0
        %v6054 = vadd.f32 %v5829, %v6053
        %v6055 = vpop.f32.mrb[0].mxu0
        %6056 = vmatprep.mubr.f32.mxu0 %v5517
        %6057 = vmatmul.mubr.f32.gmra.mrb[0].mxu0 %v5485
        %v6058 = vpop.f32.mrb[0].mxu0
        %v6059 = vadd.f32 %v5834, %v6058
        %v6060 = vpop.f32.mrb[0].mxu0
        %6061 = vmatprep.mubr.f32.mxu0 %v5518
        %6062 = vmatmul.mubr.f32.gmra.mrb[0].mxu0 %v5486
        %v6063 = vpop.f32.mrb[0].mxu0
        %v6064 = vadd.f32 %v5839, %v6063
        %v6065 = vpop.f32.mrb[0].mxu0
        %6066 = vmatprep.mubr.f32.mxu0 %v5519
        %6067 = vmatmul.mubr.f32.gmra.mrb[0].mxu0 %v5487
        %v6068 = vpop.f32.mrb[0].mxu0
        %v6069 = vadd.f32 %v5844, %v6068
        %v6070 = vpop.f32.mrb[0].mxu0
        %6071 = vdwg.mxu0
        %6072 = vmatprep.subr.mxu0 0.0
        %6073 = vmatpush1.msra.mxu0 %v4551
        %6074 = vmatprep.subr.mxu0 0.0
        %6075 = vmatpush1.msra.mxu0 %v4552
        %6076 = vmatprep.subr.mxu0 0.0
        %6077 = vmatpush1.msra.mxu0 %v4553
        %6078 = vmatprep.subr.mxu0 0.0
        %6079 = vmatpush1.msra.mxu0 %v4554
        %6080 = vmatprep.subr.mxu0 0.0
        %6081 = vmatpush1.msra.mxu0 %v4555
        %6082 = vmatprep.subr.mxu0 0.0
        %6083 = vmatpush1.msra.mxu0 %v4556
        %6084 = vmatprep.subr.mxu0 0.0
        %6085 = vmatpush1.msra.mxu0 %v4557
        %6086 = vmatprep.subr.mxu0 0.0
        %6087 = vmatpush1.msra.mxu0 %v4558
        %6088 = vmatprep.subr.mxu0 0.0
        %6089 = vmatpush1.msra.mxu0 0.0
        %6090 = vmatprep.subr.mxu0 0.0
        %6091 = vmatpush1.msra.mxu0 0.0
        %6092 = vmatprep.subr.mxu0 0.0
        %6093 = vmatpush1.msra.mxu0 0.0
        %6094 = vmatprep.subr.mxu0 0.0
        %6095 = vmatpush1.msra.mxu0 0.0
        %6096 = vmatprep.subr.mxu0 0.0
        %6097 = vmatpush1.msra.mxu0 0.0
        %6098 = vmatprep.subr.mxu0 0.0
        %6099 = vmatpush1.msra.mxu0 0.0
        %6100 = vmatprep.subr.mxu0 0.0
        %6101 = vmatpush1.msra.mxu0 0.0
        %6102 = vmatprep.subr.mxu0 0.0
        %6103 = vmatpush1.msra.mxu0 0.0
        %6104 = vmatprep.subr.mxu0 0.0
        %6105 = vmatpush1.msra.mxu0 0.0
        %6106 = vmatprep.subr.mxu0 0.0
        %6107 = vmatpush1.msra.mxu0 0.0
        %6108 = vmatprep.subr.mxu0 0.0
        %6109 = vmatpush1.msra.mxu0 0.0
        %6110 = vmatprep.subr.mxu0 0.0
        %6111 = vmatpush1.msra.mxu0 0.0
        %6112 = vmatprep.subr.mxu0 0.0
        %6113 = vmatpush1.msra.mxu0 0.0
        %6114 = vmatprep.subr.mxu0 0.0
        %6115 = vmatpush1.msra.mxu0 0.0
        %6116 = vmatprep.subr.mxu0 0.0
        %6117 = vmatpush1.msra.mxu0 0.0
        %6118 = vmatprep.subr.mxu0 0.0
        %6119 = vmatpush1.msra.mxu0 0.0
        %6120 = vmatprep.subr.mxu0 0.0
        %6121 = vmatpush1.msra.mxu0 0.0
        %6122 = vmatprep.subr.mxu0 0.0
        %6123 = vmatpush1.msra.mxu0 0.0
        %6124 = vmatprep.subr.mxu0 0.0
        %6125 = vmatpush1.msra.mxu0 0.0
        %6126 = vmatprep.subr.mxu0 0.0
        %6127 = vmatpush1.msra.mxu0 0.0
        %6128 = vmatprep.subr.mxu0 0.0
        %6129 = vmatpush1.msra.mxu0 0.0
        %6130 = vmatprep.subr.mxu0 0.0
        %6131 = vmatpush1.msra.mxu0 0.0
        %6132 = vmatprep.subr.mxu0 0.0
        %6133 = vmatpush1.msra.mxu0 0.0
        %6134 = vmatprep.subr.mxu0 0.0
        %6135 = vmatpush1.msra.mxu0 0.0
        %6136 = vmatprep.mubr.f32.mxu0 0.0
        %6137 = vmatmul.mubr.f32.gmra.mrb[0].mxu0 %v5527
        %v6138 = vpop.f32.mrb[0].mxu0
        %v6139 = vadd.f32 %v5914, %v6138
        %v6140 = vpop.f32.mrb[0].mxu0
        %6141 = vmatprep.mubr.f32.mxu0 0.0
        %6142 = vmatmul.mubr.f32.gmra.mrb[0].mxu0 %v5530
        %v6143 = vpop.f32.mrb[0].mxu0
        %v6144 = vadd.f32 %v5919, %v6143
        %v6145 = vpop.f32.mrb[0].mxu0
        %6146 = vmatprep.mubr.f32.mxu0 0.0
        %6147 = vmatmul.mubr.f32.gmra.mrb[0].mxu0 %v5533
        %v6148 = vpop.f32.mrb[0].mxu0
        %v6149 = vadd.f32 %v5924, %v6148
        %v6150 = vpop.f32.mrb[0].mxu0
        %6151 = vmatprep.mubr.f32.mxu0 0.0
        %6152 = vmatmul.mubr.f32.gmra.mrb[0].mxu0 %v5536
        %v6153 = vpop.f32.mrb[0].mxu0
        %v6154 = vadd.f32 %v5929, %v6153
        %v6155 = vpop.f32.mrb[0].mxu0
        %6156 = vmatprep.mubr.f32.mxu0 0.0
        %6157 = vmatmul.mubr.f32.gmra.mrb[0].mxu0 %v5539
        %v6158 = vpop.f32.mrb[0].mxu0
        %v6159 = vadd.f32 %v5934, %v6158
        %v6160 = vpop.f32.mrb[0].mxu0
        %6161 = vmatprep.mubr.f32.mxu0 0.0
        %6162 = vmatmul.mubr.f32.gmra.mrb[0].mxu0 %v5542
        %v6163 = vpop.f32.mrb[0].mxu0
        %v6164 = vadd.f32 %v5939, %v6163
        %v6165 = vpop.f32.mrb[0].mxu0
        %6166 = vmatprep.mubr.f32.mxu0 0.0
        %6167 = vmatmul.mubr.f32.gmra.mrb[0].mxu0 %v5545
        %v6168 = vpop.f32.mrb[0].mxu0
        %v6169 = vadd.f32 %v5944, %v6168
        %v6170 = vpop.f32.mrb[0].mxu0
        %6171 = vmatprep.mubr.f32.mxu0 0.0
        %6172 = vmatmul.mubr.f32.gmra.mrb[0].mxu0 %v5548
        %v6173 = vpop.f32.mrb[0].mxu0
        %v6174 = vadd.f32 %v5949, %v6173
        %v6175 = vpop.f32.mrb[0].mxu0
        %6176 = vmatprep.mubr.f32.mxu0 0.0
        %6177 = vmatmul.mubr.f32.gmra.mrb[0].mxu0 %v5551
        %v6178 = vpop.f32.mrb[0].mxu0
        %v6179 = vadd.f32 %v5954, %v6178
        %v6180 = vpop.f32.mrb[0].mxu0
        %6181 = vmatprep.mubr.f32.mxu0 0.0
        %6182 = vmatmul.mubr.f32.gmra.mrb[0].mxu0 %v5554
        %v6183 = vpop.f32.mrb[0].mxu0
        %v6184 = vadd.f32 %v5959, %v6183
        %v6185 = vpop.f32.mrb[0].mxu0
        %6186 = vmatprep.mubr.f32.mxu0 0.0
        %6187 = vmatmul.mubr.f32.gmra.mrb[0].mxu0 %v5557
        %v6188 = vpop.f32.mrb[0].mxu0
        %v6189 = vadd.f32 %v5964, %v6188
        %v6190 = vpop.f32.mrb[0].mxu0
        %6191 = vmatprep.mubr.f32.mxu0 0.0
        %6192 = vmatmul.mubr.f32.gmra.mrb[0].mxu0 %v5560
        %v6193 = vpop.f32.mrb[0].mxu0
        %v6194 = vadd.f32 %v5969, %v6193
        %v6195 = vpop.f32.mrb[0].mxu0
        %6196 = vmatprep.mubr.f32.mxu0 0.0
        %6197 = vmatmul.mubr.f32.gmra.mrb[0].mxu0 %v5563
        %v6198 = vpop.f32.mrb[0].mxu0
        %v6199 = vadd.f32 %v5974, %v6198
        %v6200 = vpop.f32.mrb[0].mxu0
        %6201 = vmatprep.mubr.f32.mxu0 0.0
        %6202 = vmatmul.mubr.f32.gmra.mrb[0].mxu0 %v5566
        %v6203 = vpop.f32.mrb[0].mxu0
        %v6204 = vadd.f32 %v5979, %v6203
        %v6205 = vpop.f32.mrb[0].mxu0
        %6206 = vmatprep.mubr.f32.mxu0 0.0
        %6207 = vmatmul.mubr.f32.gmra.mrb[0].mxu0 %v5569
        %v6208 = vpop.f32.mrb[0].mxu0
        %v6209 = vadd.f32 %v5984, %v6208
        %v6210 = vpop.f32.mrb[0].mxu0
        %6211 = vmatprep.mubr.f32.mxu0 0.0
        %6212 = vmatmul.mubr.f32.gmra.mrb[0].mxu0 %v5572
        %v6213 = vpop.f32.mrb[0].mxu0
        %v6214 = vadd.f32 %v5989, %v6213
        %v6215 = vpop.f32.mrb[0].mxu0
        %6216 = vmatprep.mubr.f32.mxu0 0.0
        %6217 = vmatmul.mubr.f32.gmra.mrb[0].mxu0 %v5575
        %v6218 = vpop.f32.mrb[0].mxu0
        %v6219 = vadd.f32 %v5994, %v6218
        %v6220 = vpop.f32.mrb[0].mxu0
        %6221 = vmatprep.mubr.f32.mxu0 0.0
        %6222 = vmatmul.mubr.f32.gmra.mrb[0].mxu0 %v5578
        %v6223 = vpop.f32.mrb[0].mxu0
        %v6224 = vadd.f32 %v5999, %v6223
        %v6225 = vpop.f32.mrb[0].mxu0
        %6226 = vmatprep.mubr.f32.mxu0 0.0
        %6227 = vmatmul.mubr.f32.gmra.mrb[0].mxu0 %v5581
        %v6228 = vpop.f32.mrb[0].mxu0
        %v6229 = vadd.f32 %v6004, %v6228
        %v6230 = vpop.f32.mrb[0].mxu0
        %6231 = vmatprep.mubr.f32.mxu0 0.0
        %6232 = vmatmul.mubr.f32.gmra.mrb[0].mxu0 %v5584
        %v6233 = vpop.f32.mrb[0].mxu0
        %v6234 = vadd.f32 %v6009, %v6233
        %v6235 = vpop.f32.mrb[0].mxu0
        %6236 = vmatprep.mubr.f32.mxu0 0.0
        %6237 = vmatmul.mubr.f32.gmra.mrb[0].mxu0 %v5587
        %v6238 = vpop.f32.mrb[0].mxu0
        %v6239 = vadd.f32 %v6014, %v6238
        %v6240 = vpop.f32.mrb[0].mxu0
        %6241 = vmatprep.mubr.f32.mxu0 0.0
        %6242 = vmatmul.mubr.f32.gmra.mrb[0].mxu0 %v5590
        %v6243 = vpop.f32.mrb[0].mxu0
        %v6244 = vadd.f32 %v6019, %v6243
        %v6245 = vpop.f32.mrb[0].mxu0
        %6246 = vmatprep.mubr.f32.mxu0 0.0
        %6247 = vmatmul.mubr.f32.gmra.mrb[0].mxu0 %v5593
        %v6248 = vpop.f32.mrb[0].mxu0
        %v6249 = vadd.f32 %v6024, %v6248
        %v6250 = vpop.f32.mrb[0].mxu0
        %6251 = vmatprep.mubr.f32.mxu0 0.0
        %6252 = vmatmul.mubr.f32.gmra.mrb[0].mxu0 %v5596
        %v6253 = vpop.f32.mrb[0].mxu0
        %v6254 = vadd.f32 %v6029, %v6253
        %v6255 = vpop.f32.mrb[0].mxu0
        %6256 = vmatprep.mubr.f32.mxu0 0.0
        %6257 = vmatmul.mubr.f32.gmra.mrb[0].mxu0 %v5599
        %v6258 = vpop.f32.mrb[0].mxu0
        %v6259 = vadd.f32 %v6034, %v6258
        %v6260 = vpop.f32.mrb[0].mxu0
        %6261 = vmatprep.mubr.f32.mxu0 0.0
        %6262 = vmatmul.mubr.f32.gmra.mrb[0].mxu0 %v5602
        %v6263 = vpop.f32.mrb[0].mxu0
        %v6264 = vadd.f32 %v6039, %v6263
        %v6265 = vpop.f32.mrb[0].mxu0
        %6266 = vmatprep.mubr.f32.mxu0 0.0
        %6267 = vmatmul.mubr.f32.gmra.mrb[0].mxu0 %v5605
        %v6268 = vpop.f32.mrb[0].mxu0
        %v6269 = vadd.f32 %v6044, %v6268
        %v6270 = vpop.f32.mrb[0].mxu0
        %6271 = vmatprep.mubr.f32.mxu0 0.0
        %6272 = vmatmul.mubr.f32.gmra.mrb[0].mxu0 %v5608
        %v6273 = vpop.f32.mrb[0].mxu0
        %v6274 = vadd.f32 %v6049, %v6273
        %v6275 = vpop.f32.mrb[0].mxu0
        %6276 = vmatprep.mubr.f32.mxu0 0.0
        %6277 = vmatmul.mubr.f32.gmra.mrb[0].mxu0 %v5611
        %v6278 = vpop.f32.mrb[0].mxu0
        %v6279 = vadd.f32 %v6054, %v6278
        %v6280 = vpop.f32.mrb[0].mxu0
        %6281 = vmatprep.mubr.f32.mxu0 0.0
        %6282 = vmatmul.mubr.f32.gmra.mrb[0].mxu0 %v5614
        %v6283 = vpop.f32.mrb[0].mxu0
        %v6284 = vadd.f32 %v6059, %v6283
        %v6285 = vpop.f32.mrb[0].mxu0
        %6286 = vmatprep.mubr.f32.mxu0 0.0
        %6287 = vmatmul.mubr.f32.gmra.mrb[0].mxu0 %v5617
        %v6288 = vpop.f32.mrb[0].mxu0
        %v6289 = vadd.f32 %v6064, %v6288
        %v6290 = vpop.f32.mrb[0].mxu0
        %6291 = vmatprep.mubr.f32.mxu0 0.0
        %6292 = vmatmul.mubr.f32.gmra.mrb[0].mxu0 %v5620
        %v6293 = vpop.f32.mrb[0].mxu0
        %v6294 = vadd.f32 %v6069, %v6293
        %v6295 = vpop.f32.mrb[0].mxu0
        %6296 = vdwg.mxu0
        %v6297 = vmax.f32 %v6139, 0.0
        %v6298 = vmax.f32 %v6144, 0.0
        %v6299 = vmax.f32 %v6149, 0.0
        %v6300 = vmax.f32 %v6154, 0.0
        %v6301 = vmax.f32 %v6159, 0.0
        %v6302 = vmax.f32 %v6164, 0.0
        %v6303 = vmax.f32 %v6169, 0.0
        %v6304 = vmax.f32 %v6174, 0.0
        %v6305 = vmax.f32 %v6179, 0.0
        %v6306 = vmax.f32 %v6184, 0.0
        %v6307 = vmax.f32 %v6189, 0.0
        %v6308 = vmax.f32 %v6194, 0.0
        %v6309 = vmax.f32 %v6199, 0.0
        %v6310 = vmax.f32 %v6204, 0.0
        %v6311 = vmax.f32 %v6209, 0.0
        %v6312 = vmax.f32 %v6214, 0.0
        %v6313 = vmax.f32 %v6219, 0.0
        %v6314 = vmax.f32 %v6224, 0.0
        %v6315 = vmax.f32 %v6229, 0.0
        %v6316 = vmax.f32 %v6234, 0.0
        %v6317 = vmax.f32 %v6239, 0.0
        %v6318 = vmax.f32 %v6244, 0.0
        %v6319 = vmax.f32 %v6249, 0.0
        %v6320 = vmax.f32 %v6254, 0.0
        %v6321 = vmax.f32 %v6259, 0.0
        %v6322 = vmax.f32 %v6264, 0.0
        %v6323 = vmax.f32 %v6269, 0.0
        %v6324 = vmax.f32 %v6274, 0.0
        %v6325 = vmax.f32 %v6279, 0.0
        %v6326 = vmax.f32 %v6284, 0.0
        %v6327 = vmax.f32 %v6289, 0.0
        %v6328 = vmax.f32 %v6294, 0.0
        %v6329 = vld [vmem:[%s11] sm:$0xff]
        %v6330 = vld [vmem:[#allocation3] sm:$0x1]
        %v6332 = vlaneseq
        %v6333 = vshrl.u32 %v6332, 7
        %v6334 = vsub.s32 0, %v6333
        %v6335 = vrot.slane %v6330, %v6334
        %v6338 = vsel %vm4371, %v6297, 0
        %v6341 = vsel %vm4371, %v6298, 0
        %v6344 = vsel %vm4371, %v6299, 0
        %v6347 = vsel %vm4371, %v6300, 0
        %v6350 = vsel %vm4371, %v6301, 0
        %v6353 = vsel %vm4371, %v6302, 0
        %v6356 = vsel %vm4371, %v6303, 0
        %v6359 = vsel %vm4371, %v6304, 0
        %v6362 = vsel %vm4371, %v6305, 0
        %v6365 = vsel %vm4371, %v6306, 0
        %v6368 = vsel %vm4371, %v6307, 0
        %v6371 = vsel %vm4371, %v6308, 0
        %v6374 = vsel %vm4371, %v6309, 0
        %v6377 = vsel %vm4371, %v6310, 0
        %v6380 = vsel %vm4371, %v6311, 0
        %v6383 = vsel %vm4371, %v6312, 0
        %v6386 = vsel %vm4371, %v6313, 0
        %v6389 = vsel %vm4371, %v6314, 0
        %v6392 = vsel %vm4371, %v6315, 0
        %v6395 = vsel %vm4371, %v6316, 0
        %v6398 = vsel %vm4371, %v6317, 0
        %v6401 = vsel %vm4371, %v6318, 0
        %v6404 = vsel %vm4371, %v6319, 0
        %v6407 = vsel %vm4371, %v6320, 0
        %v6410 = vsel %vm4371, %v6321, 0
        %v6413 = vsel %vm4371, %v6322, 0
        %v6416 = vsel %vm4371, %v6323, 0
        %v6419 = vsel %vm4371, %v6324, 0
        %v6422 = vsel %vm4371, %v6325, 0
        %v6425 = vsel %vm4371, %v6326, 0
        %v6428 = vsel %vm4371, %v6327, 0
        %v6431 = vsel %vm4371, %v6328, 0
        %6433 = vmatprep.subr.mxu0 0.0
        %6434 = vmatpush1.msra.mxu0 %v6329
        %6435 = vmatprep.subr.mxu0 0.0
        %6436 = vmatpush1.msra.mxu0 0.0
        %6437 = vmatprep.subr.mxu0 0.0
        %6438 = vmatpush1.msra.mxu0 0.0
        %6439 = vmatprep.subr.mxu0 0.0
        %6440 = vmatpush1.msra.mxu0 0.0
        %6441 = vmatprep.subr.mxu0 0.0
        %6442 = vmatpush1.msra.mxu0 0.0
        %6443 = vmatprep.subr.mxu0 0.0
        %6444 = vmatpush1.msra.mxu0 0.0
        %6445 = vmatprep.subr.mxu0 0.0
        %6446 = vmatpush1.msra.mxu0 0.0
        %6447 = vmatprep.subr.mxu0 0.0
        %6448 = vmatpush1.msra.mxu0 0.0
        %6449 = vmatprep.subr.mxu0 0.0
        %6450 = vmatpush1.msra.mxu0 0.0
        %6451 = vmatprep.subr.mxu0 0.0
        %6452 = vmatpush1.msra.mxu0 0.0
        %6453 = vmatprep.subr.mxu0 0.0
        %6454 = vmatpush1.msra.mxu0 0.0
        %6455 = vmatprep.subr.mxu0 0.0
        %6456 = vmatpush1.msra.mxu0 0.0
        %6457 = vmatprep.subr.mxu0 0.0
        %6458 = vmatpush1.msra.mxu0 0.0
        %6459 = vmatprep.subr.mxu0 0.0
        %6460 = vmatpush1.msra.mxu0 0.0
        %6461 = vmatprep.subr.mxu0 0.0
        %6462 = vmatpush1.msra.mxu0 0.0
        %6463 = vmatprep.subr.mxu0 0.0
        %6464 = vmatpush1.msra.mxu0 0.0
        %6465 = vmatprep.subr.mxu0 0.0
        %6466 = vmatpush1.msra.mxu0 0.0
        %6467 = vmatprep.subr.mxu0 0.0
        %6468 = vmatpush1.msra.mxu0 0.0
        %6469 = vmatprep.subr.mxu0 0.0
        %6470 = vmatpush1.msra.mxu0 0.0
        %6471 = vmatprep.subr.mxu0 0.0
        %6472 = vmatpush1.msra.mxu0 0.0
        %6473 = vmatprep.subr.mxu0 0.0
        %6474 = vmatpush1.msra.mxu0 0.0
        %6475 = vmatprep.subr.mxu0 0.0
        %6476 = vmatpush1.msra.mxu0 0.0
        %6477 = vmatprep.subr.mxu0 0.0
        %6478 = vmatpush1.msra.mxu0 0.0
        %6479 = vmatprep.subr.mxu0 0.0
        %6480 = vmatpush1.msra.mxu0 0.0
        %6481 = vmatprep.subr.mxu0 0.0
        %6482 = vmatpush1.msra.mxu0 0.0
        %6483 = vmatprep.subr.mxu0 0.0
        %6484 = vmatpush1.msra.mxu0 0.0
        %6485 = vmatprep.subr.mxu0 0.0
        %6486 = vmatpush1.msra.mxu0 0.0
        %6487 = vmatprep.subr.mxu0 0.0
        %6488 = vmatpush1.msra.mxu0 0.0
        %6489 = vmatprep.subr.mxu0 0.0
        %6490 = vmatpush1.msra.mxu0 0.0
        %6491 = vmatprep.subr.mxu0 0.0
        %6492 = vmatpush1.msra.mxu0 0.0
        %6493 = vmatprep.subr.mxu0 0.0
        %6494 = vmatpush1.msra.mxu0 0.0
        %6495 = vmatprep.subr.mxu0 0.0
        %6496 = vmatpush1.msra.mxu0 0.0
        %6497 = vmatprep.mubr.f32.mxu0 0.0
        %6498 = vmatmul.mubr.f32.gmra.mrb[0].mxu0 %v6338
        %v6499 = vpop.f32.mrb[0].mxu0
        %v6500 = vadd.f32 %v6335, %v6499
        %v6501 = vpop.f32.mrb[0].mxu0
        %6502 = vmatprep.mubr.f32.mxu0 0.0
        %6503 = vmatmul.mubr.f32.gmra.mrb[0].mxu0 %v6341
        %v6504 = vpop.f32.mrb[0].mxu0
        %v6505 = vadd.f32 %v6335, %v6504
        %v6506 = vpop.f32.mrb[0].mxu0
        %6507 = vmatprep.mubr.f32.mxu0 0.0
        %6508 = vmatmul.mubr.f32.gmra.mrb[0].mxu0 %v6344
        %v6509 = vpop.f32.mrb[0].mxu0
        %v6510 = vadd.f32 %v6335, %v6509
        %v6511 = vpop.f32.mrb[0].mxu0
        %6512 = vmatprep.mubr.f32.mxu0 0.0
        %6513 = vmatmul.mubr.f32.gmra.mrb[0].mxu0 %v6347
        %v6514 = vpop.f32.mrb[0].mxu0
        %v6515 = vadd.f32 %v6335, %v6514
        %v6516 = vpop.f32.mrb[0].mxu0
        %6517 = vmatprep.mubr.f32.mxu0 0.0
        %6518 = vmatmul.mubr.f32.gmra.mrb[0].mxu0 %v6350
        %v6519 = vpop.f32.mrb[0].mxu0
        %v6520 = vadd.f32 %v6335, %v6519
        %v6521 = vpop.f32.mrb[0].mxu0
        %6522 = vmatprep.mubr.f32.mxu0 0.0
        %6523 = vmatmul.mubr.f32.gmra.mrb[0].mxu0 %v6353
        %v6524 = vpop.f32.mrb[0].mxu0
        %v6525 = vadd.f32 %v6335, %v6524
        %v6526 = vpop.f32.mrb[0].mxu0
        %6527 = vmatprep.mubr.f32.mxu0 0.0
        %6528 = vmatmul.mubr.f32.gmra.mrb[0].mxu0 %v6356
        %v6529 = vpop.f32.mrb[0].mxu0
        %v6530 = vadd.f32 %v6335, %v6529
        %v6531 = vpop.f32.mrb[0].mxu0
        %6532 = vmatprep.mubr.f32.mxu0 0.0
        %6533 = vmatmul.mubr.f32.gmra.mrb[0].mxu0 %v6359
        %v6534 = vpop.f32.mrb[0].mxu0
        %v6535 = vadd.f32 %v6335, %v6534
        %v6536 = vpop.f32.mrb[0].mxu0
        %6537 = vmatprep.mubr.f32.mxu0 0.0
        %6538 = vmatmul.mubr.f32.gmra.mrb[0].mxu0 %v6362
        %v6539 = vpop.f32.mrb[0].mxu0
        %v6540 = vadd.f32 %v6335, %v6539
        %v6541 = vpop.f32.mrb[0].mxu0
        %6542 = vmatprep.mubr.f32.mxu0 0.0
        %6543 = vmatmul.mubr.f32.gmra.mrb[0].mxu0 %v6365
        %v6544 = vpop.f32.mrb[0].mxu0
        %v6545 = vadd.f32 %v6335, %v6544
        %v6546 = vpop.f32.mrb[0].mxu0
        %6547 = vmatprep.mubr.f32.mxu0 0.0
        %6548 = vmatmul.mubr.f32.gmra.mrb[0].mxu0 %v6368
        %v6549 = vpop.f32.mrb[0].mxu0
        %v6550 = vadd.f32 %v6335, %v6549
        %v6551 = vpop.f32.mrb[0].mxu0
        %6552 = vmatprep.mubr.f32.mxu0 0.0
        %6553 = vmatmul.mubr.f32.gmra.mrb[0].mxu0 %v6371
        %v6554 = vpop.f32.mrb[0].mxu0
        %v6555 = vadd.f32 %v6335, %v6554
        %v6556 = vpop.f32.mrb[0].mxu0
        %6557 = vmatprep.mubr.f32.mxu0 0.0
        %6558 = vmatmul.mubr.f32.gmra.mrb[0].mxu0 %v6374
        %v6559 = vpop.f32.mrb[0].mxu0
        %v6560 = vadd.f32 %v6335, %v6559
        %v6561 = vpop.f32.mrb[0].mxu0
        %6562 = vmatprep.mubr.f32.mxu0 0.0
        %6563 = vmatmul.mubr.f32.gmra.mrb[0].mxu0 %v6377
        %v6564 = vpop.f32.mrb[0].mxu0
        %v6565 = vadd.f32 %v6335, %v6564
        %v6566 = vpop.f32.mrb[0].mxu0
        %6567 = vmatprep.mubr.f32.mxu0 0.0
        %6568 = vmatmul.mubr.f32.gmra.mrb[0].mxu0 %v6380
        %v6569 = vpop.f32.mrb[0].mxu0
        %v6570 = vadd.f32 %v6335, %v6569
        %v6571 = vpop.f32.mrb[0].mxu0
        %6572 = vmatprep.mubr.f32.mxu0 0.0
        %6573 = vmatmul.mubr.f32.gmra.mrb[0].mxu0 %v6383
        %v6574 = vpop.f32.mrb[0].mxu0
        %v6575 = vadd.f32 %v6335, %v6574
        %v6576 = vpop.f32.mrb[0].mxu0
        %6577 = vmatprep.mubr.f32.mxu0 0.0
        %6578 = vmatmul.mubr.f32.gmra.mrb[0].mxu0 %v6386
        %v6579 = vpop.f32.mrb[0].mxu0
        %v6580 = vadd.f32 %v6335, %v6579
        %v6581 = vpop.f32.mrb[0].mxu0
        %6582 = vmatprep.mubr.f32.mxu0 0.0
        %6583 = vmatmul.mubr.f32.gmra.mrb[0].mxu0 %v6389
        %v6584 = vpop.f32.mrb[0].mxu0
        %v6585 = vadd.f32 %v6335, %v6584
        %v6586 = vpop.f32.mrb[0].mxu0
        %6587 = vmatprep.mubr.f32.mxu0 0.0
        %6588 = vmatmul.mubr.f32.gmra.mrb[0].mxu0 %v6392
        %v6589 = vpop.f32.mrb[0].mxu0
        %v6590 = vadd.f32 %v6335, %v6589
        %v6591 = vpop.f32.mrb[0].mxu0
        %6592 = vmatprep.mubr.f32.mxu0 0.0
        %6593 = vmatmul.mubr.f32.gmra.mrb[0].mxu0 %v6395
        %v6594 = vpop.f32.mrb[0].mxu0
        %v6595 = vadd.f32 %v6335, %v6594
        %v6596 = vpop.f32.mrb[0].mxu0
        %6597 = vmatprep.mubr.f32.mxu0 0.0
        %6598 = vmatmul.mubr.f32.gmra.mrb[0].mxu0 %v6398
        %v6599 = vpop.f32.mrb[0].mxu0
        %v6600 = vadd.f32 %v6335, %v6599
        %v6601 = vpop.f32.mrb[0].mxu0
        %6602 = vmatprep.mubr.f32.mxu0 0.0
        %6603 = vmatmul.mubr.f32.gmra.mrb[0].mxu0 %v6401
        %v6604 = vpop.f32.mrb[0].mxu0
        %v6605 = vadd.f32 %v6335, %v6604
        %v6606 = vpop.f32.mrb[0].mxu0
        %6607 = vmatprep.mubr.f32.mxu0 0.0
        %6608 = vmatmul.mubr.f32.gmra.mrb[0].mxu0 %v6404
        %v6609 = vpop.f32.mrb[0].mxu0
        %v6610 = vadd.f32 %v6335, %v6609
        %v6611 = vpop.f32.mrb[0].mxu0
        %6612 = vmatprep.mubr.f32.mxu0 0.0
        %6613 = vmatmul.mubr.f32.gmra.mrb[0].mxu0 %v6407
        %v6614 = vpop.f32.mrb[0].mxu0
        %v6615 = vadd.f32 %v6335, %v6614
        %v6616 = vpop.f32.mrb[0].mxu0
        %6617 = vmatprep.mubr.f32.mxu0 0.0
        %6618 = vmatmul.mubr.f32.gmra.mrb[0].mxu0 %v6410
        %v6619 = vpop.f32.mrb[0].mxu0
        %v6620 = vadd.f32 %v6335, %v6619
        %v6621 = vpop.f32.mrb[0].mxu0
        %6622 = vmatprep.mubr.f32.mxu0 0.0
        %6623 = vmatmul.mubr.f32.gmra.mrb[0].mxu0 %v6413
        %v6624 = vpop.f32.mrb[0].mxu0
        %v6625 = vadd.f32 %v6335, %v6624
        %v6626 = vpop.f32.mrb[0].mxu0
        %6627 = vmatprep.mubr.f32.mxu0 0.0
        %6628 = vmatmul.mubr.f32.gmra.mrb[0].mxu0 %v6416
        %v6629 = vpop.f32.mrb[0].mxu0
        %v6630 = vadd.f32 %v6335, %v6629
        %v6631 = vpop.f32.mrb[0].mxu0
        %6632 = vmatprep.mubr.f32.mxu0 0.0
        %6633 = vmatmul.mubr.f32.gmra.mrb[0].mxu0 %v6419
        %v6634 = vpop.f32.mrb[0].mxu0
        %v6635 = vadd.f32 %v6335, %v6634
        %v6636 = vpop.f32.mrb[0].mxu0
        %6637 = vmatprep.mubr.f32.mxu0 0.0
        %6638 = vmatmul.mubr.f32.gmra.mrb[0].mxu0 %v6422
        %v6639 = vpop.f32.mrb[0].mxu0
        %v6640 = vadd.f32 %v6335, %v6639
        %v6641 = vpop.f32.mrb[0].mxu0
        %6642 = vmatprep.mubr.f32.mxu0 0.0
        %6643 = vmatmul.mubr.f32.gmra.mrb[0].mxu0 %v6425
        %v6644 = vpop.f32.mrb[0].mxu0
        %v6645 = vadd.f32 %v6335, %v6644
        %v6646 = vpop.f32.mrb[0].mxu0
        %6647 = vmatprep.mubr.f32.mxu0 0.0
        %6648 = vmatmul.mubr.f32.gmra.mrb[0].mxu0 %v6428
        %v6649 = vpop.f32.mrb[0].mxu0
        %v6650 = vadd.f32 %v6335, %v6649
        %v6651 = vpop.f32.mrb[0].mxu0
        %6652 = vmatprep.mubr.f32.mxu0 0.0
        %6653 = vmatmul.mubr.f32.gmra.mrb[0].mxu0 %v6431
        %v6654 = vpop.f32.mrb[0].mxu0
        %v6655 = vadd.f32 %v6335, %v6654
        %v6656 = vpop.f32.mrb[0].mxu0
        %6657 = vdwg.mxu0
        %v6658 = vxor.u32 %v6500, 2147483648
        %v6659 = vxor.u32 %v6505, 2147483648
        %v6660 = vxor.u32 %v6510, 2147483648
        %v6661 = vxor.u32 %v6515, 2147483648
        %v6662 = vxor.u32 %v6520, 2147483648
        %v6663 = vxor.u32 %v6525, 2147483648
        %v6664 = vxor.u32 %v6530, 2147483648
        %v6665 = vxor.u32 %v6535, 2147483648
        %v6666 = vxor.u32 %v6540, 2147483648
        %v6667 = vxor.u32 %v6545, 2147483648
        %v6668 = vxor.u32 %v6550, 2147483648
        %v6669 = vxor.u32 %v6555, 2147483648
        %v6670 = vxor.u32 %v6560, 2147483648
        %v6671 = vxor.u32 %v6565, 2147483648
        %v6672 = vxor.u32 %v6570, 2147483648
        %v6673 = vxor.u32 %v6575, 2147483648
        %v6674 = vxor.u32 %v6580, 2147483648
        %v6675 = vxor.u32 %v6585, 2147483648
        %v6676 = vxor.u32 %v6590, 2147483648
        %v6677 = vxor.u32 %v6595, 2147483648
        %v6678 = vxor.u32 %v6600, 2147483648
        %v6679 = vxor.u32 %v6605, 2147483648
        %v6680 = vxor.u32 %v6610, 2147483648
        %v6681 = vxor.u32 %v6615, 2147483648
        %v6682 = vxor.u32 %v6620, 2147483648
        %v6683 = vxor.u32 %v6625, 2147483648
        %v6684 = vxor.u32 %v6630, 2147483648
        %v6685 = vxor.u32 %v6635, 2147483648
        %v6686 = vxor.u32 %v6640, 2147483648
        %v6687 = vxor.u32 %v6645, 2147483648
        %v6688 = vxor.u32 %v6650, 2147483648
        %v6689 = vxor.u32 %v6655, 2147483648
        %v6690 = vmul.f32 %v6658, 1.442695
        %v6691 = vpow.pop %v6690
        %v6692 = vmul.f32 %v6659, 1.442695
        %v6693 = vpow.pop %v6692
        %v6694 = vmul.f32 %v6660, 1.442695
        %v6695 = vpow.pop %v6694
        %v6696 = vmul.f32 %v6661, 1.442695
        %v6697 = vpow.pop %v6696
        %v6698 = vmul.f32 %v6662, 1.442695
        %v6699 = vpow.pop %v6698
        %v6700 = vmul.f32 %v6663, 1.442695
        %v6701 = vpow.pop %v6700
        %v6702 = vmul.f32 %v6664, 1.442695
        %v6703 = vpow.pop %v6702
        %v6704 = vmul.f32 %v6665, 1.442695
        %v6705 = vpow.pop %v6704
        %v6706 = vmul.f32 %v6666, 1.442695
        %v6707 = vpow.pop %v6706
        %v6708 = vmul.f32 %v6667, 1.442695
        %v6709 = vpow.pop %v6708
        %v6710 = vmul.f32 %v6668, 1.442695
        %v6711 = vpow.pop %v6710
        %v6712 = vmul.f32 %v6669, 1.442695
        %v6713 = vpow.pop %v6712
        %v6714 = vmul.f32 %v6670, 1.442695
        %v6715 = vpow.pop %v6714
        %v6716 = vmul.f32 %v6671, 1.442695
        %v6717 = vpow.pop %v6716
        %v6718 = vmul.f32 %v6672, 1.442695
        %v6719 = vpow.pop %v6718
        %v6720 = vmul.f32 %v6673, 1.442695
        %v6721 = vpow.pop %v6720
        %v6722 = vmul.f32 %v6674, 1.442695
        %v6723 = vpow.pop %v6722
        %v6724 = vmul.f32 %v6675, 1.442695
        %v6725 = vpow.pop %v6724
        %v6726 = vmul.f32 %v6676, 1.442695
        %v6727 = vpow.pop %v6726
        %v6728 = vmul.f32 %v6677, 1.442695
        %v6729 = vpow.pop %v6728
        %v6730 = vmul.f32 %v6678, 1.442695
        %v6731 = vpow.pop %v6730
        %v6732 = vmul.f32 %v6679, 1.442695
        %v6733 = vpow.pop %v6732
        %v6734 = vmul.f32 %v6680, 1.442695
        %v6735 = vpow.pop %v6734
        %v6736 = vmul.f32 %v6681, 1.442695
        %v6737 = vpow.pop %v6736
        %v6738 = vmul.f32 %v6682, 1.442695
        %v6739 = vpow.pop %v6738
        %v6740 = vmul.f32 %v6683, 1.442695
        %v6741 = vpow.pop %v6740
        %v6742 = vmul.f32 %v6684, 1.442695
        %v6743 = vpow.pop %v6742
        %v6744 = vmul.f32 %v6685, 1.442695
        %v6745 = vpow.pop %v6744
        %v6746 = vmul.f32 %v6686, 1.442695
        %v6747 = vpow.pop %v6746
        %v6748 = vmul.f32 %v6687, 1.442695
        %v6749 = vpow.pop %v6748
        %v6750 = vmul.f32 %v6688, 1.442695
        %v6751 = vpow.pop %v6750
        %v6752 = vmul.f32 %v6689, 1.442695
        %v6753 = vpow.pop %v6752
        %v6754 = vadd.f32 %v6691, 1.0
        %v6755 = vadd.f32 %v6693, 1.0
        %v6756 = vadd.f32 %v6695, 1.0
        %v6757 = vadd.f32 %v6697, 1.0
        %v6758 = vadd.f32 %v6699, 1.0
        %v6759 = vadd.f32 %v6701, 1.0
        %v6760 = vadd.f32 %v6703, 1.0
        %v6761 = vadd.f32 %v6705, 1.0
        %v6762 = vadd.f32 %v6707, 1.0
        %v6763 = vadd.f32 %v6709, 1.0
        %v6764 = vadd.f32 %v6711, 1.0
        %v6765 = vadd.f32 %v6713, 1.0
        %v6766 = vadd.f32 %v6715, 1.0
        %v6767 = vadd.f32 %v6717, 1.0
        %v6768 = vadd.f32 %v6719, 1.0
        %v6769 = vadd.f32 %v6721, 1.0
        %v6770 = vadd.f32 %v6723, 1.0
        %v6771 = vadd.f32 %v6725, 1.0
        %v6772 = vadd.f32 %v6727, 1.0
        %v6773 = vadd.f32 %v6729, 1.0
        %v6774 = vadd.f32 %v6731, 1.0
        %v6775 = vadd.f32 %v6733, 1.0
        %v6776 = vadd.f32 %v6735, 1.0
        %v6777 = vadd.f32 %v6737, 1.0
        %v6778 = vadd.f32 %v6739, 1.0
        %v6779 = vadd.f32 %v6741, 1.0
        %v6780 = vadd.f32 %v6743, 1.0
        %v6781 = vadd.f32 %v6745, 1.0
        %v6782 = vadd.f32 %v6747, 1.0
        %v6783 = vadd.f32 %v6749, 1.0
        %v6784 = vadd.f32 %v6751, 1.0
        %v6785 = vadd.f32 %v6753, 1.0
        %v6786 = vrcp.pop %v6754
        %v6787 = vmul.f32 1.0, %v6786
        %v6788 = vrcp.pop %v6755
        %v6789 = vmul.f32 1.0, %v6788
        %v6790 = vrcp.pop %v6756
        %v6791 = vmul.f32 1.0, %v6790
        %v6792 = vrcp.pop %v6757
        %v6793 = vmul.f32 1.0, %v6792
        %v6794 = vrcp.pop %v6758
        %v6795 = vmul.f32 1.0, %v6794
        %v6796 = vrcp.pop %v6759
        %v6797 = vmul.f32 1.0, %v6796
        %v6798 = vrcp.pop %v6760
        %v6799 = vmul.f32 1.0, %v6798
        %v6800 = vrcp.pop %v6761
        %v6801 = vmul.f32 1.0, %v6800
        %v6802 = vrcp.pop %v6762
        %v6803 = vmul.f32 1.0, %v6802
        %v6804 = vrcp.pop %v6763
        %v6805 = vmul.f32 1.0, %v6804
        %v6806 = vrcp.pop %v6764
        %v6807 = vmul.f32 1.0, %v6806
        %v6808 = vrcp.pop %v6765
        %v6809 = vmul.f32 1.0, %v6808
        %v6810 = vrcp.pop %v6766
        %v6811 = vmul.f32 1.0, %v6810
        %v6812 = vrcp.pop %v6767
        %v6813 = vmul.f32 1.0, %v6812
        %v6814 = vrcp.pop %v6768
        %v6815 = vmul.f32 1.0, %v6814
        %v6816 = vrcp.pop %v6769
        %v6817 = vmul.f32 1.0, %v6816
        %v6818 = vrcp.pop %v6770
        %v6819 = vmul.f32 1.0, %v6818
        %v6820 = vrcp.pop %v6771
        %v6821 = vmul.f32 1.0, %v6820
        %v6822 = vrcp.pop %v6772
        %v6823 = vmul.f32 1.0, %v6822
        %v6824 = vrcp.pop %v6773
        %v6825 = vmul.f32 1.0, %v6824
        %v6826 = vrcp.pop %v6774
        %v6827 = vmul.f32 1.0, %v6826
        %v6828 = vrcp.pop %v6775
        %v6829 = vmul.f32 1.0, %v6828
        %v6830 = vrcp.pop %v6776
        %v6831 = vmul.f32 1.0, %v6830
        %v6832 = vrcp.pop %v6777
        %v6833 = vmul.f32 1.0, %v6832
        %v6834 = vrcp.pop %v6778
        %v6835 = vmul.f32 1.0, %v6834
        %v6836 = vrcp.pop %v6779
        %v6837 = vmul.f32 1.0, %v6836
        %v6838 = vrcp.pop %v6780
        %v6839 = vmul.f32 1.0, %v6838
        %v6840 = vrcp.pop %v6781
        %v6841 = vmul.f32 1.0, %v6840
        %v6842 = vrcp.pop %v6782
        %v6843 = vmul.f32 1.0, %v6842
        %v6844 = vrcp.pop %v6783
        %v6845 = vmul.f32 1.0, %v6844
        %v6846 = vrcp.pop %v6784
        %v6847 = vmul.f32 1.0, %v6846
        %v6848 = vrcp.pop %v6785
        %v6849 = vmul.f32 1.0, %v6848
        %6851 = vset.pattern.permute.xlu0 0
        %6852 = vperm.xlu0 %6851, %v6787
        %v6853 = vpop.permute.xlu0 %6852
        %6856 = vset.pattern.permute.xlu0 0
        %6857 = vperm.xlu0 %6856, %v6789
        %v6858 = vpop.permute.xlu0 %6857
        %6861 = vset.pattern.permute.xlu0 0
        %6862 = vperm.xlu0 %6861, %v6791
        %v6863 = vpop.permute.xlu0 %6862
        %6866 = vset.pattern.permute.xlu0 0
        %6867 = vperm.xlu0 %6866, %v6793
        %v6868 = vpop.permute.xlu0 %6867
        %6871 = vset.pattern.permute.xlu0 0
        %6872 = vperm.xlu0 %6871, %v6795
        %v6873 = vpop.permute.xlu0 %6872
        %6876 = vset.pattern.permute.xlu0 0
        %6877 = vperm.xlu0 %6876, %v6797
        %v6878 = vpop.permute.xlu0 %6877
        %6881 = vset.pattern.permute.xlu0 0
        %6882 = vperm.xlu0 %6881, %v6799
        %v6883 = vpop.permute.xlu0 %6882
        %6886 = vset.pattern.permute.xlu0 0
        %6887 = vperm.xlu0 %6886, %v6801
        %v6888 = vpop.permute.xlu0 %6887
        %6891 = vset.pattern.permute.xlu0 0
        %6892 = vperm.xlu0 %6891, %v6803
        %v6893 = vpop.permute.xlu0 %6892
        %6896 = vset.pattern.permute.xlu0 0
        %6897 = vperm.xlu0 %6896, %v6805
        %v6898 = vpop.permute.xlu0 %6897
        %6901 = vset.pattern.permute.xlu0 0
        %6902 = vperm.xlu0 %6901, %v6807
        %v6903 = vpop.permute.xlu0 %6902
        %6906 = vset.pattern.permute.xlu0 0
        %6907 = vperm.xlu0 %6906, %v6809
        %v6908 = vpop.permute.xlu0 %6907
        %6911 = vset.pattern.permute.xlu0 0
        %6912 = vperm.xlu0 %6911, %v6811
        %v6913 = vpop.permute.xlu0 %6912
        %6916 = vset.pattern.permute.xlu0 0
        %6917 = vperm.xlu0 %6916, %v6813
        %v6918 = vpop.permute.xlu0 %6917
        %6921 = vset.pattern.permute.xlu0 0
        %6922 = vperm.xlu0 %6921, %v6815
        %v6923 = vpop.permute.xlu0 %6922
        %6926 = vset.pattern.permute.xlu0 0
        %6927 = vperm.xlu0 %6926, %v6817
        %v6928 = vpop.permute.xlu0 %6927
        %6931 = vset.pattern.permute.xlu0 0
        %6932 = vperm.xlu0 %6931, %v6819
        %v6933 = vpop.permute.xlu0 %6932
        %6936 = vset.pattern.permute.xlu0 0
        %6937 = vperm.xlu0 %6936, %v6821
        %v6938 = vpop.permute.xlu0 %6937
        %6941 = vset.pattern.permute.xlu0 0
        %6942 = vperm.xlu0 %6941, %v6823
        %v6943 = vpop.permute.xlu0 %6942
        %6946 = vset.pattern.permute.xlu0 0
        %6947 = vperm.xlu0 %6946, %v6825
        %v6948 = vpop.permute.xlu0 %6947
        %6951 = vset.pattern.permute.xlu0 0
        %6952 = vperm.xlu0 %6951, %v6827
        %v6953 = vpop.permute.xlu0 %6952
        %6956 = vset.pattern.permute.xlu0 0
        %6957 = vperm.xlu0 %6956, %v6829
        %v6958 = vpop.permute.xlu0 %6957
        %6961 = vset.pattern.permute.xlu0 0
        %6962 = vperm.xlu0 %6961, %v6831
        %v6963 = vpop.permute.xlu0 %6962
        %6966 = vset.pattern.permute.xlu0 0
        %6967 = vperm.xlu0 %6966, %v6833
        %v6968 = vpop.permute.xlu0 %6967
        %6971 = vset.pattern.permute.xlu0 0
        %6972 = vperm.xlu0 %6971, %v6835
        %v6973 = vpop.permute.xlu0 %6972
        %6976 = vset.pattern.permute.xlu0 0
        %6977 = vperm.xlu0 %6976, %v6837
        %v6978 = vpop.permute.xlu0 %6977
        %6981 = vset.pattern.permute.xlu0 0
        %6982 = vperm.xlu0 %6981, %v6839
        %v6983 = vpop.permute.xlu0 %6982
        %6986 = vset.pattern.permute.xlu0 0
        %6987 = vperm.xlu0 %6986, %v6841
        %v6988 = vpop.permute.xlu0 %6987
        %6991 = vset.pattern.permute.xlu0 0
        %6992 = vperm.xlu0 %6991, %v6843
        %v6993 = vpop.permute.xlu0 %6992
        %6996 = vset.pattern.permute.xlu0 0
        %6997 = vperm.xlu0 %6996, %v6845
        %v6998 = vpop.permute.xlu0 %6997
        %7001 = vset.pattern.permute.xlu0 0
        %7002 = vperm.xlu0 %7001, %v6847
        %v7003 = vpop.permute.xlu0 %7002
        %7006 = vset.pattern.permute.xlu0 0
        %7007 = vperm.xlu0 %7006, %v6849
        %v7008 = vpop.permute.xlu0 %7007
        %v7010 = vmul.f32 %v4455, %v6853
        %v7011 = vmul.f32 %v4456, %v6858
        %v7012 = vmul.f32 %v4457, %v6863
        %v7013 = vmul.f32 %v4458, %v6868
        %v7014 = vmul.f32 %v4459, %v6873
        %v7015 = vmul.f32 %v4460, %v6878
        %v7016 = vmul.f32 %v4461, %v6883
        %v7017 = vmul.f32 %v4462, %v6888
        %v7018 = vmul.f32 %v4463, %v6893
        %v7019 = vmul.f32 %v4464, %v6898
        %v7020 = vmul.f32 %v4465, %v6903
        %v7021 = vmul.f32 %v4466, %v6908
        %v7022 = vmul.f32 %v4467, %v6913
        %v7023 = vmul.f32 %v4468, %v6918
        %v7024 = vmul.f32 %v4469, %v6923
        %v7025 = vmul.f32 %v4470, %v6928
        %v7026 = vmul.f32 %v4471, %v6933
        %v7027 = vmul.f32 %v4472, %v6938
        %v7028 = vmul.f32 %v4473, %v6943
        %v7029 = vmul.f32 %v4474, %v6948
        %v7030 = vmul.f32 %v4475, %v6953
        %v7031 = vmul.f32 %v4476, %v6958
        %v7032 = vmul.f32 %v4477, %v6963
        %v7033 = vmul.f32 %v4478, %v6968
        %v7034 = vmul.f32 %v4479, %v6973
        %v7035 = vmul.f32 %v4480, %v6978
        %v7036 = vmul.f32 %v4481, %v6983
        %v7037 = vmul.f32 %v4482, %v6988
        %v7038 = vmul.f32 %v4483, %v6993
        %v7039 = vmul.f32 %v4484, %v6998
        %v7040 = vmul.f32 %v4485, %v7003
        %v7041 = vmul.f32 %v4486, %v7008
        %v7042 = vadd.f32 %v7010, %v497
        %v7043 = vadd.f32 %v7011, %v498
        %v7044 = vadd.f32 %v7012, %v499
        %v7045 = vadd.f32 %v7013, %v500
        %v7046 = vadd.f32 %v7014, %v501
        %v7047 = vadd.f32 %v7015, %v502
        %v7048 = vadd.f32 %v7016, %v503
        %v7049 = vadd.f32 %v7017, %v504
        %v7050 = vadd.f32 %v7018, %v505
        %v7051 = vadd.f32 %v7019, %v506
        %v7052 = vadd.f32 %v7020, %v507
        %v7053 = vadd.f32 %v7021, %v508
        %v7054 = vadd.f32 %v7022, %v509
        %v7055 = vadd.f32 %v7023, %v510
        %v7056 = vadd.f32 %v7024, %v511
        %v7057 = vadd.f32 %v7025, %v512
        %v7058 = vadd.f32 %v7026, %v513
        %v7059 = vadd.f32 %v7027, %v514
        %v7060 = vadd.f32 %v7028, %v515
        %v7061 = vadd.f32 %v7029, %v516
        %v7062 = vadd.f32 %v7030, %v517
        %v7063 = vadd.f32 %v7031, %v518
        %v7064 = vadd.f32 %v7032, %v519
        %v7065 = vadd.f32 %v7033, %v520
        %v7066 = vadd.f32 %v7034, %v521
        %v7067 = vadd.f32 %v7035, %v522
        %v7068 = vadd.f32 %v7036, %v523
        %v7069 = vadd.f32 %v7037, %v524
        %v7070 = vadd.f32 %v7038, %v525
        %v7071 = vadd.f32 %v7039, %v526
        %v7072 = vadd.f32 %v7040, %v527
        %v7073 = vadd.f32 %v7041, %v528
        %7074 = vst.msk [vmem:[%s435] sm:$0xff] %vm441, %v7042
        %7075 = vst.msk [vmem:[%s435 + $0x8] sm:$0xff] %vm441, %v7043
        %7076 = vst.msk [vmem:[%s435 + $0x10] sm:$0xff] %vm441, %v7044
        %7077 = vst.msk [vmem:[%s435 + $0x18] sm:$0xff] %vm441, %v7045
        %7078 = vst.msk [vmem:[%s435 + $0x20] sm:$0xff] %vm441, %v7046
        %7079 = vst.msk [vmem:[%s435 + $0x28] sm:$0xff] %vm441, %v7047
        %7080 = vst.msk [vmem:[%s435 + $0x30] sm:$0xff] %vm441, %v7048
        %7081 = vst.msk [vmem:[%s435 + $0x38] sm:$0xff] %vm441, %v7049
        %7082 = vst.msk [vmem:[%s435 + $0x40] sm:$0xff] %vm441, %v7050
        %7083 = vst.msk [vmem:[%s435 + $0x48] sm:$0xff] %vm441, %v7051
        %7084 = vst.msk [vmem:[%s435 + $0x50] sm:$0xff] %vm441, %v7052
        %7085 = vst.msk [vmem:[%s435 + $0x58] sm:$0xff] %vm441, %v7053
        %7086 = vst.msk [vmem:[%s435 + $0x60] sm:$0xff] %vm441, %v7054
        %7087 = vst.msk [vmem:[%s435 + $0x68] sm:$0xff] %vm441, %v7055
        %7088 = vst.msk [vmem:[%s435 + $0x70] sm:$0xff] %vm441, %v7056
        %7089 = vst.msk [vmem:[%s435 + $0x78] sm:$0xff] %vm441, %v7057
        %7090 = vst.msk [vmem:[%s435 + $0x80] sm:$0xff] %vm441, %v7058
        %7091 = vst.msk [vmem:[%s435 + $0x88] sm:$0xff] %vm441, %v7059
        %7092 = vst.msk [vmem:[%s435 + $0x90] sm:$0xff] %vm441, %v7060
        %7093 = vst.msk [vmem:[%s435 + $0x98] sm:$0xff] %vm441, %v7061
        %7094 = vst.msk [vmem:[%s435 + $0xa0] sm:$0xff] %vm441, %v7062
        %7095 = vst.msk [vmem:[%s435 + $0xa8] sm:$0xff] %vm441, %v7063
        %7096 = vst.msk [vmem:[%s435 + $0xb0] sm:$0xff] %vm441, %v7064
        %7097 = vst.msk [vmem:[%s435 + $0xb8] sm:$0xff] %vm441, %v7065
        %7098 = vst.msk [vmem:[%s435 + $0xc0] sm:$0xff] %vm441, %v7066
        %7099 = vst.msk [vmem:[%s435 + $0xc8] sm:$0xff] %vm441, %v7067
        %7100 = vst.msk [vmem:[%s435 + $0xd0] sm:$0xff] %vm441, %v7068
        %7101 = vst.msk [vmem:[%s435 + $0xd8] sm:$0xff] %vm441, %v7069
        %7102 = vst.msk [vmem:[%s435 + $0xe0] sm:$0xff] %vm441, %v7070
        %7103 = vst.msk [vmem:[%s435 + $0xe8] sm:$0xff] %vm441, %v7071
        %7104 = vst.msk [vmem:[%s435 + $0xf0] sm:$0xff] %vm441, %v7072
        %7105 = vst.msk [vmem:[%s435 + $0xf8] sm:$0xff] %vm441, %v7073
        %s7106 = sand.u32 %s315, 1
        %s7107 = scalar_lea.sflag [#allocation5], %s7106
        %s7108 = sand.u32 %s315, 1
        %s7109 = smul.addr %s7108, 256
        %s7110 = scalar_lea.vmem [#allocation4], %s7109
        // Predicated region
        $region73: #{tpu_custom_call.1} parent=71 // pred_check
          %p7111 = pneg %p325
        $region74: #{tpu_custom_call.1} parent=71 // pred_check_branch
          %7113 = sbr.rel (%p7111) target = $region76
        $region75: #{tpu_custom_call.1} parent=71 // pred_region
          %s7115 = ssub.s32 4096, 4096
          %7116 = vsyncadd %s7107, %s7115
          %s7117 = smul.addr %s29, 32
          %s7118 = smul.addr %s7117, 128
          %s7119 = scalar_lea.hbm %s13, %s7118
          %s7120 = sshll.u32 %s7110, 4
          %s7121 = int_to_ptr.vmem [resolvable:$true] %s7120
          %7126 = dma.vmem_to_hbm [thread:$0]  %s7121, 4096, %s7119, %s7107, 128, 128, 8
        $region76: #{tpu_custom_call.1} parent=71 // pred_fallthru
          _
      $region72: #{tpu_custom_call.1} parent=5 // pred_fallthru
        _
      %p7127 = scmp.le.s32.totalorder 2, %s24
      // Predicated region
      $region77: #{tpu_custom_call.1} parent=5 // pred_check
        %p7128 = pneg %p7127
      $region78: #{tpu_custom_call.1} parent=5 // pred_check_branch
        %7130 = sbr.rel (%p7128) target = $region80
      $region79: #{tpu_custom_call.1} parent=5 // pred_region
        %s7131 = ssub.s32 %s24, 2
        // Predicated region
        $region81: #{tpu_custom_call.1} parent=79 // pred_check
          %p7132 = pneg %p331
        $region82: #{tpu_custom_call.1} parent=79 // pred_check_branch
          %7134 = sbr.rel (%p7132) target = $region84
        $region83: #{tpu_custom_call.1} parent=79 // pred_region
          %s7135 = sand.u32 %s316, 1
          %s7136 = scalar_lea.sflag [#allocation5], %s7135
          %s7137 = sand.u32 %s316, 1
          %s7138 = smul.addr %s7137, 256
          %s7139 = scalar_lea.vmem [#allocation4], %s7138
          %7140 = dma.done %s7136, 4096
        $region84: #{tpu_custom_call.1} parent=79 // pred_fallthru
          _
      $region80: #{tpu_custom_call.1} parent=5 // pred_fallthru
        _
    $region6: #{tpu_custom_call.1} parent=1 // loop_footer
      %s28 = sadd.s32 1, %s24
    $region7: #{tpu_custom_call.1} parent=1 // loop_footer_branch
      %23 = sbr.rel target = $region3
    $region8: #{tpu_custom_call.1} parent=1 // loop_exit
      _
    %7141 = vsyncpa [#allocation5], 1
    %s7142 = scalar_lea.sflag [#allocation5], 1
    %7143 = vsyncpa %s7142, 1

</llo_original>
